<compile_context>
chip_gen: v7x
topology: tpu7x:2x2x1
jax: 0.10.0
libtpu: 0.0.40
codegen_flags: <defaults>
</compile_context>

<pallas_src>
import math
import functools

import jax
import jax.numpy as jnp
from jax import lax
from jax.experimental import pallas as pl
from jax.experimental.pallas import tpu as pltpu  # noqa: F401  (kept for TPU-specific tweaks)


# ----------------------------------------------------------------------------
# Fused kernel: self-attention stack + (fc-folded) cross-attention stack
# ----------------------------------------------------------------------------
def _qformer_kernel(tgt0_ref, vis_ref, pos_ref, w_ref, b_ref,
                    out_ref, attn_ref,
                    *, nhead, n_self, n_cross, num_queries):
    B, L, D = tgt0_ref.shape
    n_v = vis_ref.shape[1]
    n_q = pos_ref.shape[1]
    hd = D // nhead
    f32 = jnp.float32

    # torch: self-attn key/value = tgt[num_queries:] -> instead of an unaligned
    # row slice, keep all L keys and mask the first `num_queries` key columns.
    key_mask = jnp.where(
        lax.broadcasted_iota(jnp.int32, (1, L, L), 2) < num_queries, -1e30, 0.0)

    def mha(q3, k3, v3, mask):
        # q3: (B, Lq, D), k3/v3: (B, Lk, D).
        # Returns the head-concatenated output (pre-out-projection) and the
        # head-summed attention weights.  Batched over B (single batch dim),
        # static unroll over heads only.
        ohs = []
        p_sum = None
        for h in range(nhead):
            lo = h * hd
            s = jnp.einsum('bqd,bkd->bqk',
                           q3[:, :, lo:lo + hd], k3[:, :, lo:lo + hd],
                           preferred_element_type=f32)
            if mask is not None:
                s = s + mask
            s = s - jnp.max(s, axis=-1, keepdims=True)
            e = jnp.exp(s)
            p = e * pl.reciprocal(jnp.sum(e, axis=-1, keepdims=True),
                                  approx=True)
            p_sum = p if p_sum is None else p_sum + p
            ohs.append(jnp.einsum('bqk,bkd->bqd', p, v3[:, :, lo:lo + hd],
                                  preferred_element_type=f32))
        return jnp.concatenate(ohs, axis=-1), p_sum

    # ------------------ stage 1: self-attention over tgt = [queries ; txt] ---
    tgt = tgt0_ref[...]                                   # (B, L, D)
    for li in range(n_self):                              # static unroll
        wq = w_ref[4 * li + 0]; wk = w_ref[4 * li + 1]    # pre-transposed,
        wv = w_ref[4 * li + 2]; wo = w_ref[4 * li + 3]    # 1/sqrt(hd) in wq/bq
        bq = b_ref[6 * li + 0:6 * li + 1]
        bk = b_ref[6 * li + 1:6 * li + 2]
        bv = b_ref[6 * li + 2:6 * li + 3]
        bo = b_ref[6 * li + 3:6 * li + 4]

        x = tgt.reshape(B * L, D)                         # free leading merge
        q = jnp.dot(x, wq, preferred_element_type=f32) + bq
        k = jnp.dot(x, wk, preferred_element_type=f32) + bk
        v = jnp.dot(x, wv, preferred_element_type=f32) + bv

        o, _ = mha(q.reshape(B, L, D), k.reshape(B, L, D), v.reshape(B, L, D),
                   key_mask)
        # ONE deferred out-projection for all batches/heads.
        attn_out = jnp.dot(o.reshape(B * L, D), wo,
                           preferred_element_type=f32) + bo
        tgt = tgt + attn_out.reshape(B, L, D)             # residual: out + tgt

    # ------------------ stage 2: cross-attention (fc folded into K/V) --------
    cur = tgt[:, 0:n_q, :]                                # tgt2 = tgt[:n_q]
    pos = pos_ref[...]                                    # (B, n_q, D)
    vis_flat = vis_ref[...].reshape(B * n_v, D)           # zero-padded to D

    for li in range(n_cross):
        j = n_self + li
        wq = w_ref[4 * j + 0]; wk = w_ref[4 * j + 1]      # wk/wv: fc folded in
        wv = w_ref[4 * j + 2]; wo = w_ref[4 * j + 3]
        bq = b_ref[6 * j + 0:6 * j + 1]
        bk = b_ref[6 * j + 1:6 * j + 2]
        bv = b_ref[6 * j + 2:6 * j + 3]
        bo = b_ref[6 * j + 3:6 * j + 4]
        g = b_ref[6 * j + 4:6 * j + 5]
        be = b_ref[6 * j + 5:6 * j + 6]

        qp = (cur + pos).reshape(B * n_q, D)
        q = jnp.dot(qp, wq, preferred_element_type=f32) + bq
        k = jnp.dot(vis_flat, wk, preferred_element_type=f32) + bk
        v = jnp.dot(vis_flat, wv, preferred_element_type=f32) + bv

        o, p_sum = mha(q.reshape(B, n_q, D), k.reshape(B, n_v, D),
                       v.reshape(B, n_v, D), None)
        attn_out = jnp.dot(o.reshape(B * n_q, D), wo,
                           preferred_element_type=f32) + bo

        # residual (without pos, DETR-style) + post-LayerNorm
        res = cur + attn_out.reshape(B, n_q, D)
        mean = jnp.mean(res, axis=-1, keepdims=True)
        var = jnp.mean((res - mean) ** 2, axis=-1, keepdims=True)
        y = (res - mean) * lax.rsqrt(var + 1e-5) * g + be

        if li < n_cross - 1:
            cur = y                                       # feed next layer
        else:
            # lane-dense (n_q, B*D) src slab: two static lane-slice stores,
            # no lane-concat relayout; wrapper reshape is a view.
            for bb in range(B):
                out_ref[:, bb * D:(bb + 1) * D] = y[bb]
            # head-averaged attention weights: ONE contiguous store.
            attn_ref[...] = p_sum * (1.0 / nhead)


@functools.partial(jax.jit,
                   static_argnames=("nhead", "n_self", "n_cross", "num_queries"))
def _qformer_forward(queries, txt, vis, pos, w_slab, b_slab, *,
                     nhead, n_self, n_cross, num_queries):
    n_q, b, d = queries.shape
    n_v, _, d_vis = vis.shape

    # (seq, batch, dim) -> (batch, seq, dim); fused with the concat under jit.
    tgt0 = jnp.transpose(jnp.concatenate([queries, txt], axis=0), (1, 0, 2))
    vis_b = jnp.transpose(vis, (1, 0, 2))
    if d_vis < d:
        # zero-pad vis features so the fc-folded K/V weights are (D, D) slabs
        # (padding rows are zero -> exact).
        vis_b = jnp.pad(vis_b, ((0, 0), (0, 0), (0, d - d_vis)))
    pos_b = jnp.transpose(pos, (1, 0, 2))

    kernel = functools.partial(_qformer_kernel, nhead=nhead, n_self=n_self,
                               n_cross=n_cross, num_queries=num_queries)
    out2d, attn = pl.pallas_call(
        kernel,
        out_shape=[
            jax.ShapeDtypeStruct((n_q, b * d), jnp.float32),   # lane-dense src
            jax.ShapeDtypeStruct((b, n_q, n_v), jnp.float32),  # attn weights
        ],
    )(tgt0, vis_b, pos_b, w_slab, b_slab)

    src = out2d.reshape(n_q, b, d)                 # back to (N_q, B, D) (view)
    return src, attn


# ----------------------------------------------------------------------------
# Qformer_3 wrapper: parameters + packing (fold/transpose/stack) + forward glue
# ----------------------------------------------------------------------------
class QformerPallas:
    def __init__(self, hidden_size, nhead=8, selfattn_layer=1, crossattn_layer=1,
                 dropout=0.1, key=jax.random.PRNGKey(0)):
        d_model, d_vis = hidden_size
        assert d_model % nhead == 0
        assert d_vis <= d_model, "fc-fold packing assumes d_vis <= d_model"
        self.d_model, self.d_vis, self.nhead = d_model, d_vis, nhead
        self.n_self, self.n_cross = selfattn_layer, crossattn_layer
        self.num_queries = 1                       # matches the torch module

        def dense(k, shape):
            return jax.random.normal(k, shape, jnp.float32) * 0.05

        nkeys = 2 + 8 * selfattn_layer + 10 * crossattn_layer
        keys = iter(jax.random.split(key, nkeys))

        self.fc_w = dense(next(keys), (d_model, d_vis))
        self.fc_b = dense(next(keys), (d_model,))

        self.self_layers = []
        for _ in range(selfattn_layer):
            self.self_layers.append({
                "wq": dense(next(keys), (d_model, d_model)),
                "bq": dense(next(keys), (d_model,)),
                "wk": dense(next(keys), (d_model, d_model)),
                "bk": dense(next(keys), (d_model,)),
                "wv": dense(next(keys), (d_model, d_model)),
                "bv": dense(next(keys), (d_model,)),
                "wo": dense(next(keys), (d_model, d_model)),
                "bo": dense(next(keys), (d_model,)),
            })

        self.cross_layers = []
        for _ in range(crossattn_layer):
            self.cross_layers.append({
                "wq": dense(next(keys), (d_model, d_model)),
                "bq": dense(next(keys), (d_model,)),
                "wk": dense(next(keys), (d_model, d_model)),
                "bk": dense(next(keys), (d_model,)),
                "wv": dense(next(keys), (d_model, d_model)),
                "bv": dense(next(keys), (d_model,)),
                "wo": dense(next(keys), (d_model, d_model)),
                "bo": dense(next(keys), (d_model,)),
                "gamma": 1.0 + 0.1 * jax.random.normal(next(keys), (d_model,), jnp.float32),
                "beta": 0.1 * jax.random.normal(next(keys), (d_model,), jnp.float32),
            })

        self._pack()

    def _pack(self):
        """Pre-transpose, fold 1/sqrt(hd) into Wq/bq, fold fc into cross K/V,
        then stack everything into ONE weight slab and ONE bias slab."""
        d = self.d_model
        scale = 1.0 / math.sqrt(d // self.nhead)
        fcT = self.fc_w.T                          # (d_vis, d_model)
        pad = d - self.d_vis
        ws, bs = [], []
        one = jnp.ones((d,), jnp.float32)
        zero = jnp.zeros((d,), jnp.float32)
        for lp in self.self_layers:
            ws += [(lp["wq"] * scale).T, lp["wk"].T, lp["wv"].T, lp["wo"].T]
            bs += [lp["bq"] * scale, lp["bk"], lp["bv"], lp["bo"], one, zero]
        for lp in self.cross_layers:
            wk_f = jnp.pad(fcT @ lp["wk"].T, ((0, pad), (0, 0)))
            wv_f = jnp.pad(fcT @ lp["wv"].T, ((0, pad), (0, 0)))
            bk_f = self.fc_b @ lp["wk"].T + lp["bk"]
            bv_f = self.fc_b @ lp["wv"].T + lp["bv"]
            ws += [(lp["wq"] * scale).T, wk_f, wv_f, lp["wo"].T]
            bs += [lp["bq"] * scale, bk_f, bv_f, lp["bo"], lp["gamma"], lp["beta"]]
        self.w_slab = jnp.stack(ws)                # (4*(n_self+n_cross), D, D)
        self.b_slab = jnp.stack(bs)                # (6*(n_self+n_cross), D)

    def forward(self, queries, vis, txt, query_pos=None, return_attn=False):
        """queries: (N_q, B, D), vis: (N_v, B, D_vis), txt: (N_t, B, D)."""
        pos = query_pos if query_pos is not None else jnp.zeros_like(queries)
        src, attn = _qformer_forward(queries, txt, vis, pos,
                                     self.w_slab, self.b_slab,
                                     nhead=self.nhead, n_self=self.n_self,
                                     n_cross=self.n_cross,
                                     num_queries=self.num_queries)
        # torch's `return (src if not return_attn else src, attn)` is always a
        # 2-tuple (the conditional binds tighter than the comma) -> mirror it.
        return src, attn


# ----------------------------------------------------------------------------
# Pure-JAX reference (uses the raw, un-folded weights) for correctness check
# ----------------------------------------------------------------------------
def ref_forward(model, queries, vis, txt, query_pos=None):
    d, nhead = model.d_model, model.nhead
    hd = d // nhead
    scale = 1.0 / math.sqrt(hd)
    n_q = queries.shape[0]
    n_v = vis.shape[0]
    nq0 = model.num_queries
    pos = query_pos if query_pos is not None else jnp.zeros_like(queries)

    # stage 1: self-attention stack, key/value = tgt[num_queries:]
    tgt = jnp.concatenate([queries, txt], axis=0)
    L, B, _ = tgt.shape
    for lp in model.self_layers:
        kv = tgt[nq0:]
        Lk = L - nq0
        q = jnp.einsum("lbd,ed->lbe", tgt, lp["wq"]) + lp["bq"]
        k = jnp.einsum("lbd,ed->lbe", kv, lp["wk"]) + lp["bk"]
        v = jnp.einsum("lbd,ed->lbe", kv, lp["wv"]) + lp["bv"]
        qh = q.reshape(L, B, nhead, hd).transpose(1, 2, 0, 3) * scale
        kh = k.reshape(Lk, B, nhead, hd).transpose(1, 2, 0, 3)
        vh = v.reshape(Lk, B, nhead, hd).transpose(1, 2, 0, 3)
        s = jnp.einsum("bhqd,bhkd->bhqk", qh, kh)
        p = jax.nn.softmax(s, axis=-1)
        oh = jnp.einsum("bhqk,bhkd->bhqd", p, vh)
        o = oh.transpose(2, 0, 1, 3).reshape(L, B, d)
        attn_out = jnp.einsum("lbd,ed->lbe", o, lp["wo"]) + lp["bo"]
        tgt = attn_out + tgt

    tgt2 = tgt[:n_q]
    vis_fc = jnp.einsum("nbk,dk->nbd", vis, model.fc_w) + model.fc_b

    out = tgt2
    attn = None
    for lp in model.cross_layers:
        q = jnp.einsum("nbd,ed->nbe", out + pos, lp["wq"]) + lp["bq"]
        k = jnp.einsum("nbd,ed->nbe", vis_fc, lp["wk"]) + lp["bk"]
        v = jnp.einsum("nbd,ed->nbe", vis_fc, lp["wv"]) + lp["bv"]
        qh = q.reshape(n_q, B, nhead, hd).transpose(1, 2, 0, 3) * scale
        kh = k.reshape(n_v, B, nhead, hd).transpose(1, 2, 0, 3)
        vh = v.reshape(n_v, B, nhead, hd).transpose(1, 2, 0, 3)
        s = jnp.einsum("bhqd,bhkd->bhqk", qh, kh)
        p = jax.nn.softmax(s, axis=-1)
        oh = jnp.einsum("bhqk,bhkd->bhqd", p, vh)
        o = oh.transpose(2, 0, 1, 3).reshape(n_q, B, d)
        attn_out = jnp.einsum("nbd,ed->nbe", o, lp["wo"]) + lp["bo"]
        res = out + attn_out
        mean = res.mean(-1, keepdims=True)
        var = ((res - mean) ** 2).mean(-1, keepdims=True)
        out = (res - mean) / jnp.sqrt(var + 1e-5) * lp["gamma"] + lp["beta"]
        attn = p.mean(axis=1)                      # head-averaged (B, N_q, N_v)
    return out, attn


if __name__ == "__main__":
    key = jax.random.PRNGKey(0)
    k_q, k_v, k_t, k_p, k_w = jax.random.split(key, 5)

    hidden_size = [64, 48]     # [d_model, d_vis]
    nhead = 8
    n_q, n_v, n_t, batch = 8, 16, 8, 2

    queries = jax.random.normal(k_q, (n_q, batch, hidden_size[0]), jnp.float32)
    vis = jax.random.normal(k_v, (n_v, batch, hidden_size[1]), jnp.float32)
    txt = jax.random.normal(k_t, (n_t, batch, hidden_size[0]), jnp.float32)
    query_pos = jax.random.normal(k_p, (n_q, batch, hidden_size[0]), jnp.float32)

    model = QformerPallas(hidden_size, nhead=nhead, selfattn_layer=1,
                          crossattn_layer=1, key=k_w)

    src, attn = model.forward(queries, vis, txt, query_pos=query_pos,
                              return_attn=True)
    src = jax.block_until_ready(src)
    attn = jax.block_until_ready(attn)

    src_ref, attn_ref = ref_forward(model, queries, vis, txt, query_pos=query_pos)

    assert src.shape == (n_q, batch, hidden_size[0])
    assert attn.shape == (batch, n_q, n_v)
    assert jnp.allclose(src, src_ref, atol=2e-3, rtol=2e-3), \
        float(jnp.max(jnp.abs(src - src_ref)))
    assert jnp.allclose(attn, attn_ref, atol=2e-3, rtol=2e-3), \
        float(jnp.max(jnp.abs(attn - attn_ref)))

    print("KERNEL_OK")
</pallas_src>

<mosaic_0001>
module attributes {stable_mosaic.version = 11 : i64} {
  func.func @_qformer_kernel(%arg0: memref<2x16x64xf32, #tpu.memory_space<vmem>>, %arg1: memref<2x16x64xf32, #tpu.memory_space<vmem>>, %arg2: memref<2x8x64xf32, #tpu.memory_space<vmem>>, %arg3: memref<8x64x64xf32, #tpu.memory_space<vmem>>, %arg4: memref<12x64xf32, #tpu.memory_space<vmem>>, %arg5: memref<8x128xf32, #tpu.memory_space<vmem>>, %arg6: memref<2x8x16xf32, #tpu.memory_space<vmem>>) attributes {dimension_semantics = [], scalar_prefetch = 0 : i64, scratch_operands = 0 : i64, tpu.core_type = #tpu.core_type<tc>} {
    %0 = tpu.iota {dimensions = array<i32: 2>} : vector<1x16x16xi32>
    %c1_i32 = arith.constant 1 : i32
    %1 = vector.broadcast %c1_i32 : i32 to vector<1x16x16xi32>
    %2 = arith.cmpi slt, %0, %1 : vector<1x16x16xi32>
    %cst = arith.constant -1.000000e+30 : f32
    %cst_0 = arith.constant 0.000000e+00 : f32
    %3 = vector.broadcast %cst : f32 to vector<1x16x16xf32>
    %4 = vector.broadcast %cst_0 : f32 to vector<1x16x16xf32>
    %5 = arith.select %2, %3, %4 : vector<1x16x16xi1>, vector<1x16x16xf32>
    %c0 = arith.constant 0 : index
    %c0_1 = arith.constant 0 : index
    %c0_2 = arith.constant 0 : index
    %6 = vector.load %arg0[%c0, %c0_1, %c0_2] : memref<2x16x64xf32, #tpu.memory_space<vmem>>, vector<2x16x64xf32>
    %c0_3 = arith.constant 0 : index
    %c0_4 = arith.constant 0 : index
    %c0_5 = arith.constant 0 : index
    %7 = vector.load %arg3[%c0_3, %c0_4, %c0_5] : memref<8x64x64xf32, #tpu.memory_space<vmem>>, vector<1x64x64xf32>
    %8 = vector.shape_cast %7 : vector<1x64x64xf32> to vector<64x64xf32>
    %c1 = arith.constant 1 : index
    %c0_6 = arith.constant 0 : index
    %c0_7 = arith.constant 0 : index
    %9 = vector.load %arg3[%c1, %c0_6, %c0_7] : memref<8x64x64xf32, #tpu.memory_space<vmem>>, vector<1x64x64xf32>
    %10 = vector.shape_cast %9 : vector<1x64x64xf32> to vector<64x64xf32>
    %c2 = arith.constant 2 : index
    %c0_8 = arith.constant 0 : index
    %c0_9 = arith.constant 0 : index
    %11 = vector.load %arg3[%c2, %c0_8, %c0_9] : memref<8x64x64xf32, #tpu.memory_space<vmem>>, vector<1x64x64xf32>
    %12 = vector.shape_cast %11 : vector<1x64x64xf32> to vector<64x64xf32>
    %c3 = arith.constant 3 : index
    %c0_10 = arith.constant 0 : index
    %c0_11 = arith.constant 0 : index
    %13 = vector.load %arg3[%c3, %c0_10, %c0_11] : memref<8x64x64xf32, #tpu.memory_space<vmem>>, vector<1x64x64xf32>
    %14 = vector.shape_cast %13 : vector<1x64x64xf32> to vector<64x64xf32>
    %c0_12 = arith.constant 0 : index
    %c0_13 = arith.constant 0 : index
    %15 = vector.load %arg4[%c0_12, %c0_13] : memref<12x64xf32, #tpu.memory_space<vmem>>, vector<1x64xf32>
    %c1_14 = arith.constant 1 : index
    %c0_15 = arith.constant 0 : index
    %16 = vector.load %arg4[%c1_14, %c0_15] : memref<12x64xf32, #tpu.memory_space<vmem>>, vector<1x64xf32>
    %c2_16 = arith.constant 2 : index
    %c0_17 = arith.constant 0 : index
    %17 = vector.load %arg4[%c2_16, %c0_17] : memref<12x64xf32, #tpu.memory_space<vmem>>, vector<1x64xf32>
    %c3_18 = arith.constant 3 : index
    %c0_19 = arith.constant 0 : index
    %18 = vector.load %arg4[%c3_18, %c0_19] : memref<12x64xf32, #tpu.memory_space<vmem>>, vector<1x64xf32>
    %19 = vector.shape_cast %6 : vector<2x16x64xf32> to vector<32x64xf32>
    %cst_20 = arith.constant dense<0.000000e+00> : vector<32x64xf32>
    %20 = tpu.matmul %19, %8, %cst_20 {dimension_numbers = #tpu.dot_dimension_numbers<[1], [0], [0], [1], [0, 0, 1, 1], [], []>} : vector<32x64xf32>, vector<64x64xf32>, vector<32x64xf32> -> vector<32x64xf32>
    %21 = vector.broadcast %15 : vector<1x64xf32> to vector<32x64xf32>
    %22 = arith.addf %20, %21 : vector<32x64xf32>
    %cst_21 = arith.constant dense<0.000000e+00> : vector<32x64xf32>
    %23 = tpu.matmul %19, %10, %cst_21 {dimension_numbers = #tpu.dot_dimension_numbers<[1], [0], [0], [1], [0, 0, 1, 1], [], []>} : vector<32x64xf32>, vector<64x64xf32>, vector<32x64xf32> -> vector<32x64xf32>
    %24 = vector.broadcast %16 : vector<1x64xf32> to vector<32x64xf32>
    %25 = arith.addf %23, %24 : vector<32x64xf32>
    %cst_22 = arith.constant dense<0.000000e+00> : vector<32x64xf32>
    %26 = tpu.matmul %19, %12, %cst_22 {dimension_numbers = #tpu.dot_dimension_numbers<[1], [0], [0], [1], [0, 0, 1, 1], [], []>} : vector<32x64xf32>, vector<64x64xf32>, vector<32x64xf32> -> vector<32x64xf32>
    %27 = vector.broadcast %17 : vector<1x64xf32> to vector<32x64xf32>
    %28 = arith.addf %26, %27 : vector<32x64xf32>
    %29 = vector.shape_cast %22 : vector<32x64xf32> to vector<2x16x64xf32>
    %30 = vector.shape_cast %25 : vector<32x64xf32> to vector<2x16x64xf32>
    %31 = vector.shape_cast %28 : vector<32x64xf32> to vector<2x16x64xf32>
    %32 = vector.extract_strided_slice %29 {offsets = [0, 0, 0], sizes = [2, 16, 8], strides = [1, 1, 1]} : vector<2x16x64xf32> to vector<2x16x8xf32>
    %33 = vector.extract_strided_slice %30 {offsets = [0, 0, 0], sizes = [2, 16, 8], strides = [1, 1, 1]} : vector<2x16x64xf32> to vector<2x16x8xf32>
    "tpu.trace_start"() <{level = 10 : i32, message = "bqd,bkd->bqk"}> : () -> ()
    %cst_23 = arith.constant dense<0.000000e+00> : vector<2x16x16xf32>
    %34 = tpu.matmul %32, %33, %cst_23 {dimension_numbers = #tpu.dot_dimension_numbers<[2], [2], [1], [1], [0, 0, 0, 1, 1, 1], [0], [0]>} : vector<2x16x8xf32>, vector<2x16x8xf32>, vector<2x16x16xf32> -> vector<2x16x16xf32>
    "tpu.trace_stop"() : () -> ()
    %35 = vector.broadcast %5 : vector<1x16x16xf32> to vector<2x16x16xf32>
    %36 = arith.addf %34, %35 : vector<2x16x16xf32>
    %cst_24 = arith.constant dense<0xFF800000> : vector<2x16xf32>
    %37 = vector.multi_reduction <maximumf>, %36, %cst_24 [2] : vector<2x16x16xf32> to vector<2x16xf32>
    %38 = vector.shape_cast %37 : vector<2x16xf32> to vector<2x16x1xf32>
    %39 = vector.broadcast %38 : vector<2x16x1xf32> to vector<2x16x16xf32>
    %40 = arith.subf %36, %39 : vector<2x16x16xf32>
    %41 = math.exp %40 : vector<2x16x16xf32>
    %cst_25 = arith.constant dense<0.000000e+00> : vector<2x16xf32>
    %42 = vector.multi_reduction <add>, %41, %cst_25 [2] : vector<2x16x16xf32> to vector<2x16xf32>
    %43 = vector.shape_cast %42 : vector<2x16xf32> to vector<2x16x1xf32>
    %44 = tpu.reciprocal %43 {approx = true} : vector<2x16x1xf32> -> vector<2x16x1xf32>
    %45 = vector.broadcast %44 : vector<2x16x1xf32> to vector<2x16x16xf32>
    %46 = arith.mulf %41, %45 : vector<2x16x16xf32>
    %47 = vector.extract_strided_slice %31 {offsets = [0, 0, 0], sizes = [2, 16, 8], strides = [1, 1, 1]} : vector<2x16x64xf32> to vector<2x16x8xf32>
    "tpu.trace_start"() <{level = 10 : i32, message = "bqk,bkd->bqd"}> : () -> ()
    %cst_26 = arith.constant dense<0.000000e+00> : vector<2x16x8xf32>
    %48 = tpu.matmul %46, %47, %cst_26 {dimension_numbers = #tpu.dot_dimension_numbers<[2], [1], [1], [2], [0, 0, 0, 1, 1, 2], [0], [0]>} : vector<2x16x16xf32>, vector<2x16x8xf32>, vector<2x16x8xf32> -> vector<2x16x8xf32>
    "tpu.trace_stop"() : () -> ()
    %49 = vector.extract_strided_slice %29 {offsets = [0, 0, 8], sizes = [2, 16, 8], strides = [1, 1, 1]} : vector<2x16x64xf32> to vector<2x16x8xf32>
    %50 = vector.extract_strided_slice %30 {offsets = [0, 0, 8], sizes = [2, 16, 8], strides = [1, 1, 1]} : vector<2x16x64xf32> to vector<2x16x8xf32>
    "tpu.trace_start"() <{level = 10 : i32, message = "bqd,bkd->bqk"}> : () -> ()
    %cst_27 = arith.constant dense<0.000000e+00> : vector<2x16x16xf32>
    %51 = tpu.matmul %49, %50, %cst_27 {dimension_numbers = #tpu.dot_dimension_numbers<[2], [2], [1], [1], [0, 0, 0, 1, 1, 1], [0], [0]>} : vector<2x16x8xf32>, vector<2x16x8xf32>, vector<2x16x16xf32> -> vector<2x16x16xf32>
    "tpu.trace_stop"() : () -> ()
    %52 = vector.broadcast %5 : vector<1x16x16xf32> to vector<2x16x16xf32>
    %53 = arith.addf %51, %52 : vector<2x16x16xf32>
    %cst_28 = arith.constant dense<0xFF800000> : vector<2x16xf32>
    %54 = vector.multi_reduction <maximumf>, %53, %cst_28 [2] : vector<2x16x16xf32> to vector<2x16xf32>
    %55 = vector.shape_cast %54 : vector<2x16xf32> to vector<2x16x1xf32>
    %56 = vector.broadcast %55 : vector<2x16x1xf32> to vector<2x16x16xf32>
    %57 = arith.subf %53, %56 : vector<2x16x16xf32>
    %58 = math.exp %57 : vector<2x16x16xf32>
    %cst_29 = arith.constant dense<0.000000e+00> : vector<2x16xf32>
    %59 = vector.multi_reduction <add>, %58, %cst_29 [2] : vector<2x16x16xf32> to vector<2x16xf32>
    %60 = vector.shape_cast %59 : vector<2x16xf32> to vector<2x16x1xf32>
    %61 = tpu.reciprocal %60 {approx = true} : vector<2x16x1xf32> -> vector<2x16x1xf32>
    %62 = vector.broadcast %61 : vector<2x16x1xf32> to vector<2x16x16xf32>
    %63 = arith.mulf %58, %62 : vector<2x16x16xf32>
    %64 = vector.extract_strided_slice %31 {offsets = [0, 0, 8], sizes = [2, 16, 8], strides = [1, 1, 1]} : vector<2x16x64xf32> to vector<2x16x8xf32>
    "tpu.trace_start"() <{level = 10 : i32, message = "bqk,bkd->bqd"}> : () -> ()
    %cst_30 = arith.constant dense<0.000000e+00> : vector<2x16x8xf32>
    %65 = tpu.matmul %63, %64, %cst_30 {dimension_numbers = #tpu.dot_dimension_numbers<[2], [1], [1], [2], [0, 0, 0, 1, 1, 2], [0], [0]>} : vector<2x16x16xf32>, vector<2x16x8xf32>, vector<2x16x8xf32> -> vector<2x16x8xf32>
    "tpu.trace_stop"() : () -> ()
    %66 = vector.extract_strided_slice %29 {offsets = [0, 0, 16], sizes = [2, 16, 8], strides = [1, 1, 1]} : vector<2x16x64xf32> to vector<2x16x8xf32>
    %67 = vector.extract_strided_slice %30 {offsets = [0, 0, 16], sizes = [2, 16, 8], strides = [1, 1, 1]} : vector<2x16x64xf32> to vector<2x16x8xf32>
    "tpu.trace_start"() <{level = 10 : i32, message = "bqd,bkd->bqk"}> : () -> ()
    %cst_31 = arith.constant dense<0.000000e+00> : vector<2x16x16xf32>
    %68 = tpu.matmul %66, %67, %cst_31 {dimension_numbers = #tpu.dot_dimension_numbers<[2], [2], [1], [1], [0, 0, 0, 1, 1, 1], [0], [0]>} : vector<2x16x8xf32>, vector<2x16x8xf32>, vector<2x16x16xf32> -> vector<2x16x16xf32>
    "tpu.trace_stop"() : () -> ()
    %69 = vector.broadcast %5 : vector<1x16x16xf32> to vector<2x16x16xf32>
    %70 = arith.addf %68, %69 : vector<2x16x16xf32>
    %cst_32 = arith.constant dense<0xFF800000> : vector<2x16xf32>
    %71 = vector.multi_reduction <maximumf>, %70, %cst_32 [2] : vector<2x16x16xf32> to vector<2x16xf32>
    %72 = vector.shape_cast %71 : vector<2x16xf32> to vector<2x16x1xf32>
    %73 = vector.broadcast %72 : vector<2x16x1xf32> to vector<2x16x16xf32>
    %74 = arith.subf %70, %73 : vector<2x16x16xf32>
    %75 = math.exp %74 : vector<2x16x16xf32>
    %cst_33 = arith.constant dense<0.000000e+00> : vector<2x16xf32>
    %76 = vector.multi_reduction <add>, %75, %cst_33 [2] : vector<2x16x16xf32> to vector<2x16xf32>
    %77 = vector.shape_cast %76 : vector<2x16xf32> to vector<2x16x1xf32>
    %78 = tpu.reciprocal %77 {approx = true} : vector<2x16x1xf32> -> vector<2x16x1xf32>
    %79 = vector.broadcast %78 : vector<2x16x1xf32> to vector<2x16x16xf32>
    %80 = arith.mulf %75, %79 : vector<2x16x16xf32>
    %81 = vector.extract_strided_slice %31 {offsets = [0, 0, 16], sizes = [2, 16, 8], strides = [1, 1, 1]} : vector<2x16x64xf32> to vector<2x16x8xf32>
    "tpu.trace_start"() <{level = 10 : i32, message = "bqk,bkd->bqd"}> : () -> ()
    %cst_34 = arith.constant dense<0.000000e+00> : vector<2x16x8xf32>
    %82 = tpu.matmul %80, %81, %cst_34 {dimension_numbers = #tpu.dot_dimension_numbers<[2], [1], [1], [2], [0, 0, 0, 1, 1, 2], [0], [0]>} : vector<2x16x16xf32>, vector<2x16x8xf32>, vector<2x16x8xf32> -> vector<2x16x8xf32>
    "tpu.trace_stop"() : () -> ()
    %83 = vector.extract_strided_slice %29 {offsets = [0, 0, 24], sizes = [2, 16, 8], strides = [1, 1, 1]} : vector<2x16x64xf32> to vector<2x16x8xf32>
    %84 = vector.extract_strided_slice %30 {offsets = [0, 0, 24], sizes = [2, 16, 8], strides = [1, 1, 1]} : vector<2x16x64xf32> to vector<2x16x8xf32>
    "tpu.trace_start"() <{level = 10 : i32, message = "bqd,bkd->bqk"}> : () -> ()
    %cst_35 = arith.constant dense<0.000000e+00> : vector<2x16x16xf32>
    %85 = tpu.matmul %83, %84, %cst_35 {dimension_numbers = #tpu.dot_dimension_numbers<[2], [2], [1], [1], [0, 0, 0, 1, 1, 1], [0], [0]>} : vector<2x16x8xf32>, vector<2x16x8xf32>, vector<2x16x16xf32> -> vector<2x16x16xf32>
    "tpu.trace_stop"() : () -> ()
    %86 = vector.broadcast %5 : vector<1x16x16xf32> to vector<2x16x16xf32>
    %87 = arith.addf %85, %86 : vector<2x16x16xf32>
    %cst_36 = arith.constant dense<0xFF800000> : vector<2x16xf32>
    %88 = vector.multi_reduction <maximumf>, %87, %cst_36 [2] : vector<2x16x16xf32> to vector<2x16xf32>
    %89 = vector.shape_cast %88 : vector<2x16xf32> to vector<2x16x1xf32>
    %90 = vector.broadcast %89 : vector<2x16x1xf32> to vector<2x16x16xf32>
    %91 = arith.subf %87, %90 : vector<2x16x16xf32>
    %92 = math.exp %91 : vector<2x16x16xf32>
    %cst_37 = arith.constant dense<0.000000e+00> : vector<2x16xf32>
    %93 = vector.multi_reduction <add>, %92, %cst_37 [2] : vector<2x16x16xf32> to vector<2x16xf32>
    %94 = vector.shape_cast %93 : vector<2x16xf32> to vector<2x16x1xf32>
    %95 = tpu.reciprocal %94 {approx = true} : vector<2x16x1xf32> -> vector<2x16x1xf32>
    %96 = vector.broadcast %95 : vector<2x16x1xf32> to vector<2x16x16xf32>
    %97 = arith.mulf %92, %96 : vector<2x16x16xf32>
    %98 = vector.extract_strided_slice %31 {offsets = [0, 0, 24], sizes = [2, 16, 8], strides = [1, 1, 1]} : vector<2x16x64xf32> to vector<2x16x8xf32>
    "tpu.trace_start"() <{level = 10 : i32, message = "bqk,bkd->bqd"}> : () -> ()
    %cst_38 = arith.constant dense<0.000000e+00> : vector<2x16x8xf32>
    %99 = tpu.matmul %97, %98, %cst_38 {dimension_numbers = #tpu.dot_dimension_numbers<[2], [1], [1], [2], [0, 0, 0, 1, 1, 2], [0], [0]>} : vector<2x16x16xf32>, vector<2x16x8xf32>, vector<2x16x8xf32> -> vector<2x16x8xf32>
    "tpu.trace_stop"() : () -> ()
    %100 = vector.extract_strided_slice %29 {offsets = [0, 0, 32], sizes = [2, 16, 8], strides = [1, 1, 1]} : vector<2x16x64xf32> to vector<2x16x8xf32>
    %101 = vector.extract_strided_slice %30 {offsets = [0, 0, 32], sizes = [2, 16, 8], strides = [1, 1, 1]} : vector<2x16x64xf32> to vector<2x16x8xf32>
    "tpu.trace_start"() <{level = 10 : i32, message = "bqd,bkd->bqk"}> : () -> ()
    %cst_39 = arith.constant dense<0.000000e+00> : vector<2x16x16xf32>
    %102 = tpu.matmul %100, %101, %cst_39 {dimension_numbers = #tpu.dot_dimension_numbers<[2], [2], [1], [1], [0, 0, 0, 1, 1, 1], [0], [0]>} : vector<2x16x8xf32>, vector<2x16x8xf32>, vector<2x16x16xf32> -> vector<2x16x16xf32>
    "tpu.trace_stop"() : () -> ()
    %103 = vector.broadcast %5 : vector<1x16x16xf32> to vector<2x16x16xf32>
    %104 = arith.addf %102, %103 : vector<2x16x16xf32>
    %cst_40 = arith.constant dense<0xFF800000> : vector<2x16xf32>
    %105 = vector.multi_reduction <maximumf>, %104, %cst_40 [2] : vector<2x16x16xf32> to vector<2x16xf32>
    %106 = vector.shape_cast %105 : vector<2x16xf32> to vector<2x16x1xf32>
    %107 = vector.broadcast %106 : vector<2x16x1xf32> to vector<2x16x16xf32>
    %108 = arith.subf %104, %107 : vector<2x16x16xf32>
    %109 = math.exp %108 : vector<2x16x16xf32>
    %cst_41 = arith.constant dense<0.000000e+00> : vector<2x16xf32>
    %110 = vector.multi_reduction <add>, %109, %cst_41 [2] : vector<2x16x16xf32> to vector<2x16xf32>
    %111 = vector.shape_cast %110 : vector<2x16xf32> to vector<2x16x1xf32>
    %112 = tpu.reciprocal %111 {approx = true} : vector<2x16x1xf32> -> vector<2x16x1xf32>
    %113 = vector.broadcast %112 : vector<2x16x1xf32> to vector<2x16x16xf32>
    %114 = arith.mulf %109, %113 : vector<2x16x16xf32>
    %115 = vector.extract_strided_slice %31 {offsets = [0, 0, 32], sizes = [2, 16, 8], strides = [1, 1, 1]} : vector<2x16x64xf32> to vector<2x16x8xf32>
    "tpu.trace_start"() <{level = 10 : i32, message = "bqk,bkd->bqd"}> : () -> ()
    %cst_42 = arith.constant dense<0.000000e+00> : vector<2x16x8xf32>
    %116 = tpu.matmul %114, %115, %cst_42 {dimension_numbers = #tpu.dot_dimension_numbers<[2], [1], [1], [2], [0, 0, 0, 1, 1, 2], [0], [0]>} : vector<2x16x16xf32>, vector<2x16x8xf32>, vector<2x16x8xf32> -> vector<2x16x8xf32>
    "tpu.trace_stop"() : () -> ()
    %117 = vector.extract_strided_slice %29 {offsets = [0, 0, 40], sizes = [2, 16, 8], strides = [1, 1, 1]} : vector<2x16x64xf32> to vector<2x16x8xf32>
    %118 = vector.extract_strided_slice %30 {offsets = [0, 0, 40], sizes = [2, 16, 8], strides = [1, 1, 1]} : vector<2x16x64xf32> to vector<2x16x8xf32>
    "tpu.trace_start"() <{level = 10 : i32, message = "bqd,bkd->bqk"}> : () -> ()
    %cst_43 = arith.constant dense<0.000000e+00> : vector<2x16x16xf32>
    %119 = tpu.matmul %117, %118, %cst_43 {dimension_numbers = #tpu.dot_dimension_numbers<[2], [2], [1], [1], [0, 0, 0, 1, 1, 1], [0], [0]>} : vector<2x16x8xf32>, vector<2x16x8xf32>, vector<2x16x16xf32> -> vector<2x16x16xf32>
    "tpu.trace_stop"() : () -> ()
    %120 = vector.broadcast %5 : vector<1x16x16xf32> to vector<2x16x16xf32>
    %121 = arith.addf %119, %120 : vector<2x16x16xf32>
    %cst_44 = arith.constant dense<0xFF800000> : vector<2x16xf32>
    %122 = vector.multi_reduction <maximumf>, %121, %cst_44 [2] : vector<2x16x16xf32> to vector<2x16xf32>
    %123 = vector.shape_cast %122 : vector<2x16xf32> to vector<2x16x1xf32>
    %124 = vector.broadcast %123 : vector<2x16x1xf32> to vector<2x16x16xf32>
    %125 = arith.subf %121, %124 : vector<2x16x16xf32>
    %126 = math.exp %125 : vector<2x16x16xf32>
    %cst_45 = arith.constant dense<0.000000e+00> : vector<2x16xf32>
    %127 = vector.multi_reduction <add>, %126, %cst_45 [2] : vector<2x16x16xf32> to vector<2x16xf32>
    %128 = vector.shape_cast %127 : vector<2x16xf32> to vector<2x16x1xf32>
    %129 = tpu.reciprocal %128 {approx = true} : vector<2x16x1xf32> -> vector<2x16x1xf32>
    %130 = vector.broadcast %129 : vector<2x16x1xf32> to vector<2x16x16xf32>
    %131 = arith.mulf %126, %130 : vector<2x16x16xf32>
    %132 = vector.extract_strided_slice %31 {offsets = [0, 0, 40], sizes = [2, 16, 8], strides = [1, 1, 1]} : vector<2x16x64xf32> to vector<2x16x8xf32>
    "tpu.trace_start"() <{level = 10 : i32, message = "bqk,bkd->bqd"}> : () -> ()
    %cst_46 = arith.constant dense<0.000000e+00> : vector<2x16x8xf32>
    %133 = tpu.matmul %131, %132, %cst_46 {dimension_numbers = #tpu.dot_dimension_numbers<[2], [1], [1], [2], [0, 0, 0, 1, 1, 2], [0], [0]>} : vector<2x16x16xf32>, vector<2x16x8xf32>, vector<2x16x8xf32> -> vector<2x16x8xf32>
    "tpu.trace_stop"() : () -> ()
    %134 = vector.extract_strided_slice %29 {offsets = [0, 0, 48], sizes = [2, 16, 8], strides = [1, 1, 1]} : vector<2x16x64xf32> to vector<2x16x8xf32>
    %135 = vector.extract_strided_slice %30 {offsets = [0, 0, 48], sizes = [2, 16, 8], strides = [1, 1, 1]} : vector<2x16x64xf32> to vector<2x16x8xf32>
    "tpu.trace_start"() <{level = 10 : i32, message = "bqd,bkd->bqk"}> : () -> ()
    %cst_47 = arith.constant dense<0.000000e+00> : vector<2x16x16xf32>
    %136 = tpu.matmul %134, %135, %cst_47 {dimension_numbers = #tpu.dot_dimension_numbers<[2], [2], [1], [1], [0, 0, 0, 1, 1, 1], [0], [0]>} : vector<2x16x8xf32>, vector<2x16x8xf32>, vector<2x16x16xf32> -> vector<2x16x16xf32>
    "tpu.trace_stop"() : () -> ()
    %137 = vector.broadcast %5 : vector<1x16x16xf32> to vector<2x16x16xf32>
    %138 = arith.addf %136, %137 : vector<2x16x16xf32>
    %cst_48 = arith.constant dense<0xFF800000> : vector<2x16xf32>
    %139 = vector.multi_reduction <maximumf>, %138, %cst_48 [2] : vector<2x16x16xf32> to vector<2x16xf32>
    %140 = vector.shape_cast %139 : vector<2x16xf32> to vector<2x16x1xf32>
    %141 = vector.broadcast %140 : vector<2x16x1xf32> to vector<2x16x16xf32>
    %142 = arith.subf %138, %141 : vector<2x16x16xf32>
    %143 = math.exp %142 : vector<2x16x16xf32>
    %cst_49 = arith.constant dense<0.000000e+00> : vector<2x16xf32>
    %144 = vector.multi_reduction <add>, %143, %cst_49 [2] : vector<2x16x16xf32> to vector<2x16xf32>
    %145 = vector.shape_cast %144 : vector<2x16xf32> to vector<2x16x1xf32>
    %146 = tpu.reciprocal %145 {approx = true} : vector<2x16x1xf32> -> vector<2x16x1xf32>
    %147 = vector.broadcast %146 : vector<2x16x1xf32> to vector<2x16x16xf32>
    %148 = arith.mulf %143, %147 : vector<2x16x16xf32>
    %149 = vector.extract_strided_slice %31 {offsets = [0, 0, 48], sizes = [2, 16, 8], strides = [1, 1, 1]} : vector<2x16x64xf32> to vector<2x16x8xf32>
    "tpu.trace_start"() <{level = 10 : i32, message = "bqk,bkd->bqd"}> : () -> ()
    %cst_50 = arith.constant dense<0.000000e+00> : vector<2x16x8xf32>
    %150 = tpu.matmul %148, %149, %cst_50 {dimension_numbers = #tpu.dot_dimension_numbers<[2], [1], [1], [2], [0, 0, 0, 1, 1, 2], [0], [0]>} : vector<2x16x16xf32>, vector<2x16x8xf32>, vector<2x16x8xf32> -> vector<2x16x8xf32>
    "tpu.trace_stop"() : () -> ()
    %151 = vector.extract_strided_slice %29 {offsets = [0, 0, 56], sizes = [2, 16, 8], strides = [1, 1, 1]} : vector<2x16x64xf32> to vector<2x16x8xf32>
    %152 = vector.extract_strided_slice %30 {offsets = [0, 0, 56], sizes = [2, 16, 8], strides = [1, 1, 1]} : vector<2x16x64xf32> to vector<2x16x8xf32>
    "tpu.trace_start"() <{level = 10 : i32, message = "bqd,bkd->bqk"}> : () -> ()
    %cst_51 = arith.constant dense<0.000000e+00> : vector<2x16x16xf32>
    %153 = tpu.matmul %151, %152, %cst_51 {dimension_numbers = #tpu.dot_dimension_numbers<[2], [2], [1], [1], [0, 0, 0, 1, 1, 1], [0], [0]>} : vector<2x16x8xf32>, vector<2x16x8xf32>, vector<2x16x16xf32> -> vector<2x16x16xf32>
    "tpu.trace_stop"() : () -> ()
    %154 = vector.broadcast %5 : vector<1x16x16xf32> to vector<2x16x16xf32>
    %155 = arith.addf %153, %154 : vector<2x16x16xf32>
    %cst_52 = arith.constant dense<0xFF800000> : vector<2x16xf32>
    %156 = vector.multi_reduction <maximumf>, %155, %cst_52 [2] : vector<2x16x16xf32> to vector<2x16xf32>
    %157 = vector.shape_cast %156 : vector<2x16xf32> to vector<2x16x1xf32>
    %158 = vector.broadcast %157 : vector<2x16x1xf32> to vector<2x16x16xf32>
    %159 = arith.subf %155, %158 : vector<2x16x16xf32>
    %160 = math.exp %159 : vector<2x16x16xf32>
    %cst_53 = arith.constant dense<0.000000e+00> : vector<2x16xf32>
    %161 = vector.multi_reduction <add>, %160, %cst_53 [2] : vector<2x16x16xf32> to vector<2x16xf32>
    %162 = vector.shape_cast %161 : vector<2x16xf32> to vector<2x16x1xf32>
    %163 = tpu.reciprocal %162 {approx = true} : vector<2x16x1xf32> -> vector<2x16x1xf32>
    %164 = vector.broadcast %163 : vector<2x16x1xf32> to vector<2x16x16xf32>
    %165 = arith.mulf %160, %164 : vector<2x16x16xf32>
    %166 = vector.extract_strided_slice %31 {offsets = [0, 0, 56], sizes = [2, 16, 8], strides = [1, 1, 1]} : vector<2x16x64xf32> to vector<2x16x8xf32>
    "tpu.trace_start"() <{level = 10 : i32, message = "bqk,bkd->bqd"}> : () -> ()
    %cst_54 = arith.constant dense<0.000000e+00> : vector<2x16x8xf32>
    %167 = tpu.matmul %165, %166, %cst_54 {dimension_numbers = #tpu.dot_dimension_numbers<[2], [1], [1], [2], [0, 0, 0, 1, 1, 2], [0], [0]>} : vector<2x16x16xf32>, vector<2x16x8xf32>, vector<2x16x8xf32> -> vector<2x16x8xf32>
    "tpu.trace_stop"() : () -> ()
    %168 = tpu.concatenate %48, %65, %82, %99, %116, %133, %150, %167 in 2 : vector<2x16x8xf32>, vector<2x16x8xf32>, vector<2x16x8xf32>, vector<2x16x8xf32>, vector<2x16x8xf32>, vector<2x16x8xf32>, vector<2x16x8xf32>, vector<2x16x8xf32> -> vector<2x16x64xf32>
    %169 = vector.shape_cast %168 : vector<2x16x64xf32> to vector<32x64xf32>
    %cst_55 = arith.constant dense<0.000000e+00> : vector<32x64xf32>
    %170 = tpu.matmul %169, %14, %cst_55 {dimension_numbers = #tpu.dot_dimension_numbers<[1], [0], [0], [1], [0, 0, 1, 1], [], []>} : vector<32x64xf32>, vector<64x64xf32>, vector<32x64xf32> -> vector<32x64xf32>
    %171 = vector.broadcast %18 : vector<1x64xf32> to vector<32x64xf32>
    %172 = arith.addf %170, %171 : vector<32x64xf32>
    %173 = vector.shape_cast %172 : vector<32x64xf32> to vector<2x16x64xf32>
    %174 = arith.addf %6, %173 : vector<2x16x64xf32>
    %175 = vector.extract_strided_slice %174 {offsets = [0, 0, 0], sizes = [2, 8, 64], strides = [1, 1, 1]} : vector<2x16x64xf32> to vector<2x8x64xf32>
    %c0_56 = arith.constant 0 : index
    %c0_57 = arith.constant 0 : index
    %c0_58 = arith.constant 0 : index
    %176 = vector.load %arg2[%c0_56, %c0_57, %c0_58] : memref<2x8x64xf32, #tpu.memory_space<vmem>>, vector<2x8x64xf32>
    %c0_59 = arith.constant 0 : index
    %c0_60 = arith.constant 0 : index
    %c0_61 = arith.constant 0 : index
    %177 = vector.load %arg1[%c0_59, %c0_60, %c0_61] : memref<2x16x64xf32, #tpu.memory_space<vmem>>, vector<2x16x64xf32>
    %178 = vector.shape_cast %177 : vector<2x16x64xf32> to vector<32x64xf32>
    %c4 = arith.constant 4 : index
    %c0_62 = arith.constant 0 : index
    %c0_63 = arith.constant 0 : index
    %179 = vector.load %arg3[%c4, %c0_62, %c0_63] : memref<8x64x64xf32, #tpu.memory_space<vmem>>, vector<1x64x64xf32>
    %180 = vector.shape_cast %179 : vector<1x64x64xf32> to vector<64x64xf32>
    %c5 = arith.constant 5 : index
    %c0_64 = arith.constant 0 : index
    %c0_65 = arith.constant 0 : index
    %181 = vector.load %arg3[%c5, %c0_64, %c0_65] : memref<8x64x64xf32, #tpu.memory_space<vmem>>, vector<1x64x64xf32>
    %182 = vector.shape_cast %181 : vector<1x64x64xf32> to vector<64x64xf32>
    %c6 = arith.constant 6 : index
    %c0_66 = arith.constant 0 : index
    %c0_67 = arith.constant 0 : index
    %183 = vector.load %arg3[%c6, %c0_66, %c0_67] : memref<8x64x64xf32, #tpu.memory_space<vmem>>, vector<1x64x64xf32>
    %184 = vector.shape_cast %183 : vector<1x64x64xf32> to vector<64x64xf32>
    %c7 = arith.constant 7 : index
    %c0_68 = arith.constant 0 : index
    %c0_69 = arith.constant 0 : index
    %185 = vector.load %arg3[%c7, %c0_68, %c0_69] : memref<8x64x64xf32, #tpu.memory_space<vmem>>, vector<1x64x64xf32>
    %186 = vector.shape_cast %185 : vector<1x64x64xf32> to vector<64x64xf32>
    %c6_70 = arith.constant 6 : index
    %c0_71 = arith.constant 0 : index
    %187 = vector.load %arg4[%c6_70, %c0_71] : memref<12x64xf32, #tpu.memory_space<vmem>>, vector<1x64xf32>
    %c7_72 = arith.constant 7 : index
    %c0_73 = arith.constant 0 : index
    %188 = vector.load %arg4[%c7_72, %c0_73] : memref<12x64xf32, #tpu.memory_space<vmem>>, vector<1x64xf32>
    %c8 = arith.constant 8 : index
    %c0_74 = arith.constant 0 : index
    %189 = vector.load %arg4[%c8, %c0_74] : memref<12x64xf32, #tpu.memory_space<vmem>>, vector<1x64xf32>
    %c9 = arith.constant 9 : index
    %c0_75 = arith.constant 0 : index
    %190 = vector.load %arg4[%c9, %c0_75] : memref<12x64xf32, #tpu.memory_space<vmem>>, vector<1x64xf32>
    %c10 = arith.constant 10 : index
    %c0_76 = arith.constant 0 : index
    %191 = vector.load %arg4[%c10, %c0_76] : memref<12x64xf32, #tpu.memory_space<vmem>>, vector<1x64xf32>
    %c11 = arith.constant 11 : index
    %c0_77 = arith.constant 0 : index
    %192 = vector.load %arg4[%c11, %c0_77] : memref<12x64xf32, #tpu.memory_space<vmem>>, vector<1x64xf32>
    %193 = arith.addf %175, %176 : vector<2x8x64xf32>
    %194 = vector.shape_cast %193 : vector<2x8x64xf32> to vector<16x64xf32>
    %cst_78 = arith.constant dense<0.000000e+00> : vector<16x64xf32>
    %195 = tpu.matmul %194, %180, %cst_78 {dimension_numbers = #tpu.dot_dimension_numbers<[1], [0], [0], [1], [0, 0, 1, 1], [], []>} : vector<16x64xf32>, vector<64x64xf32>, vector<16x64xf32> -> vector<16x64xf32>
    %196 = vector.broadcast %187 : vector<1x64xf32> to vector<16x64xf32>
    %197 = arith.addf %195, %196 : vector<16x64xf32>
    %cst_79 = arith.constant dense<0.000000e+00> : vector<32x64xf32>
    %198 = tpu.matmul %178, %182, %cst_79 {dimension_numbers = #tpu.dot_dimension_numbers<[1], [0], [0], [1], [0, 0, 1, 1], [], []>} : vector<32x64xf32>, vector<64x64xf32>, vector<32x64xf32> -> vector<32x64xf32>
    %199 = vector.broadcast %188 : vector<1x64xf32> to vector<32x64xf32>
    %200 = arith.addf %198, %199 : vector<32x64xf32>
    %cst_80 = arith.constant dense<0.000000e+00> : vector<32x64xf32>
    %201 = tpu.matmul %178, %184, %cst_80 {dimension_numbers = #tpu.dot_dimension_numbers<[1], [0], [0], [1], [0, 0, 1, 1], [], []>} : vector<32x64xf32>, vector<64x64xf32>, vector<32x64xf32> -> vector<32x64xf32>
    %202 = vector.broadcast %189 : vector<1x64xf32> to vector<32x64xf32>
    %203 = arith.addf %201, %202 : vector<32x64xf32>
    %204 = vector.shape_cast %197 : vector<16x64xf32> to vector<2x8x64xf32>
    %205 = vector.shape_cast %200 : vector<32x64xf32> to vector<2x16x64xf32>
    %206 = vector.shape_cast %203 : vector<32x64xf32> to vector<2x16x64xf32>
    %207 = vector.extract_strided_slice %204 {offsets = [0, 0, 0], sizes = [2, 8, 8], strides = [1, 1, 1]} : vector<2x8x64xf32> to vector<2x8x8xf32>
    %208 = vector.extract_strided_slice %205 {offsets = [0, 0, 0], sizes = [2, 16, 8], strides = [1, 1, 1]} : vector<2x16x64xf32> to vector<2x16x8xf32>
    "tpu.trace_start"() <{level = 10 : i32, message = "bqd,bkd->bqk"}> : () -> ()
    %cst_81 = arith.constant dense<0.000000e+00> : vector<2x8x16xf32>
    %209 = tpu.matmul %207, %208, %cst_81 {dimension_numbers = #tpu.dot_dimension_numbers<[2], [2], [1], [1], [0, 0, 0, 1, 1, 1], [0], [0]>} : vector<2x8x8xf32>, vector<2x16x8xf32>, vector<2x8x16xf32> -> vector<2x8x16xf32>
    "tpu.trace_stop"() : () -> ()
    %cst_82 = arith.constant dense<0xFF800000> : vector<2x8xf32>
    %210 = vector.multi_reduction <maximumf>, %209, %cst_82 [2] : vector<2x8x16xf32> to vector<2x8xf32>
    %211 = vector.shape_cast %210 : vector<2x8xf32> to vector<2x8x1xf32>
    %212 = vector.broadcast %211 : vector<2x8x1xf32> to vector<2x8x16xf32>
    %213 = arith.subf %209, %212 : vector<2x8x16xf32>
    %214 = math.exp %213 : vector<2x8x16xf32>
    %cst_83 = arith.constant dense<0.000000e+00> : vector<2x8xf32>
    %215 = vector.multi_reduction <add>, %214, %cst_83 [2] : vector<2x8x16xf32> to vector<2x8xf32>
    %216 = vector.shape_cast %215 : vector<2x8xf32> to vector<2x8x1xf32>
    %217 = tpu.reciprocal %216 {approx = true} : vector<2x8x1xf32> -> vector<2x8x1xf32>
    %218 = vector.broadcast %217 : vector<2x8x1xf32> to vector<2x8x16xf32>
    %219 = arith.mulf %214, %218 : vector<2x8x16xf32>
    %220 = vector.extract_strided_slice %206 {offsets = [0, 0, 0], sizes = [2, 16, 8], strides = [1, 1, 1]} : vector<2x16x64xf32> to vector<2x16x8xf32>
    "tpu.trace_start"() <{level = 10 : i32, message = "bqk,bkd->bqd"}> : () -> ()
    %cst_84 = arith.constant dense<0.000000e+00> : vector<2x8x8xf32>
    %221 = tpu.matmul %219, %220, %cst_84 {dimension_numbers = #tpu.dot_dimension_numbers<[2], [1], [1], [2], [0, 0, 0, 1, 1, 2], [0], [0]>} : vector<2x8x16xf32>, vector<2x16x8xf32>, vector<2x8x8xf32> -> vector<2x8x8xf32>
    "tpu.trace_stop"() : () -> ()
    %222 = vector.extract_strided_slice %204 {offsets = [0, 0, 8], sizes = [2, 8, 8], strides = [1, 1, 1]} : vector<2x8x64xf32> to vector<2x8x8xf32>
    %223 = vector.extract_strided_slice %205 {offsets = [0, 0, 8], sizes = [2, 16, 8], strides = [1, 1, 1]} : vector<2x16x64xf32> to vector<2x16x8xf32>
    "tpu.trace_start"() <{level = 10 : i32, message = "bqd,bkd->bqk"}> : () -> ()
    %cst_85 = arith.constant dense<0.000000e+00> : vector<2x8x16xf32>
    %224 = tpu.matmul %222, %223, %cst_85 {dimension_numbers = #tpu.dot_dimension_numbers<[2], [2], [1], [1], [0, 0, 0, 1, 1, 1], [0], [0]>} : vector<2x8x8xf32>, vector<2x16x8xf32>, vector<2x8x16xf32> -> vector<2x8x16xf32>
    "tpu.trace_stop"() : () -> ()
    %cst_86 = arith.constant dense<0xFF800000> : vector<2x8xf32>
    %225 = vector.multi_reduction <maximumf>, %224, %cst_86 [2] : vector<2x8x16xf32> to vector<2x8xf32>
    %226 = vector.shape_cast %225 : vector<2x8xf32> to vector<2x8x1xf32>
    %227 = vector.broadcast %226 : vector<2x8x1xf32> to vector<2x8x16xf32>
    %228 = arith.subf %224, %227 : vector<2x8x16xf32>
    %229 = math.exp %228 : vector<2x8x16xf32>
    %cst_87 = arith.constant dense<0.000000e+00> : vector<2x8xf32>
    %230 = vector.multi_reduction <add>, %229, %cst_87 [2] : vector<2x8x16xf32> to vector<2x8xf32>
    %231 = vector.shape_cast %230 : vector<2x8xf32> to vector<2x8x1xf32>
    %232 = tpu.reciprocal %231 {approx = true} : vector<2x8x1xf32> -> vector<2x8x1xf32>
    %233 = vector.broadcast %232 : vector<2x8x1xf32> to vector<2x8x16xf32>
    %234 = arith.mulf %229, %233 : vector<2x8x16xf32>
    %235 = arith.addf %219, %234 : vector<2x8x16xf32>
    %236 = vector.extract_strided_slice %206 {offsets = [0, 0, 8], sizes = [2, 16, 8], strides = [1, 1, 1]} : vector<2x16x64xf32> to vector<2x16x8xf32>
    "tpu.trace_start"() <{level = 10 : i32, message = "bqk,bkd->bqd"}> : () -> ()
    %cst_88 = arith.constant dense<0.000000e+00> : vector<2x8x8xf32>
    %237 = tpu.matmul %234, %236, %cst_88 {dimension_numbers = #tpu.dot_dimension_numbers<[2], [1], [1], [2], [0, 0, 0, 1, 1, 2], [0], [0]>} : vector<2x8x16xf32>, vector<2x16x8xf32>, vector<2x8x8xf32> -> vector<2x8x8xf32>
    "tpu.trace_stop"() : () -> ()
    %238 = vector.extract_strided_slice %204 {offsets = [0, 0, 16], sizes = [2, 8, 8], strides = [1, 1, 1]} : vector<2x8x64xf32> to vector<2x8x8xf32>
    %239 = vector.extract_strided_slice %205 {offsets = [0, 0, 16], sizes = [2, 16, 8], strides = [1, 1, 1]} : vector<2x16x64xf32> to vector<2x16x8xf32>
    "tpu.trace_start"() <{level = 10 : i32, message = "bqd,bkd->bqk"}> : () -> ()
    %cst_89 = arith.constant dense<0.000000e+00> : vector<2x8x16xf32>
    %240 = tpu.matmul %238, %239, %cst_89 {dimension_numbers = #tpu.dot_dimension_numbers<[2], [2], [1], [1], [0, 0, 0, 1, 1, 1], [0], [0]>} : vector<2x8x8xf32>, vector<2x16x8xf32>, vector<2x8x16xf32> -> vector<2x8x16xf32>
    "tpu.trace_stop"() : () -> ()
    %cst_90 = arith.constant dense<0xFF800000> : vector<2x8xf32>
    %241 = vector.multi_reduction <maximumf>, %240, %cst_90 [2] : vector<2x8x16xf32> to vector<2x8xf32>
    %242 = vector.shape_cast %241 : vector<2x8xf32> to vector<2x8x1xf32>
    %243 = vector.broadcast %242 : vector<2x8x1xf32> to vector<2x8x16xf32>
    %244 = arith.subf %240, %243 : vector<2x8x16xf32>
    %245 = math.exp %244 : vector<2x8x16xf32>
    %cst_91 = arith.constant dense<0.000000e+00> : vector<2x8xf32>
    %246 = vector.multi_reduction <add>, %245, %cst_91 [2] : vector<2x8x16xf32> to vector<2x8xf32>
    %247 = vector.shape_cast %246 : vector<2x8xf32> to vector<2x8x1xf32>
    %248 = tpu.reciprocal %247 {approx = true} : vector<2x8x1xf32> -> vector<2x8x1xf32>
    %249 = vector.broadcast %248 : vector<2x8x1xf32> to vector<2x8x16xf32>
    %250 = arith.mulf %245, %249 : vector<2x8x16xf32>
    %251 = arith.addf %235, %250 : vector<2x8x16xf32>
    %252 = vector.extract_strided_slice %206 {offsets = [0, 0, 16], sizes = [2, 16, 8], strides = [1, 1, 1]} : vector<2x16x64xf32> to vector<2x16x8xf32>
    "tpu.trace_start"() <{level = 10 : i32, message = "bqk,bkd->bqd"}> : () -> ()
    %cst_92 = arith.constant dense<0.000000e+00> : vector<2x8x8xf32>
    %253 = tpu.matmul %250, %252, %cst_92 {dimension_numbers = #tpu.dot_dimension_numbers<[2], [1], [1], [2], [0, 0, 0, 1, 1, 2], [0], [0]>} : vector<2x8x16xf32>, vector<2x16x8xf32>, vector<2x8x8xf32> -> vector<2x8x8xf32>
    "tpu.trace_stop"() : () -> ()
    %254 = vector.extract_strided_slice %204 {offsets = [0, 0, 24], sizes = [2, 8, 8], strides = [1, 1, 1]} : vector<2x8x64xf32> to vector<2x8x8xf32>
    %255 = vector.extract_strided_slice %205 {offsets = [0, 0, 24], sizes = [2, 16, 8], strides = [1, 1, 1]} : vector<2x16x64xf32> to vector<2x16x8xf32>
    "tpu.trace_start"() <{level = 10 : i32, message = "bqd,bkd->bqk"}> : () -> ()
    %cst_93 = arith.constant dense<0.000000e+00> : vector<2x8x16xf32>
    %256 = tpu.matmul %254, %255, %cst_93 {dimension_numbers = #tpu.dot_dimension_numbers<[2], [2], [1], [1], [0, 0, 0, 1, 1, 1], [0], [0]>} : vector<2x8x8xf32>, vector<2x16x8xf32>, vector<2x8x16xf32> -> vector<2x8x16xf32>
    "tpu.trace_stop"() : () -> ()
    %cst_94 = arith.constant dense<0xFF800000> : vector<2x8xf32>
    %257 = vector.multi_reduction <maximumf>, %256, %cst_94 [2] : vector<2x8x16xf32> to vector<2x8xf32>
    %258 = vector.shape_cast %257 : vector<2x8xf32> to vector<2x8x1xf32>
    %259 = vector.broadcast %258 : vector<2x8x1xf32> to vector<2x8x16xf32>
    %260 = arith.subf %256, %259 : vector<2x8x16xf32>
    %261 = math.exp %260 : vector<2x8x16xf32>
    %cst_95 = arith.constant dense<0.000000e+00> : vector<2x8xf32>
    %262 = vector.multi_reduction <add>, %261, %cst_95 [2] : vector<2x8x16xf32> to vector<2x8xf32>
    %263 = vector.shape_cast %262 : vector<2x8xf32> to vector<2x8x1xf32>
    %264 = tpu.reciprocal %263 {approx = true} : vector<2x8x1xf32> -> vector<2x8x1xf32>
    %265 = vector.broadcast %264 : vector<2x8x1xf32> to vector<2x8x16xf32>
    %266 = arith.mulf %261, %265 : vector<2x8x16xf32>
    %267 = arith.addf %251, %266 : vector<2x8x16xf32>
    %268 = vector.extract_strided_slice %206 {offsets = [0, 0, 24], sizes = [2, 16, 8], strides = [1, 1, 1]} : vector<2x16x64xf32> to vector<2x16x8xf32>
    "tpu.trace_start"() <{level = 10 : i32, message = "bqk,bkd->bqd"}> : () -> ()
    %cst_96 = arith.constant dense<0.000000e+00> : vector<2x8x8xf32>
    %269 = tpu.matmul %266, %268, %cst_96 {dimension_numbers = #tpu.dot_dimension_numbers<[2], [1], [1], [2], [0, 0, 0, 1, 1, 2], [0], [0]>} : vector<2x8x16xf32>, vector<2x16x8xf32>, vector<2x8x8xf32> -> vector<2x8x8xf32>
    "tpu.trace_stop"() : () -> ()
    %270 = vector.extract_strided_slice %204 {offsets = [0, 0, 32], sizes = [2, 8, 8], strides = [1, 1, 1]} : vector<2x8x64xf32> to vector<2x8x8xf32>
    %271 = vector.extract_strided_slice %205 {offsets = [0, 0, 32], sizes = [2, 16, 8], strides = [1, 1, 1]} : vector<2x16x64xf32> to vector<2x16x8xf32>
    "tpu.trace_start"() <{level = 10 : i32, message = "bqd,bkd->bqk"}> : () -> ()
    %cst_97 = arith.constant dense<0.000000e+00> : vector<2x8x16xf32>
    %272 = tpu.matmul %270, %271, %cst_97 {dimension_numbers = #tpu.dot_dimension_numbers<[2], [2], [1], [1], [0, 0, 0, 1, 1, 1], [0], [0]>} : vector<2x8x8xf32>, vector<2x16x8xf32>, vector<2x8x16xf32> -> vector<2x8x16xf32>
    "tpu.trace_stop"() : () -> ()
    %cst_98 = arith.constant dense<0xFF800000> : vector<2x8xf32>
    %273 = vector.multi_reduction <maximumf>, %272, %cst_98 [2] : vector<2x8x16xf32> to vector<2x8xf32>
    %274 = vector.shape_cast %273 : vector<2x8xf32> to vector<2x8x1xf32>
    %275 = vector.broadcast %274 : vector<2x8x1xf32> to vector<2x8x16xf32>
    %276 = arith.subf %272, %275 : vector<2x8x16xf32>
    %277 = math.exp %276 : vector<2x8x16xf32>
    %cst_99 = arith.constant dense<0.000000e+00> : vector<2x8xf32>
    %278 = vector.multi_reduction <add>, %277, %cst_99 [2] : vector<2x8x16xf32> to vector<2x8xf32>
    %279 = vector.shape_cast %278 : vector<2x8xf32> to vector<2x8x1xf32>
    %280 = tpu.reciprocal %279 {approx = true} : vector<2x8x1xf32> -> vector<2x8x1xf32>
    %281 = vector.broadcast %280 : vector<2x8x1xf32> to vector<2x8x16xf32>
    %282 = arith.mulf %277, %281 : vector<2x8x16xf32>
    %283 = arith.addf %267, %282 : vector<2x8x16xf32>
    %284 = vector.extract_strided_slice %206 {offsets = [0, 0, 32], sizes = [2, 16, 8], strides = [1, 1, 1]} : vector<2x16x64xf32> to vector<2x16x8xf32>
    "tpu.trace_start"() <{level = 10 : i32, message = "bqk,bkd->bqd"}> : () -> ()
    %cst_100 = arith.constant dense<0.000000e+00> : vector<2x8x8xf32>
    %285 = tpu.matmul %282, %284, %cst_100 {dimension_numbers = #tpu.dot_dimension_numbers<[2], [1], [1], [2], [0, 0, 0, 1, 1, 2], [0], [0]>} : vector<2x8x16xf32>, vector<2x16x8xf32>, vector<2x8x8xf32> -> vector<2x8x8xf32>
    "tpu.trace_stop"() : () -> ()
    %286 = vector.extract_strided_slice %204 {offsets = [0, 0, 40], sizes = [2, 8, 8], strides = [1, 1, 1]} : vector<2x8x64xf32> to vector<2x8x8xf32>
    %287 = vector.extract_strided_slice %205 {offsets = [0, 0, 40], sizes = [2, 16, 8], strides = [1, 1, 1]} : vector<2x16x64xf32> to vector<2x16x8xf32>
    "tpu.trace_start"() <{level = 10 : i32, message = "bqd,bkd->bqk"}> : () -> ()
    %cst_101 = arith.constant dense<0.000000e+00> : vector<2x8x16xf32>
    %288 = tpu.matmul %286, %287, %cst_101 {dimension_numbers = #tpu.dot_dimension_numbers<[2], [2], [1], [1], [0, 0, 0, 1, 1, 1], [0], [0]>} : vector<2x8x8xf32>, vector<2x16x8xf32>, vector<2x8x16xf32> -> vector<2x8x16xf32>
    "tpu.trace_stop"() : () -> ()
    %cst_102 = arith.constant dense<0xFF800000> : vector<2x8xf32>
    %289 = vector.multi_reduction <maximumf>, %288, %cst_102 [2] : vector<2x8x16xf32> to vector<2x8xf32>
    %290 = vector.shape_cast %289 : vector<2x8xf32> to vector<2x8x1xf32>
    %291 = vector.broadcast %290 : vector<2x8x1xf32> to vector<2x8x16xf32>
    %292 = arith.subf %288, %291 : vector<2x8x16xf32>
    %293 = math.exp %292 : vector<2x8x16xf32>
    %cst_103 = arith.constant dense<0.000000e+00> : vector<2x8xf32>
    %294 = vector.multi_reduction <add>, %293, %cst_103 [2] : vector<2x8x16xf32> to vector<2x8xf32>
    %295 = vector.shape_cast %294 : vector<2x8xf32> to vector<2x8x1xf32>
    %296 = tpu.reciprocal %295 {approx = true} : vector<2x8x1xf32> -> vector<2x8x1xf32>
    %297 = vector.broadcast %296 : vector<2x8x1xf32> to vector<2x8x16xf32>
    %298 = arith.mulf %293, %297 : vector<2x8x16xf32>
    %299 = arith.addf %283, %298 : vector<2x8x16xf32>
    %300 = vector.extract_strided_slice %206 {offsets = [0, 0, 40], sizes = [2, 16, 8], strides = [1, 1, 1]} : vector<2x16x64xf32> to vector<2x16x8xf32>
    "tpu.trace_start"() <{level = 10 : i32, message = "bqk,bkd->bqd"}> : () -> ()
    %cst_104 = arith.constant dense<0.000000e+00> : vector<2x8x8xf32>
    %301 = tpu.matmul %298, %300, %cst_104 {dimension_numbers = #tpu.dot_dimension_numbers<[2], [1], [1], [2], [0, 0, 0, 1, 1, 2], [0], [0]>} : vector<2x8x16xf32>, vector<2x16x8xf32>, vector<2x8x8xf32> -> vector<2x8x8xf32>
    "tpu.trace_stop"() : () -> ()
    %302 = vector.extract_strided_slice %204 {offsets = [0, 0, 48], sizes = [2, 8, 8], strides = [1, 1, 1]} : vector<2x8x64xf32> to vector<2x8x8xf32>
    %303 = vector.extract_strided_slice %205 {offsets = [0, 0, 48], sizes = [2, 16, 8], strides = [1, 1, 1]} : vector<2x16x64xf32> to vector<2x16x8xf32>
    "tpu.trace_start"() <{level = 10 : i32, message = "bqd,bkd->bqk"}> : () -> ()
    %cst_105 = arith.constant dense<0.000000e+00> : vector<2x8x16xf32>
    %304 = tpu.matmul %302, %303, %cst_105 {dimension_numbers = #tpu.dot_dimension_numbers<[2], [2], [1], [1], [0, 0, 0, 1, 1, 1], [0], [0]>} : vector<2x8x8xf32>, vector<2x16x8xf32>, vector<2x8x16xf32> -> vector<2x8x16xf32>
    "tpu.trace_stop"() : () -> ()
    %cst_106 = arith.constant dense<0xFF800000> : vector<2x8xf32>
    %305 = vector.multi_reduction <maximumf>, %304, %cst_106 [2] : vector<2x8x16xf32> to vector<2x8xf32>
    %306 = vector.shape_cast %305 : vector<2x8xf32> to vector<2x8x1xf32>
    %307 = vector.broadcast %306 : vector<2x8x1xf32> to vector<2x8x16xf32>
    %308 = arith.subf %304, %307 : vector<2x8x16xf32>
    %309 = math.exp %308 : vector<2x8x16xf32>
    %cst_107 = arith.constant dense<0.000000e+00> : vector<2x8xf32>
    %310 = vector.multi_reduction <add>, %309, %cst_107 [2] : vector<2x8x16xf32> to vector<2x8xf32>
    %311 = vector.shape_cast %310 : vector<2x8xf32> to vector<2x8x1xf32>
    %312 = tpu.reciprocal %311 {approx = true} : vector<2x8x1xf32> -> vector<2x8x1xf32>
    %313 = vector.broadcast %312 : vector<2x8x1xf32> to vector<2x8x16xf32>
    %314 = arith.mulf %309, %313 : vector<2x8x16xf32>
    %315 = arith.addf %299, %314 : vector<2x8x16xf32>
    %316 = vector.extract_strided_slice %206 {offsets = [0, 0, 48], sizes = [2, 16, 8], strides = [1, 1, 1]} : vector<2x16x64xf32> to vector<2x16x8xf32>
    "tpu.trace_start"() <{level = 10 : i32, message = "bqk,bkd->bqd"}> : () -> ()
    %cst_108 = arith.constant dense<0.000000e+00> : vector<2x8x8xf32>
    %317 = tpu.matmul %314, %316, %cst_108 {dimension_numbers = #tpu.dot_dimension_numbers<[2], [1], [1], [2], [0, 0, 0, 1, 1, 2], [0], [0]>} : vector<2x8x16xf32>, vector<2x16x8xf32>, vector<2x8x8xf32> -> vector<2x8x8xf32>
    "tpu.trace_stop"() : () -> ()
    %318 = vector.extract_strided_slice %204 {offsets = [0, 0, 56], sizes = [2, 8, 8], strides = [1, 1, 1]} : vector<2x8x64xf32> to vector<2x8x8xf32>
    %319 = vector.extract_strided_slice %205 {offsets = [0, 0, 56], sizes = [2, 16, 8], strides = [1, 1, 1]} : vector<2x16x64xf32> to vector<2x16x8xf32>
    "tpu.trace_start"() <{level = 10 : i32, message = "bqd,bkd->bqk"}> : () -> ()
    %cst_109 = arith.constant dense<0.000000e+00> : vector<2x8x16xf32>
    %320 = tpu.matmul %318, %319, %cst_109 {dimension_numbers = #tpu.dot_dimension_numbers<[2], [2], [1], [1], [0, 0, 0, 1, 1, 1], [0], [0]>} : vector<2x8x8xf32>, vector<2x16x8xf32>, vector<2x8x16xf32> -> vector<2x8x16xf32>
    "tpu.trace_stop"() : () -> ()
    %cst_110 = arith.constant dense<0xFF800000> : vector<2x8xf32>
    %321 = vector.multi_reduction <maximumf>, %320, %cst_110 [2] : vector<2x8x16xf32> to vector<2x8xf32>
    %322 = vector.shape_cast %321 : vector<2x8xf32> to vector<2x8x1xf32>
    %323 = vector.broadcast %322 : vector<2x8x1xf32> to vector<2x8x16xf32>
    %324 = arith.subf %320, %323 : vector<2x8x16xf32>
    %325 = math.exp %324 : vector<2x8x16xf32>
    %cst_111 = arith.constant dense<0.000000e+00> : vector<2x8xf32>
    %326 = vector.multi_reduction <add>, %325, %cst_111 [2] : vector<2x8x16xf32> to vector<2x8xf32>
    %327 = vector.shape_cast %326 : vector<2x8xf32> to vector<2x8x1xf32>
    %328 = tpu.reciprocal %327 {approx = true} : vector<2x8x1xf32> -> vector<2x8x1xf32>
    %329 = vector.broadcast %328 : vector<2x8x1xf32> to vector<2x8x16xf32>
    %330 = arith.mulf %325, %329 : vector<2x8x16xf32>
    %331 = arith.addf %315, %330 : vector<2x8x16xf32>
    %332 = vector.extract_strided_slice %206 {offsets = [0, 0, 56], sizes = [2, 16, 8], strides = [1, 1, 1]} : vector<2x16x64xf32> to vector<2x16x8xf32>
    "tpu.trace_start"() <{level = 10 : i32, message = "bqk,bkd->bqd"}> : () -> ()
    %cst_112 = arith.constant dense<0.000000e+00> : vector<2x8x8xf32>
    %333 = tpu.matmul %330, %332, %cst_112 {dimension_numbers = #tpu.dot_dimension_numbers<[2], [1], [1], [2], [0, 0, 0, 1, 1, 2], [0], [0]>} : vector<2x8x16xf32>, vector<2x16x8xf32>, vector<2x8x8xf32> -> vector<2x8x8xf32>
    "tpu.trace_stop"() : () -> ()
    %334 = tpu.concatenate %221, %237, %253, %269, %285, %301, %317, %333 in 2 : vector<2x8x8xf32>, vector<2x8x8xf32>, vector<2x8x8xf32>, vector<2x8x8xf32>, vector<2x8x8xf32>, vector<2x8x8xf32>, vector<2x8x8xf32>, vector<2x8x8xf32> -> vector<2x8x64xf32>
    %335 = vector.shape_cast %334 : vector<2x8x64xf32> to vector<16x64xf32>
    %cst_113 = arith.constant dense<0.000000e+00> : vector<16x64xf32>
    %336 = tpu.matmul %335, %186, %cst_113 {dimension_numbers = #tpu.dot_dimension_numbers<[1], [0], [0], [1], [0, 0, 1, 1], [], []>} : vector<16x64xf32>, vector<64x64xf32>, vector<16x64xf32> -> vector<16x64xf32>
    %337 = vector.broadcast %190 : vector<1x64xf32> to vector<16x64xf32>
    %338 = arith.addf %336, %337 : vector<16x64xf32>
    %339 = vector.shape_cast %338 : vector<16x64xf32> to vector<2x8x64xf32>
    %340 = arith.addf %175, %339 : vector<2x8x64xf32>
    %cst_114 = arith.constant dense<0.000000e+00> : vector<2x8xf32>
    %341 = vector.multi_reduction <add>, %340, %cst_114 [2] : vector<2x8x64xf32> to vector<2x8xf32>
    %342 = vector.shape_cast %341 : vector<2x8xf32> to vector<2x8x1xf32>
    %cst_115 = arith.constant 6.400000e+01 : f32
    %343 = vector.broadcast %cst_115 : f32 to vector<2x8x1xf32>
    %344 = arith.divf %342, %343 : vector<2x8x1xf32>
    %345 = vector.broadcast %344 : vector<2x8x1xf32> to vector<2x8x64xf32>
    %346 = arith.subf %340, %345 : vector<2x8x64xf32>
    %347 = arith.mulf %346, %346 : vector<2x8x64xf32>
    %cst_116 = arith.constant dense<0.000000e+00> : vector<2x8xf32>
    %348 = vector.multi_reduction <add>, %347, %cst_116 [2] : vector<2x8x64xf32> to vector<2x8xf32>
    %349 = vector.shape_cast %348 : vector<2x8xf32> to vector<2x8x1xf32>
    %cst_117 = arith.constant 6.400000e+01 : f32
    %350 = vector.broadcast %cst_117 : f32 to vector<2x8x1xf32>
    %351 = arith.divf %349, %350 : vector<2x8x1xf32>
    %352 = vector.broadcast %344 : vector<2x8x1xf32> to vector<2x8x64xf32>
    %353 = arith.subf %340, %352 : vector<2x8x64xf32>
    %cst_118 = arith.constant 9.99999974E-6 : f32
    %354 = vector.broadcast %cst_118 : f32 to vector<2x8x1xf32>
    %355 = arith.addf %351, %354 : vector<2x8x1xf32>
    %356 = math.rsqrt %355 : vector<2x8x1xf32>
    %357 = vector.broadcast %356 : vector<2x8x1xf32> to vector<2x8x64xf32>
    %358 = arith.mulf %353, %357 : vector<2x8x64xf32>
    %359 = vector.shape_cast %191 : vector<1x64xf32> to vector<1x1x64xf32>
    %360 = vector.broadcast %359 : vector<1x1x64xf32> to vector<2x8x64xf32>
    %361 = arith.mulf %358, %360 : vector<2x8x64xf32>
    %362 = vector.shape_cast %192 : vector<1x64xf32> to vector<1x1x64xf32>
    %363 = vector.broadcast %362 : vector<1x1x64xf32> to vector<2x8x64xf32>
    %364 = arith.addf %361, %363 : vector<2x8x64xf32>
    %365 = vector.extract_strided_slice %364 {offsets = [0, 0, 0], sizes = [1, 8, 64], strides = [1, 1, 1]} : vector<2x8x64xf32> to vector<1x8x64xf32>
    %366 = vector.shape_cast %365 : vector<1x8x64xf32> to vector<8x64xf32>
    %c0_119 = arith.constant 0 : index
    %c0_120 = arith.constant 0 : index
    %367 = vector.load %arg5[%c0_119, %c0_120] : memref<8x128xf32, #tpu.memory_space<vmem>>, vector<8x64xf32>
    tpu.vector_store %arg5[%c0_119, %c0_120], %366 {strides = array<i32>} : memref<8x128xf32, #tpu.memory_space<vmem>>, vector<8x64xf32>,
    %368 = vector.extract_strided_slice %364 {offsets = [1, 0, 0], sizes = [1, 8, 64], strides = [1, 1, 1]} : vector<2x8x64xf32> to vector<1x8x64xf32>
    %369 = vector.shape_cast %368 : vector<1x8x64xf32> to vector<8x64xf32>
    %c0_121 = arith.constant 0 : index
    %c64 = arith.constant 64 : index
    %370 = vector.load %arg5[%c0_121, %c64] : memref<8x128xf32, #tpu.memory_space<vmem>>, vector<8x64xf32>
    tpu.vector_store %arg5[%c0_121, %c64], %369 {strides = array<i32>} : memref<8x128xf32, #tpu.memory_space<vmem>>, vector<8x64xf32>,
    %cst_122 = arith.constant 1.250000e-01 : f32
    %371 = vector.broadcast %cst_122 : f32 to vector<2x8x16xf32>
    %372 = arith.mulf %331, %371 : vector<2x8x16xf32>
    %c0_123 = arith.constant 0 : index
    %c0_124 = arith.constant 0 : index
    %c0_125 = arith.constant 0 : index
    %373 = vector.load %arg6[%c0_123, %c0_124, %c0_125] : memref<2x8x16xf32, #tpu.memory_space<vmem>>, vector<2x8x16xf32>
    tpu.vector_store %arg6[%c0_123, %c0_124, %c0_125], %372 {strides = array<i32>} : memref<2x8x16xf32, #tpu.memory_space<vmem>>, vector<2x8x16xf32>,
    return
  }
}

</mosaic_0001>

<llo_original>
// kernel: _qformer_forward.1
$region0: #{_qformer_forward.1}
  #allocation0 [shape = 'u32[]', space=smem, size = 0x4, offset = 0x4, fixed_abs, tag = 'smem constant byte address 0x4 - core index']
  #allocation1 [shape = 'u32[144,128]{1,0:T(1,128)}', space=vmem, size = 0x12000, scoped, tag = 'internal scratch']
  %s0 = inlined_call_operand.vmem [shape: f32[2,16,64], index: 0, kind: input, shape index: {}]
  %s1 = inlined_call_operand.vmem [shape: f32[2,16,64], index: 1, kind: input, shape index: {}]
  %s2 = inlined_call_operand.vmem [shape: f32[2,8,64], index: 2, kind: input, shape index: {}]
  %s3 = inlined_call_operand.hbm [shape: f32[8,64,64], index: 3, kind: input, shape index: {}]
  %s4 = inlined_call_operand.vmem [shape: f32[12,64], index: 4, kind: input, shape index: {}]
  %s5 = inlined_call_operand.vmem [shape: f32[8,128], index: 5, kind: output, shape index: {0}]
  %s6 = inlined_call_operand.hbm [shape: f32[2,8,16], index: 6, kind: output, shape index: {1}]
  %7 = xla_tuple %s5, %s6
  %s8 = sld [smem:[#allocation0]]
  $region42: #{_qformer_forward.1} parent=0
    _
  %s10 = ssub.s32 1, %s8
  %s11 = scalar_select 0, %s10, %s8
  $region1: #{_qformer_forward.1} parent=0
    #allocation2 [shape = 'u8[262144]{0}', space=vmem, size = 0x40000, scoped, tag = 'input window, operand 3, single buffered']
    #allocation3 [shape = 's32[1]{0}', space=sflag, size = 0x4, scoped, tag = 'scoped memory for _qformer_forward.1']
    #allocation4 [shape = 's32[1]{0}', space=sflag, size = 0x4, scoped, tag = 'scoped memory for _qformer_forward.1']
    #allocation5 [shape = 'u8[8192]{0}', space=vmem, size = 0x2000, scoped, tag = 'output window, operand 1, single buffered']
    %12 = vsyncpa [#allocation3], 0
    %13 = vsyncpa [#allocation4], 0
    // Predicated region
    $region2: #{_qformer_forward.1} parent=1 // pred_check
      _
    $region3: #{_qformer_forward.1} parent=1 // pred_check_branch
      %15 = sbr.rel (0) target = $region5
    $region4: #{_qformer_forward.1} parent=1 // pred_region
      _
    $region5: #{_qformer_forward.1} parent=1 // pred_fallthru
      _
    // Predicated region
    $region6: #{_qformer_forward.1} parent=1 // pred_check
      _
    $region7: #{_qformer_forward.1} parent=1 // pred_check_branch
      %17 = sbr.rel (0) target = $region9
    $region8: #{_qformer_forward.1} parent=1 // pred_region
      _
    $region9: #{_qformer_forward.1} parent=1 // pred_fallthru
      _
    // Predicated region
    $region10: #{_qformer_forward.1} parent=1 // pred_check
      _
    $region11: #{_qformer_forward.1} parent=1 // pred_check_branch
      %19 = sbr.rel (0) target = $region13
    $region12: #{_qformer_forward.1} parent=1 // pred_region
      _
    $region13: #{_qformer_forward.1} parent=1 // pred_fallthru
      _
    // Predicated region
    $region14: #{_qformer_forward.1} parent=1 // pred_check
      _
    $region15: #{_qformer_forward.1} parent=1 // pred_check_branch
      %21 = sbr.rel (0) target = $region17
    $region16: #{_qformer_forward.1} parent=1 // pred_region
      %s23 = ssub.s32 8192, 8192
      %24 = vsyncadd [#allocation3], %s23
      %s25 = sshll.u32 [#allocation2], 4
      %s26 = int_to_ptr.vmem [resolvable:$true] %s25
      %31 = dma.hbm_to_vmem [thread:$0]  %s3, 8192, %s26, [#allocation3], 128, 128, 8
    $region17: #{_qformer_forward.1} parent=1 // pred_fallthru
      _
    // Predicated region
    $region18: #{_qformer_forward.1} parent=1 // pred_check
      _
    $region19: #{_qformer_forward.1} parent=1 // pred_check_branch
      %33 = sbr.rel (0) target = $region21
    $region20: #{_qformer_forward.1} parent=1 // pred_region
      _
    $region21: #{_qformer_forward.1} parent=1 // pred_fallthru
      _
    // Predicated region
    $region22: #{_qformer_forward.1} parent=1 // pred_check
      _
    $region23: #{_qformer_forward.1} parent=1 // pred_check_branch
      %35 = sbr.rel (0) target = $region25
    $region24: #{_qformer_forward.1} parent=1 // pred_region
      %36 = dma.done [#allocation3], 8192
    $region25: #{_qformer_forward.1} parent=1 // pred_fallthru
      _
    %v37 = vlaneseq
    %v38 = vand.u32 %v37, 127
    %vm39 = vcmp.lt.s32.totalorder %v38, 1
    %v40 = vsel %vm39, -1e+30, 0.0
    %v41 = vld [vmem:[%s0] sm:$0xff]
    %v42 = vld [vmem:[%s0 + $0x8] sm:$0xff]
    %v43 = vld [vmem:[%s0 + $0x10] sm:$0xff]
    %v44 = vld [vmem:[%s0 + $0x18] sm:$0xff]
    %v45 = vld [vmem:[#allocation2] sm:$0xff]
    %v46 = vld [vmem:[#allocation2 + $0x8] sm:$0xff]
    %v47 = vld [vmem:[#allocation2 + $0x10] sm:$0xff]
    %v48 = vld [vmem:[#allocation2 + $0x18] sm:$0xff]
    %v49 = vld [vmem:[#allocation2 + $0x20] sm:$0xff]
    %v50 = vld [vmem:[#allocation2 + $0x28] sm:$0xff]
    %v51 = vld [vmem:[#allocation2 + $0x30] sm:$0xff]
    %v52 = vld [vmem:[#allocation2 + $0x38] sm:$0xff]
    %s53 = scalar_lea.vmem [#allocation2], 64
    %v54 = vld [vmem:[%s53] sm:$0xff]
    %v55 = vld [vmem:[%s53 + $0x8] sm:$0xff]
    %v56 = vld [vmem:[%s53 + $0x10] sm:$0xff]
    %v57 = vld [vmem:[%s53 + $0x18] sm:$0xff]
    %v58 = vld [vmem:[%s53 + $0x20] sm:$0xff]
    %v59 = vld [vmem:[%s53 + $0x28] sm:$0xff]
    %v60 = vld [vmem:[%s53 + $0x30] sm:$0xff]
    %v61 = vld [vmem:[%s53 + $0x38] sm:$0xff]
    %s62 = scalar_lea.vmem [#allocation2], 128
    %v63 = vld [vmem:[%s62] sm:$0xff]
    %v64 = vld [vmem:[%s62 + $0x8] sm:$0xff]
    %v65 = vld [vmem:[%s62 + $0x10] sm:$0xff]
    %v66 = vld [vmem:[%s62 + $0x18] sm:$0xff]
    %v67 = vld [vmem:[%s62 + $0x20] sm:$0xff]
    %v68 = vld [vmem:[%s62 + $0x28] sm:$0xff]
    %v69 = vld [vmem:[%s62 + $0x30] sm:$0xff]
    %v70 = vld [vmem:[%s62 + $0x38] sm:$0xff]
    %s71 = scalar_lea.vmem [#allocation2], 192
    %v72 = vld [vmem:[%s71] sm:$0xff]
    %v73 = vld [vmem:[%s71 + $0x8] sm:$0xff]
    %v74 = vld [vmem:[%s71 + $0x10] sm:$0xff]
    %v75 = vld [vmem:[%s71 + $0x18] sm:$0xff]
    %v76 = vld [vmem:[%s71 + $0x20] sm:$0xff]
    %v77 = vld [vmem:[%s71 + $0x28] sm:$0xff]
    %v78 = vld [vmem:[%s71 + $0x30] sm:$0xff]
    %v79 = vld [vmem:[%s71 + $0x38] sm:$0xff]
    %v80 = vld [vmem:[%s4] sm:$0x1]
    %v81 = vld [vmem:[%s4 + $0x1] sm:$0x1]
    %v82 = vld [vmem:[%s4 + $0x2] sm:$0x1]
    %v83 = vld [vmem:[%s4 + $0x3] sm:$0x1]
    %v84 = vlaneseq
    %v85 = vshrl.u32 %v84, 7
    %v86 = vsub.s32 0, %v85
    %v87 = vrot.slane %v80, %v86
    %vm88 = vcmask 523264
    %v90 = vsel %vm88, %v41, 0
    %v93 = vsel %vm88, %v42, 0
    %v96 = vsel %vm88, %v43, 0
    %v99 = vsel %vm88, %v44, 0
    %101 = vmatprep.subr.mxu0 0.0
    %102 = vmatpush1.msra.mxu0 %v45
    %103 = vmatprep.subr.mxu0 0.0
    %104 = vmatpush1.msra.mxu0 %v46
    %105 = vmatprep.subr.mxu0 0.0
    %106 = vmatpush1.msra.mxu0 %v47
    %107 = vmatprep.subr.mxu0 0.0
    %108 = vmatpush1.msra.mxu0 %v48
    %109 = vmatprep.subr.mxu0 0.0
    %110 = vmatpush1.msra.mxu0 %v49
    %111 = vmatprep.subr.mxu0 0.0
    %112 = vmatpush1.msra.mxu0 %v50
    %113 = vmatprep.subr.mxu0 0.0
    %114 = vmatpush1.msra.mxu0 %v51
    %115 = vmatprep.subr.mxu0 0.0
    %116 = vmatpush1.msra.mxu0 %v52
    %117 = vmatprep.subr.mxu0 0.0
    %118 = vmatpush1.msra.mxu0 0.0
    %119 = vmatprep.subr.mxu0 0.0
    %120 = vmatpush1.msra.mxu0 0.0
    %121 = vmatprep.subr.mxu0 0.0
    %122 = vmatpush1.msra.mxu0 0.0
    %123 = vmatprep.subr.mxu0 0.0
    %124 = vmatpush1.msra.mxu0 0.0
    %125 = vmatprep.subr.mxu0 0.0
    %126 = vmatpush1.msra.mxu0 0.0
    %127 = vmatprep.subr.mxu0 0.0
    %128 = vmatpush1.msra.mxu0 0.0
    %129 = vmatprep.subr.mxu0 0.0
    %130 = vmatpush1.msra.mxu0 0.0
    %131 = vmatprep.subr.mxu0 0.0
    %132 = vmatpush1.msra.mxu0 0.0
    %133 = vmatprep.subr.mxu0 0.0
    %134 = vmatpush1.msra.mxu0 0.0
    %135 = vmatprep.subr.mxu0 0.0
    %136 = vmatpush1.msra.mxu0 0.0
    %137 = vmatprep.subr.mxu0 0.0
    %138 = vmatpush1.msra.mxu0 0.0
    %139 = vmatprep.subr.mxu0 0.0
    %140 = vmatpush1.msra.mxu0 0.0
    %141 = vmatprep.subr.mxu0 0.0
    %142 = vmatpush1.msra.mxu0 0.0
    %143 = vmatprep.subr.mxu0 0.0
    %144 = vmatpush1.msra.mxu0 0.0
    %145 = vmatprep.subr.mxu0 0.0
    %146 = vmatpush1.msra.mxu0 0.0
    %147 = vmatprep.subr.mxu0 0.0
    %148 = vmatpush1.msra.mxu0 0.0
    %149 = vmatprep.subr.mxu0 0.0
    %150 = vmatpush1.msra.mxu0 0.0
    %151 = vmatprep.subr.mxu0 0.0
    %152 = vmatpush1.msra.mxu0 0.0
    %153 = vmatprep.subr.mxu0 0.0
    %154 = vmatpush1.msra.mxu0 0.0
    %155 = vmatprep.subr.mxu0 0.0
    %156 = vmatpush1.msra.mxu0 0.0
    %157 = vmatprep.subr.mxu0 0.0
    %158 = vmatpush1.msra.mxu0 0.0
    %159 = vmatprep.subr.mxu0 0.0
    %160 = vmatpush1.msra.mxu0 0.0
    %161 = vmatprep.subr.mxu0 0.0
    %162 = vmatpush1.msra.mxu0 0.0
    %163 = vmatprep.subr.mxu0 0.0
    %164 = vmatpush1.msra.mxu0 0.0
    %165 = vmatprep.mubr.f32.mxu0 0.0
    %166 = vmatmul.mubr.f32.gmra.mrb[0].mxu0 %v90
    %v167 = vpop.f32.mrb[0].mxu0
    %v168 = vadd.f32 %v87, %v167
    %v169 = vpop.f32.mrb[0].mxu0
    %170 = vmatprep.mubr.f32.mxu0 0.0
    %171 = vmatmul.mubr.f32.gmra.mrb[0].mxu0 %v93
    %v172 = vpop.f32.mrb[0].mxu0
    %v173 = vadd.f32 %v87, %v172
    %v174 = vpop.f32.mrb[0].mxu0
    %175 = vmatprep.mubr.f32.mxu0 0.0
    %176 = vmatmul.mubr.f32.gmra.mrb[0].mxu0 %v96
    %v177 = vpop.f32.mrb[0].mxu0
    %v178 = vadd.f32 %v87, %v177
    %v179 = vpop.f32.mrb[0].mxu0
    %180 = vmatprep.mubr.f32.mxu0 0.0
    %181 = vmatmul.mubr.f32.gmra.mrb[0].mxu0 %v99
    %v182 = vpop.f32.mrb[0].mxu0
    %v183 = vadd.f32 %v87, %v182
    %v184 = vpop.f32.mrb[0].mxu0
    %185 = vdwg.mxu0
    %v186 = vlaneseq
    %v187 = vshrl.u32 %v186, 7
    %v188 = vsub.s32 0, %v187
    %v189 = vrot.slane %v81, %v188
    %190 = vmatprep.subr.mxu0 0.0
    %191 = vmatpush1.msra.mxu0 %v54
    %192 = vmatprep.subr.mxu0 0.0
    %193 = vmatpush1.msra.mxu0 %v55
    %194 = vmatprep.subr.mxu0 0.0
    %195 = vmatpush1.msra.mxu0 %v56
    %196 = vmatprep.subr.mxu0 0.0
    %197 = vmatpush1.msra.mxu0 %v57
    %198 = vmatprep.subr.mxu0 0.0
    %199 = vmatpush1.msra.mxu0 %v58
    %200 = vmatprep.subr.mxu0 0.0
    %201 = vmatpush1.msra.mxu0 %v59
    %202 = vmatprep.subr.mxu0 0.0
    %203 = vmatpush1.msra.mxu0 %v60
    %204 = vmatprep.subr.mxu0 0.0
    %205 = vmatpush1.msra.mxu0 %v61
    %206 = vmatprep.subr.mxu0 0.0
    %207 = vmatpush1.msra.mxu0 0.0
    %208 = vmatprep.subr.mxu0 0.0
    %209 = vmatpush1.msra.mxu0 0.0
    %210 = vmatprep.subr.mxu0 0.0
    %211 = vmatpush1.msra.mxu0 0.0
    %212 = vmatprep.subr.mxu0 0.0
    %213 = vmatpush1.msra.mxu0 0.0
    %214 = vmatprep.subr.mxu0 0.0
    %215 = vmatpush1.msra.mxu0 0.0
    %216 = vmatprep.subr.mxu0 0.0
    %217 = vmatpush1.msra.mxu0 0.0
    %218 = vmatprep.subr.mxu0 0.0
    %219 = vmatpush1.msra.mxu0 0.0
    %220 = vmatprep.subr.mxu0 0.0
    %221 = vmatpush1.msra.mxu0 0.0
    %222 = vmatprep.subr.mxu0 0.0
    %223 = vmatpush1.msra.mxu0 0.0
    %224 = vmatprep.subr.mxu0 0.0
    %225 = vmatpush1.msra.mxu0 0.0
    %226 = vmatprep.subr.mxu0 0.0
    %227 = vmatpush1.msra.mxu0 0.0
    %228 = vmatprep.subr.mxu0 0.0
    %229 = vmatpush1.msra.mxu0 0.0
    %230 = vmatprep.subr.mxu0 0.0
    %231 = vmatpush1.msra.mxu0 0.0
    %232 = vmatprep.subr.mxu0 0.0
    %233 = vmatpush1.msra.mxu0 0.0
    %234 = vmatprep.subr.mxu0 0.0
    %235 = vmatpush1.msra.mxu0 0.0
    %236 = vmatprep.subr.mxu0 0.0
    %237 = vmatpush1.msra.mxu0 0.0
    %238 = vmatprep.subr.mxu0 0.0
    %239 = vmatpush1.msra.mxu0 0.0
    %240 = vmatprep.subr.mxu0 0.0
    %241 = vmatpush1.msra.mxu0 0.0
    %242 = vmatprep.subr.mxu0 0.0
    %243 = vmatpush1.msra.mxu0 0.0
    %244 = vmatprep.subr.mxu0 0.0
    %245 = vmatpush1.msra.mxu0 0.0
    %246 = vmatprep.subr.mxu0 0.0
    %247 = vmatpush1.msra.mxu0 0.0
    %248 = vmatprep.subr.mxu0 0.0
    %249 = vmatpush1.msra.mxu0 0.0
    %250 = vmatprep.subr.mxu0 0.0
    %251 = vmatpush1.msra.mxu0 0.0
    %252 = vmatprep.subr.mxu0 0.0
    %253 = vmatpush1.msra.mxu0 0.0
    %254 = vmatprep.mubr.f32.mxu0 0.0
    %255 = vmatmul.mubr.f32.gmra.mrb[0].mxu0 %v90
    %v256 = vpop.f32.mrb[0].mxu0
    %v257 = vadd.f32 %v189, %v256
    %v258 = vpop.f32.mrb[0].mxu0
    %259 = vmatprep.mubr.f32.mxu0 0.0
    %260 = vmatmul.mubr.f32.gmra.mrb[0].mxu0 %v93
    %v261 = vpop.f32.mrb[0].mxu0
    %v262 = vadd.f32 %v189, %v261
    %v263 = vpop.f32.mrb[0].mxu0
    %264 = vmatprep.mubr.f32.mxu0 0.0
    %265 = vmatmul.mubr.f32.gmra.mrb[0].mxu0 %v96
    %v266 = vpop.f32.mrb[0].mxu0
    %v267 = vadd.f32 %v189, %v266
    %v268 = vpop.f32.mrb[0].mxu0
    %269 = vmatprep.mubr.f32.mxu0 0.0
    %270 = vmatmul.mubr.f32.gmra.mrb[0].mxu0 %v99
    %v271 = vpop.f32.mrb[0].mxu0
    %v272 = vadd.f32 %v189, %v271
    %v273 = vpop.f32.mrb[0].mxu0
    %274 = vdwg.mxu0
    %v275 = vlaneseq
    %v276 = vshrl.u32 %v275, 7
    %v277 = vsub.s32 0, %v276
    %v278 = vrot.slane %v82, %v277
    %279 = vmatprep.subr.mxu0 0.0
    %280 = vmatpush1.msra.mxu0 %v63
    %281 = vmatprep.subr.mxu0 0.0
    %282 = vmatpush1.msra.mxu0 %v64
    %283 = vmatprep.subr.mxu0 0.0
    %284 = vmatpush1.msra.mxu0 %v65
    %285 = vmatprep.subr.mxu0 0.0
    %286 = vmatpush1.msra.mxu0 %v66
    %287 = vmatprep.subr.mxu0 0.0
    %288 = vmatpush1.msra.mxu0 %v67
    %289 = vmatprep.subr.mxu0 0.0
    %290 = vmatpush1.msra.mxu0 %v68
    %291 = vmatprep.subr.mxu0 0.0
    %292 = vmatpush1.msra.mxu0 %v69
    %293 = vmatprep.subr.mxu0 0.0
    %294 = vmatpush1.msra.mxu0 %v70
    %295 = vmatprep.subr.mxu0 0.0
    %296 = vmatpush1.msra.mxu0 0.0
    %297 = vmatprep.subr.mxu0 0.0
    %298 = vmatpush1.msra.mxu0 0.0
    %299 = vmatprep.subr.mxu0 0.0
    %300 = vmatpush1.msra.mxu0 0.0
    %301 = vmatprep.subr.mxu0 0.0
    %302 = vmatpush1.msra.mxu0 0.0
    %303 = vmatprep.subr.mxu0 0.0
    %304 = vmatpush1.msra.mxu0 0.0
    %305 = vmatprep.subr.mxu0 0.0
    %306 = vmatpush1.msra.mxu0 0.0
    %307 = vmatprep.subr.mxu0 0.0
    %308 = vmatpush1.msra.mxu0 0.0
    %309 = vmatprep.subr.mxu0 0.0
    %310 = vmatpush1.msra.mxu0 0.0
    %311 = vmatprep.subr.mxu0 0.0
    %312 = vmatpush1.msra.mxu0 0.0
    %313 = vmatprep.subr.mxu0 0.0
    %314 = vmatpush1.msra.mxu0 0.0
    %315 = vmatprep.subr.mxu0 0.0
    %316 = vmatpush1.msra.mxu0 0.0
    %317 = vmatprep.subr.mxu0 0.0
    %318 = vmatpush1.msra.mxu0 0.0
    %319 = vmatprep.subr.mxu0 0.0
    %320 = vmatpush1.msra.mxu0 0.0
    %321 = vmatprep.subr.mxu0 0.0
    %322 = vmatpush1.msra.mxu0 0.0
    %323 = vmatprep.subr.mxu0 0.0
    %324 = vmatpush1.msra.mxu0 0.0
    %325 = vmatprep.subr.mxu0 0.0
    %326 = vmatpush1.msra.mxu0 0.0
    %327 = vmatprep.subr.mxu0 0.0
    %328 = vmatpush1.msra.mxu0 0.0
    %329 = vmatprep.subr.mxu0 0.0
    %330 = vmatpush1.msra.mxu0 0.0
    %331 = vmatprep.subr.mxu0 0.0
    %332 = vmatpush1.msra.mxu0 0.0
    %333 = vmatprep.subr.mxu0 0.0
    %334 = vmatpush1.msra.mxu0 0.0
    %335 = vmatprep.subr.mxu0 0.0
    %336 = vmatpush1.msra.mxu0 0.0
    %337 = vmatprep.subr.mxu0 0.0
    %338 = vmatpush1.msra.mxu0 0.0
    %339 = vmatprep.subr.mxu0 0.0
    %340 = vmatpush1.msra.mxu0 0.0
    %341 = vmatprep.subr.mxu0 0.0
    %342 = vmatpush1.msra.mxu0 0.0
    %343 = vmatprep.mubr.f32.mxu0 0.0
    %344 = vmatmul.mubr.f32.gmra.mrb[0].mxu0 %v90
    %v345 = vpop.f32.mrb[0].mxu0
    %v346 = vadd.f32 %v278, %v345
    %v347 = vpop.f32.mrb[0].mxu0
    %348 = vmatprep.mubr.f32.mxu0 0.0
    %349 = vmatmul.mubr.f32.gmra.mrb[0].mxu0 %v93
    %v350 = vpop.f32.mrb[0].mxu0
    %v351 = vadd.f32 %v278, %v350
    %v352 = vpop.f32.mrb[0].mxu0
    %353 = vmatprep.mubr.f32.mxu0 0.0
    %354 = vmatmul.mubr.f32.gmra.mrb[0].mxu0 %v96
    %v355 = vpop.f32.mrb[0].mxu0
    %v356 = vadd.f32 %v278, %v355
    %v357 = vpop.f32.mrb[0].mxu0
    %358 = vmatprep.mubr.f32.mxu0 0.0
    %359 = vmatmul.mubr.f32.gmra.mrb[0].mxu0 %v99
    %v360 = vpop.f32.mrb[0].mxu0
    %v361 = vadd.f32 %v278, %v360
    %v362 = vpop.f32.mrb[0].mxu0
    %363 = vdwg.mxu0
    %vm364 = vcmask 64512
    %v366 = vsel %vm364, %v168, 0
    %v369 = vsel %vm364, %v173, 0
    %v372 = vsel %vm364, %v257, 0
    %v375 = vsel %vm364, %v262, 0
    %377 = vmatprep.subr.mxu0 0.0
    %378 = vmatpush1.xpose.msra.mxu0 %v372
    %379 = vmatprep.subr.mxu0 0.0
    %380 = vmatpush1.xpose.msra.mxu0 %v375
    %381 = vmatprep.subr.mxu0 0.0
    %382 = vmatpush1.xpose.msra.mxu0 0.0
    %383 = vmatprep.subr.mxu0 0.0
    %384 = vmatpush1.xpose.msra.mxu0 0.0
    %385 = vmatprep.subr.mxu0 0.0
    %386 = vmatpush1.xpose.msra.mxu0 0.0
    %387 = vmatprep.subr.mxu0 0.0
    %388 = vmatpush1.xpose.msra.mxu0 0.0
    %389 = vmatprep.subr.mxu0 0.0
    %390 = vmatpush1.xpose.msra.mxu0 0.0
    %391 = vmatprep.subr.mxu0 0.0
    %392 = vmatpush1.xpose.msra.mxu0 0.0
    %393 = vmatprep.subr.mxu0 0.0
    %394 = vmatpush1.xpose.msra.mxu0 0.0
    %395 = vmatprep.subr.mxu0 0.0
    %396 = vmatpush1.xpose.msra.mxu0 0.0
    %397 = vmatprep.subr.mxu0 0.0
    %398 = vmatpush1.xpose.msra.mxu0 0.0
    %399 = vmatprep.subr.mxu0 0.0
    %400 = vmatpush1.xpose.msra.mxu0 0.0
    %401 = vmatprep.subr.mxu0 0.0
    %402 = vmatpush1.xpose.msra.mxu0 0.0
    %403 = vmatprep.subr.mxu0 0.0
    %404 = vmatpush1.xpose.msra.mxu0 0.0
    %405 = vmatprep.subr.mxu0 0.0
    %406 = vmatpush1.xpose.msra.mxu0 0.0
    %407 = vmatprep.subr.mxu0 0.0
    %408 = vmatpush1.xpose.msra.mxu0 0.0
    %409 = vmatprep.subr.mxu0 0.0
    %410 = vmatpush1.xpose.msra.mxu0 0.0
    %411 = vmatprep.subr.mxu0 0.0
    %412 = vmatpush1.xpose.msra.mxu0 0.0
    %413 = vmatprep.subr.mxu0 0.0
    %414 = vmatpush1.xpose.msra.mxu0 0.0
    %415 = vmatprep.subr.mxu0 0.0
    %416 = vmatpush1.xpose.msra.mxu0 0.0
    %417 = vmatprep.subr.mxu0 0.0
    %418 = vmatpush1.xpose.msra.mxu0 0.0
    %419 = vmatprep.subr.mxu0 0.0
    %420 = vmatpush1.xpose.msra.mxu0 0.0
    %421 = vmatprep.subr.mxu0 0.0
    %422 = vmatpush1.xpose.msra.mxu0 0.0
    %423 = vmatprep.subr.mxu0 0.0
    %424 = vmatpush1.xpose.msra.mxu0 0.0
    %425 = vmatprep.subr.mxu0 0.0
    %426 = vmatpush1.xpose.msra.mxu0 0.0
    %427 = vmatprep.subr.mxu0 0.0
    %428 = vmatpush1.xpose.msra.mxu0 0.0
    %429 = vmatprep.subr.mxu0 0.0
    %430 = vmatpush1.xpose.msra.mxu0 0.0
    %431 = vmatprep.subr.mxu0 0.0
    %432 = vmatpush1.xpose.msra.mxu0 0.0
    %433 = vmatprep.subr.mxu0 0.0
    %434 = vmatpush1.xpose.msra.mxu0 0.0
    %435 = vmatprep.subr.mxu0 0.0
    %436 = vmatpush1.xpose.msra.mxu0 0.0
    %437 = vmatprep.subr.mxu0 0.0
    %438 = vmatpush1.xpose.msra.mxu0 0.0
    %439 = vmatprep.subr.mxu0 0.0
    %440 = vmatpush1.xpose.msra.mxu0 0.0
    %441 = vmatprep.mubr.f32.mxu0 0.0
    %442 = vmatmul.mubr.f32.gmra.mrb[0].mxu0 %v366
    %v443 = vpop.f32.mrb[0].mxu0
    %v444 = vadd.f32 %v40, %v443
    %v445 = vpop.f32.mrb[0].mxu0
    %446 = vmatprep.mubr.f32.mxu0 0.0
    %447 = vmatmul.mubr.f32.gmra.mrb[0].mxu0 %v369
    %v448 = vpop.f32.mrb[0].mxu0
    %v449 = vadd.f32 %v40, %v448
    %v450 = vpop.f32.mrb[0].mxu0
    %451 = vdwg.mxu0
    %v453 = vsel %vm364, %v178, 0
    %v456 = vsel %vm364, %v183, 0
    %v459 = vsel %vm364, %v267, 0
    %v462 = vsel %vm364, %v272, 0
    %464 = vmatprep.subr.mxu0 0.0
    %465 = vmatpush1.xpose.msra.mxu0 %v459
    %466 = vmatprep.subr.mxu0 0.0
    %467 = vmatpush1.xpose.msra.mxu0 %v462
    %468 = vmatprep.subr.mxu0 0.0
    %469 = vmatpush1.xpose.msra.mxu0 0.0
    %470 = vmatprep.subr.mxu0 0.0
    %471 = vmatpush1.xpose.msra.mxu0 0.0
    %472 = vmatprep.subr.mxu0 0.0
    %473 = vmatpush1.xpose.msra.mxu0 0.0
    %474 = vmatprep.subr.mxu0 0.0
    %475 = vmatpush1.xpose.msra.mxu0 0.0
    %476 = vmatprep.subr.mxu0 0.0
    %477 = vmatpush1.xpose.msra.mxu0 0.0
    %478 = vmatprep.subr.mxu0 0.0
    %479 = vmatpush1.xpose.msra.mxu0 0.0
    %480 = vmatprep.subr.mxu0 0.0
    %481 = vmatpush1.xpose.msra.mxu0 0.0
    %482 = vmatprep.subr.mxu0 0.0
    %483 = vmatpush1.xpose.msra.mxu0 0.0
    %484 = vmatprep.subr.mxu0 0.0
    %485 = vmatpush1.xpose.msra.mxu0 0.0
    %486 = vmatprep.subr.mxu0 0.0
    %487 = vmatpush1.xpose.msra.mxu0 0.0
    %488 = vmatprep.subr.mxu0 0.0
    %489 = vmatpush1.xpose.msra.mxu0 0.0
    %490 = vmatprep.subr.mxu0 0.0
    %491 = vmatpush1.xpose.msra.mxu0 0.0
    %492 = vmatprep.subr.mxu0 0.0
    %493 = vmatpush1.xpose.msra.mxu0 0.0
    %494 = vmatprep.subr.mxu0 0.0
    %495 = vmatpush1.xpose.msra.mxu0 0.0
    %496 = vmatprep.subr.mxu0 0.0
    %497 = vmatpush1.xpose.msra.mxu0 0.0
    %498 = vmatprep.subr.mxu0 0.0
    %499 = vmatpush1.xpose.msra.mxu0 0.0
    %500 = vmatprep.subr.mxu0 0.0
    %501 = vmatpush1.xpose.msra.mxu0 0.0
    %502 = vmatprep.subr.mxu0 0.0
    %503 = vmatpush1.xpose.msra.mxu0 0.0
    %504 = vmatprep.subr.mxu0 0.0
    %505 = vmatpush1.xpose.msra.mxu0 0.0
    %506 = vmatprep.subr.mxu0 0.0
    %507 = vmatpush1.xpose.msra.mxu0 0.0
    %508 = vmatprep.subr.mxu0 0.0
    %509 = vmatpush1.xpose.msra.mxu0 0.0
    %510 = vmatprep.subr.mxu0 0.0
    %511 = vmatpush1.xpose.msra.mxu0 0.0
    %512 = vmatprep.subr.mxu0 0.0
    %513 = vmatpush1.xpose.msra.mxu0 0.0
    %514 = vmatprep.subr.mxu0 0.0
    %515 = vmatpush1.xpose.msra.mxu0 0.0
    %516 = vmatprep.subr.mxu0 0.0
    %517 = vmatpush1.xpose.msra.mxu0 0.0
    %518 = vmatprep.subr.mxu0 0.0
    %519 = vmatpush1.xpose.msra.mxu0 0.0
    %520 = vmatprep.subr.mxu0 0.0
    %521 = vmatpush1.xpose.msra.mxu0 0.0
    %522 = vmatprep.subr.mxu0 0.0
    %523 = vmatpush1.xpose.msra.mxu0 0.0
    %524 = vmatprep.subr.mxu0 0.0
    %525 = vmatpush1.xpose.msra.mxu0 0.0
    %526 = vmatprep.subr.mxu0 0.0
    %527 = vmatpush1.xpose.msra.mxu0 0.0
    %528 = vmatprep.mubr.f32.mxu0 0.0
    %529 = vmatmul.mubr.f32.gmra.mrb[0].mxu0 %v453
    %v530 = vpop.f32.mrb[0].mxu0
    %v531 = vadd.f32 %v40, %v530
    %v532 = vpop.f32.mrb[0].mxu0
    %533 = vmatprep.mubr.f32.mxu0 0.0
    %534 = vmatmul.mubr.f32.gmra.mrb[0].mxu0 %v456
    %v535 = vpop.f32.mrb[0].mxu0
    %v536 = vadd.f32 %v40, %v535
    %v537 = vpop.f32.mrb[0].mxu0
    %538 = vdwg.mxu0
    %vm539 = vcmask 130048
    %v540 = vsel %vm539, %v444, -inf
    %541 = vmax.xlane.f32.xlu0 %v540
    %v542 = vpop.xlane.xlu0 %541
    %v543 = vsel %vm539, %v449, -inf
    %544 = vmax.xlane.f32.xlu0 %v543
    %v545 = vpop.xlane.xlu0 %544
    %v546 = vsel %vm539, %v531, -inf
    %547 = vmax.xlane.f32.xlu0 %v546
    %v548 = vpop.xlane.xlu0 %547
    %v549 = vsel %vm539, %v536, -inf
    %550 = vmax.xlane.f32.xlu0 %v549
    %v551 = vpop.xlane.xlu0 %550
    %v552 = vsub.f32 %v444, %v542
    %v553 = vsub.f32 %v449, %v545
    %v554 = vsub.f32 %v531, %v548
    %v555 = vsub.f32 %v536, %v551
    %v556 = vmul.f32 %v552, 1.442695
    %v557 = vpow.pop %v556
    %v558 = vmul.f32 %v553, 1.442695
    %v559 = vpow.pop %v558
    %v560 = vmul.f32 %v554, 1.442695
    %v561 = vpow.pop %v560
    %v562 = vmul.f32 %v555, 1.442695
    %v563 = vpow.pop %v562
    %v564 = vsel %vm539, %v557, 0.0
    %565 = vadd.xlane.f32.xlu0 %v564
    %v566 = vpop.xlane.xlu0 %565
    %v567 = vsel %vm539, %v559, 0.0
    %568 = vadd.xlane.f32.xlu0 %v567
    %v569 = vpop.xlane.xlu0 %568
    %v570 = vsel %vm539, %v561, 0.0
    %571 = vadd.xlane.f32.xlu0 %v570
    %v572 = vpop.xlane.xlu0 %571
    %v573 = vsel %vm539, %v563, 0.0
    %574 = vadd.xlane.f32.xlu0 %v573
    %v575 = vpop.xlane.xlu0 %574
    %v576 = vrcp.pop %v566
    %v577 = vrcp.pop %v569
    %v578 = vrcp.pop %v572
    %v579 = vrcp.pop %v575
    %v580 = vmul.f32 %v557, %v576
    %v581 = vmul.f32 %v559, %v577
    %v582 = vmul.f32 %v561, %v578
    %v583 = vmul.f32 %v563, %v579
    %v585 = vsel %vm539, %v580, 0
    %v588 = vsel %vm539, %v581, 0
    %590 = vmatprep.subr.mxu0 0.0
    %591 = vmatpush1.msra.mxu0 %v346
    %592 = vmatprep.subr.mxu0 0.0
    %593 = vmatpush1.msra.mxu0 %v351
    %594 = vmatprep.subr.mxu0 0.0
    %595 = vmatpush1.msra.mxu0 0.0
    %596 = vmatprep.subr.mxu0 0.0
    %597 = vmatpush1.msra.mxu0 0.0
    %598 = vmatprep.subr.mxu0 0.0
    %599 = vmatpush1.msra.mxu0 0.0
    %600 = vmatprep.subr.mxu0 0.0
    %601 = vmatpush1.msra.mxu0 0.0
    %602 = vmatprep.subr.mxu0 0.0
    %603 = vmatpush1.msra.mxu0 0.0
    %604 = vmatprep.subr.mxu0 0.0
    %605 = vmatpush1.msra.mxu0 0.0
    %606 = vmatprep.subr.mxu0 0.0
    %607 = vmatpush1.msra.mxu0 0.0
    %608 = vmatprep.subr.mxu0 0.0
    %609 = vmatpush1.msra.mxu0 0.0
    %610 = vmatprep.subr.mxu0 0.0
    %611 = vmatpush1.msra.mxu0 0.0
    %612 = vmatprep.subr.mxu0 0.0
    %613 = vmatpush1.msra.mxu0 0.0
    %614 = vmatprep.subr.mxu0 0.0
    %615 = vmatpush1.msra.mxu0 0.0
    %616 = vmatprep.subr.mxu0 0.0
    %617 = vmatpush1.msra.mxu0 0.0
    %618 = vmatprep.subr.mxu0 0.0
    %619 = vmatpush1.msra.mxu0 0.0
    %620 = vmatprep.subr.mxu0 0.0
    %621 = vmatpush1.msra.mxu0 0.0
    %622 = vmatprep.subr.mxu0 0.0
    %623 = vmatpush1.msra.mxu0 0.0
    %624 = vmatprep.subr.mxu0 0.0
    %625 = vmatpush1.msra.mxu0 0.0
    %626 = vmatprep.subr.mxu0 0.0
    %627 = vmatpush1.msra.mxu0 0.0
    %628 = vmatprep.subr.mxu0 0.0
    %629 = vmatpush1.msra.mxu0 0.0
    %630 = vmatprep.subr.mxu0 0.0
    %631 = vmatpush1.msra.mxu0 0.0
    %632 = vmatprep.subr.mxu0 0.0
    %633 = vmatpush1.msra.mxu0 0.0
    %634 = vmatprep.subr.mxu0 0.0
    %635 = vmatpush1.msra.mxu0 0.0
    %636 = vmatprep.subr.mxu0 0.0
    %637 = vmatpush1.msra.mxu0 0.0
    %638 = vmatprep.subr.mxu0 0.0
    %639 = vmatpush1.msra.mxu0 0.0
    %640 = vmatprep.subr.mxu0 0.0
    %641 = vmatpush1.msra.mxu0 0.0
    %642 = vmatprep.subr.mxu0 0.0
    %643 = vmatpush1.msra.mxu0 0.0
    %644 = vmatprep.subr.mxu0 0.0
    %645 = vmatpush1.msra.mxu0 0.0
    %646 = vmatprep.subr.mxu0 0.0
    %647 = vmatpush1.msra.mxu0 0.0
    %648 = vmatprep.subr.mxu0 0.0
    %649 = vmatpush1.msra.mxu0 0.0
    %650 = vmatprep.subr.mxu0 0.0
    %651 = vmatpush1.msra.mxu0 0.0
    %652 = vmatprep.subr.mxu0 0.0
    %653 = vmatpush1.msra.mxu0 0.0
    %654 = vmatprep.mubr.f32.mxu0 0.0
    %655 = vmatmul.mubr.f32.gmra.mrb[0].mxu0 %v585
    %v656 = vpop.f32.mrb[0].mxu0
    %v657 = vadd.f32 0.0, %v656
    %v658 = vpop.f32.mrb[0].mxu0
    %659 = vmatprep.mubr.f32.mxu0 0.0
    %660 = vmatmul.mubr.f32.gmra.mrb[0].mxu0 %v588
    %v661 = vpop.f32.mrb[0].mxu0
    %v662 = vadd.f32 0.0, %v661
    %v663 = vpop.f32.mrb[0].mxu0
    %664 = vdwg.mxu0
    %v666 = vsel %vm539, %v582, 0
    %v669 = vsel %vm539, %v583, 0
    %671 = vmatprep.subr.mxu0 0.0
    %672 = vmatpush1.msra.mxu0 %v356
    %673 = vmatprep.subr.mxu0 0.0
    %674 = vmatpush1.msra.mxu0 %v361
    %675 = vmatprep.subr.mxu0 0.0
    %676 = vmatpush1.msra.mxu0 0.0
    %677 = vmatprep.subr.mxu0 0.0
    %678 = vmatpush1.msra.mxu0 0.0
    %679 = vmatprep.subr.mxu0 0.0
    %680 = vmatpush1.msra.mxu0 0.0
    %681 = vmatprep.subr.mxu0 0.0
    %682 = vmatpush1.msra.mxu0 0.0
    %683 = vmatprep.subr.mxu0 0.0
    %684 = vmatpush1.msra.mxu0 0.0
    %685 = vmatprep.subr.mxu0 0.0
    %686 = vmatpush1.msra.mxu0 0.0
    %687 = vmatprep.subr.mxu0 0.0
    %688 = vmatpush1.msra.mxu0 0.0
    %689 = vmatprep.subr.mxu0 0.0
    %690 = vmatpush1.msra.mxu0 0.0
    %691 = vmatprep.subr.mxu0 0.0
    %692 = vmatpush1.msra.mxu0 0.0
    %693 = vmatprep.subr.mxu0 0.0
    %694 = vmatpush1.msra.mxu0 0.0
    %695 = vmatprep.subr.mxu0 0.0
    %696 = vmatpush1.msra.mxu0 0.0
    %697 = vmatprep.subr.mxu0 0.0
    %698 = vmatpush1.msra.mxu0 0.0
    %699 = vmatprep.subr.mxu0 0.0
    %700 = vmatpush1.msra.mxu0 0.0
    %701 = vmatprep.subr.mxu0 0.0
    %702 = vmatpush1.msra.mxu0 0.0
    %703 = vmatprep.subr.mxu0 0.0
    %704 = vmatpush1.msra.mxu0 0.0
    %705 = vmatprep.subr.mxu0 0.0
    %706 = vmatpush1.msra.mxu0 0.0
    %707 = vmatprep.subr.mxu0 0.0
    %708 = vmatpush1.msra.mxu0 0.0
    %709 = vmatprep.subr.mxu0 0.0
    %710 = vmatpush1.msra.mxu0 0.0
    %711 = vmatprep.subr.mxu0 0.0
    %712 = vmatpush1.msra.mxu0 0.0
    %713 = vmatprep.subr.mxu0 0.0
    %714 = vmatpush1.msra.mxu0 0.0
    %715 = vmatprep.subr.mxu0 0.0
    %716 = vmatpush1.msra.mxu0 0.0
    %717 = vmatprep.subr.mxu0 0.0
    %718 = vmatpush1.msra.mxu0 0.0
    %719 = vmatprep.subr.mxu0 0.0
    %720 = vmatpush1.msra.mxu0 0.0
    %721 = vmatprep.subr.mxu0 0.0
    %722 = vmatpush1.msra.mxu0 0.0
    %723 = vmatprep.subr.mxu0 0.0
    %724 = vmatpush1.msra.mxu0 0.0
    %725 = vmatprep.subr.mxu0 0.0
    %726 = vmatpush1.msra.mxu0 0.0
    %727 = vmatprep.subr.mxu0 0.0
    %728 = vmatpush1.msra.mxu0 0.0
    %729 = vmatprep.subr.mxu0 0.0
    %730 = vmatpush1.msra.mxu0 0.0
    %731 = vmatprep.subr.mxu0 0.0
    %732 = vmatpush1.msra.mxu0 0.0
    %733 = vmatprep.subr.mxu0 0.0
    %734 = vmatpush1.msra.mxu0 0.0
    %735 = vmatprep.mubr.f32.mxu0 0.0
    %736 = vmatmul.mubr.f32.gmra.mrb[0].mxu0 %v666
    %v737 = vpop.f32.mrb[0].mxu0
    %v738 = vadd.f32 0.0, %v737
    %v739 = vpop.f32.mrb[0].mxu0
    %740 = vmatprep.mubr.f32.mxu0 0.0
    %741 = vmatmul.mubr.f32.gmra.mrb[0].mxu0 %v669
    %v742 = vpop.f32.mrb[0].mxu0
    %v743 = vadd.f32 0.0, %v742
    %v744 = vpop.f32.mrb[0].mxu0
    %745 = vdwg.mxu0
    %746 = vrot.lane.b32.xlu0 %v168, 120
    %v747 = vpop.permute.xlu0 %746
    %748 = vrot.lane.b32.xlu0 %v173, 120
    %v749 = vpop.permute.xlu0 %748
    %750 = vrot.lane.b32.xlu0 %v257, 120
    %v751 = vpop.permute.xlu0 %750
    %752 = vrot.lane.b32.xlu0 %v262, 120
    %v753 = vpop.permute.xlu0 %752
    %v754 = vsel %vm364, %v747, 0
    %v756 = vsel %vm364, %v749, 0
    %v758 = vsel %vm364, %v751, 0
    %v760 = vsel %vm364, %v753, 0
    %762 = vmatprep.subr.mxu0 0.0
    %763 = vmatpush1.xpose.msra.mxu0 %v758
    %764 = vmatprep.subr.mxu0 0.0
    %765 = vmatpush1.xpose.msra.mxu0 %v760
    %766 = vmatprep.subr.mxu0 0.0
    %767 = vmatpush1.xpose.msra.mxu0 0.0
    %768 = vmatprep.subr.mxu0 0.0
    %769 = vmatpush1.xpose.msra.mxu0 0.0
    %770 = vmatprep.subr.mxu0 0.0
    %771 = vmatpush1.xpose.msra.mxu0 0.0
    %772 = vmatprep.subr.mxu0 0.0
    %773 = vmatpush1.xpose.msra.mxu0 0.0
    %774 = vmatprep.subr.mxu0 0.0
    %775 = vmatpush1.xpose.msra.mxu0 0.0
    %776 = vmatprep.subr.mxu0 0.0
    %777 = vmatpush1.xpose.msra.mxu0 0.0
    %778 = vmatprep.subr.mxu0 0.0
    %779 = vmatpush1.xpose.msra.mxu0 0.0
    %780 = vmatprep.subr.mxu0 0.0
    %781 = vmatpush1.xpose.msra.mxu0 0.0
    %782 = vmatprep.subr.mxu0 0.0
    %783 = vmatpush1.xpose.msra.mxu0 0.0
    %784 = vmatprep.subr.mxu0 0.0
    %785 = vmatpush1.xpose.msra.mxu0 0.0
    %786 = vmatprep.subr.mxu0 0.0
    %787 = vmatpush1.xpose.msra.mxu0 0.0
    %788 = vmatprep.subr.mxu0 0.0
    %789 = vmatpush1.xpose.msra.mxu0 0.0
    %790 = vmatprep.subr.mxu0 0.0
    %791 = vmatpush1.xpose.msra.mxu0 0.0
    %792 = vmatprep.subr.mxu0 0.0
    %793 = vmatpush1.xpose.msra.mxu0 0.0
    %794 = vmatprep.subr.mxu0 0.0
    %795 = vmatpush1.xpose.msra.mxu0 0.0
    %796 = vmatprep.subr.mxu0 0.0
    %797 = vmatpush1.xpose.msra.mxu0 0.0
    %798 = vmatprep.subr.mxu0 0.0
    %799 = vmatpush1.xpose.msra.mxu0 0.0
    %800 = vmatprep.subr.mxu0 0.0
    %801 = vmatpush1.xpose.msra.mxu0 0.0
    %802 = vmatprep.subr.mxu0 0.0
    %803 = vmatpush1.xpose.msra.mxu0 0.0
    %804 = vmatprep.subr.mxu0 0.0
    %805 = vmatpush1.xpose.msra.mxu0 0.0
    %806 = vmatprep.subr.mxu0 0.0
    %807 = vmatpush1.xpose.msra.mxu0 0.0
    %808 = vmatprep.subr.mxu0 0.0
    %809 = vmatpush1.xpose.msra.mxu0 0.0
    %810 = vmatprep.subr.mxu0 0.0
    %811 = vmatpush1.xpose.msra.mxu0 0.0
    %812 = vmatprep.subr.mxu0 0.0
    %813 = vmatpush1.xpose.msra.mxu0 0.0
    %814 = vmatprep.subr.mxu0 0.0
    %815 = vmatpush1.xpose.msra.mxu0 0.0
    %816 = vmatprep.subr.mxu0 0.0
    %817 = vmatpush1.xpose.msra.mxu0 0.0
    %818 = vmatprep.subr.mxu0 0.0
    %819 = vmatpush1.xpose.msra.mxu0 0.0
    %820 = vmatprep.subr.mxu0 0.0
    %821 = vmatpush1.xpose.msra.mxu0 0.0
    %822 = vmatprep.subr.mxu0 0.0
    %823 = vmatpush1.xpose.msra.mxu0 0.0
    %824 = vmatprep.subr.mxu0 0.0
    %825 = vmatpush1.xpose.msra.mxu0 0.0
    %826 = vmatprep.mubr.f32.mxu0 0.0
    %827 = vmatmul.mubr.f32.gmra.mrb[0].mxu0 %v754
    %v828 = vpop.f32.mrb[0].mxu0
    %v829 = vadd.f32 %v40, %v828
    %v830 = vpop.f32.mrb[0].mxu0
    %831 = vmatprep.mubr.f32.mxu0 0.0
    %832 = vmatmul.mubr.f32.gmra.mrb[0].mxu0 %v756
    %v833 = vpop.f32.mrb[0].mxu0
    %v834 = vadd.f32 %v40, %v833
    %v835 = vpop.f32.mrb[0].mxu0
    %836 = vdwg.mxu0
    %837 = vrot.lane.b32.xlu0 %v178, 120
    %v838 = vpop.permute.xlu0 %837
    %839 = vrot.lane.b32.xlu0 %v183, 120
    %v840 = vpop.permute.xlu0 %839
    %841 = vrot.lane.b32.xlu0 %v267, 120
    %v842 = vpop.permute.xlu0 %841
    %843 = vrot.lane.b32.xlu0 %v272, 120
    %v844 = vpop.permute.xlu0 %843
    %v845 = vsel %vm364, %v838, 0
    %v847 = vsel %vm364, %v840, 0
    %v849 = vsel %vm364, %v842, 0
    %v851 = vsel %vm364, %v844, 0
    %853 = vmatprep.subr.mxu0 0.0
    %854 = vmatpush1.xpose.msra.mxu0 %v849
    %855 = vmatprep.subr.mxu0 0.0
    %856 = vmatpush1.xpose.msra.mxu0 %v851
    %857 = vmatprep.subr.mxu0 0.0
    %858 = vmatpush1.xpose.msra.mxu0 0.0
    %859 = vmatprep.subr.mxu0 0.0
    %860 = vmatpush1.xpose.msra.mxu0 0.0
    %861 = vmatprep.subr.mxu0 0.0
    %862 = vmatpush1.xpose.msra.mxu0 0.0
    %863 = vmatprep.subr.mxu0 0.0
    %864 = vmatpush1.xpose.msra.mxu0 0.0
    %865 = vmatprep.subr.mxu0 0.0
    %866 = vmatpush1.xpose.msra.mxu0 0.0
    %867 = vmatprep.subr.mxu0 0.0
    %868 = vmatpush1.xpose.msra.mxu0 0.0
    %869 = vmatprep.subr.mxu0 0.0
    %870 = vmatpush1.xpose.msra.mxu0 0.0
    %871 = vmatprep.subr.mxu0 0.0
    %872 = vmatpush1.xpose.msra.mxu0 0.0
    %873 = vmatprep.subr.mxu0 0.0
    %874 = vmatpush1.xpose.msra.mxu0 0.0
    %875 = vmatprep.subr.mxu0 0.0
    %876 = vmatpush1.xpose.msra.mxu0 0.0
    %877 = vmatprep.subr.mxu0 0.0
    %878 = vmatpush1.xpose.msra.mxu0 0.0
    %879 = vmatprep.subr.mxu0 0.0
    %880 = vmatpush1.xpose.msra.mxu0 0.0
    %881 = vmatprep.subr.mxu0 0.0
    %882 = vmatpush1.xpose.msra.mxu0 0.0
    %883 = vmatprep.subr.mxu0 0.0
    %884 = vmatpush1.xpose.msra.mxu0 0.0
    %885 = vmatprep.subr.mxu0 0.0
    %886 = vmatpush1.xpose.msra.mxu0 0.0
    %887 = vmatprep.subr.mxu0 0.0
    %888 = vmatpush1.xpose.msra.mxu0 0.0
    %889 = vmatprep.subr.mxu0 0.0
    %890 = vmatpush1.xpose.msra.mxu0 0.0
    %891 = vmatprep.subr.mxu0 0.0
    %892 = vmatpush1.xpose.msra.mxu0 0.0
    %893 = vmatprep.subr.mxu0 0.0
    %894 = vmatpush1.xpose.msra.mxu0 0.0
    %895 = vmatprep.subr.mxu0 0.0
    %896 = vmatpush1.xpose.msra.mxu0 0.0
    %897 = vmatprep.subr.mxu0 0.0
    %898 = vmatpush1.xpose.msra.mxu0 0.0
    %899 = vmatprep.subr.mxu0 0.0
    %900 = vmatpush1.xpose.msra.mxu0 0.0
    %901 = vmatprep.subr.mxu0 0.0
    %902 = vmatpush1.xpose.msra.mxu0 0.0
    %903 = vmatprep.subr.mxu0 0.0
    %904 = vmatpush1.xpose.msra.mxu0 0.0
    %905 = vmatprep.subr.mxu0 0.0
    %906 = vmatpush1.xpose.msra.mxu0 0.0
    %907 = vmatprep.subr.mxu0 0.0
    %908 = vmatpush1.xpose.msra.mxu0 0.0
    %909 = vmatprep.subr.mxu0 0.0
    %910 = vmatpush1.xpose.msra.mxu0 0.0
    %911 = vmatprep.subr.mxu0 0.0
    %912 = vmatpush1.xpose.msra.mxu0 0.0
    %913 = vmatprep.subr.mxu0 0.0
    %914 = vmatpush1.xpose.msra.mxu0 0.0
    %915 = vmatprep.subr.mxu0 0.0
    %916 = vmatpush1.xpose.msra.mxu0 0.0
    %917 = vmatprep.mubr.f32.mxu0 0.0
    %918 = vmatmul.mubr.f32.gmra.mrb[0].mxu0 %v845
    %v919 = vpop.f32.mrb[0].mxu0
    %v920 = vadd.f32 %v40, %v919
    %v921 = vpop.f32.mrb[0].mxu0
    %922 = vmatprep.mubr.f32.mxu0 0.0
    %923 = vmatmul.mubr.f32.gmra.mrb[0].mxu0 %v847
    %v924 = vpop.f32.mrb[0].mxu0
    %v925 = vadd.f32 %v40, %v924
    %v926 = vpop.f32.mrb[0].mxu0
    %927 = vdwg.mxu0
    %v928 = vsel %vm539, %v829, -inf
    %929 = vmax.xlane.f32.xlu0 %v928
    %v930 = vpop.xlane.xlu0 %929
    %v931 = vsel %vm539, %v834, -inf
    %932 = vmax.xlane.f32.xlu0 %v931
    %v933 = vpop.xlane.xlu0 %932
    %v934 = vsel %vm539, %v920, -inf
    %935 = vmax.xlane.f32.xlu0 %v934
    %v936 = vpop.xlane.xlu0 %935
    %v937 = vsel %vm539, %v925, -inf
    %938 = vmax.xlane.f32.xlu0 %v937
    %v939 = vpop.xlane.xlu0 %938
    %v940 = vsub.f32 %v829, %v930
    %v941 = vsub.f32 %v834, %v933
    %v942 = vsub.f32 %v920, %v936
    %v943 = vsub.f32 %v925, %v939
    %v944 = vmul.f32 %v940, 1.442695
    %v945 = vpow.pop %v944
    %v946 = vmul.f32 %v941, 1.442695
    %v947 = vpow.pop %v946
    %v948 = vmul.f32 %v942, 1.442695
    %v949 = vpow.pop %v948
    %v950 = vmul.f32 %v943, 1.442695
    %v951 = vpow.pop %v950
    %v952 = vsel %vm539, %v945, 0.0
    %953 = vadd.xlane.f32.xlu0 %v952
    %v954 = vpop.xlane.xlu0 %953
    %v955 = vsel %vm539, %v947, 0.0
    %956 = vadd.xlane.f32.xlu0 %v955
    %v957 = vpop.xlane.xlu0 %956
    %v958 = vsel %vm539, %v949, 0.0
    %959 = vadd.xlane.f32.xlu0 %v958
    %v960 = vpop.xlane.xlu0 %959
    %v961 = vsel %vm539, %v951, 0.0
    %962 = vadd.xlane.f32.xlu0 %v961
    %v963 = vpop.xlane.xlu0 %962
    %v964 = vrcp.pop %v954
    %v965 = vrcp.pop %v957
    %v966 = vrcp.pop %v960
    %v967 = vrcp.pop %v963
    %v968 = vmul.f32 %v945, %v964
    %v969 = vmul.f32 %v947, %v965
    %v970 = vmul.f32 %v949, %v966
    %v971 = vmul.f32 %v951, %v967
    %974 = vrot.lane.b32.xlu0 %v346, 120
    %v975 = vpop.permute.xlu0 %974
    %976 = vrot.lane.b32.xlu0 %v351, 120
    %v977 = vpop.permute.xlu0 %976
    %v981 = vsel %vm539, %v968, 0
    %v984 = vsel %vm539, %v969, 0
    %986 = vmatprep.subr.mxu0 0.0
    %987 = vmatpush1.msra.mxu0 %v975
    %988 = vmatprep.subr.mxu0 0.0
    %989 = vmatpush1.msra.mxu0 %v977
    %990 = vmatprep.subr.mxu0 0.0
    %991 = vmatpush1.msra.mxu0 0.0
    %992 = vmatprep.subr.mxu0 0.0
    %993 = vmatpush1.msra.mxu0 0.0
    %994 = vmatprep.subr.mxu0 0.0
    %995 = vmatpush1.msra.mxu0 0.0
    %996 = vmatprep.subr.mxu0 0.0
    %997 = vmatpush1.msra.mxu0 0.0
    %998 = vmatprep.subr.mxu0 0.0
    %999 = vmatpush1.msra.mxu0 0.0
    %1000 = vmatprep.subr.mxu0 0.0
    %1001 = vmatpush1.msra.mxu0 0.0
    %1002 = vmatprep.subr.mxu0 0.0
    %1003 = vmatpush1.msra.mxu0 0.0
    %1004 = vmatprep.subr.mxu0 0.0
    %1005 = vmatpush1.msra.mxu0 0.0
    %1006 = vmatprep.subr.mxu0 0.0
    %1007 = vmatpush1.msra.mxu0 0.0
    %1008 = vmatprep.subr.mxu0 0.0
    %1009 = vmatpush1.msra.mxu0 0.0
    %1010 = vmatprep.subr.mxu0 0.0
    %1011 = vmatpush1.msra.mxu0 0.0
    %1012 = vmatprep.subr.mxu0 0.0
    %1013 = vmatpush1.msra.mxu0 0.0
    %1014 = vmatprep.subr.mxu0 0.0
    %1015 = vmatpush1.msra.mxu0 0.0
    %1016 = vmatprep.subr.mxu0 0.0
    %1017 = vmatpush1.msra.mxu0 0.0
    %1018 = vmatprep.subr.mxu0 0.0
    %1019 = vmatpush1.msra.mxu0 0.0
    %1020 = vmatprep.subr.mxu0 0.0
    %1021 = vmatpush1.msra.mxu0 0.0
    %1022 = vmatprep.subr.mxu0 0.0
    %1023 = vmatpush1.msra.mxu0 0.0
    %1024 = vmatprep.subr.mxu0 0.0
    %1025 = vmatpush1.msra.mxu0 0.0
    %1026 = vmatprep.subr.mxu0 0.0
    %1027 = vmatpush1.msra.mxu0 0.0
    %1028 = vmatprep.subr.mxu0 0.0
    %1029 = vmatpush1.msra.mxu0 0.0
    %1030 = vmatprep.subr.mxu0 0.0
    %1031 = vmatpush1.msra.mxu0 0.0
    %1032 = vmatprep.subr.mxu0 0.0
    %1033 = vmatpush1.msra.mxu0 0.0
    %1034 = vmatprep.subr.mxu0 0.0
    %1035 = vmatpush1.msra.mxu0 0.0
    %1036 = vmatprep.subr.mxu0 0.0
    %1037 = vmatpush1.msra.mxu0 0.0
    %1038 = vmatprep.subr.mxu0 0.0
    %1039 = vmatpush1.msra.mxu0 0.0
    %1040 = vmatprep.subr.mxu0 0.0
    %1041 = vmatpush1.msra.mxu0 0.0
    %1042 = vmatprep.subr.mxu0 0.0
    %1043 = vmatpush1.msra.mxu0 0.0
    %1044 = vmatprep.subr.mxu0 0.0
    %1045 = vmatpush1.msra.mxu0 0.0
    %1046 = vmatprep.subr.mxu0 0.0
    %1047 = vmatpush1.msra.mxu0 0.0
    %1048 = vmatprep.subr.mxu0 0.0
    %1049 = vmatpush1.msra.mxu0 0.0
    %1050 = vmatprep.mubr.f32.mxu0 0.0
    %1051 = vmatmul.mubr.f32.gmra.mrb[0].mxu0 %v981
    %v1052 = vpop.f32.mrb[0].mxu0
    %v1053 = vadd.f32 0.0, %v1052
    %v1054 = vpop.f32.mrb[0].mxu0
    %1055 = vmatprep.mubr.f32.mxu0 0.0
    %1056 = vmatmul.mubr.f32.gmra.mrb[0].mxu0 %v984
    %v1057 = vpop.f32.mrb[0].mxu0
    %v1058 = vadd.f32 0.0, %v1057
    %v1059 = vpop.f32.mrb[0].mxu0
    %1060 = vdwg.mxu0
    %1063 = vrot.lane.b32.xlu0 %v356, 120
    %v1064 = vpop.permute.xlu0 %1063
    %1065 = vrot.lane.b32.xlu0 %v361, 120
    %v1066 = vpop.permute.xlu0 %1065
    %v1070 = vsel %vm539, %v970, 0
    %v1073 = vsel %vm539, %v971, 0
    %1075 = vmatprep.subr.mxu0 0.0
    %1076 = vmatpush1.msra.mxu0 %v1064
    %1077 = vmatprep.subr.mxu0 0.0
    %1078 = vmatpush1.msra.mxu0 %v1066
    %1079 = vmatprep.subr.mxu0 0.0
    %1080 = vmatpush1.msra.mxu0 0.0
    %1081 = vmatprep.subr.mxu0 0.0
    %1082 = vmatpush1.msra.mxu0 0.0
    %1083 = vmatprep.subr.mxu0 0.0
    %1084 = vmatpush1.msra.mxu0 0.0
    %1085 = vmatprep.subr.mxu0 0.0
    %1086 = vmatpush1.msra.mxu0 0.0
    %1087 = vmatprep.subr.mxu0 0.0
    %1088 = vmatpush1.msra.mxu0 0.0
    %1089 = vmatprep.subr.mxu0 0.0
    %1090 = vmatpush1.msra.mxu0 0.0
    %1091 = vmatprep.subr.mxu0 0.0
    %1092 = vmatpush1.msra.mxu0 0.0
    %1093 = vmatprep.subr.mxu0 0.0
    %1094 = vmatpush1.msra.mxu0 0.0
    %1095 = vmatprep.subr.mxu0 0.0
    %1096 = vmatpush1.msra.mxu0 0.0
    %1097 = vmatprep.subr.mxu0 0.0
    %1098 = vmatpush1.msra.mxu0 0.0
    %1099 = vmatprep.subr.mxu0 0.0
    %1100 = vmatpush1.msra.mxu0 0.0
    %1101 = vmatprep.subr.mxu0 0.0
    %1102 = vmatpush1.msra.mxu0 0.0
    %1103 = vmatprep.subr.mxu0 0.0
    %1104 = vmatpush1.msra.mxu0 0.0
    %1105 = vmatprep.subr.mxu0 0.0
    %1106 = vmatpush1.msra.mxu0 0.0
    %1107 = vmatprep.subr.mxu0 0.0
    %1108 = vmatpush1.msra.mxu0 0.0
    %1109 = vmatprep.subr.mxu0 0.0
    %1110 = vmatpush1.msra.mxu0 0.0
    %1111 = vmatprep.subr.mxu0 0.0
    %1112 = vmatpush1.msra.mxu0 0.0
    %1113 = vmatprep.subr.mxu0 0.0
    %1114 = vmatpush1.msra.mxu0 0.0
    %1115 = vmatprep.subr.mxu0 0.0
    %1116 = vmatpush1.msra.mxu0 0.0
    %1117 = vmatprep.subr.mxu0 0.0
    %1118 = vmatpush1.msra.mxu0 0.0
    %1119 = vmatprep.subr.mxu0 0.0
    %1120 = vmatpush1.msra.mxu0 0.0
    %1121 = vmatprep.subr.mxu0 0.0
    %1122 = vmatpush1.msra.mxu0 0.0
    %1123 = vmatprep.subr.mxu0 0.0
    %1124 = vmatpush1.msra.mxu0 0.0
    %1125 = vmatprep.subr.mxu0 0.0
    %1126 = vmatpush1.msra.mxu0 0.0
    %1127 = vmatprep.subr.mxu0 0.0
    %1128 = vmatpush1.msra.mxu0 0.0
    %1129 = vmatprep.subr.mxu0 0.0
    %1130 = vmatpush1.msra.mxu0 0.0
    %1131 = vmatprep.subr.mxu0 0.0
    %1132 = vmatpush1.msra.mxu0 0.0
    %1133 = vmatprep.subr.mxu0 0.0
    %1134 = vmatpush1.msra.mxu0 0.0
    %1135 = vmatprep.subr.mxu0 0.0
    %1136 = vmatpush1.msra.mxu0 0.0
    %1137 = vmatprep.subr.mxu0 0.0
    %1138 = vmatpush1.msra.mxu0 0.0
    %1139 = vmatprep.mubr.f32.mxu0 0.0
    %1140 = vmatmul.mubr.f32.gmra.mrb[0].mxu0 %v1070
    %v1141 = vpop.f32.mrb[0].mxu0
    %v1142 = vadd.f32 0.0, %v1141
    %v1143 = vpop.f32.mrb[0].mxu0
    %1144 = vmatprep.mubr.f32.mxu0 0.0
    %1145 = vmatmul.mubr.f32.gmra.mrb[0].mxu0 %v1073
    %v1146 = vpop.f32.mrb[0].mxu0
    %v1147 = vadd.f32 0.0, %v1146
    %v1148 = vpop.f32.mrb[0].mxu0
    %1149 = vdwg.mxu0
    %1150 = vrot.lane.b32.xlu0 %v168, 112
    %v1151 = vpop.permute.xlu0 %1150
    %1152 = vrot.lane.b32.xlu0 %v173, 112
    %v1153 = vpop.permute.xlu0 %1152
    %1154 = vrot.lane.b32.xlu0 %v257, 112
    %v1155 = vpop.permute.xlu0 %1154
    %1156 = vrot.lane.b32.xlu0 %v262, 112
    %v1157 = vpop.permute.xlu0 %1156
    %v1158 = vsel %vm364, %v1151, 0
    %v1160 = vsel %vm364, %v1153, 0
    %v1162 = vsel %vm364, %v1155, 0
    %v1164 = vsel %vm364, %v1157, 0
    %1166 = vmatprep.subr.mxu0 0.0
    %1167 = vmatpush1.xpose.msra.mxu0 %v1162
    %1168 = vmatprep.subr.mxu0 0.0
    %1169 = vmatpush1.xpose.msra.mxu0 %v1164
    %1170 = vmatprep.subr.mxu0 0.0
    %1171 = vmatpush1.xpose.msra.mxu0 0.0
    %1172 = vmatprep.subr.mxu0 0.0
    %1173 = vmatpush1.xpose.msra.mxu0 0.0
    %1174 = vmatprep.subr.mxu0 0.0
    %1175 = vmatpush1.xpose.msra.mxu0 0.0
    %1176 = vmatprep.subr.mxu0 0.0
    %1177 = vmatpush1.xpose.msra.mxu0 0.0
    %1178 = vmatprep.subr.mxu0 0.0
    %1179 = vmatpush1.xpose.msra.mxu0 0.0
    %1180 = vmatprep.subr.mxu0 0.0
    %1181 = vmatpush1.xpose.msra.mxu0 0.0
    %1182 = vmatprep.subr.mxu0 0.0
    %1183 = vmatpush1.xpose.msra.mxu0 0.0
    %1184 = vmatprep.subr.mxu0 0.0
    %1185 = vmatpush1.xpose.msra.mxu0 0.0
    %1186 = vmatprep.subr.mxu0 0.0
    %1187 = vmatpush1.xpose.msra.mxu0 0.0
    %1188 = vmatprep.subr.mxu0 0.0
    %1189 = vmatpush1.xpose.msra.mxu0 0.0
    %1190 = vmatprep.subr.mxu0 0.0
    %1191 = vmatpush1.xpose.msra.mxu0 0.0
    %1192 = vmatprep.subr.mxu0 0.0
    %1193 = vmatpush1.xpose.msra.mxu0 0.0
    %1194 = vmatprep.subr.mxu0 0.0
    %1195 = vmatpush1.xpose.msra.mxu0 0.0
    %1196 = vmatprep.subr.mxu0 0.0
    %1197 = vmatpush1.xpose.msra.mxu0 0.0
    %1198 = vmatprep.subr.mxu0 0.0
    %1199 = vmatpush1.xpose.msra.mxu0 0.0
    %1200 = vmatprep.subr.mxu0 0.0
    %1201 = vmatpush1.xpose.msra.mxu0 0.0
    %1202 = vmatprep.subr.mxu0 0.0
    %1203 = vmatpush1.xpose.msra.mxu0 0.0
    %1204 = vmatprep.subr.mxu0 0.0
    %1205 = vmatpush1.xpose.msra.mxu0 0.0
    %1206 = vmatprep.subr.mxu0 0.0
    %1207 = vmatpush1.xpose.msra.mxu0 0.0
    %1208 = vmatprep.subr.mxu0 0.0
    %1209 = vmatpush1.xpose.msra.mxu0 0.0
    %1210 = vmatprep.subr.mxu0 0.0
    %1211 = vmatpush1.xpose.msra.mxu0 0.0
    %1212 = vmatprep.subr.mxu0 0.0
    %1213 = vmatpush1.xpose.msra.mxu0 0.0
    %1214 = vmatprep.subr.mxu0 0.0
    %1215 = vmatpush1.xpose.msra.mxu0 0.0
    %1216 = vmatprep.subr.mxu0 0.0
    %1217 = vmatpush1.xpose.msra.mxu0 0.0
    %1218 = vmatprep.subr.mxu0 0.0
    %1219 = vmatpush1.xpose.msra.mxu0 0.0
    %1220 = vmatprep.subr.mxu0 0.0
    %1221 = vmatpush1.xpose.msra.mxu0 0.0
    %1222 = vmatprep.subr.mxu0 0.0
    %1223 = vmatpush1.xpose.msra.mxu0 0.0
    %1224 = vmatprep.subr.mxu0 0.0
    %1225 = vmatpush1.xpose.msra.mxu0 0.0
    %1226 = vmatprep.subr.mxu0 0.0
    %1227 = vmatpush1.xpose.msra.mxu0 0.0
    %1228 = vmatprep.subr.mxu0 0.0
    %1229 = vmatpush1.xpose.msra.mxu0 0.0
    %1230 = vmatprep.mubr.f32.mxu0 0.0
    %1231 = vmatmul.mubr.f32.gmra.mrb[0].mxu0 %v1158
    %v1232 = vpop.f32.mrb[0].mxu0
    %v1233 = vadd.f32 %v40, %v1232
    %v1234 = vpop.f32.mrb[0].mxu0
    %1235 = vmatprep.mubr.f32.mxu0 0.0
    %1236 = vmatmul.mubr.f32.gmra.mrb[0].mxu0 %v1160
    %v1237 = vpop.f32.mrb[0].mxu0
    %v1238 = vadd.f32 %v40, %v1237
    %v1239 = vpop.f32.mrb[0].mxu0
    %1240 = vdwg.mxu0
    %1241 = vrot.lane.b32.xlu0 %v178, 112
    %v1242 = vpop.permute.xlu0 %1241
    %1243 = vrot.lane.b32.xlu0 %v183, 112
    %v1244 = vpop.permute.xlu0 %1243
    %1245 = vrot.lane.b32.xlu0 %v267, 112
    %v1246 = vpop.permute.xlu0 %1245
    %1247 = vrot.lane.b32.xlu0 %v272, 112
    %v1248 = vpop.permute.xlu0 %1247
    %v1249 = vsel %vm364, %v1242, 0
    %v1251 = vsel %vm364, %v1244, 0
    %v1253 = vsel %vm364, %v1246, 0
    %v1255 = vsel %vm364, %v1248, 0
    %1257 = vmatprep.subr.mxu0 0.0
    %1258 = vmatpush1.xpose.msra.mxu0 %v1253
    %1259 = vmatprep.subr.mxu0 0.0
    %1260 = vmatpush1.xpose.msra.mxu0 %v1255
    %1261 = vmatprep.subr.mxu0 0.0
    %1262 = vmatpush1.xpose.msra.mxu0 0.0
    %1263 = vmatprep.subr.mxu0 0.0
    %1264 = vmatpush1.xpose.msra.mxu0 0.0
    %1265 = vmatprep.subr.mxu0 0.0
    %1266 = vmatpush1.xpose.msra.mxu0 0.0
    %1267 = vmatprep.subr.mxu0 0.0
    %1268 = vmatpush1.xpose.msra.mxu0 0.0
    %1269 = vmatprep.subr.mxu0 0.0
    %1270 = vmatpush1.xpose.msra.mxu0 0.0
    %1271 = vmatprep.subr.mxu0 0.0
    %1272 = vmatpush1.xpose.msra.mxu0 0.0
    %1273 = vmatprep.subr.mxu0 0.0
    %1274 = vmatpush1.xpose.msra.mxu0 0.0
    %1275 = vmatprep.subr.mxu0 0.0
    %1276 = vmatpush1.xpose.msra.mxu0 0.0
    %1277 = vmatprep.subr.mxu0 0.0
    %1278 = vmatpush1.xpose.msra.mxu0 0.0
    %1279 = vmatprep.subr.mxu0 0.0
    %1280 = vmatpush1.xpose.msra.mxu0 0.0
    %1281 = vmatprep.subr.mxu0 0.0
    %1282 = vmatpush1.xpose.msra.mxu0 0.0
    %1283 = vmatprep.subr.mxu0 0.0
    %1284 = vmatpush1.xpose.msra.mxu0 0.0
    %1285 = vmatprep.subr.mxu0 0.0
    %1286 = vmatpush1.xpose.msra.mxu0 0.0
    %1287 = vmatprep.subr.mxu0 0.0
    %1288 = vmatpush1.xpose.msra.mxu0 0.0
    %1289 = vmatprep.subr.mxu0 0.0
    %1290 = vmatpush1.xpose.msra.mxu0 0.0
    %1291 = vmatprep.subr.mxu0 0.0
    %1292 = vmatpush1.xpose.msra.mxu0 0.0
    %1293 = vmatprep.subr.mxu0 0.0
    %1294 = vmatpush1.xpose.msra.mxu0 0.0
    %1295 = vmatprep.subr.mxu0 0.0
    %1296 = vmatpush1.xpose.msra.mxu0 0.0
    %1297 = vmatprep.subr.mxu0 0.0
    %1298 = vmatpush1.xpose.msra.mxu0 0.0
    %1299 = vmatprep.subr.mxu0 0.0
    %1300 = vmatpush1.xpose.msra.mxu0 0.0
    %1301 = vmatprep.subr.mxu0 0.0
    %1302 = vmatpush1.xpose.msra.mxu0 0.0
    %1303 = vmatprep.subr.mxu0 0.0
    %1304 = vmatpush1.xpose.msra.mxu0 0.0
    %1305 = vmatprep.subr.mxu0 0.0
    %1306 = vmatpush1.xpose.msra.mxu0 0.0
    %1307 = vmatprep.subr.mxu0 0.0
    %1308 = vmatpush1.xpose.msra.mxu0 0.0
    %1309 = vmatprep.subr.mxu0 0.0
    %1310 = vmatpush1.xpose.msra.mxu0 0.0
    %1311 = vmatprep.subr.mxu0 0.0
    %1312 = vmatpush1.xpose.msra.mxu0 0.0
    %1313 = vmatprep.subr.mxu0 0.0
    %1314 = vmatpush1.xpose.msra.mxu0 0.0
    %1315 = vmatprep.subr.mxu0 0.0
    %1316 = vmatpush1.xpose.msra.mxu0 0.0
    %1317 = vmatprep.subr.mxu0 0.0
    %1318 = vmatpush1.xpose.msra.mxu0 0.0
    %1319 = vmatprep.subr.mxu0 0.0
    %1320 = vmatpush1.xpose.msra.mxu0 0.0
    %1321 = vmatprep.mubr.f32.mxu0 0.0
    %1322 = vmatmul.mubr.f32.gmra.mrb[0].mxu0 %v1249
    %v1323 = vpop.f32.mrb[0].mxu0
    %v1324 = vadd.f32 %v40, %v1323
    %v1325 = vpop.f32.mrb[0].mxu0
    %1326 = vmatprep.mubr.f32.mxu0 0.0
    %1327 = vmatmul.mubr.f32.gmra.mrb[0].mxu0 %v1251
    %v1328 = vpop.f32.mrb[0].mxu0
    %v1329 = vadd.f32 %v40, %v1328
    %v1330 = vpop.f32.mrb[0].mxu0
    %1331 = vdwg.mxu0
    %v1332 = vsel %vm539, %v1233, -inf
    %1333 = vmax.xlane.f32.xlu0 %v1332
    %v1334 = vpop.xlane.xlu0 %1333
    %v1335 = vsel %vm539, %v1238, -inf
    %1336 = vmax.xlane.f32.xlu0 %v1335
    %v1337 = vpop.xlane.xlu0 %1336
    %v1338 = vsel %vm539, %v1324, -inf
    %1339 = vmax.xlane.f32.xlu0 %v1338
    %v1340 = vpop.xlane.xlu0 %1339
    %v1341 = vsel %vm539, %v1329, -inf
    %1342 = vmax.xlane.f32.xlu0 %v1341
    %v1343 = vpop.xlane.xlu0 %1342
    %v1344 = vsub.f32 %v1233, %v1334
    %v1345 = vsub.f32 %v1238, %v1337
    %v1346 = vsub.f32 %v1324, %v1340
    %v1347 = vsub.f32 %v1329, %v1343
    %v1348 = vmul.f32 %v1344, 1.442695
    %v1349 = vpow.pop %v1348
    %v1350 = vmul.f32 %v1345, 1.442695
    %v1351 = vpow.pop %v1350
    %v1352 = vmul.f32 %v1346, 1.442695
    %v1353 = vpow.pop %v1352
    %v1354 = vmul.f32 %v1347, 1.442695
    %v1355 = vpow.pop %v1354
    %v1356 = vsel %vm539, %v1349, 0.0
    %1357 = vadd.xlane.f32.xlu0 %v1356
    %v1358 = vpop.xlane.xlu0 %1357
    %v1359 = vsel %vm539, %v1351, 0.0
    %1360 = vadd.xlane.f32.xlu0 %v1359
    %v1361 = vpop.xlane.xlu0 %1360
    %v1362 = vsel %vm539, %v1353, 0.0
    %1363 = vadd.xlane.f32.xlu0 %v1362
    %v1364 = vpop.xlane.xlu0 %1363
    %v1365 = vsel %vm539, %v1355, 0.0
    %1366 = vadd.xlane.f32.xlu0 %v1365
    %v1367 = vpop.xlane.xlu0 %1366
    %v1368 = vrcp.pop %v1358
    %v1369 = vrcp.pop %v1361
    %v1370 = vrcp.pop %v1364
    %v1371 = vrcp.pop %v1367
    %v1372 = vmul.f32 %v1349, %v1368
    %v1373 = vmul.f32 %v1351, %v1369
    %v1374 = vmul.f32 %v1353, %v1370
    %v1375 = vmul.f32 %v1355, %v1371
    %1376 = vrot.lane.b32.xlu0 %v346, 112
    %v1377 = vpop.permute.xlu0 %1376
    %1378 = vrot.lane.b32.xlu0 %v351, 112
    %v1379 = vpop.permute.xlu0 %1378
    %v1383 = vsel %vm539, %v1372, 0
    %v1386 = vsel %vm539, %v1373, 0
    %1388 = vmatprep.subr.mxu0 0.0
    %1389 = vmatpush1.msra.mxu0 %v1377
    %1390 = vmatprep.subr.mxu0 0.0
    %1391 = vmatpush1.msra.mxu0 %v1379
    %1392 = vmatprep.subr.mxu0 0.0
    %1393 = vmatpush1.msra.mxu0 0.0
    %1394 = vmatprep.subr.mxu0 0.0
    %1395 = vmatpush1.msra.mxu0 0.0
    %1396 = vmatprep.subr.mxu0 0.0
    %1397 = vmatpush1.msra.mxu0 0.0
    %1398 = vmatprep.subr.mxu0 0.0
    %1399 = vmatpush1.msra.mxu0 0.0
    %1400 = vmatprep.subr.mxu0 0.0
    %1401 = vmatpush1.msra.mxu0 0.0
    %1402 = vmatprep.subr.mxu0 0.0
    %1403 = vmatpush1.msra.mxu0 0.0
    %1404 = vmatprep.subr.mxu0 0.0
    %1405 = vmatpush1.msra.mxu0 0.0
    %1406 = vmatprep.subr.mxu0 0.0
    %1407 = vmatpush1.msra.mxu0 0.0
    %1408 = vmatprep.subr.mxu0 0.0
    %1409 = vmatpush1.msra.mxu0 0.0
    %1410 = vmatprep.subr.mxu0 0.0
    %1411 = vmatpush1.msra.mxu0 0.0
    %1412 = vmatprep.subr.mxu0 0.0
    %1413 = vmatpush1.msra.mxu0 0.0
    %1414 = vmatprep.subr.mxu0 0.0
    %1415 = vmatpush1.msra.mxu0 0.0
    %1416 = vmatprep.subr.mxu0 0.0
    %1417 = vmatpush1.msra.mxu0 0.0
    %1418 = vmatprep.subr.mxu0 0.0
    %1419 = vmatpush1.msra.mxu0 0.0
    %1420 = vmatprep.subr.mxu0 0.0
    %1421 = vmatpush1.msra.mxu0 0.0
    %1422 = vmatprep.subr.mxu0 0.0
    %1423 = vmatpush1.msra.mxu0 0.0
    %1424 = vmatprep.subr.mxu0 0.0
    %1425 = vmatpush1.msra.mxu0 0.0
    %1426 = vmatprep.subr.mxu0 0.0
    %1427 = vmatpush1.msra.mxu0 0.0
    %1428 = vmatprep.subr.mxu0 0.0
    %1429 = vmatpush1.msra.mxu0 0.0
    %1430 = vmatprep.subr.mxu0 0.0
    %1431 = vmatpush1.msra.mxu0 0.0
    %1432 = vmatprep.subr.mxu0 0.0
    %1433 = vmatpush1.msra.mxu0 0.0
    %1434 = vmatprep.subr.mxu0 0.0
    %1435 = vmatpush1.msra.mxu0 0.0
    %1436 = vmatprep.subr.mxu0 0.0
    %1437 = vmatpush1.msra.mxu0 0.0
    %1438 = vmatprep.subr.mxu0 0.0
    %1439 = vmatpush1.msra.mxu0 0.0
    %1440 = vmatprep.subr.mxu0 0.0
    %1441 = vmatpush1.msra.mxu0 0.0
    %1442 = vmatprep.subr.mxu0 0.0
    %1443 = vmatpush1.msra.mxu0 0.0
    %1444 = vmatprep.subr.mxu0 0.0
    %1445 = vmatpush1.msra.mxu0 0.0
    %1446 = vmatprep.subr.mxu0 0.0
    %1447 = vmatpush1.msra.mxu0 0.0
    %1448 = vmatprep.subr.mxu0 0.0
    %1449 = vmatpush1.msra.mxu0 0.0
    %1450 = vmatprep.subr.mxu0 0.0
    %1451 = vmatpush1.msra.mxu0 0.0
    %1452 = vmatprep.mubr.f32.mxu0 0.0
    %1453 = vmatmul.mubr.f32.gmra.mrb[0].mxu0 %v1383
    %v1454 = vpop.f32.mrb[0].mxu0
    %v1455 = vadd.f32 0.0, %v1454
    %v1456 = vpop.f32.mrb[0].mxu0
    %1457 = vmatprep.mubr.f32.mxu0 0.0
    %1458 = vmatmul.mubr.f32.gmra.mrb[0].mxu0 %v1386
    %v1459 = vpop.f32.mrb[0].mxu0
    %v1460 = vadd.f32 0.0, %v1459
    %v1461 = vpop.f32.mrb[0].mxu0
    %1462 = vdwg.mxu0
    %1463 = vrot.lane.b32.xlu0 %v356, 112
    %v1464 = vpop.permute.xlu0 %1463
    %1465 = vrot.lane.b32.xlu0 %v361, 112
    %v1466 = vpop.permute.xlu0 %1465
    %v1470 = vsel %vm539, %v1374, 0
    %v1473 = vsel %vm539, %v1375, 0
    %1475 = vmatprep.subr.mxu0 0.0
    %1476 = vmatpush1.msra.mxu0 %v1464
    %1477 = vmatprep.subr.mxu0 0.0
    %1478 = vmatpush1.msra.mxu0 %v1466
    %1479 = vmatprep.subr.mxu0 0.0
    %1480 = vmatpush1.msra.mxu0 0.0
    %1481 = vmatprep.subr.mxu0 0.0
    %1482 = vmatpush1.msra.mxu0 0.0
    %1483 = vmatprep.subr.mxu0 0.0
    %1484 = vmatpush1.msra.mxu0 0.0
    %1485 = vmatprep.subr.mxu0 0.0
    %1486 = vmatpush1.msra.mxu0 0.0
    %1487 = vmatprep.subr.mxu0 0.0
    %1488 = vmatpush1.msra.mxu0 0.0
    %1489 = vmatprep.subr.mxu0 0.0
    %1490 = vmatpush1.msra.mxu0 0.0
    %1491 = vmatprep.subr.mxu0 0.0
    %1492 = vmatpush1.msra.mxu0 0.0
    %1493 = vmatprep.subr.mxu0 0.0
    %1494 = vmatpush1.msra.mxu0 0.0
    %1495 = vmatprep.subr.mxu0 0.0
    %1496 = vmatpush1.msra.mxu0 0.0
    %1497 = vmatprep.subr.mxu0 0.0
    %1498 = vmatpush1.msra.mxu0 0.0
    %1499 = vmatprep.subr.mxu0 0.0
    %1500 = vmatpush1.msra.mxu0 0.0
    %1501 = vmatprep.subr.mxu0 0.0
    %1502 = vmatpush1.msra.mxu0 0.0
    %1503 = vmatprep.subr.mxu0 0.0
    %1504 = vmatpush1.msra.mxu0 0.0
    %1505 = vmatprep.subr.mxu0 0.0
    %1506 = vmatpush1.msra.mxu0 0.0
    %1507 = vmatprep.subr.mxu0 0.0
    %1508 = vmatpush1.msra.mxu0 0.0
    %1509 = vmatprep.subr.mxu0 0.0
    %1510 = vmatpush1.msra.mxu0 0.0
    %1511 = vmatprep.subr.mxu0 0.0
    %1512 = vmatpush1.msra.mxu0 0.0
    %1513 = vmatprep.subr.mxu0 0.0
    %1514 = vmatpush1.msra.mxu0 0.0
    %1515 = vmatprep.subr.mxu0 0.0
    %1516 = vmatpush1.msra.mxu0 0.0
    %1517 = vmatprep.subr.mxu0 0.0
    %1518 = vmatpush1.msra.mxu0 0.0
    %1519 = vmatprep.subr.mxu0 0.0
    %1520 = vmatpush1.msra.mxu0 0.0
    %1521 = vmatprep.subr.mxu0 0.0
    %1522 = vmatpush1.msra.mxu0 0.0
    %1523 = vmatprep.subr.mxu0 0.0
    %1524 = vmatpush1.msra.mxu0 0.0
    %1525 = vmatprep.subr.mxu0 0.0
    %1526 = vmatpush1.msra.mxu0 0.0
    %1527 = vmatprep.subr.mxu0 0.0
    %1528 = vmatpush1.msra.mxu0 0.0
    %1529 = vmatprep.subr.mxu0 0.0
    %1530 = vmatpush1.msra.mxu0 0.0
    %1531 = vmatprep.subr.mxu0 0.0
    %1532 = vmatpush1.msra.mxu0 0.0
    %1533 = vmatprep.subr.mxu0 0.0
    %1534 = vmatpush1.msra.mxu0 0.0
    %1535 = vmatprep.subr.mxu0 0.0
    %1536 = vmatpush1.msra.mxu0 0.0
    %1537 = vmatprep.subr.mxu0 0.0
    %1538 = vmatpush1.msra.mxu0 0.0
    %1539 = vmatprep.mubr.f32.mxu0 0.0
    %1540 = vmatmul.mubr.f32.gmra.mrb[0].mxu0 %v1470
    %v1541 = vpop.f32.mrb[0].mxu0
    %v1542 = vadd.f32 0.0, %v1541
    %v1543 = vpop.f32.mrb[0].mxu0
    %1544 = vmatprep.mubr.f32.mxu0 0.0
    %1545 = vmatmul.mubr.f32.gmra.mrb[0].mxu0 %v1473
    %v1546 = vpop.f32.mrb[0].mxu0
    %v1547 = vadd.f32 0.0, %v1546
    %v1548 = vpop.f32.mrb[0].mxu0
    %1549 = vdwg.mxu0
    %1550 = vrot.lane.b32.xlu0 %v168, 104
    %v1551 = vpop.permute.xlu0 %1550
    %1552 = vrot.lane.b32.xlu0 %v173, 104
    %v1553 = vpop.permute.xlu0 %1552
    %1554 = vrot.lane.b32.xlu0 %v257, 104
    %v1555 = vpop.permute.xlu0 %1554
    %1556 = vrot.lane.b32.xlu0 %v262, 104
    %v1557 = vpop.permute.xlu0 %1556
    %v1558 = vsel %vm364, %v1551, 0
    %v1560 = vsel %vm364, %v1553, 0
    %v1562 = vsel %vm364, %v1555, 0
    %v1564 = vsel %vm364, %v1557, 0
    %1566 = vmatprep.subr.mxu0 0.0
    %1567 = vmatpush1.xpose.msra.mxu0 %v1562
    %1568 = vmatprep.subr.mxu0 0.0
    %1569 = vmatpush1.xpose.msra.mxu0 %v1564
    %1570 = vmatprep.subr.mxu0 0.0
    %1571 = vmatpush1.xpose.msra.mxu0 0.0
    %1572 = vmatprep.subr.mxu0 0.0
    %1573 = vmatpush1.xpose.msra.mxu0 0.0
    %1574 = vmatprep.subr.mxu0 0.0
    %1575 = vmatpush1.xpose.msra.mxu0 0.0
    %1576 = vmatprep.subr.mxu0 0.0
    %1577 = vmatpush1.xpose.msra.mxu0 0.0
    %1578 = vmatprep.subr.mxu0 0.0
    %1579 = vmatpush1.xpose.msra.mxu0 0.0
    %1580 = vmatprep.subr.mxu0 0.0
    %1581 = vmatpush1.xpose.msra.mxu0 0.0
    %1582 = vmatprep.subr.mxu0 0.0
    %1583 = vmatpush1.xpose.msra.mxu0 0.0
    %1584 = vmatprep.subr.mxu0 0.0
    %1585 = vmatpush1.xpose.msra.mxu0 0.0
    %1586 = vmatprep.subr.mxu0 0.0
    %1587 = vmatpush1.xpose.msra.mxu0 0.0
    %1588 = vmatprep.subr.mxu0 0.0
    %1589 = vmatpush1.xpose.msra.mxu0 0.0
    %1590 = vmatprep.subr.mxu0 0.0
    %1591 = vmatpush1.xpose.msra.mxu0 0.0
    %1592 = vmatprep.subr.mxu0 0.0
    %1593 = vmatpush1.xpose.msra.mxu0 0.0
    %1594 = vmatprep.subr.mxu0 0.0
    %1595 = vmatpush1.xpose.msra.mxu0 0.0
    %1596 = vmatprep.subr.mxu0 0.0
    %1597 = vmatpush1.xpose.msra.mxu0 0.0
    %1598 = vmatprep.subr.mxu0 0.0
    %1599 = vmatpush1.xpose.msra.mxu0 0.0
    %1600 = vmatprep.subr.mxu0 0.0
    %1601 = vmatpush1.xpose.msra.mxu0 0.0
    %1602 = vmatprep.subr.mxu0 0.0
    %1603 = vmatpush1.xpose.msra.mxu0 0.0
    %1604 = vmatprep.subr.mxu0 0.0
    %1605 = vmatpush1.xpose.msra.mxu0 0.0
    %1606 = vmatprep.subr.mxu0 0.0
    %1607 = vmatpush1.xpose.msra.mxu0 0.0
    %1608 = vmatprep.subr.mxu0 0.0
    %1609 = vmatpush1.xpose.msra.mxu0 0.0
    %1610 = vmatprep.subr.mxu0 0.0
    %1611 = vmatpush1.xpose.msra.mxu0 0.0
    %1612 = vmatprep.subr.mxu0 0.0
    %1613 = vmatpush1.xpose.msra.mxu0 0.0
    %1614 = vmatprep.subr.mxu0 0.0
    %1615 = vmatpush1.xpose.msra.mxu0 0.0
    %1616 = vmatprep.subr.mxu0 0.0
    %1617 = vmatpush1.xpose.msra.mxu0 0.0
    %1618 = vmatprep.subr.mxu0 0.0
    %1619 = vmatpush1.xpose.msra.mxu0 0.0
    %1620 = vmatprep.subr.mxu0 0.0
    %1621 = vmatpush1.xpose.msra.mxu0 0.0
    %1622 = vmatprep.subr.mxu0 0.0
    %1623 = vmatpush1.xpose.msra.mxu0 0.0
    %1624 = vmatprep.subr.mxu0 0.0
    %1625 = vmatpush1.xpose.msra.mxu0 0.0
    %1626 = vmatprep.subr.mxu0 0.0
    %1627 = vmatpush1.xpose.msra.mxu0 0.0
    %1628 = vmatprep.subr.mxu0 0.0
    %1629 = vmatpush1.xpose.msra.mxu0 0.0
    %1630 = vmatprep.mubr.f32.mxu0 0.0
    %1631 = vmatmul.mubr.f32.gmra.mrb[0].mxu0 %v1558
    %v1632 = vpop.f32.mrb[0].mxu0
    %v1633 = vadd.f32 %v40, %v1632
    %v1634 = vpop.f32.mrb[0].mxu0
    %1635 = vmatprep.mubr.f32.mxu0 0.0
    %1636 = vmatmul.mubr.f32.gmra.mrb[0].mxu0 %v1560
    %v1637 = vpop.f32.mrb[0].mxu0
    %v1638 = vadd.f32 %v40, %v1637
    %v1639 = vpop.f32.mrb[0].mxu0
    %1640 = vdwg.mxu0
    %1641 = vrot.lane.b32.xlu0 %v178, 104
    %v1642 = vpop.permute.xlu0 %1641
    %1643 = vrot.lane.b32.xlu0 %v183, 104
    %v1644 = vpop.permute.xlu0 %1643
    %1645 = vrot.lane.b32.xlu0 %v267, 104
    %v1646 = vpop.permute.xlu0 %1645
    %1647 = vrot.lane.b32.xlu0 %v272, 104
    %v1648 = vpop.permute.xlu0 %1647
    %v1649 = vsel %vm364, %v1642, 0
    %v1651 = vsel %vm364, %v1644, 0
    %v1653 = vsel %vm364, %v1646, 0
    %v1655 = vsel %vm364, %v1648, 0
    %1657 = vmatprep.subr.mxu0 0.0
    %1658 = vmatpush1.xpose.msra.mxu0 %v1653
    %1659 = vmatprep.subr.mxu0 0.0
    %1660 = vmatpush1.xpose.msra.mxu0 %v1655
    %1661 = vmatprep.subr.mxu0 0.0
    %1662 = vmatpush1.xpose.msra.mxu0 0.0
    %1663 = vmatprep.subr.mxu0 0.0
    %1664 = vmatpush1.xpose.msra.mxu0 0.0
    %1665 = vmatprep.subr.mxu0 0.0
    %1666 = vmatpush1.xpose.msra.mxu0 0.0
    %1667 = vmatprep.subr.mxu0 0.0
    %1668 = vmatpush1.xpose.msra.mxu0 0.0
    %1669 = vmatprep.subr.mxu0 0.0
    %1670 = vmatpush1.xpose.msra.mxu0 0.0
    %1671 = vmatprep.subr.mxu0 0.0
    %1672 = vmatpush1.xpose.msra.mxu0 0.0
    %1673 = vmatprep.subr.mxu0 0.0
    %1674 = vmatpush1.xpose.msra.mxu0 0.0
    %1675 = vmatprep.subr.mxu0 0.0
    %1676 = vmatpush1.xpose.msra.mxu0 0.0
    %1677 = vmatprep.subr.mxu0 0.0
    %1678 = vmatpush1.xpose.msra.mxu0 0.0
    %1679 = vmatprep.subr.mxu0 0.0
    %1680 = vmatpush1.xpose.msra.mxu0 0.0
    %1681 = vmatprep.subr.mxu0 0.0
    %1682 = vmatpush1.xpose.msra.mxu0 0.0
    %1683 = vmatprep.subr.mxu0 0.0
    %1684 = vmatpush1.xpose.msra.mxu0 0.0
    %1685 = vmatprep.subr.mxu0 0.0
    %1686 = vmatpush1.xpose.msra.mxu0 0.0
    %1687 = vmatprep.subr.mxu0 0.0
    %1688 = vmatpush1.xpose.msra.mxu0 0.0
    %1689 = vmatprep.subr.mxu0 0.0
    %1690 = vmatpush1.xpose.msra.mxu0 0.0
    %1691 = vmatprep.subr.mxu0 0.0
    %1692 = vmatpush1.xpose.msra.mxu0 0.0
    %1693 = vmatprep.subr.mxu0 0.0
    %1694 = vmatpush1.xpose.msra.mxu0 0.0
    %1695 = vmatprep.subr.mxu0 0.0
    %1696 = vmatpush1.xpose.msra.mxu0 0.0
    %1697 = vmatprep.subr.mxu0 0.0
    %1698 = vmatpush1.xpose.msra.mxu0 0.0
    %1699 = vmatprep.subr.mxu0 0.0
    %1700 = vmatpush1.xpose.msra.mxu0 0.0
    %1701 = vmatprep.subr.mxu0 0.0
    %1702 = vmatpush1.xpose.msra.mxu0 0.0
    %1703 = vmatprep.subr.mxu0 0.0
    %1704 = vmatpush1.xpose.msra.mxu0 0.0
    %1705 = vmatprep.subr.mxu0 0.0
    %1706 = vmatpush1.xpose.msra.mxu0 0.0
    %1707 = vmatprep.subr.mxu0 0.0
    %1708 = vmatpush1.xpose.msra.mxu0 0.0
    %1709 = vmatprep.subr.mxu0 0.0
    %1710 = vmatpush1.xpose.msra.mxu0 0.0
    %1711 = vmatprep.subr.mxu0 0.0
    %1712 = vmatpush1.xpose.msra.mxu0 0.0
    %1713 = vmatprep.subr.mxu0 0.0
    %1714 = vmatpush1.xpose.msra.mxu0 0.0
    %1715 = vmatprep.subr.mxu0 0.0
    %1716 = vmatpush1.xpose.msra.mxu0 0.0
    %1717 = vmatprep.subr.mxu0 0.0
    %1718 = vmatpush1.xpose.msra.mxu0 0.0
    %1719 = vmatprep.subr.mxu0 0.0
    %1720 = vmatpush1.xpose.msra.mxu0 0.0
    %1721 = vmatprep.mubr.f32.mxu0 0.0
    %1722 = vmatmul.mubr.f32.gmra.mrb[0].mxu0 %v1649
    %v1723 = vpop.f32.mrb[0].mxu0
    %v1724 = vadd.f32 %v40, %v1723
    %v1725 = vpop.f32.mrb[0].mxu0
    %1726 = vmatprep.mubr.f32.mxu0 0.0
    %1727 = vmatmul.mubr.f32.gmra.mrb[0].mxu0 %v1651
    %v1728 = vpop.f32.mrb[0].mxu0
    %v1729 = vadd.f32 %v40, %v1728
    %v1730 = vpop.f32.mrb[0].mxu0
    %1731 = vdwg.mxu0
    %v1732 = vsel %vm539, %v1633, -inf
    %1733 = vmax.xlane.f32.xlu0 %v1732
    %v1734 = vpop.xlane.xlu0 %1733
    %v1735 = vsel %vm539, %v1638, -inf
    %1736 = vmax.xlane.f32.xlu0 %v1735
    %v1737 = vpop.xlane.xlu0 %1736
    %v1738 = vsel %vm539, %v1724, -inf
    %1739 = vmax.xlane.f32.xlu0 %v1738
    %v1740 = vpop.xlane.xlu0 %1739
    %v1741 = vsel %vm539, %v1729, -inf
    %1742 = vmax.xlane.f32.xlu0 %v1741
    %v1743 = vpop.xlane.xlu0 %1742
    %v1744 = vsub.f32 %v1633, %v1734
    %v1745 = vsub.f32 %v1638, %v1737
    %v1746 = vsub.f32 %v1724, %v1740
    %v1747 = vsub.f32 %v1729, %v1743
    %v1748 = vmul.f32 %v1744, 1.442695
    %v1749 = vpow.pop %v1748
    %v1750 = vmul.f32 %v1745, 1.442695
    %v1751 = vpow.pop %v1750
    %v1752 = vmul.f32 %v1746, 1.442695
    %v1753 = vpow.pop %v1752
    %v1754 = vmul.f32 %v1747, 1.442695
    %v1755 = vpow.pop %v1754
    %v1756 = vsel %vm539, %v1749, 0.0
    %1757 = vadd.xlane.f32.xlu0 %v1756
    %v1758 = vpop.xlane.xlu0 %1757
    %v1759 = vsel %vm539, %v1751, 0.0
    %1760 = vadd.xlane.f32.xlu0 %v1759
    %v1761 = vpop.xlane.xlu0 %1760
    %v1762 = vsel %vm539, %v1753, 0.0
    %1763 = vadd.xlane.f32.xlu0 %v1762
    %v1764 = vpop.xlane.xlu0 %1763
    %v1765 = vsel %vm539, %v1755, 0.0
    %1766 = vadd.xlane.f32.xlu0 %v1765
    %v1767 = vpop.xlane.xlu0 %1766
    %v1768 = vrcp.pop %v1758
    %v1769 = vrcp.pop %v1761
    %v1770 = vrcp.pop %v1764
    %v1771 = vrcp.pop %v1767
    %v1772 = vmul.f32 %v1749, %v1768
    %v1773 = vmul.f32 %v1751, %v1769
    %v1774 = vmul.f32 %v1753, %v1770
    %v1775 = vmul.f32 %v1755, %v1771
    %1776 = vrot.lane.b32.xlu0 %v346, 104
    %v1777 = vpop.permute.xlu0 %1776
    %1778 = vrot.lane.b32.xlu0 %v351, 104
    %v1779 = vpop.permute.xlu0 %1778
    %v1783 = vsel %vm539, %v1772, 0
    %v1786 = vsel %vm539, %v1773, 0
    %1788 = vmatprep.subr.mxu0 0.0
    %1789 = vmatpush1.msra.mxu0 %v1777
    %1790 = vmatprep.subr.mxu0 0.0
    %1791 = vmatpush1.msra.mxu0 %v1779
    %1792 = vmatprep.subr.mxu0 0.0
    %1793 = vmatpush1.msra.mxu0 0.0
    %1794 = vmatprep.subr.mxu0 0.0
    %1795 = vmatpush1.msra.mxu0 0.0
    %1796 = vmatprep.subr.mxu0 0.0
    %1797 = vmatpush1.msra.mxu0 0.0
    %1798 = vmatprep.subr.mxu0 0.0
    %1799 = vmatpush1.msra.mxu0 0.0
    %1800 = vmatprep.subr.mxu0 0.0
    %1801 = vmatpush1.msra.mxu0 0.0
    %1802 = vmatprep.subr.mxu0 0.0
    %1803 = vmatpush1.msra.mxu0 0.0
    %1804 = vmatprep.subr.mxu0 0.0
    %1805 = vmatpush1.msra.mxu0 0.0
    %1806 = vmatprep.subr.mxu0 0.0
    %1807 = vmatpush1.msra.mxu0 0.0
    %1808 = vmatprep.subr.mxu0 0.0
    %1809 = vmatpush1.msra.mxu0 0.0
    %1810 = vmatprep.subr.mxu0 0.0
    %1811 = vmatpush1.msra.mxu0 0.0
    %1812 = vmatprep.subr.mxu0 0.0
    %1813 = vmatpush1.msra.mxu0 0.0
    %1814 = vmatprep.subr.mxu0 0.0
    %1815 = vmatpush1.msra.mxu0 0.0
    %1816 = vmatprep.subr.mxu0 0.0
    %1817 = vmatpush1.msra.mxu0 0.0
    %1818 = vmatprep.subr.mxu0 0.0
    %1819 = vmatpush1.msra.mxu0 0.0
    %1820 = vmatprep.subr.mxu0 0.0
    %1821 = vmatpush1.msra.mxu0 0.0
    %1822 = vmatprep.subr.mxu0 0.0
    %1823 = vmatpush1.msra.mxu0 0.0
    %1824 = vmatprep.subr.mxu0 0.0
    %1825 = vmatpush1.msra.mxu0 0.0
    %1826 = vmatprep.subr.mxu0 0.0
    %1827 = vmatpush1.msra.mxu0 0.0
    %1828 = vmatprep.subr.mxu0 0.0
    %1829 = vmatpush1.msra.mxu0 0.0
    %1830 = vmatprep.subr.mxu0 0.0
    %1831 = vmatpush1.msra.mxu0 0.0
    %1832 = vmatprep.subr.mxu0 0.0
    %1833 = vmatpush1.msra.mxu0 0.0
    %1834 = vmatprep.subr.mxu0 0.0
    %1835 = vmatpush1.msra.mxu0 0.0
    %1836 = vmatprep.subr.mxu0 0.0
    %1837 = vmatpush1.msra.mxu0 0.0
    %1838 = vmatprep.subr.mxu0 0.0
    %1839 = vmatpush1.msra.mxu0 0.0
    %1840 = vmatprep.subr.mxu0 0.0
    %1841 = vmatpush1.msra.mxu0 0.0
    %1842 = vmatprep.subr.mxu0 0.0
    %1843 = vmatpush1.msra.mxu0 0.0
    %1844 = vmatprep.subr.mxu0 0.0
    %1845 = vmatpush1.msra.mxu0 0.0
    %1846 = vmatprep.subr.mxu0 0.0
    %1847 = vmatpush1.msra.mxu0 0.0
    %1848 = vmatprep.subr.mxu0 0.0
    %1849 = vmatpush1.msra.mxu0 0.0
    %1850 = vmatprep.subr.mxu0 0.0
    %1851 = vmatpush1.msra.mxu0 0.0
    %1852 = vmatprep.mubr.f32.mxu0 0.0
    %1853 = vmatmul.mubr.f32.gmra.mrb[0].mxu0 %v1783
    %v1854 = vpop.f32.mrb[0].mxu0
    %v1855 = vadd.f32 0.0, %v1854
    %v1856 = vpop.f32.mrb[0].mxu0
    %1857 = vmatprep.mubr.f32.mxu0 0.0
    %1858 = vmatmul.mubr.f32.gmra.mrb[0].mxu0 %v1786
    %v1859 = vpop.f32.mrb[0].mxu0
    %v1860 = vadd.f32 0.0, %v1859
    %v1861 = vpop.f32.mrb[0].mxu0
    %1862 = vdwg.mxu0
    %1863 = vrot.lane.b32.xlu0 %v356, 104
    %v1864 = vpop.permute.xlu0 %1863
    %1865 = vrot.lane.b32.xlu0 %v361, 104
    %v1866 = vpop.permute.xlu0 %1865
    %v1870 = vsel %vm539, %v1774, 0
    %v1873 = vsel %vm539, %v1775, 0
    %1875 = vmatprep.subr.mxu0 0.0
    %1876 = vmatpush1.msra.mxu0 %v1864
    %1877 = vmatprep.subr.mxu0 0.0
    %1878 = vmatpush1.msra.mxu0 %v1866
    %1879 = vmatprep.subr.mxu0 0.0
    %1880 = vmatpush1.msra.mxu0 0.0
    %1881 = vmatprep.subr.mxu0 0.0
    %1882 = vmatpush1.msra.mxu0 0.0
    %1883 = vmatprep.subr.mxu0 0.0
    %1884 = vmatpush1.msra.mxu0 0.0
    %1885 = vmatprep.subr.mxu0 0.0
    %1886 = vmatpush1.msra.mxu0 0.0
    %1887 = vmatprep.subr.mxu0 0.0
    %1888 = vmatpush1.msra.mxu0 0.0
    %1889 = vmatprep.subr.mxu0 0.0
    %1890 = vmatpush1.msra.mxu0 0.0
    %1891 = vmatprep.subr.mxu0 0.0
    %1892 = vmatpush1.msra.mxu0 0.0
    %1893 = vmatprep.subr.mxu0 0.0
    %1894 = vmatpush1.msra.mxu0 0.0
    %1895 = vmatprep.subr.mxu0 0.0
    %1896 = vmatpush1.msra.mxu0 0.0
    %1897 = vmatprep.subr.mxu0 0.0
    %1898 = vmatpush1.msra.mxu0 0.0
    %1899 = vmatprep.subr.mxu0 0.0
    %1900 = vmatpush1.msra.mxu0 0.0
    %1901 = vmatprep.subr.mxu0 0.0
    %1902 = vmatpush1.msra.mxu0 0.0
    %1903 = vmatprep.subr.mxu0 0.0
    %1904 = vmatpush1.msra.mxu0 0.0
    %1905 = vmatprep.subr.mxu0 0.0
    %1906 = vmatpush1.msra.mxu0 0.0
    %1907 = vmatprep.subr.mxu0 0.0
    %1908 = vmatpush1.msra.mxu0 0.0
    %1909 = vmatprep.subr.mxu0 0.0
    %1910 = vmatpush1.msra.mxu0 0.0
    %1911 = vmatprep.subr.mxu0 0.0
    %1912 = vmatpush1.msra.mxu0 0.0
    %1913 = vmatprep.subr.mxu0 0.0
    %1914 = vmatpush1.msra.mxu0 0.0
    %1915 = vmatprep.subr.mxu0 0.0
    %1916 = vmatpush1.msra.mxu0 0.0
    %1917 = vmatprep.subr.mxu0 0.0
    %1918 = vmatpush1.msra.mxu0 0.0
    %1919 = vmatprep.subr.mxu0 0.0
    %1920 = vmatpush1.msra.mxu0 0.0
    %1921 = vmatprep.subr.mxu0 0.0
    %1922 = vmatpush1.msra.mxu0 0.0
    %1923 = vmatprep.subr.mxu0 0.0
    %1924 = vmatpush1.msra.mxu0 0.0
    %1925 = vmatprep.subr.mxu0 0.0
    %1926 = vmatpush1.msra.mxu0 0.0
    %1927 = vmatprep.subr.mxu0 0.0
    %1928 = vmatpush1.msra.mxu0 0.0
    %1929 = vmatprep.subr.mxu0 0.0
    %1930 = vmatpush1.msra.mxu0 0.0
    %1931 = vmatprep.subr.mxu0 0.0
    %1932 = vmatpush1.msra.mxu0 0.0
    %1933 = vmatprep.subr.mxu0 0.0
    %1934 = vmatpush1.msra.mxu0 0.0
    %1935 = vmatprep.subr.mxu0 0.0
    %1936 = vmatpush1.msra.mxu0 0.0
    %1937 = vmatprep.subr.mxu0 0.0
    %1938 = vmatpush1.msra.mxu0 0.0
    %1939 = vmatprep.mubr.f32.mxu0 0.0
    %1940 = vmatmul.mubr.f32.gmra.mrb[0].mxu0 %v1870
    %v1941 = vpop.f32.mrb[0].mxu0
    %v1942 = vadd.f32 0.0, %v1941
    %v1943 = vpop.f32.mrb[0].mxu0
    %1944 = vmatprep.mubr.f32.mxu0 0.0
    %1945 = vmatmul.mubr.f32.gmra.mrb[0].mxu0 %v1873
    %v1946 = vpop.f32.mrb[0].mxu0
    %v1947 = vadd.f32 0.0, %v1946
    %v1948 = vpop.f32.mrb[0].mxu0
    %1949 = vdwg.mxu0
    %1950 = vrot.lane.b32.xlu0 %v168, 96
    %v1951 = vpop.permute.xlu0 %1950
    %1952 = vrot.lane.b32.xlu0 %v173, 96
    %v1953 = vpop.permute.xlu0 %1952
    %1954 = vrot.lane.b32.xlu0 %v257, 96
    %v1955 = vpop.permute.xlu0 %1954
    %1956 = vrot.lane.b32.xlu0 %v262, 96
    %v1957 = vpop.permute.xlu0 %1956
    %v1958 = vsel %vm364, %v1951, 0
    %v1960 = vsel %vm364, %v1953, 0
    %v1962 = vsel %vm364, %v1955, 0
    %v1964 = vsel %vm364, %v1957, 0
    %1966 = vmatprep.subr.mxu0 0.0
    %1967 = vmatpush1.xpose.msra.mxu0 %v1962
    %1968 = vmatprep.subr.mxu0 0.0
    %1969 = vmatpush1.xpose.msra.mxu0 %v1964
    %1970 = vmatprep.subr.mxu0 0.0
    %1971 = vmatpush1.xpose.msra.mxu0 0.0
    %1972 = vmatprep.subr.mxu0 0.0
    %1973 = vmatpush1.xpose.msra.mxu0 0.0
    %1974 = vmatprep.subr.mxu0 0.0
    %1975 = vmatpush1.xpose.msra.mxu0 0.0
    %1976 = vmatprep.subr.mxu0 0.0
    %1977 = vmatpush1.xpose.msra.mxu0 0.0
    %1978 = vmatprep.subr.mxu0 0.0
    %1979 = vmatpush1.xpose.msra.mxu0 0.0
    %1980 = vmatprep.subr.mxu0 0.0
    %1981 = vmatpush1.xpose.msra.mxu0 0.0
    %1982 = vmatprep.subr.mxu0 0.0
    %1983 = vmatpush1.xpose.msra.mxu0 0.0
    %1984 = vmatprep.subr.mxu0 0.0
    %1985 = vmatpush1.xpose.msra.mxu0 0.0
    %1986 = vmatprep.subr.mxu0 0.0
    %1987 = vmatpush1.xpose.msra.mxu0 0.0
    %1988 = vmatprep.subr.mxu0 0.0
    %1989 = vmatpush1.xpose.msra.mxu0 0.0
    %1990 = vmatprep.subr.mxu0 0.0
    %1991 = vmatpush1.xpose.msra.mxu0 0.0
    %1992 = vmatprep.subr.mxu0 0.0
    %1993 = vmatpush1.xpose.msra.mxu0 0.0
    %1994 = vmatprep.subr.mxu0 0.0
    %1995 = vmatpush1.xpose.msra.mxu0 0.0
    %1996 = vmatprep.subr.mxu0 0.0
    %1997 = vmatpush1.xpose.msra.mxu0 0.0
    %1998 = vmatprep.subr.mxu0 0.0
    %1999 = vmatpush1.xpose.msra.mxu0 0.0
    %2000 = vmatprep.subr.mxu0 0.0
    %2001 = vmatpush1.xpose.msra.mxu0 0.0
    %2002 = vmatprep.subr.mxu0 0.0
    %2003 = vmatpush1.xpose.msra.mxu0 0.0
    %2004 = vmatprep.subr.mxu0 0.0
    %2005 = vmatpush1.xpose.msra.mxu0 0.0
    %2006 = vmatprep.subr.mxu0 0.0
    %2007 = vmatpush1.xpose.msra.mxu0 0.0
    %2008 = vmatprep.subr.mxu0 0.0
    %2009 = vmatpush1.xpose.msra.mxu0 0.0
    %2010 = vmatprep.subr.mxu0 0.0
    %2011 = vmatpush1.xpose.msra.mxu0 0.0
    %2012 = vmatprep.subr.mxu0 0.0
    %2013 = vmatpush1.xpose.msra.mxu0 0.0
    %2014 = vmatprep.subr.mxu0 0.0
    %2015 = vmatpush1.xpose.msra.mxu0 0.0
    %2016 = vmatprep.subr.mxu0 0.0
    %2017 = vmatpush1.xpose.msra.mxu0 0.0
    %2018 = vmatprep.subr.mxu0 0.0
    %2019 = vmatpush1.xpose.msra.mxu0 0.0
    %2020 = vmatprep.subr.mxu0 0.0
    %2021 = vmatpush1.xpose.msra.mxu0 0.0
    %2022 = vmatprep.subr.mxu0 0.0
    %2023 = vmatpush1.xpose.msra.mxu0 0.0
    %2024 = vmatprep.subr.mxu0 0.0
    %2025 = vmatpush1.xpose.msra.mxu0 0.0
    %2026 = vmatprep.subr.mxu0 0.0
    %2027 = vmatpush1.xpose.msra.mxu0 0.0
    %2028 = vmatprep.subr.mxu0 0.0
    %2029 = vmatpush1.xpose.msra.mxu0 0.0
    %2030 = vmatprep.mubr.f32.mxu0 0.0
    %2031 = vmatmul.mubr.f32.gmra.mrb[0].mxu0 %v1958
    %v2032 = vpop.f32.mrb[0].mxu0
    %v2033 = vadd.f32 %v40, %v2032
    %v2034 = vpop.f32.mrb[0].mxu0
    %2035 = vmatprep.mubr.f32.mxu0 0.0
    %2036 = vmatmul.mubr.f32.gmra.mrb[0].mxu0 %v1960
    %v2037 = vpop.f32.mrb[0].mxu0
    %v2038 = vadd.f32 %v40, %v2037
    %v2039 = vpop.f32.mrb[0].mxu0
    %2040 = vdwg.mxu0
    %2041 = vrot.lane.b32.xlu0 %v178, 96
    %v2042 = vpop.permute.xlu0 %2041
    %2043 = vrot.lane.b32.xlu0 %v183, 96
    %v2044 = vpop.permute.xlu0 %2043
    %2045 = vrot.lane.b32.xlu0 %v267, 96
    %v2046 = vpop.permute.xlu0 %2045
    %2047 = vrot.lane.b32.xlu0 %v272, 96
    %v2048 = vpop.permute.xlu0 %2047
    %v2049 = vsel %vm364, %v2042, 0
    %v2051 = vsel %vm364, %v2044, 0
    %v2053 = vsel %vm364, %v2046, 0
    %v2055 = vsel %vm364, %v2048, 0
    %2057 = vmatprep.subr.mxu0 0.0
    %2058 = vmatpush1.xpose.msra.mxu0 %v2053
    %2059 = vmatprep.subr.mxu0 0.0
    %2060 = vmatpush1.xpose.msra.mxu0 %v2055
    %2061 = vmatprep.subr.mxu0 0.0
    %2062 = vmatpush1.xpose.msra.mxu0 0.0
    %2063 = vmatprep.subr.mxu0 0.0
    %2064 = vmatpush1.xpose.msra.mxu0 0.0
    %2065 = vmatprep.subr.mxu0 0.0
    %2066 = vmatpush1.xpose.msra.mxu0 0.0
    %2067 = vmatprep.subr.mxu0 0.0
    %2068 = vmatpush1.xpose.msra.mxu0 0.0
    %2069 = vmatprep.subr.mxu0 0.0
    %2070 = vmatpush1.xpose.msra.mxu0 0.0
    %2071 = vmatprep.subr.mxu0 0.0
    %2072 = vmatpush1.xpose.msra.mxu0 0.0
    %2073 = vmatprep.subr.mxu0 0.0
    %2074 = vmatpush1.xpose.msra.mxu0 0.0
    %2075 = vmatprep.subr.mxu0 0.0
    %2076 = vmatpush1.xpose.msra.mxu0 0.0
    %2077 = vmatprep.subr.mxu0 0.0
    %2078 = vmatpush1.xpose.msra.mxu0 0.0
    %2079 = vmatprep.subr.mxu0 0.0
    %2080 = vmatpush1.xpose.msra.mxu0 0.0
    %2081 = vmatprep.subr.mxu0 0.0
    %2082 = vmatpush1.xpose.msra.mxu0 0.0
    %2083 = vmatprep.subr.mxu0 0.0
    %2084 = vmatpush1.xpose.msra.mxu0 0.0
    %2085 = vmatprep.subr.mxu0 0.0
    %2086 = vmatpush1.xpose.msra.mxu0 0.0
    %2087 = vmatprep.subr.mxu0 0.0
    %2088 = vmatpush1.xpose.msra.mxu0 0.0
    %2089 = vmatprep.subr.mxu0 0.0
    %2090 = vmatpush1.xpose.msra.mxu0 0.0
    %2091 = vmatprep.subr.mxu0 0.0
    %2092 = vmatpush1.xpose.msra.mxu0 0.0
    %2093 = vmatprep.subr.mxu0 0.0
    %2094 = vmatpush1.xpose.msra.mxu0 0.0
    %2095 = vmatprep.subr.mxu0 0.0
    %2096 = vmatpush1.xpose.msra.mxu0 0.0
    %2097 = vmatprep.subr.mxu0 0.0
    %2098 = vmatpush1.xpose.msra.mxu0 0.0
    %2099 = vmatprep.subr.mxu0 0.0
    %2100 = vmatpush1.xpose.msra.mxu0 0.0
    %2101 = vmatprep.subr.mxu0 0.0
    %2102 = vmatpush1.xpose.msra.mxu0 0.0
    %2103 = vmatprep.subr.mxu0 0.0
    %2104 = vmatpush1.xpose.msra.mxu0 0.0
    %2105 = vmatprep.subr.mxu0 0.0
    %2106 = vmatpush1.xpose.msra.mxu0 0.0
    %2107 = vmatprep.subr.mxu0 0.0
    %2108 = vmatpush1.xpose.msra.mxu0 0.0
    %2109 = vmatprep.subr.mxu0 0.0
    %2110 = vmatpush1.xpose.msra.mxu0 0.0
    %2111 = vmatprep.subr.mxu0 0.0
    %2112 = vmatpush1.xpose.msra.mxu0 0.0
    %2113 = vmatprep.subr.mxu0 0.0
    %2114 = vmatpush1.xpose.msra.mxu0 0.0
    %2115 = vmatprep.subr.mxu0 0.0
    %2116 = vmatpush1.xpose.msra.mxu0 0.0
    %2117 = vmatprep.subr.mxu0 0.0
    %2118 = vmatpush1.xpose.msra.mxu0 0.0
    %2119 = vmatprep.subr.mxu0 0.0
    %2120 = vmatpush1.xpose.msra.mxu0 0.0
    %2121 = vmatprep.mubr.f32.mxu0 0.0
    %2122 = vmatmul.mubr.f32.gmra.mrb[0].mxu0 %v2049
    %v2123 = vpop.f32.mrb[0].mxu0
    %v2124 = vadd.f32 %v40, %v2123
    %v2125 = vpop.f32.mrb[0].mxu0
    %2126 = vmatprep.mubr.f32.mxu0 0.0
    %2127 = vmatmul.mubr.f32.gmra.mrb[0].mxu0 %v2051
    %v2128 = vpop.f32.mrb[0].mxu0
    %v2129 = vadd.f32 %v40, %v2128
    %v2130 = vpop.f32.mrb[0].mxu0
    %2131 = vdwg.mxu0
    %v2132 = vsel %vm539, %v2033, -inf
    %2133 = vmax.xlane.f32.xlu0 %v2132
    %v2134 = vpop.xlane.xlu0 %2133
    %v2135 = vsel %vm539, %v2038, -inf
    %2136 = vmax.xlane.f32.xlu0 %v2135
    %v2137 = vpop.xlane.xlu0 %2136
    %v2138 = vsel %vm539, %v2124, -inf
    %2139 = vmax.xlane.f32.xlu0 %v2138
    %v2140 = vpop.xlane.xlu0 %2139
    %v2141 = vsel %vm539, %v2129, -inf
    %2142 = vmax.xlane.f32.xlu0 %v2141
    %v2143 = vpop.xlane.xlu0 %2142
    %v2144 = vsub.f32 %v2033, %v2134
    %v2145 = vsub.f32 %v2038, %v2137
    %v2146 = vsub.f32 %v2124, %v2140
    %v2147 = vsub.f32 %v2129, %v2143
    %v2148 = vmul.f32 %v2144, 1.442695
    %v2149 = vpow.pop %v2148
    %v2150 = vmul.f32 %v2145, 1.442695
    %v2151 = vpow.pop %v2150
    %v2152 = vmul.f32 %v2146, 1.442695
    %v2153 = vpow.pop %v2152
    %v2154 = vmul.f32 %v2147, 1.442695
    %v2155 = vpow.pop %v2154
    %v2156 = vsel %vm539, %v2149, 0.0
    %2157 = vadd.xlane.f32.xlu0 %v2156
    %v2158 = vpop.xlane.xlu0 %2157
    %v2159 = vsel %vm539, %v2151, 0.0
    %2160 = vadd.xlane.f32.xlu0 %v2159
    %v2161 = vpop.xlane.xlu0 %2160
    %v2162 = vsel %vm539, %v2153, 0.0
    %2163 = vadd.xlane.f32.xlu0 %v2162
    %v2164 = vpop.xlane.xlu0 %2163
    %v2165 = vsel %vm539, %v2155, 0.0
    %2166 = vadd.xlane.f32.xlu0 %v2165
    %v2167 = vpop.xlane.xlu0 %2166
    %v2168 = vrcp.pop %v2158
    %v2169 = vrcp.pop %v2161
    %v2170 = vrcp.pop %v2164
    %v2171 = vrcp.pop %v2167
    %v2172 = vmul.f32 %v2149, %v2168
    %v2173 = vmul.f32 %v2151, %v2169
    %v2174 = vmul.f32 %v2153, %v2170
    %v2175 = vmul.f32 %v2155, %v2171
    %2176 = vrot.lane.b32.xlu0 %v346, 96
    %v2177 = vpop.permute.xlu0 %2176
    %2178 = vrot.lane.b32.xlu0 %v351, 96
    %v2179 = vpop.permute.xlu0 %2178
    %v2183 = vsel %vm539, %v2172, 0
    %v2186 = vsel %vm539, %v2173, 0
    %2188 = vmatprep.subr.mxu0 0.0
    %2189 = vmatpush1.msra.mxu0 %v2177
    %2190 = vmatprep.subr.mxu0 0.0
    %2191 = vmatpush1.msra.mxu0 %v2179
    %2192 = vmatprep.subr.mxu0 0.0
    %2193 = vmatpush1.msra.mxu0 0.0
    %2194 = vmatprep.subr.mxu0 0.0
    %2195 = vmatpush1.msra.mxu0 0.0
    %2196 = vmatprep.subr.mxu0 0.0
    %2197 = vmatpush1.msra.mxu0 0.0
    %2198 = vmatprep.subr.mxu0 0.0
    %2199 = vmatpush1.msra.mxu0 0.0
    %2200 = vmatprep.subr.mxu0 0.0
    %2201 = vmatpush1.msra.mxu0 0.0
    %2202 = vmatprep.subr.mxu0 0.0
    %2203 = vmatpush1.msra.mxu0 0.0
    %2204 = vmatprep.subr.mxu0 0.0
    %2205 = vmatpush1.msra.mxu0 0.0
    %2206 = vmatprep.subr.mxu0 0.0
    %2207 = vmatpush1.msra.mxu0 0.0
    %2208 = vmatprep.subr.mxu0 0.0
    %2209 = vmatpush1.msra.mxu0 0.0
    %2210 = vmatprep.subr.mxu0 0.0
    %2211 = vmatpush1.msra.mxu0 0.0
    %2212 = vmatprep.subr.mxu0 0.0
    %2213 = vmatpush1.msra.mxu0 0.0
    %2214 = vmatprep.subr.mxu0 0.0
    %2215 = vmatpush1.msra.mxu0 0.0
    %2216 = vmatprep.subr.mxu0 0.0
    %2217 = vmatpush1.msra.mxu0 0.0
    %2218 = vmatprep.subr.mxu0 0.0
    %2219 = vmatpush1.msra.mxu0 0.0
    %2220 = vmatprep.subr.mxu0 0.0
    %2221 = vmatpush1.msra.mxu0 0.0
    %2222 = vmatprep.subr.mxu0 0.0
    %2223 = vmatpush1.msra.mxu0 0.0
    %2224 = vmatprep.subr.mxu0 0.0
    %2225 = vmatpush1.msra.mxu0 0.0
    %2226 = vmatprep.subr.mxu0 0.0
    %2227 = vmatpush1.msra.mxu0 0.0
    %2228 = vmatprep.subr.mxu0 0.0
    %2229 = vmatpush1.msra.mxu0 0.0
    %2230 = vmatprep.subr.mxu0 0.0
    %2231 = vmatpush1.msra.mxu0 0.0
    %2232 = vmatprep.subr.mxu0 0.0
    %2233 = vmatpush1.msra.mxu0 0.0
    %2234 = vmatprep.subr.mxu0 0.0
    %2235 = vmatpush1.msra.mxu0 0.0
    %2236 = vmatprep.subr.mxu0 0.0
    %2237 = vmatpush1.msra.mxu0 0.0
    %2238 = vmatprep.subr.mxu0 0.0
    %2239 = vmatpush1.msra.mxu0 0.0
    %2240 = vmatprep.subr.mxu0 0.0
    %2241 = vmatpush1.msra.mxu0 0.0
    %2242 = vmatprep.subr.mxu0 0.0
    %2243 = vmatpush1.msra.mxu0 0.0
    %2244 = vmatprep.subr.mxu0 0.0
    %2245 = vmatpush1.msra.mxu0 0.0
    %2246 = vmatprep.subr.mxu0 0.0
    %2247 = vmatpush1.msra.mxu0 0.0
    %2248 = vmatprep.subr.mxu0 0.0
    %2249 = vmatpush1.msra.mxu0 0.0
    %2250 = vmatprep.subr.mxu0 0.0
    %2251 = vmatpush1.msra.mxu0 0.0
    %2252 = vmatprep.mubr.f32.mxu0 0.0
    %2253 = vmatmul.mubr.f32.gmra.mrb[0].mxu0 %v2183
    %v2254 = vpop.f32.mrb[0].mxu0
    %v2255 = vadd.f32 0.0, %v2254
    %v2256 = vpop.f32.mrb[0].mxu0
    %2257 = vmatprep.mubr.f32.mxu0 0.0
    %2258 = vmatmul.mubr.f32.gmra.mrb[0].mxu0 %v2186
    %v2259 = vpop.f32.mrb[0].mxu0
    %v2260 = vadd.f32 0.0, %v2259
    %v2261 = vpop.f32.mrb[0].mxu0
    %2262 = vdwg.mxu0
    %2263 = vrot.lane.b32.xlu0 %v356, 96
    %v2264 = vpop.permute.xlu0 %2263
    %2265 = vrot.lane.b32.xlu0 %v361, 96
    %v2266 = vpop.permute.xlu0 %2265
    %v2270 = vsel %vm539, %v2174, 0
    %v2273 = vsel %vm539, %v2175, 0
    %2275 = vmatprep.subr.mxu0 0.0
    %2276 = vmatpush1.msra.mxu0 %v2264
    %2277 = vmatprep.subr.mxu0 0.0
    %2278 = vmatpush1.msra.mxu0 %v2266
    %2279 = vmatprep.subr.mxu0 0.0
    %2280 = vmatpush1.msra.mxu0 0.0
    %2281 = vmatprep.subr.mxu0 0.0
    %2282 = vmatpush1.msra.mxu0 0.0
    %2283 = vmatprep.subr.mxu0 0.0
    %2284 = vmatpush1.msra.mxu0 0.0
    %2285 = vmatprep.subr.mxu0 0.0
    %2286 = vmatpush1.msra.mxu0 0.0
    %2287 = vmatprep.subr.mxu0 0.0
    %2288 = vmatpush1.msra.mxu0 0.0
    %2289 = vmatprep.subr.mxu0 0.0
    %2290 = vmatpush1.msra.mxu0 0.0
    %2291 = vmatprep.subr.mxu0 0.0
    %2292 = vmatpush1.msra.mxu0 0.0
    %2293 = vmatprep.subr.mxu0 0.0
    %2294 = vmatpush1.msra.mxu0 0.0
    %2295 = vmatprep.subr.mxu0 0.0
    %2296 = vmatpush1.msra.mxu0 0.0
    %2297 = vmatprep.subr.mxu0 0.0
    %2298 = vmatpush1.msra.mxu0 0.0
    %2299 = vmatprep.subr.mxu0 0.0
    %2300 = vmatpush1.msra.mxu0 0.0
    %2301 = vmatprep.subr.mxu0 0.0
    %2302 = vmatpush1.msra.mxu0 0.0
    %2303 = vmatprep.subr.mxu0 0.0
    %2304 = vmatpush1.msra.mxu0 0.0
    %2305 = vmatprep.subr.mxu0 0.0
    %2306 = vmatpush1.msra.mxu0 0.0
    %2307 = vmatprep.subr.mxu0 0.0
    %2308 = vmatpush1.msra.mxu0 0.0
    %2309 = vmatprep.subr.mxu0 0.0
    %2310 = vmatpush1.msra.mxu0 0.0
    %2311 = vmatprep.subr.mxu0 0.0
    %2312 = vmatpush1.msra.mxu0 0.0
    %2313 = vmatprep.subr.mxu0 0.0
    %2314 = vmatpush1.msra.mxu0 0.0
    %2315 = vmatprep.subr.mxu0 0.0
    %2316 = vmatpush1.msra.mxu0 0.0
    %2317 = vmatprep.subr.mxu0 0.0
    %2318 = vmatpush1.msra.mxu0 0.0
    %2319 = vmatprep.subr.mxu0 0.0
    %2320 = vmatpush1.msra.mxu0 0.0
    %2321 = vmatprep.subr.mxu0 0.0
    %2322 = vmatpush1.msra.mxu0 0.0
    %2323 = vmatprep.subr.mxu0 0.0
    %2324 = vmatpush1.msra.mxu0 0.0
    %2325 = vmatprep.subr.mxu0 0.0
    %2326 = vmatpush1.msra.mxu0 0.0
    %2327 = vmatprep.subr.mxu0 0.0
    %2328 = vmatpush1.msra.mxu0 0.0
    %2329 = vmatprep.subr.mxu0 0.0
    %2330 = vmatpush1.msra.mxu0 0.0
    %2331 = vmatprep.subr.mxu0 0.0
    %2332 = vmatpush1.msra.mxu0 0.0
    %2333 = vmatprep.subr.mxu0 0.0
    %2334 = vmatpush1.msra.mxu0 0.0
    %2335 = vmatprep.subr.mxu0 0.0
    %2336 = vmatpush1.msra.mxu0 0.0
    %2337 = vmatprep.subr.mxu0 0.0
    %2338 = vmatpush1.msra.mxu0 0.0
    %2339 = vmatprep.mubr.f32.mxu0 0.0
    %2340 = vmatmul.mubr.f32.gmra.mrb[0].mxu0 %v2270
    %v2341 = vpop.f32.mrb[0].mxu0
    %v2342 = vadd.f32 0.0, %v2341
    %v2343 = vpop.f32.mrb[0].mxu0
    %2344 = vmatprep.mubr.f32.mxu0 0.0
    %2345 = vmatmul.mubr.f32.gmra.mrb[0].mxu0 %v2273
    %v2346 = vpop.f32.mrb[0].mxu0
    %v2347 = vadd.f32 0.0, %v2346
    %v2348 = vpop.f32.mrb[0].mxu0
    %2349 = vdwg.mxu0
    %2350 = vrot.lane.b32.xlu0 %v168, 88
    %v2351 = vpop.permute.xlu0 %2350
    %2352 = vrot.lane.b32.xlu0 %v173, 88
    %v2353 = vpop.permute.xlu0 %2352
    %2354 = vrot.lane.b32.xlu0 %v257, 88
    %v2355 = vpop.permute.xlu0 %2354
    %2356 = vrot.lane.b32.xlu0 %v262, 88
    %v2357 = vpop.permute.xlu0 %2356
    %v2358 = vsel %vm364, %v2351, 0
    %v2360 = vsel %vm364, %v2353, 0
    %v2362 = vsel %vm364, %v2355, 0
    %v2364 = vsel %vm364, %v2357, 0
    %2366 = vmatprep.subr.mxu0 0.0
    %2367 = vmatpush1.xpose.msra.mxu0 %v2362
    %2368 = vmatprep.subr.mxu0 0.0
    %2369 = vmatpush1.xpose.msra.mxu0 %v2364
    %2370 = vmatprep.subr.mxu0 0.0
    %2371 = vmatpush1.xpose.msra.mxu0 0.0
    %2372 = vmatprep.subr.mxu0 0.0
    %2373 = vmatpush1.xpose.msra.mxu0 0.0
    %2374 = vmatprep.subr.mxu0 0.0
    %2375 = vmatpush1.xpose.msra.mxu0 0.0
    %2376 = vmatprep.subr.mxu0 0.0
    %2377 = vmatpush1.xpose.msra.mxu0 0.0
    %2378 = vmatprep.subr.mxu0 0.0
    %2379 = vmatpush1.xpose.msra.mxu0 0.0
    %2380 = vmatprep.subr.mxu0 0.0
    %2381 = vmatpush1.xpose.msra.mxu0 0.0
    %2382 = vmatprep.subr.mxu0 0.0
    %2383 = vmatpush1.xpose.msra.mxu0 0.0
    %2384 = vmatprep.subr.mxu0 0.0
    %2385 = vmatpush1.xpose.msra.mxu0 0.0
    %2386 = vmatprep.subr.mxu0 0.0
    %2387 = vmatpush1.xpose.msra.mxu0 0.0
    %2388 = vmatprep.subr.mxu0 0.0
    %2389 = vmatpush1.xpose.msra.mxu0 0.0
    %2390 = vmatprep.subr.mxu0 0.0
    %2391 = vmatpush1.xpose.msra.mxu0 0.0
    %2392 = vmatprep.subr.mxu0 0.0
    %2393 = vmatpush1.xpose.msra.mxu0 0.0
    %2394 = vmatprep.subr.mxu0 0.0
    %2395 = vmatpush1.xpose.msra.mxu0 0.0
    %2396 = vmatprep.subr.mxu0 0.0
    %2397 = vmatpush1.xpose.msra.mxu0 0.0
    %2398 = vmatprep.subr.mxu0 0.0
    %2399 = vmatpush1.xpose.msra.mxu0 0.0
    %2400 = vmatprep.subr.mxu0 0.0
    %2401 = vmatpush1.xpose.msra.mxu0 0.0
    %2402 = vmatprep.subr.mxu0 0.0
    %2403 = vmatpush1.xpose.msra.mxu0 0.0
    %2404 = vmatprep.subr.mxu0 0.0
    %2405 = vmatpush1.xpose.msra.mxu0 0.0
    %2406 = vmatprep.subr.mxu0 0.0
    %2407 = vmatpush1.xpose.msra.mxu0 0.0
    %2408 = vmatprep.subr.mxu0 0.0
    %2409 = vmatpush1.xpose.msra.mxu0 0.0
    %2410 = vmatprep.subr.mxu0 0.0
    %2411 = vmatpush1.xpose.msra.mxu0 0.0
    %2412 = vmatprep.subr.mxu0 0.0
    %2413 = vmatpush1.xpose.msra.mxu0 0.0
    %2414 = vmatprep.subr.mxu0 0.0
    %2415 = vmatpush1.xpose.msra.mxu0 0.0
    %2416 = vmatprep.subr.mxu0 0.0
    %2417 = vmatpush1.xpose.msra.mxu0 0.0
    %2418 = vmatprep.subr.mxu0 0.0
    %2419 = vmatpush1.xpose.msra.mxu0 0.0
    %2420 = vmatprep.subr.mxu0 0.0
    %2421 = vmatpush1.xpose.msra.mxu0 0.0
    %2422 = vmatprep.subr.mxu0 0.0
    %2423 = vmatpush1.xpose.msra.mxu0 0.0
    %2424 = vmatprep.subr.mxu0 0.0
    %2425 = vmatpush1.xpose.msra.mxu0 0.0
    %2426 = vmatprep.subr.mxu0 0.0
    %2427 = vmatpush1.xpose.msra.mxu0 0.0
    %2428 = vmatprep.subr.mxu0 0.0
    %2429 = vmatpush1.xpose.msra.mxu0 0.0
    %2430 = vmatprep.mubr.f32.mxu0 0.0
    %2431 = vmatmul.mubr.f32.gmra.mrb[0].mxu0 %v2358
    %v2432 = vpop.f32.mrb[0].mxu0
    %v2433 = vadd.f32 %v40, %v2432
    %v2434 = vpop.f32.mrb[0].mxu0
    %2435 = vmatprep.mubr.f32.mxu0 0.0
    %2436 = vmatmul.mubr.f32.gmra.mrb[0].mxu0 %v2360
    %v2437 = vpop.f32.mrb[0].mxu0
    %v2438 = vadd.f32 %v40, %v2437
    %v2439 = vpop.f32.mrb[0].mxu0
    %2440 = vdwg.mxu0
    %2441 = vrot.lane.b32.xlu0 %v178, 88
    %v2442 = vpop.permute.xlu0 %2441
    %2443 = vrot.lane.b32.xlu0 %v183, 88
    %v2444 = vpop.permute.xlu0 %2443
    %2445 = vrot.lane.b32.xlu0 %v267, 88
    %v2446 = vpop.permute.xlu0 %2445
    %2447 = vrot.lane.b32.xlu0 %v272, 88
    %v2448 = vpop.permute.xlu0 %2447
    %v2449 = vsel %vm364, %v2442, 0
    %v2451 = vsel %vm364, %v2444, 0
    %v2453 = vsel %vm364, %v2446, 0
    %v2455 = vsel %vm364, %v2448, 0
    %2457 = vmatprep.subr.mxu0 0.0
    %2458 = vmatpush1.xpose.msra.mxu0 %v2453
    %2459 = vmatprep.subr.mxu0 0.0
    %2460 = vmatpush1.xpose.msra.mxu0 %v2455
    %2461 = vmatprep.subr.mxu0 0.0
    %2462 = vmatpush1.xpose.msra.mxu0 0.0
    %2463 = vmatprep.subr.mxu0 0.0
    %2464 = vmatpush1.xpose.msra.mxu0 0.0
    %2465 = vmatprep.subr.mxu0 0.0
    %2466 = vmatpush1.xpose.msra.mxu0 0.0
    %2467 = vmatprep.subr.mxu0 0.0
    %2468 = vmatpush1.xpose.msra.mxu0 0.0
    %2469 = vmatprep.subr.mxu0 0.0
    %2470 = vmatpush1.xpose.msra.mxu0 0.0
    %2471 = vmatprep.subr.mxu0 0.0
    %2472 = vmatpush1.xpose.msra.mxu0 0.0
    %2473 = vmatprep.subr.mxu0 0.0
    %2474 = vmatpush1.xpose.msra.mxu0 0.0
    %2475 = vmatprep.subr.mxu0 0.0
    %2476 = vmatpush1.xpose.msra.mxu0 0.0
    %2477 = vmatprep.subr.mxu0 0.0
    %2478 = vmatpush1.xpose.msra.mxu0 0.0
    %2479 = vmatprep.subr.mxu0 0.0
    %2480 = vmatpush1.xpose.msra.mxu0 0.0
    %2481 = vmatprep.subr.mxu0 0.0
    %2482 = vmatpush1.xpose.msra.mxu0 0.0
    %2483 = vmatprep.subr.mxu0 0.0
    %2484 = vmatpush1.xpose.msra.mxu0 0.0
    %2485 = vmatprep.subr.mxu0 0.0
    %2486 = vmatpush1.xpose.msra.mxu0 0.0
    %2487 = vmatprep.subr.mxu0 0.0
    %2488 = vmatpush1.xpose.msra.mxu0 0.0
    %2489 = vmatprep.subr.mxu0 0.0
    %2490 = vmatpush1.xpose.msra.mxu0 0.0
    %2491 = vmatprep.subr.mxu0 0.0
    %2492 = vmatpush1.xpose.msra.mxu0 0.0
    %2493 = vmatprep.subr.mxu0 0.0
    %2494 = vmatpush1.xpose.msra.mxu0 0.0
    %2495 = vmatprep.subr.mxu0 0.0
    %2496 = vmatpush1.xpose.msra.mxu0 0.0
    %2497 = vmatprep.subr.mxu0 0.0
    %2498 = vmatpush1.xpose.msra.mxu0 0.0
    %2499 = vmatprep.subr.mxu0 0.0
    %2500 = vmatpush1.xpose.msra.mxu0 0.0
    %2501 = vmatprep.subr.mxu0 0.0
    %2502 = vmatpush1.xpose.msra.mxu0 0.0
    %2503 = vmatprep.subr.mxu0 0.0
    %2504 = vmatpush1.xpose.msra.mxu0 0.0
    %2505 = vmatprep.subr.mxu0 0.0
    %2506 = vmatpush1.xpose.msra.mxu0 0.0
    %2507 = vmatprep.subr.mxu0 0.0
    %2508 = vmatpush1.xpose.msra.mxu0 0.0
    %2509 = vmatprep.subr.mxu0 0.0
    %2510 = vmatpush1.xpose.msra.mxu0 0.0
    %2511 = vmatprep.subr.mxu0 0.0
    %2512 = vmatpush1.xpose.msra.mxu0 0.0
    %2513 = vmatprep.subr.mxu0 0.0
    %2514 = vmatpush1.xpose.msra.mxu0 0.0
    %2515 = vmatprep.subr.mxu0 0.0
    %2516 = vmatpush1.xpose.msra.mxu0 0.0
    %2517 = vmatprep.subr.mxu0 0.0
    %2518 = vmatpush1.xpose.msra.mxu0 0.0
    %2519 = vmatprep.subr.mxu0 0.0
    %2520 = vmatpush1.xpose.msra.mxu0 0.0
    %2521 = vmatprep.mubr.f32.mxu0 0.0
    %2522 = vmatmul.mubr.f32.gmra.mrb[0].mxu0 %v2449
    %v2523 = vpop.f32.mrb[0].mxu0
    %v2524 = vadd.f32 %v40, %v2523
    %v2525 = vpop.f32.mrb[0].mxu0
    %2526 = vmatprep.mubr.f32.mxu0 0.0
    %2527 = vmatmul.mubr.f32.gmra.mrb[0].mxu0 %v2451
    %v2528 = vpop.f32.mrb[0].mxu0
    %v2529 = vadd.f32 %v40, %v2528
    %v2530 = vpop.f32.mrb[0].mxu0
    %2531 = vdwg.mxu0
    %v2532 = vsel %vm539, %v2433, -inf
    %2533 = vmax.xlane.f32.xlu0 %v2532
    %v2534 = vpop.xlane.xlu0 %2533
    %v2535 = vsel %vm539, %v2438, -inf
    %2536 = vmax.xlane.f32.xlu0 %v2535
    %v2537 = vpop.xlane.xlu0 %2536
    %v2538 = vsel %vm539, %v2524, -inf
    %2539 = vmax.xlane.f32.xlu0 %v2538
    %v2540 = vpop.xlane.xlu0 %2539
    %v2541 = vsel %vm539, %v2529, -inf
    %2542 = vmax.xlane.f32.xlu0 %v2541
    %v2543 = vpop.xlane.xlu0 %2542
    %v2544 = vsub.f32 %v2433, %v2534
    %v2545 = vsub.f32 %v2438, %v2537
    %v2546 = vsub.f32 %v2524, %v2540
    %v2547 = vsub.f32 %v2529, %v2543
    %v2548 = vmul.f32 %v2544, 1.442695
    %v2549 = vpow.pop %v2548
    %v2550 = vmul.f32 %v2545, 1.442695
    %v2551 = vpow.pop %v2550
    %v2552 = vmul.f32 %v2546, 1.442695
    %v2553 = vpow.pop %v2552
    %v2554 = vmul.f32 %v2547, 1.442695
    %v2555 = vpow.pop %v2554
    %v2556 = vsel %vm539, %v2549, 0.0
    %2557 = vadd.xlane.f32.xlu0 %v2556
    %v2558 = vpop.xlane.xlu0 %2557
    %v2559 = vsel %vm539, %v2551, 0.0
    %2560 = vadd.xlane.f32.xlu0 %v2559
    %v2561 = vpop.xlane.xlu0 %2560
    %v2562 = vsel %vm539, %v2553, 0.0
    %2563 = vadd.xlane.f32.xlu0 %v2562
    %v2564 = vpop.xlane.xlu0 %2563
    %v2565 = vsel %vm539, %v2555, 0.0
    %2566 = vadd.xlane.f32.xlu0 %v2565
    %v2567 = vpop.xlane.xlu0 %2566
    %v2568 = vrcp.pop %v2558
    %v2569 = vrcp.pop %v2561
    %v2570 = vrcp.pop %v2564
    %v2571 = vrcp.pop %v2567
    %v2572 = vmul.f32 %v2549, %v2568
    %v2573 = vmul.f32 %v2551, %v2569
    %v2574 = vmul.f32 %v2553, %v2570
    %v2575 = vmul.f32 %v2555, %v2571
    %2576 = vrot.lane.b32.xlu0 %v346, 88
    %v2577 = vpop.permute.xlu0 %2576
    %2578 = vrot.lane.b32.xlu0 %v351, 88
    %v2579 = vpop.permute.xlu0 %2578
    %v2583 = vsel %vm539, %v2572, 0
    %v2586 = vsel %vm539, %v2573, 0
    %2588 = vmatprep.subr.mxu0 0.0
    %2589 = vmatpush1.msra.mxu0 %v2577
    %2590 = vmatprep.subr.mxu0 0.0
    %2591 = vmatpush1.msra.mxu0 %v2579
    %2592 = vmatprep.subr.mxu0 0.0
    %2593 = vmatpush1.msra.mxu0 0.0
    %2594 = vmatprep.subr.mxu0 0.0
    %2595 = vmatpush1.msra.mxu0 0.0
    %2596 = vmatprep.subr.mxu0 0.0
    %2597 = vmatpush1.msra.mxu0 0.0
    %2598 = vmatprep.subr.mxu0 0.0
    %2599 = vmatpush1.msra.mxu0 0.0
    %2600 = vmatprep.subr.mxu0 0.0
    %2601 = vmatpush1.msra.mxu0 0.0
    %2602 = vmatprep.subr.mxu0 0.0
    %2603 = vmatpush1.msra.mxu0 0.0
    %2604 = vmatprep.subr.mxu0 0.0
    %2605 = vmatpush1.msra.mxu0 0.0
    %2606 = vmatprep.subr.mxu0 0.0
    %2607 = vmatpush1.msra.mxu0 0.0
    %2608 = vmatprep.subr.mxu0 0.0
    %2609 = vmatpush1.msra.mxu0 0.0
    %2610 = vmatprep.subr.mxu0 0.0
    %2611 = vmatpush1.msra.mxu0 0.0
    %2612 = vmatprep.subr.mxu0 0.0
    %2613 = vmatpush1.msra.mxu0 0.0
    %2614 = vmatprep.subr.mxu0 0.0
    %2615 = vmatpush1.msra.mxu0 0.0
    %2616 = vmatprep.subr.mxu0 0.0
    %2617 = vmatpush1.msra.mxu0 0.0
    %2618 = vmatprep.subr.mxu0 0.0
    %2619 = vmatpush1.msra.mxu0 0.0
    %2620 = vmatprep.subr.mxu0 0.0
    %2621 = vmatpush1.msra.mxu0 0.0
    %2622 = vmatprep.subr.mxu0 0.0
    %2623 = vmatpush1.msra.mxu0 0.0
    %2624 = vmatprep.subr.mxu0 0.0
    %2625 = vmatpush1.msra.mxu0 0.0
    %2626 = vmatprep.subr.mxu0 0.0
    %2627 = vmatpush1.msra.mxu0 0.0
    %2628 = vmatprep.subr.mxu0 0.0
    %2629 = vmatpush1.msra.mxu0 0.0
    %2630 = vmatprep.subr.mxu0 0.0
    %2631 = vmatpush1.msra.mxu0 0.0
    %2632 = vmatprep.subr.mxu0 0.0
    %2633 = vmatpush1.msra.mxu0 0.0
    %2634 = vmatprep.subr.mxu0 0.0
    %2635 = vmatpush1.msra.mxu0 0.0
    %2636 = vmatprep.subr.mxu0 0.0
    %2637 = vmatpush1.msra.mxu0 0.0
    %2638 = vmatprep.subr.mxu0 0.0
    %2639 = vmatpush1.msra.mxu0 0.0
    %2640 = vmatprep.subr.mxu0 0.0
    %2641 = vmatpush1.msra.mxu0 0.0
    %2642 = vmatprep.subr.mxu0 0.0
    %2643 = vmatpush1.msra.mxu0 0.0
    %2644 = vmatprep.subr.mxu0 0.0
    %2645 = vmatpush1.msra.mxu0 0.0
    %2646 = vmatprep.subr.mxu0 0.0
    %2647 = vmatpush1.msra.mxu0 0.0
    %2648 = vmatprep.subr.mxu0 0.0
    %2649 = vmatpush1.msra.mxu0 0.0
    %2650 = vmatprep.subr.mxu0 0.0
    %2651 = vmatpush1.msra.mxu0 0.0
    %2652 = vmatprep.mubr.f32.mxu0 0.0
    %2653 = vmatmul.mubr.f32.gmra.mrb[0].mxu0 %v2583
    %v2654 = vpop.f32.mrb[0].mxu0
    %v2655 = vadd.f32 0.0, %v2654
    %v2656 = vpop.f32.mrb[0].mxu0
    %2657 = vmatprep.mubr.f32.mxu0 0.0
    %2658 = vmatmul.mubr.f32.gmra.mrb[0].mxu0 %v2586
    %v2659 = vpop.f32.mrb[0].mxu0
    %v2660 = vadd.f32 0.0, %v2659
    %v2661 = vpop.f32.mrb[0].mxu0
    %2662 = vdwg.mxu0
    %2663 = vrot.lane.b32.xlu0 %v356, 88
    %v2664 = vpop.permute.xlu0 %2663
    %2665 = vrot.lane.b32.xlu0 %v361, 88
    %v2666 = vpop.permute.xlu0 %2665
    %v2670 = vsel %vm539, %v2574, 0
    %v2673 = vsel %vm539, %v2575, 0
    %2675 = vmatprep.subr.mxu0 0.0
    %2676 = vmatpush1.msra.mxu0 %v2664
    %2677 = vmatprep.subr.mxu0 0.0
    %2678 = vmatpush1.msra.mxu0 %v2666
    %2679 = vmatprep.subr.mxu0 0.0
    %2680 = vmatpush1.msra.mxu0 0.0
    %2681 = vmatprep.subr.mxu0 0.0
    %2682 = vmatpush1.msra.mxu0 0.0
    %2683 = vmatprep.subr.mxu0 0.0
    %2684 = vmatpush1.msra.mxu0 0.0
    %2685 = vmatprep.subr.mxu0 0.0
    %2686 = vmatpush1.msra.mxu0 0.0
    %2687 = vmatprep.subr.mxu0 0.0
    %2688 = vmatpush1.msra.mxu0 0.0
    %2689 = vmatprep.subr.mxu0 0.0
    %2690 = vmatpush1.msra.mxu0 0.0
    %2691 = vmatprep.subr.mxu0 0.0
    %2692 = vmatpush1.msra.mxu0 0.0
    %2693 = vmatprep.subr.mxu0 0.0
    %2694 = vmatpush1.msra.mxu0 0.0
    %2695 = vmatprep.subr.mxu0 0.0
    %2696 = vmatpush1.msra.mxu0 0.0
    %2697 = vmatprep.subr.mxu0 0.0
    %2698 = vmatpush1.msra.mxu0 0.0
    %2699 = vmatprep.subr.mxu0 0.0
    %2700 = vmatpush1.msra.mxu0 0.0
    %2701 = vmatprep.subr.mxu0 0.0
    %2702 = vmatpush1.msra.mxu0 0.0
    %2703 = vmatprep.subr.mxu0 0.0
    %2704 = vmatpush1.msra.mxu0 0.0
    %2705 = vmatprep.subr.mxu0 0.0
    %2706 = vmatpush1.msra.mxu0 0.0
    %2707 = vmatprep.subr.mxu0 0.0
    %2708 = vmatpush1.msra.mxu0 0.0
    %2709 = vmatprep.subr.mxu0 0.0
    %2710 = vmatpush1.msra.mxu0 0.0
    %2711 = vmatprep.subr.mxu0 0.0
    %2712 = vmatpush1.msra.mxu0 0.0
    %2713 = vmatprep.subr.mxu0 0.0
    %2714 = vmatpush1.msra.mxu0 0.0
    %2715 = vmatprep.subr.mxu0 0.0
    %2716 = vmatpush1.msra.mxu0 0.0
    %2717 = vmatprep.subr.mxu0 0.0
    %2718 = vmatpush1.msra.mxu0 0.0
    %2719 = vmatprep.subr.mxu0 0.0
    %2720 = vmatpush1.msra.mxu0 0.0
    %2721 = vmatprep.subr.mxu0 0.0
    %2722 = vmatpush1.msra.mxu0 0.0
    %2723 = vmatprep.subr.mxu0 0.0
    %2724 = vmatpush1.msra.mxu0 0.0
    %2725 = vmatprep.subr.mxu0 0.0
    %2726 = vmatpush1.msra.mxu0 0.0
    %2727 = vmatprep.subr.mxu0 0.0
    %2728 = vmatpush1.msra.mxu0 0.0
    %2729 = vmatprep.subr.mxu0 0.0
    %2730 = vmatpush1.msra.mxu0 0.0
    %2731 = vmatprep.subr.mxu0 0.0
    %2732 = vmatpush1.msra.mxu0 0.0
    %2733 = vmatprep.subr.mxu0 0.0
    %2734 = vmatpush1.msra.mxu0 0.0
    %2735 = vmatprep.subr.mxu0 0.0
    %2736 = vmatpush1.msra.mxu0 0.0
    %2737 = vmatprep.subr.mxu0 0.0
    %2738 = vmatpush1.msra.mxu0 0.0
    %2739 = vmatprep.mubr.f32.mxu0 0.0
    %2740 = vmatmul.mubr.f32.gmra.mrb[0].mxu0 %v2670
    %v2741 = vpop.f32.mrb[0].mxu0
    %v2742 = vadd.f32 0.0, %v2741
    %v2743 = vpop.f32.mrb[0].mxu0
    %2744 = vmatprep.mubr.f32.mxu0 0.0
    %2745 = vmatmul.mubr.f32.gmra.mrb[0].mxu0 %v2673
    %v2746 = vpop.f32.mrb[0].mxu0
    %v2747 = vadd.f32 0.0, %v2746
    %v2748 = vpop.f32.mrb[0].mxu0
    %2749 = vdwg.mxu0
    %2750 = vrot.lane.b32.xlu0 %v168, 80
    %v2751 = vpop.permute.xlu0 %2750
    %2752 = vrot.lane.b32.xlu0 %v173, 80
    %v2753 = vpop.permute.xlu0 %2752
    %2754 = vrot.lane.b32.xlu0 %v257, 80
    %v2755 = vpop.permute.xlu0 %2754
    %2756 = vrot.lane.b32.xlu0 %v262, 80
    %v2757 = vpop.permute.xlu0 %2756
    %v2758 = vsel %vm364, %v2751, 0
    %v2760 = vsel %vm364, %v2753, 0
    %v2762 = vsel %vm364, %v2755, 0
    %v2764 = vsel %vm364, %v2757, 0
    %2766 = vmatprep.subr.mxu0 0.0
    %2767 = vmatpush1.xpose.msra.mxu0 %v2762
    %2768 = vmatprep.subr.mxu0 0.0
    %2769 = vmatpush1.xpose.msra.mxu0 %v2764
    %2770 = vmatprep.subr.mxu0 0.0
    %2771 = vmatpush1.xpose.msra.mxu0 0.0
    %2772 = vmatprep.subr.mxu0 0.0
    %2773 = vmatpush1.xpose.msra.mxu0 0.0
    %2774 = vmatprep.subr.mxu0 0.0
    %2775 = vmatpush1.xpose.msra.mxu0 0.0
    %2776 = vmatprep.subr.mxu0 0.0
    %2777 = vmatpush1.xpose.msra.mxu0 0.0
    %2778 = vmatprep.subr.mxu0 0.0
    %2779 = vmatpush1.xpose.msra.mxu0 0.0
    %2780 = vmatprep.subr.mxu0 0.0
    %2781 = vmatpush1.xpose.msra.mxu0 0.0
    %2782 = vmatprep.subr.mxu0 0.0
    %2783 = vmatpush1.xpose.msra.mxu0 0.0
    %2784 = vmatprep.subr.mxu0 0.0
    %2785 = vmatpush1.xpose.msra.mxu0 0.0
    %2786 = vmatprep.subr.mxu0 0.0
    %2787 = vmatpush1.xpose.msra.mxu0 0.0
    %2788 = vmatprep.subr.mxu0 0.0
    %2789 = vmatpush1.xpose.msra.mxu0 0.0
    %2790 = vmatprep.subr.mxu0 0.0
    %2791 = vmatpush1.xpose.msra.mxu0 0.0
    %2792 = vmatprep.subr.mxu0 0.0
    %2793 = vmatpush1.xpose.msra.mxu0 0.0
    %2794 = vmatprep.subr.mxu0 0.0
    %2795 = vmatpush1.xpose.msra.mxu0 0.0
    %2796 = vmatprep.subr.mxu0 0.0
    %2797 = vmatpush1.xpose.msra.mxu0 0.0
    %2798 = vmatprep.subr.mxu0 0.0
    %2799 = vmatpush1.xpose.msra.mxu0 0.0
    %2800 = vmatprep.subr.mxu0 0.0
    %2801 = vmatpush1.xpose.msra.mxu0 0.0
    %2802 = vmatprep.subr.mxu0 0.0
    %2803 = vmatpush1.xpose.msra.mxu0 0.0
    %2804 = vmatprep.subr.mxu0 0.0
    %2805 = vmatpush1.xpose.msra.mxu0 0.0
    %2806 = vmatprep.subr.mxu0 0.0
    %2807 = vmatpush1.xpose.msra.mxu0 0.0
    %2808 = vmatprep.subr.mxu0 0.0
    %2809 = vmatpush1.xpose.msra.mxu0 0.0
    %2810 = vmatprep.subr.mxu0 0.0
    %2811 = vmatpush1.xpose.msra.mxu0 0.0
    %2812 = vmatprep.subr.mxu0 0.0
    %2813 = vmatpush1.xpose.msra.mxu0 0.0
    %2814 = vmatprep.subr.mxu0 0.0
    %2815 = vmatpush1.xpose.msra.mxu0 0.0
    %2816 = vmatprep.subr.mxu0 0.0
    %2817 = vmatpush1.xpose.msra.mxu0 0.0
    %2818 = vmatprep.subr.mxu0 0.0
    %2819 = vmatpush1.xpose.msra.mxu0 0.0
    %2820 = vmatprep.subr.mxu0 0.0
    %2821 = vmatpush1.xpose.msra.mxu0 0.0
    %2822 = vmatprep.subr.mxu0 0.0
    %2823 = vmatpush1.xpose.msra.mxu0 0.0
    %2824 = vmatprep.subr.mxu0 0.0
    %2825 = vmatpush1.xpose.msra.mxu0 0.0
    %2826 = vmatprep.subr.mxu0 0.0
    %2827 = vmatpush1.xpose.msra.mxu0 0.0
    %2828 = vmatprep.subr.mxu0 0.0
    %2829 = vmatpush1.xpose.msra.mxu0 0.0
    %2830 = vmatprep.mubr.f32.mxu0 0.0
    %2831 = vmatmul.mubr.f32.gmra.mrb[0].mxu0 %v2758
    %v2832 = vpop.f32.mrb[0].mxu0
    %v2833 = vadd.f32 %v40, %v2832
    %v2834 = vpop.f32.mrb[0].mxu0
    %2835 = vmatprep.mubr.f32.mxu0 0.0
    %2836 = vmatmul.mubr.f32.gmra.mrb[0].mxu0 %v2760
    %v2837 = vpop.f32.mrb[0].mxu0
    %v2838 = vadd.f32 %v40, %v2837
    %v2839 = vpop.f32.mrb[0].mxu0
    %2840 = vdwg.mxu0
    %2841 = vrot.lane.b32.xlu0 %v178, 80
    %v2842 = vpop.permute.xlu0 %2841
    %2843 = vrot.lane.b32.xlu0 %v183, 80
    %v2844 = vpop.permute.xlu0 %2843
    %2845 = vrot.lane.b32.xlu0 %v267, 80
    %v2846 = vpop.permute.xlu0 %2845
    %2847 = vrot.lane.b32.xlu0 %v272, 80
    %v2848 = vpop.permute.xlu0 %2847
    %v2849 = vsel %vm364, %v2842, 0
    %v2851 = vsel %vm364, %v2844, 0
    %v2853 = vsel %vm364, %v2846, 0
    %v2855 = vsel %vm364, %v2848, 0
    %2857 = vmatprep.subr.mxu0 0.0
    %2858 = vmatpush1.xpose.msra.mxu0 %v2853
    %2859 = vmatprep.subr.mxu0 0.0
    %2860 = vmatpush1.xpose.msra.mxu0 %v2855
    %2861 = vmatprep.subr.mxu0 0.0
    %2862 = vmatpush1.xpose.msra.mxu0 0.0
    %2863 = vmatprep.subr.mxu0 0.0
    %2864 = vmatpush1.xpose.msra.mxu0 0.0
    %2865 = vmatprep.subr.mxu0 0.0
    %2866 = vmatpush1.xpose.msra.mxu0 0.0
    %2867 = vmatprep.subr.mxu0 0.0
    %2868 = vmatpush1.xpose.msra.mxu0 0.0
    %2869 = vmatprep.subr.mxu0 0.0
    %2870 = vmatpush1.xpose.msra.mxu0 0.0
    %2871 = vmatprep.subr.mxu0 0.0
    %2872 = vmatpush1.xpose.msra.mxu0 0.0
    %2873 = vmatprep.subr.mxu0 0.0
    %2874 = vmatpush1.xpose.msra.mxu0 0.0
    %2875 = vmatprep.subr.mxu0 0.0
    %2876 = vmatpush1.xpose.msra.mxu0 0.0
    %2877 = vmatprep.subr.mxu0 0.0
    %2878 = vmatpush1.xpose.msra.mxu0 0.0
    %2879 = vmatprep.subr.mxu0 0.0
    %2880 = vmatpush1.xpose.msra.mxu0 0.0
    %2881 = vmatprep.subr.mxu0 0.0
    %2882 = vmatpush1.xpose.msra.mxu0 0.0
    %2883 = vmatprep.subr.mxu0 0.0
    %2884 = vmatpush1.xpose.msra.mxu0 0.0
    %2885 = vmatprep.subr.mxu0 0.0
    %2886 = vmatpush1.xpose.msra.mxu0 0.0
    %2887 = vmatprep.subr.mxu0 0.0
    %2888 = vmatpush1.xpose.msra.mxu0 0.0
    %2889 = vmatprep.subr.mxu0 0.0
    %2890 = vmatpush1.xpose.msra.mxu0 0.0
    %2891 = vmatprep.subr.mxu0 0.0
    %2892 = vmatpush1.xpose.msra.mxu0 0.0
    %2893 = vmatprep.subr.mxu0 0.0
    %2894 = vmatpush1.xpose.msra.mxu0 0.0
    %2895 = vmatprep.subr.mxu0 0.0
    %2896 = vmatpush1.xpose.msra.mxu0 0.0
    %2897 = vmatprep.subr.mxu0 0.0
    %2898 = vmatpush1.xpose.msra.mxu0 0.0
    %2899 = vmatprep.subr.mxu0 0.0
    %2900 = vmatpush1.xpose.msra.mxu0 0.0
    %2901 = vmatprep.subr.mxu0 0.0
    %2902 = vmatpush1.xpose.msra.mxu0 0.0
    %2903 = vmatprep.subr.mxu0 0.0
    %2904 = vmatpush1.xpose.msra.mxu0 0.0
    %2905 = vmatprep.subr.mxu0 0.0
    %2906 = vmatpush1.xpose.msra.mxu0 0.0
    %2907 = vmatprep.subr.mxu0 0.0
    %2908 = vmatpush1.xpose.msra.mxu0 0.0
    %2909 = vmatprep.subr.mxu0 0.0
    %2910 = vmatpush1.xpose.msra.mxu0 0.0
    %2911 = vmatprep.subr.mxu0 0.0
    %2912 = vmatpush1.xpose.msra.mxu0 0.0
    %2913 = vmatprep.subr.mxu0 0.0
    %2914 = vmatpush1.xpose.msra.mxu0 0.0
    %2915 = vmatprep.subr.mxu0 0.0
    %2916 = vmatpush1.xpose.msra.mxu0 0.0
    %2917 = vmatprep.subr.mxu0 0.0
    %2918 = vmatpush1.xpose.msra.mxu0 0.0
    %2919 = vmatprep.subr.mxu0 0.0
    %2920 = vmatpush1.xpose.msra.mxu0 0.0
    %2921 = vmatprep.mubr.f32.mxu0 0.0
    %2922 = vmatmul.mubr.f32.gmra.mrb[0].mxu0 %v2849
    %v2923 = vpop.f32.mrb[0].mxu0
    %v2924 = vadd.f32 %v40, %v2923
    %v2925 = vpop.f32.mrb[0].mxu0
    %2926 = vmatprep.mubr.f32.mxu0 0.0
    %2927 = vmatmul.mubr.f32.gmra.mrb[0].mxu0 %v2851
    %v2928 = vpop.f32.mrb[0].mxu0
    %v2929 = vadd.f32 %v40, %v2928
    %v2930 = vpop.f32.mrb[0].mxu0
    %2931 = vdwg.mxu0
    %v2932 = vsel %vm539, %v2833, -inf
    %2933 = vmax.xlane.f32.xlu0 %v2932
    %v2934 = vpop.xlane.xlu0 %2933
    %v2935 = vsel %vm539, %v2838, -inf
    %2936 = vmax.xlane.f32.xlu0 %v2935
    %v2937 = vpop.xlane.xlu0 %2936
    %v2938 = vsel %vm539, %v2924, -inf
    %2939 = vmax.xlane.f32.xlu0 %v2938
    %v2940 = vpop.xlane.xlu0 %2939
    %v2941 = vsel %vm539, %v2929, -inf
    %2942 = vmax.xlane.f32.xlu0 %v2941
    %v2943 = vpop.xlane.xlu0 %2942
    %v2944 = vsub.f32 %v2833, %v2934
    %v2945 = vsub.f32 %v2838, %v2937
    %v2946 = vsub.f32 %v2924, %v2940
    %v2947 = vsub.f32 %v2929, %v2943
    %v2948 = vmul.f32 %v2944, 1.442695
    %v2949 = vpow.pop %v2948
    %v2950 = vmul.f32 %v2945, 1.442695
    %v2951 = vpow.pop %v2950
    %v2952 = vmul.f32 %v2946, 1.442695
    %v2953 = vpow.pop %v2952
    %v2954 = vmul.f32 %v2947, 1.442695
    %v2955 = vpow.pop %v2954
    %v2956 = vsel %vm539, %v2949, 0.0
    %2957 = vadd.xlane.f32.xlu0 %v2956
    %v2958 = vpop.xlane.xlu0 %2957
    %v2959 = vsel %vm539, %v2951, 0.0
    %2960 = vadd.xlane.f32.xlu0 %v2959
    %v2961 = vpop.xlane.xlu0 %2960
    %v2962 = vsel %vm539, %v2953, 0.0
    %2963 = vadd.xlane.f32.xlu0 %v2962
    %v2964 = vpop.xlane.xlu0 %2963
    %v2965 = vsel %vm539, %v2955, 0.0
    %2966 = vadd.xlane.f32.xlu0 %v2965
    %v2967 = vpop.xlane.xlu0 %2966
    %v2968 = vrcp.pop %v2958
    %v2969 = vrcp.pop %v2961
    %v2970 = vrcp.pop %v2964
    %v2971 = vrcp.pop %v2967
    %v2972 = vmul.f32 %v2949, %v2968
    %v2973 = vmul.f32 %v2951, %v2969
    %v2974 = vmul.f32 %v2953, %v2970
    %v2975 = vmul.f32 %v2955, %v2971
    %2976 = vrot.lane.b32.xlu0 %v346, 80
    %v2977 = vpop.permute.xlu0 %2976
    %2978 = vrot.lane.b32.xlu0 %v351, 80
    %v2979 = vpop.permute.xlu0 %2978
    %v2983 = vsel %vm539, %v2972, 0
    %v2986 = vsel %vm539, %v2973, 0
    %2988 = vmatprep.subr.mxu0 0.0
    %2989 = vmatpush1.msra.mxu0 %v2977
    %2990 = vmatprep.subr.mxu0 0.0
    %2991 = vmatpush1.msra.mxu0 %v2979
    %2992 = vmatprep.subr.mxu0 0.0
    %2993 = vmatpush1.msra.mxu0 0.0
    %2994 = vmatprep.subr.mxu0 0.0
    %2995 = vmatpush1.msra.mxu0 0.0
    %2996 = vmatprep.subr.mxu0 0.0
    %2997 = vmatpush1.msra.mxu0 0.0
    %2998 = vmatprep.subr.mxu0 0.0
    %2999 = vmatpush1.msra.mxu0 0.0
    %3000 = vmatprep.subr.mxu0 0.0
    %3001 = vmatpush1.msra.mxu0 0.0
    %3002 = vmatprep.subr.mxu0 0.0
    %3003 = vmatpush1.msra.mxu0 0.0
    %3004 = vmatprep.subr.mxu0 0.0
    %3005 = vmatpush1.msra.mxu0 0.0
    %3006 = vmatprep.subr.mxu0 0.0
    %3007 = vmatpush1.msra.mxu0 0.0
    %3008 = vmatprep.subr.mxu0 0.0
    %3009 = vmatpush1.msra.mxu0 0.0
    %3010 = vmatprep.subr.mxu0 0.0
    %3011 = vmatpush1.msra.mxu0 0.0
    %3012 = vmatprep.subr.mxu0 0.0
    %3013 = vmatpush1.msra.mxu0 0.0
    %3014 = vmatprep.subr.mxu0 0.0
    %3015 = vmatpush1.msra.mxu0 0.0
    %3016 = vmatprep.subr.mxu0 0.0
    %3017 = vmatpush1.msra.mxu0 0.0
    %3018 = vmatprep.subr.mxu0 0.0
    %3019 = vmatpush1.msra.mxu0 0.0
    %3020 = vmatprep.subr.mxu0 0.0
    %3021 = vmatpush1.msra.mxu0 0.0
    %3022 = vmatprep.subr.mxu0 0.0
    %3023 = vmatpush1.msra.mxu0 0.0
    %3024 = vmatprep.subr.mxu0 0.0
    %3025 = vmatpush1.msra.mxu0 0.0
    %3026 = vmatprep.subr.mxu0 0.0
    %3027 = vmatpush1.msra.mxu0 0.0
    %3028 = vmatprep.subr.mxu0 0.0
    %3029 = vmatpush1.msra.mxu0 0.0
    %3030 = vmatprep.subr.mxu0 0.0
    %3031 = vmatpush1.msra.mxu0 0.0
    %3032 = vmatprep.subr.mxu0 0.0
    %3033 = vmatpush1.msra.mxu0 0.0
    %3034 = vmatprep.subr.mxu0 0.0
    %3035 = vmatpush1.msra.mxu0 0.0
    %3036 = vmatprep.subr.mxu0 0.0
    %3037 = vmatpush1.msra.mxu0 0.0
    %3038 = vmatprep.subr.mxu0 0.0
    %3039 = vmatpush1.msra.mxu0 0.0
    %3040 = vmatprep.subr.mxu0 0.0
    %3041 = vmatpush1.msra.mxu0 0.0
    %3042 = vmatprep.subr.mxu0 0.0
    %3043 = vmatpush1.msra.mxu0 0.0
    %3044 = vmatprep.subr.mxu0 0.0
    %3045 = vmatpush1.msra.mxu0 0.0
    %3046 = vmatprep.subr.mxu0 0.0
    %3047 = vmatpush1.msra.mxu0 0.0
    %3048 = vmatprep.subr.mxu0 0.0
    %3049 = vmatpush1.msra.mxu0 0.0
    %3050 = vmatprep.subr.mxu0 0.0
    %3051 = vmatpush1.msra.mxu0 0.0
    %3052 = vmatprep.mubr.f32.mxu0 0.0
    %3053 = vmatmul.mubr.f32.gmra.mrb[0].mxu0 %v2983
    %v3054 = vpop.f32.mrb[0].mxu0
    %v3055 = vadd.f32 0.0, %v3054
    %v3056 = vpop.f32.mrb[0].mxu0
    %3057 = vmatprep.mubr.f32.mxu0 0.0
    %3058 = vmatmul.mubr.f32.gmra.mrb[0].mxu0 %v2986
    %v3059 = vpop.f32.mrb[0].mxu0
    %v3060 = vadd.f32 0.0, %v3059
    %v3061 = vpop.f32.mrb[0].mxu0
    %3062 = vdwg.mxu0
    %3063 = vrot.lane.b32.xlu0 %v356, 80
    %v3064 = vpop.permute.xlu0 %3063
    %3065 = vrot.lane.b32.xlu0 %v361, 80
    %v3066 = vpop.permute.xlu0 %3065
    %v3070 = vsel %vm539, %v2974, 0
    %v3073 = vsel %vm539, %v2975, 0
    %3075 = vmatprep.subr.mxu0 0.0
    %3076 = vmatpush1.msra.mxu0 %v3064
    %3077 = vmatprep.subr.mxu0 0.0
    %3078 = vmatpush1.msra.mxu0 %v3066
    %3079 = vmatprep.subr.mxu0 0.0
    %3080 = vmatpush1.msra.mxu0 0.0
    %3081 = vmatprep.subr.mxu0 0.0
    %3082 = vmatpush1.msra.mxu0 0.0
    %3083 = vmatprep.subr.mxu0 0.0
    %3084 = vmatpush1.msra.mxu0 0.0
    %3085 = vmatprep.subr.mxu0 0.0
    %3086 = vmatpush1.msra.mxu0 0.0
    %3087 = vmatprep.subr.mxu0 0.0
    %3088 = vmatpush1.msra.mxu0 0.0
    %3089 = vmatprep.subr.mxu0 0.0
    %3090 = vmatpush1.msra.mxu0 0.0
    %3091 = vmatprep.subr.mxu0 0.0
    %3092 = vmatpush1.msra.mxu0 0.0
    %3093 = vmatprep.subr.mxu0 0.0
    %3094 = vmatpush1.msra.mxu0 0.0
    %3095 = vmatprep.subr.mxu0 0.0
    %3096 = vmatpush1.msra.mxu0 0.0
    %3097 = vmatprep.subr.mxu0 0.0
    %3098 = vmatpush1.msra.mxu0 0.0
    %3099 = vmatprep.subr.mxu0 0.0
    %3100 = vmatpush1.msra.mxu0 0.0
    %3101 = vmatprep.subr.mxu0 0.0
    %3102 = vmatpush1.msra.mxu0 0.0
    %3103 = vmatprep.subr.mxu0 0.0
    %3104 = vmatpush1.msra.mxu0 0.0
    %3105 = vmatprep.subr.mxu0 0.0
    %3106 = vmatpush1.msra.mxu0 0.0
    %3107 = vmatprep.subr.mxu0 0.0
    %3108 = vmatpush1.msra.mxu0 0.0
    %3109 = vmatprep.subr.mxu0 0.0
    %3110 = vmatpush1.msra.mxu0 0.0
    %3111 = vmatprep.subr.mxu0 0.0
    %3112 = vmatpush1.msra.mxu0 0.0
    %3113 = vmatprep.subr.mxu0 0.0
    %3114 = vmatpush1.msra.mxu0 0.0
    %3115 = vmatprep.subr.mxu0 0.0
    %3116 = vmatpush1.msra.mxu0 0.0
    %3117 = vmatprep.subr.mxu0 0.0
    %3118 = vmatpush1.msra.mxu0 0.0
    %3119 = vmatprep.subr.mxu0 0.0
    %3120 = vmatpush1.msra.mxu0 0.0
    %3121 = vmatprep.subr.mxu0 0.0
    %3122 = vmatpush1.msra.mxu0 0.0
    %3123 = vmatprep.subr.mxu0 0.0
    %3124 = vmatpush1.msra.mxu0 0.0
    %3125 = vmatprep.subr.mxu0 0.0
    %3126 = vmatpush1.msra.mxu0 0.0
    %3127 = vmatprep.subr.mxu0 0.0
    %3128 = vmatpush1.msra.mxu0 0.0
    %3129 = vmatprep.subr.mxu0 0.0
    %3130 = vmatpush1.msra.mxu0 0.0
    %3131 = vmatprep.subr.mxu0 0.0
    %3132 = vmatpush1.msra.mxu0 0.0
    %3133 = vmatprep.subr.mxu0 0.0
    %3134 = vmatpush1.msra.mxu0 0.0
    %3135 = vmatprep.subr.mxu0 0.0
    %3136 = vmatpush1.msra.mxu0 0.0
    %3137 = vmatprep.subr.mxu0 0.0
    %3138 = vmatpush1.msra.mxu0 0.0
    %3139 = vmatprep.mubr.f32.mxu0 0.0
    %3140 = vmatmul.mubr.f32.gmra.mrb[0].mxu0 %v3070
    %v3141 = vpop.f32.mrb[0].mxu0
    %v3142 = vadd.f32 0.0, %v3141
    %v3143 = vpop.f32.mrb[0].mxu0
    %3144 = vmatprep.mubr.f32.mxu0 0.0
    %3145 = vmatmul.mubr.f32.gmra.mrb[0].mxu0 %v3073
    %v3146 = vpop.f32.mrb[0].mxu0
    %v3147 = vadd.f32 0.0, %v3146
    %v3148 = vpop.f32.mrb[0].mxu0
    %3149 = vdwg.mxu0
    %3150 = vrot.lane.b32.xlu0 %v168, 72
    %v3151 = vpop.permute.xlu0 %3150
    %3152 = vrot.lane.b32.xlu0 %v173, 72
    %v3153 = vpop.permute.xlu0 %3152
    %3154 = vrot.lane.b32.xlu0 %v257, 72
    %v3155 = vpop.permute.xlu0 %3154
    %3156 = vrot.lane.b32.xlu0 %v262, 72
    %v3157 = vpop.permute.xlu0 %3156
    %v3158 = vsel %vm364, %v3151, 0
    %v3160 = vsel %vm364, %v3153, 0
    %v3162 = vsel %vm364, %v3155, 0
    %v3164 = vsel %vm364, %v3157, 0
    %3166 = vmatprep.subr.mxu0 0.0
    %3167 = vmatpush1.xpose.msra.mxu0 %v3162
    %3168 = vmatprep.subr.mxu0 0.0
    %3169 = vmatpush1.xpose.msra.mxu0 %v3164
    %3170 = vmatprep.subr.mxu0 0.0
    %3171 = vmatpush1.xpose.msra.mxu0 0.0
    %3172 = vmatprep.subr.mxu0 0.0
    %3173 = vmatpush1.xpose.msra.mxu0 0.0
    %3174 = vmatprep.subr.mxu0 0.0
    %3175 = vmatpush1.xpose.msra.mxu0 0.0
    %3176 = vmatprep.subr.mxu0 0.0
    %3177 = vmatpush1.xpose.msra.mxu0 0.0
    %3178 = vmatprep.subr.mxu0 0.0
    %3179 = vmatpush1.xpose.msra.mxu0 0.0
    %3180 = vmatprep.subr.mxu0 0.0
    %3181 = vmatpush1.xpose.msra.mxu0 0.0
    %3182 = vmatprep.subr.mxu0 0.0
    %3183 = vmatpush1.xpose.msra.mxu0 0.0
    %3184 = vmatprep.subr.mxu0 0.0
    %3185 = vmatpush1.xpose.msra.mxu0 0.0
    %3186 = vmatprep.subr.mxu0 0.0
    %3187 = vmatpush1.xpose.msra.mxu0 0.0
    %3188 = vmatprep.subr.mxu0 0.0
    %3189 = vmatpush1.xpose.msra.mxu0 0.0
    %3190 = vmatprep.subr.mxu0 0.0
    %3191 = vmatpush1.xpose.msra.mxu0 0.0
    %3192 = vmatprep.subr.mxu0 0.0
    %3193 = vmatpush1.xpose.msra.mxu0 0.0
    %3194 = vmatprep.subr.mxu0 0.0
    %3195 = vmatpush1.xpose.msra.mxu0 0.0
    %3196 = vmatprep.subr.mxu0 0.0
    %3197 = vmatpush1.xpose.msra.mxu0 0.0
    %3198 = vmatprep.subr.mxu0 0.0
    %3199 = vmatpush1.xpose.msra.mxu0 0.0
    %3200 = vmatprep.subr.mxu0 0.0
    %3201 = vmatpush1.xpose.msra.mxu0 0.0
    %3202 = vmatprep.subr.mxu0 0.0
    %3203 = vmatpush1.xpose.msra.mxu0 0.0
    %3204 = vmatprep.subr.mxu0 0.0
    %3205 = vmatpush1.xpose.msra.mxu0 0.0
    %3206 = vmatprep.subr.mxu0 0.0
    %3207 = vmatpush1.xpose.msra.mxu0 0.0
    %3208 = vmatprep.subr.mxu0 0.0
    %3209 = vmatpush1.xpose.msra.mxu0 0.0
    %3210 = vmatprep.subr.mxu0 0.0
    %3211 = vmatpush1.xpose.msra.mxu0 0.0
    %3212 = vmatprep.subr.mxu0 0.0
    %3213 = vmatpush1.xpose.msra.mxu0 0.0
    %3214 = vmatprep.subr.mxu0 0.0
    %3215 = vmatpush1.xpose.msra.mxu0 0.0
    %3216 = vmatprep.subr.mxu0 0.0
    %3217 = vmatpush1.xpose.msra.mxu0 0.0
    %3218 = vmatprep.subr.mxu0 0.0
    %3219 = vmatpush1.xpose.msra.mxu0 0.0
    %3220 = vmatprep.subr.mxu0 0.0
    %3221 = vmatpush1.xpose.msra.mxu0 0.0
    %3222 = vmatprep.subr.mxu0 0.0
    %3223 = vmatpush1.xpose.msra.mxu0 0.0
    %3224 = vmatprep.subr.mxu0 0.0
    %3225 = vmatpush1.xpose.msra.mxu0 0.0
    %3226 = vmatprep.subr.mxu0 0.0
    %3227 = vmatpush1.xpose.msra.mxu0 0.0
    %3228 = vmatprep.subr.mxu0 0.0
    %3229 = vmatpush1.xpose.msra.mxu0 0.0
    %3230 = vmatprep.mubr.f32.mxu0 0.0
    %3231 = vmatmul.mubr.f32.gmra.mrb[0].mxu0 %v3158
    %v3232 = vpop.f32.mrb[0].mxu0
    %v3233 = vadd.f32 %v40, %v3232
    %v3234 = vpop.f32.mrb[0].mxu0
    %3235 = vmatprep.mubr.f32.mxu0 0.0
    %3236 = vmatmul.mubr.f32.gmra.mrb[0].mxu0 %v3160
    %v3237 = vpop.f32.mrb[0].mxu0
    %v3238 = vadd.f32 %v40, %v3237
    %v3239 = vpop.f32.mrb[0].mxu0
    %3240 = vdwg.mxu0
    %3241 = vrot.lane.b32.xlu0 %v178, 72
    %v3242 = vpop.permute.xlu0 %3241
    %3243 = vrot.lane.b32.xlu0 %v183, 72
    %v3244 = vpop.permute.xlu0 %3243
    %3245 = vrot.lane.b32.xlu0 %v267, 72
    %v3246 = vpop.permute.xlu0 %3245
    %3247 = vrot.lane.b32.xlu0 %v272, 72
    %v3248 = vpop.permute.xlu0 %3247
    %v3249 = vsel %vm364, %v3242, 0
    %v3251 = vsel %vm364, %v3244, 0
    %v3253 = vsel %vm364, %v3246, 0
    %v3255 = vsel %vm364, %v3248, 0
    %3257 = vmatprep.subr.mxu0 0.0
    %3258 = vmatpush1.xpose.msra.mxu0 %v3253
    %3259 = vmatprep.subr.mxu0 0.0
    %3260 = vmatpush1.xpose.msra.mxu0 %v3255
    %3261 = vmatprep.subr.mxu0 0.0
    %3262 = vmatpush1.xpose.msra.mxu0 0.0
    %3263 = vmatprep.subr.mxu0 0.0
    %3264 = vmatpush1.xpose.msra.mxu0 0.0
    %3265 = vmatprep.subr.mxu0 0.0
    %3266 = vmatpush1.xpose.msra.mxu0 0.0
    %3267 = vmatprep.subr.mxu0 0.0
    %3268 = vmatpush1.xpose.msra.mxu0 0.0
    %3269 = vmatprep.subr.mxu0 0.0
    %3270 = vmatpush1.xpose.msra.mxu0 0.0
    %3271 = vmatprep.subr.mxu0 0.0
    %3272 = vmatpush1.xpose.msra.mxu0 0.0
    %3273 = vmatprep.subr.mxu0 0.0
    %3274 = vmatpush1.xpose.msra.mxu0 0.0
    %3275 = vmatprep.subr.mxu0 0.0
    %3276 = vmatpush1.xpose.msra.mxu0 0.0
    %3277 = vmatprep.subr.mxu0 0.0
    %3278 = vmatpush1.xpose.msra.mxu0 0.0
    %3279 = vmatprep.subr.mxu0 0.0
    %3280 = vmatpush1.xpose.msra.mxu0 0.0
    %3281 = vmatprep.subr.mxu0 0.0
    %3282 = vmatpush1.xpose.msra.mxu0 0.0
    %3283 = vmatprep.subr.mxu0 0.0
    %3284 = vmatpush1.xpose.msra.mxu0 0.0
    %3285 = vmatprep.subr.mxu0 0.0
    %3286 = vmatpush1.xpose.msra.mxu0 0.0
    %3287 = vmatprep.subr.mxu0 0.0
    %3288 = vmatpush1.xpose.msra.mxu0 0.0
    %3289 = vmatprep.subr.mxu0 0.0
    %3290 = vmatpush1.xpose.msra.mxu0 0.0
    %3291 = vmatprep.subr.mxu0 0.0
    %3292 = vmatpush1.xpose.msra.mxu0 0.0
    %3293 = vmatprep.subr.mxu0 0.0
    %3294 = vmatpush1.xpose.msra.mxu0 0.0
    %3295 = vmatprep.subr.mxu0 0.0
    %3296 = vmatpush1.xpose.msra.mxu0 0.0
    %3297 = vmatprep.subr.mxu0 0.0
    %3298 = vmatpush1.xpose.msra.mxu0 0.0
    %3299 = vmatprep.subr.mxu0 0.0
    %3300 = vmatpush1.xpose.msra.mxu0 0.0
    %3301 = vmatprep.subr.mxu0 0.0
    %3302 = vmatpush1.xpose.msra.mxu0 0.0
    %3303 = vmatprep.subr.mxu0 0.0
    %3304 = vmatpush1.xpose.msra.mxu0 0.0
    %3305 = vmatprep.subr.mxu0 0.0
    %3306 = vmatpush1.xpose.msra.mxu0 0.0
    %3307 = vmatprep.subr.mxu0 0.0
    %3308 = vmatpush1.xpose.msra.mxu0 0.0
    %3309 = vmatprep.subr.mxu0 0.0
    %3310 = vmatpush1.xpose.msra.mxu0 0.0
    %3311 = vmatprep.subr.mxu0 0.0
    %3312 = vmatpush1.xpose.msra.mxu0 0.0
    %3313 = vmatprep.subr.mxu0 0.0
    %3314 = vmatpush1.xpose.msra.mxu0 0.0
    %3315 = vmatprep.subr.mxu0 0.0
    %3316 = vmatpush1.xpose.msra.mxu0 0.0
    %3317 = vmatprep.subr.mxu0 0.0
    %3318 = vmatpush1.xpose.msra.mxu0 0.0
    %3319 = vmatprep.subr.mxu0 0.0
    %3320 = vmatpush1.xpose.msra.mxu0 0.0
    %3321 = vmatprep.mubr.f32.mxu0 0.0
    %3322 = vmatmul.mubr.f32.gmra.mrb[0].mxu0 %v3249
    %v3323 = vpop.f32.mrb[0].mxu0
    %v3324 = vadd.f32 %v40, %v3323
    %v3325 = vpop.f32.mrb[0].mxu0
    %3326 = vmatprep.mubr.f32.mxu0 0.0
    %3327 = vmatmul.mubr.f32.gmra.mrb[0].mxu0 %v3251
    %v3328 = vpop.f32.mrb[0].mxu0
    %v3329 = vadd.f32 %v40, %v3328
    %v3330 = vpop.f32.mrb[0].mxu0
    %3331 = vdwg.mxu0
    %v3332 = vsel %vm539, %v3233, -inf
    %3333 = vmax.xlane.f32.xlu0 %v3332
    %v3334 = vpop.xlane.xlu0 %3333
    %v3335 = vsel %vm539, %v3238, -inf
    %3336 = vmax.xlane.f32.xlu0 %v3335
    %v3337 = vpop.xlane.xlu0 %3336
    %v3338 = vsel %vm539, %v3324, -inf
    %3339 = vmax.xlane.f32.xlu0 %v3338
    %v3340 = vpop.xlane.xlu0 %3339
    %v3341 = vsel %vm539, %v3329, -inf
    %3342 = vmax.xlane.f32.xlu0 %v3341
    %v3343 = vpop.xlane.xlu0 %3342
    %v3344 = vsub.f32 %v3233, %v3334
    %v3345 = vsub.f32 %v3238, %v3337
    %v3346 = vsub.f32 %v3324, %v3340
    %v3347 = vsub.f32 %v3329, %v3343
    %v3348 = vmul.f32 %v3344, 1.442695
    %v3349 = vpow.pop %v3348
    %v3350 = vmul.f32 %v3345, 1.442695
    %v3351 = vpow.pop %v3350
    %v3352 = vmul.f32 %v3346, 1.442695
    %v3353 = vpow.pop %v3352
    %v3354 = vmul.f32 %v3347, 1.442695
    %v3355 = vpow.pop %v3354
    %v3356 = vsel %vm539, %v3349, 0.0
    %3357 = vadd.xlane.f32.xlu0 %v3356
    %v3358 = vpop.xlane.xlu0 %3357
    %v3359 = vsel %vm539, %v3351, 0.0
    %3360 = vadd.xlane.f32.xlu0 %v3359
    %v3361 = vpop.xlane.xlu0 %3360
    %v3362 = vsel %vm539, %v3353, 0.0
    %3363 = vadd.xlane.f32.xlu0 %v3362
    %v3364 = vpop.xlane.xlu0 %3363
    %v3365 = vsel %vm539, %v3355, 0.0
    %3366 = vadd.xlane.f32.xlu0 %v3365
    %v3367 = vpop.xlane.xlu0 %3366
    %v3368 = vrcp.pop %v3358
    %v3369 = vrcp.pop %v3361
    %v3370 = vrcp.pop %v3364
    %v3371 = vrcp.pop %v3367
    %v3372 = vmul.f32 %v3349, %v3368
    %v3373 = vmul.f32 %v3351, %v3369
    %v3374 = vmul.f32 %v3353, %v3370
    %v3375 = vmul.f32 %v3355, %v3371
    %3376 = vrot.lane.b32.xlu0 %v346, 72
    %v3377 = vpop.permute.xlu0 %3376
    %3378 = vrot.lane.b32.xlu0 %v351, 72
    %v3379 = vpop.permute.xlu0 %3378
    %v3383 = vsel %vm539, %v3372, 0
    %v3386 = vsel %vm539, %v3373, 0
    %3388 = vmatprep.subr.mxu0 0.0
    %3389 = vmatpush1.msra.mxu0 %v3377
    %3390 = vmatprep.subr.mxu0 0.0
    %3391 = vmatpush1.msra.mxu0 %v3379
    %3392 = vmatprep.subr.mxu0 0.0
    %3393 = vmatpush1.msra.mxu0 0.0
    %3394 = vmatprep.subr.mxu0 0.0
    %3395 = vmatpush1.msra.mxu0 0.0
    %3396 = vmatprep.subr.mxu0 0.0
    %3397 = vmatpush1.msra.mxu0 0.0
    %3398 = vmatprep.subr.mxu0 0.0
    %3399 = vmatpush1.msra.mxu0 0.0
    %3400 = vmatprep.subr.mxu0 0.0
    %3401 = vmatpush1.msra.mxu0 0.0
    %3402 = vmatprep.subr.mxu0 0.0
    %3403 = vmatpush1.msra.mxu0 0.0
    %3404 = vmatprep.subr.mxu0 0.0
    %3405 = vmatpush1.msra.mxu0 0.0
    %3406 = vmatprep.subr.mxu0 0.0
    %3407 = vmatpush1.msra.mxu0 0.0
    %3408 = vmatprep.subr.mxu0 0.0
    %3409 = vmatpush1.msra.mxu0 0.0
    %3410 = vmatprep.subr.mxu0 0.0
    %3411 = vmatpush1.msra.mxu0 0.0
    %3412 = vmatprep.subr.mxu0 0.0
    %3413 = vmatpush1.msra.mxu0 0.0
    %3414 = vmatprep.subr.mxu0 0.0
    %3415 = vmatpush1.msra.mxu0 0.0
    %3416 = vmatprep.subr.mxu0 0.0
    %3417 = vmatpush1.msra.mxu0 0.0
    %3418 = vmatprep.subr.mxu0 0.0
    %3419 = vmatpush1.msra.mxu0 0.0
    %3420 = vmatprep.subr.mxu0 0.0
    %3421 = vmatpush1.msra.mxu0 0.0
    %3422 = vmatprep.subr.mxu0 0.0
    %3423 = vmatpush1.msra.mxu0 0.0
    %3424 = vmatprep.subr.mxu0 0.0
    %3425 = vmatpush1.msra.mxu0 0.0
    %3426 = vmatprep.subr.mxu0 0.0
    %3427 = vmatpush1.msra.mxu0 0.0
    %3428 = vmatprep.subr.mxu0 0.0
    %3429 = vmatpush1.msra.mxu0 0.0
    %3430 = vmatprep.subr.mxu0 0.0
    %3431 = vmatpush1.msra.mxu0 0.0
    %3432 = vmatprep.subr.mxu0 0.0
    %3433 = vmatpush1.msra.mxu0 0.0
    %3434 = vmatprep.subr.mxu0 0.0
    %3435 = vmatpush1.msra.mxu0 0.0
    %3436 = vmatprep.subr.mxu0 0.0
    %3437 = vmatpush1.msra.mxu0 0.0
    %3438 = vmatprep.subr.mxu0 0.0
    %3439 = vmatpush1.msra.mxu0 0.0
    %3440 = vmatprep.subr.mxu0 0.0
    %3441 = vmatpush1.msra.mxu0 0.0
    %3442 = vmatprep.subr.mxu0 0.0
    %3443 = vmatpush1.msra.mxu0 0.0
    %3444 = vmatprep.subr.mxu0 0.0
    %3445 = vmatpush1.msra.mxu0 0.0
    %3446 = vmatprep.subr.mxu0 0.0
    %3447 = vmatpush1.msra.mxu0 0.0
    %3448 = vmatprep.subr.mxu0 0.0
    %3449 = vmatpush1.msra.mxu0 0.0
    %3450 = vmatprep.subr.mxu0 0.0
    %3451 = vmatpush1.msra.mxu0 0.0
    %3452 = vmatprep.mubr.f32.mxu0 0.0
    %3453 = vmatmul.mubr.f32.gmra.mrb[0].mxu0 %v3383
    %v3454 = vpop.f32.mrb[0].mxu0
    %v3455 = vadd.f32 0.0, %v3454
    %v3456 = vpop.f32.mrb[0].mxu0
    %3457 = vmatprep.mubr.f32.mxu0 0.0
    %3458 = vmatmul.mubr.f32.gmra.mrb[0].mxu0 %v3386
    %v3459 = vpop.f32.mrb[0].mxu0
    %v3460 = vadd.f32 0.0, %v3459
    %v3461 = vpop.f32.mrb[0].mxu0
    %3462 = vdwg.mxu0
    %3463 = vrot.lane.b32.xlu0 %v356, 72
    %v3464 = vpop.permute.xlu0 %3463
    %3465 = vrot.lane.b32.xlu0 %v361, 72
    %v3466 = vpop.permute.xlu0 %3465
    %v3470 = vsel %vm539, %v3374, 0
    %v3473 = vsel %vm539, %v3375, 0
    %3475 = vmatprep.subr.mxu0 0.0
    %3476 = vmatpush1.msra.mxu0 %v3464
    %3477 = vmatprep.subr.mxu0 0.0
    %3478 = vmatpush1.msra.mxu0 %v3466
    %3479 = vmatprep.subr.mxu0 0.0
    %3480 = vmatpush1.msra.mxu0 0.0
    %3481 = vmatprep.subr.mxu0 0.0
    %3482 = vmatpush1.msra.mxu0 0.0
    %3483 = vmatprep.subr.mxu0 0.0
    %3484 = vmatpush1.msra.mxu0 0.0
    %3485 = vmatprep.subr.mxu0 0.0
    %3486 = vmatpush1.msra.mxu0 0.0
    %3487 = vmatprep.subr.mxu0 0.0
    %3488 = vmatpush1.msra.mxu0 0.0
    %3489 = vmatprep.subr.mxu0 0.0
    %3490 = vmatpush1.msra.mxu0 0.0
    %3491 = vmatprep.subr.mxu0 0.0
    %3492 = vmatpush1.msra.mxu0 0.0
    %3493 = vmatprep.subr.mxu0 0.0
    %3494 = vmatpush1.msra.mxu0 0.0
    %3495 = vmatprep.subr.mxu0 0.0
    %3496 = vmatpush1.msra.mxu0 0.0
    %3497 = vmatprep.subr.mxu0 0.0
    %3498 = vmatpush1.msra.mxu0 0.0
    %3499 = vmatprep.subr.mxu0 0.0
    %3500 = vmatpush1.msra.mxu0 0.0
    %3501 = vmatprep.subr.mxu0 0.0
    %3502 = vmatpush1.msra.mxu0 0.0
    %3503 = vmatprep.subr.mxu0 0.0
    %3504 = vmatpush1.msra.mxu0 0.0
    %3505 = vmatprep.subr.mxu0 0.0
    %3506 = vmatpush1.msra.mxu0 0.0
    %3507 = vmatprep.subr.mxu0 0.0
    %3508 = vmatpush1.msra.mxu0 0.0
    %3509 = vmatprep.subr.mxu0 0.0
    %3510 = vmatpush1.msra.mxu0 0.0
    %3511 = vmatprep.subr.mxu0 0.0
    %3512 = vmatpush1.msra.mxu0 0.0
    %3513 = vmatprep.subr.mxu0 0.0
    %3514 = vmatpush1.msra.mxu0 0.0
    %3515 = vmatprep.subr.mxu0 0.0
    %3516 = vmatpush1.msra.mxu0 0.0
    %3517 = vmatprep.subr.mxu0 0.0
    %3518 = vmatpush1.msra.mxu0 0.0
    %3519 = vmatprep.subr.mxu0 0.0
    %3520 = vmatpush1.msra.mxu0 0.0
    %3521 = vmatprep.subr.mxu0 0.0
    %3522 = vmatpush1.msra.mxu0 0.0
    %3523 = vmatprep.subr.mxu0 0.0
    %3524 = vmatpush1.msra.mxu0 0.0
    %3525 = vmatprep.subr.mxu0 0.0
    %3526 = vmatpush1.msra.mxu0 0.0
    %3527 = vmatprep.subr.mxu0 0.0
    %3528 = vmatpush1.msra.mxu0 0.0
    %3529 = vmatprep.subr.mxu0 0.0
    %3530 = vmatpush1.msra.mxu0 0.0
    %3531 = vmatprep.subr.mxu0 0.0
    %3532 = vmatpush1.msra.mxu0 0.0
    %3533 = vmatprep.subr.mxu0 0.0
    %3534 = vmatpush1.msra.mxu0 0.0
    %3535 = vmatprep.subr.mxu0 0.0
    %3536 = vmatpush1.msra.mxu0 0.0
    %3537 = vmatprep.subr.mxu0 0.0
    %3538 = vmatpush1.msra.mxu0 0.0
    %3539 = vmatprep.mubr.f32.mxu0 0.0
    %3540 = vmatmul.mubr.f32.gmra.mrb[0].mxu0 %v3470
    %v3541 = vpop.f32.mrb[0].mxu0
    %v3542 = vadd.f32 0.0, %v3541
    %v3543 = vpop.f32.mrb[0].mxu0
    %3544 = vmatprep.mubr.f32.mxu0 0.0
    %3545 = vmatmul.mubr.f32.gmra.mrb[0].mxu0 %v3473
    %v3546 = vpop.f32.mrb[0].mxu0
    %v3547 = vadd.f32 0.0, %v3546
    %v3548 = vpop.f32.mrb[0].mxu0
    %3549 = vdwg.mxu0
    %3554 = vrot.lane.b32.xlu0 %v1053, 8
    %v3555 = vpop.permute.xlu0 %3554
    %3556 = vrot.lane.b32.xlu0 %v1058, 8
    %v3557 = vpop.permute.xlu0 %3556
    %3558 = vrot.lane.b32.xlu0 %v1142, 8
    %v3559 = vpop.permute.xlu0 %3558
    %3560 = vrot.lane.b32.xlu0 %v1147, 8
    %v3561 = vpop.permute.xlu0 %3560
    %3570 = vrot.lane.b32.xlu0 %v1455, 16
    %v3571 = vpop.permute.xlu0 %3570
    %3572 = vrot.lane.b32.xlu0 %v1460, 16
    %v3573 = vpop.permute.xlu0 %3572
    %3574 = vrot.lane.b32.xlu0 %v1542, 16
    %v3575 = vpop.permute.xlu0 %3574
    %3576 = vrot.lane.b32.xlu0 %v1547, 16
    %v3577 = vpop.permute.xlu0 %3576
    %3586 = vrot.lane.b32.xlu0 %v1855, 24
    %v3587 = vpop.permute.xlu0 %3586
    %3588 = vrot.lane.b32.xlu0 %v1860, 24
    %v3589 = vpop.permute.xlu0 %3588
    %3590 = vrot.lane.b32.xlu0 %v1942, 24
    %v3591 = vpop.permute.xlu0 %3590
    %3592 = vrot.lane.b32.xlu0 %v1947, 24
    %v3593 = vpop.permute.xlu0 %3592
    %3602 = vrot.lane.b32.xlu0 %v2255, 32
    %v3603 = vpop.permute.xlu0 %3602
    %3604 = vrot.lane.b32.xlu0 %v2260, 32
    %v3605 = vpop.permute.xlu0 %3604
    %3606 = vrot.lane.b32.xlu0 %v2342, 32
    %v3607 = vpop.permute.xlu0 %3606
    %3608 = vrot.lane.b32.xlu0 %v2347, 32
    %v3609 = vpop.permute.xlu0 %3608
    %3618 = vrot.lane.b32.xlu0 %v2655, 40
    %v3619 = vpop.permute.xlu0 %3618
    %3620 = vrot.lane.b32.xlu0 %v2660, 40
    %v3621 = vpop.permute.xlu0 %3620
    %3622 = vrot.lane.b32.xlu0 %v2742, 40
    %v3623 = vpop.permute.xlu0 %3622
    %3624 = vrot.lane.b32.xlu0 %v2747, 40
    %v3625 = vpop.permute.xlu0 %3624
    %3634 = vrot.lane.b32.xlu0 %v3055, 48
    %v3635 = vpop.permute.xlu0 %3634
    %3636 = vrot.lane.b32.xlu0 %v3060, 48
    %v3637 = vpop.permute.xlu0 %3636
    %3638 = vrot.lane.b32.xlu0 %v3142, 48
    %v3639 = vpop.permute.xlu0 %3638
    %3640 = vrot.lane.b32.xlu0 %v3147, 48
    %v3641 = vpop.permute.xlu0 %3640
    %3650 = vrot.lane.b32.xlu0 %v3455, 56
    %v3651 = vpop.permute.xlu0 %3650
    %3652 = vrot.lane.b32.xlu0 %v3460, 56
    %v3653 = vpop.permute.xlu0 %3652
    %3654 = vrot.lane.b32.xlu0 %v3542, 56
    %v3655 = vpop.permute.xlu0 %3654
    %3656 = vrot.lane.b32.xlu0 %v3547, 56
    %v3657 = vpop.permute.xlu0 %3656
    %v3662 = vsel %vm364, %v657, %v3555
    %v3663 = vsel %vm364, %v662, %v3557
    %v3664 = vsel %vm364, %v738, %v3559
    %v3665 = vsel %vm364, %v743, %v3561
    %v3666 = vsel %vm539, %v3662, %v3571
    %v3667 = vsel %vm539, %v3663, %v3573
    %v3668 = vsel %vm539, %v3664, %v3575
    %v3669 = vsel %vm539, %v3665, %v3577
    %vm3670 = vcmask 195584
    %v3671 = vsel %vm3670, %v3666, %v3587
    %v3672 = vsel %vm3670, %v3667, %v3589
    %v3673 = vsel %vm3670, %v3668, %v3591
    %v3674 = vsel %vm3670, %v3669, %v3593
    %vm3675 = vcmask 261120
    %v3676 = vsel %vm3675, %v3671, %v3603
    %v3677 = vsel %vm3675, %v3672, %v3605
    %v3678 = vsel %vm3675, %v3673, %v3607
    %v3679 = vsel %vm3675, %v3674, %v3609
    %vm3680 = vcmask 326656
    %v3681 = vsel %vm3680, %v3676, %v3619
    %v3682 = vsel %vm3680, %v3677, %v3621
    %v3683 = vsel %vm3680, %v3678, %v3623
    %v3684 = vsel %vm3680, %v3679, %v3625
    %vm3685 = vcmask 392192
    %v3686 = vsel %vm3685, %v3681, %v3635
    %v3687 = vsel %vm3685, %v3682, %v3637
    %v3688 = vsel %vm3685, %v3683, %v3639
    %v3689 = vsel %vm3685, %v3684, %v3641
    %vm3690 = vcmask 457728
    %v3691 = vsel %vm3690, %v3686, %v3651
    %v3692 = vsel %vm3690, %v3687, %v3653
    %v3693 = vsel %vm3690, %v3688, %v3655
    %v3694 = vsel %vm3690, %v3689, %v3657
    %v3695 = vlaneseq
    %v3696 = vshrl.u32 %v3695, 7
    %v3697 = vsub.s32 0, %v3696
    %v3698 = vrot.slane %v83, %v3697
    %v3700 = vsel %vm88, %v3691, 0
    %v3703 = vsel %vm88, %v3692, 0
    %v3706 = vsel %vm88, %v3693, 0
    %v3709 = vsel %vm88, %v3694, 0
    %3711 = vmatprep.subr.mxu0 0.0
    %3712 = vmatpush1.msra.mxu0 %v72
    %3713 = vmatprep.subr.mxu0 0.0
    %3714 = vmatpush1.msra.mxu0 %v73
    %3715 = vmatprep.subr.mxu0 0.0
    %3716 = vmatpush1.msra.mxu0 %v74
    %3717 = vmatprep.subr.mxu0 0.0
    %3718 = vmatpush1.msra.mxu0 %v75
    %3719 = vmatprep.subr.mxu0 0.0
    %3720 = vmatpush1.msra.mxu0 %v76
    %3721 = vmatprep.subr.mxu0 0.0
    %3722 = vmatpush1.msra.mxu0 %v77
    %3723 = vmatprep.subr.mxu0 0.0
    %3724 = vmatpush1.msra.mxu0 %v78
    %3725 = vmatprep.subr.mxu0 0.0
    %3726 = vmatpush1.msra.mxu0 %v79
    %3727 = vmatprep.subr.mxu0 0.0
    %3728 = vmatpush1.msra.mxu0 0.0
    %3729 = vmatprep.subr.mxu0 0.0
    %3730 = vmatpush1.msra.mxu0 0.0
    %3731 = vmatprep.subr.mxu0 0.0
    %3732 = vmatpush1.msra.mxu0 0.0
    %3733 = vmatprep.subr.mxu0 0.0
    %3734 = vmatpush1.msra.mxu0 0.0
    %3735 = vmatprep.subr.mxu0 0.0
    %3736 = vmatpush1.msra.mxu0 0.0
    %3737 = vmatprep.subr.mxu0 0.0
    %3738 = vmatpush1.msra.mxu0 0.0
    %3739 = vmatprep.subr.mxu0 0.0
    %3740 = vmatpush1.msra.mxu0 0.0
    %3741 = vmatprep.subr.mxu0 0.0
    %3742 = vmatpush1.msra.mxu0 0.0
    %3743 = vmatprep.subr.mxu0 0.0
    %3744 = vmatpush1.msra.mxu0 0.0
    %3745 = vmatprep.subr.mxu0 0.0
    %3746 = vmatpush1.msra.mxu0 0.0
    %3747 = vmatprep.subr.mxu0 0.0
    %3748 = vmatpush1.msra.mxu0 0.0
    %3749 = vmatprep.subr.mxu0 0.0
    %3750 = vmatpush1.msra.mxu0 0.0
    %3751 = vmatprep.subr.mxu0 0.0
    %3752 = vmatpush1.msra.mxu0 0.0
    %3753 = vmatprep.subr.mxu0 0.0
    %3754 = vmatpush1.msra.mxu0 0.0
    %3755 = vmatprep.subr.mxu0 0.0
    %3756 = vmatpush1.msra.mxu0 0.0
    %3757 = vmatprep.subr.mxu0 0.0
    %3758 = vmatpush1.msra.mxu0 0.0
    %3759 = vmatprep.subr.mxu0 0.0
    %3760 = vmatpush1.msra.mxu0 0.0
    %3761 = vmatprep.subr.mxu0 0.0
    %3762 = vmatpush1.msra.mxu0 0.0
    %3763 = vmatprep.subr.mxu0 0.0
    %3764 = vmatpush1.msra.mxu0 0.0
    %3765 = vmatprep.subr.mxu0 0.0
    %3766 = vmatpush1.msra.mxu0 0.0
    %3767 = vmatprep.subr.mxu0 0.0
    %3768 = vmatpush1.msra.mxu0 0.0
    %3769 = vmatprep.subr.mxu0 0.0
    %3770 = vmatpush1.msra.mxu0 0.0
    %3771 = vmatprep.subr.mxu0 0.0
    %3772 = vmatpush1.msra.mxu0 0.0
    %3773 = vmatprep.subr.mxu0 0.0
    %3774 = vmatpush1.msra.mxu0 0.0
    %3775 = vmatprep.mubr.f32.mxu0 0.0
    %3776 = vmatmul.mubr.f32.gmra.mrb[0].mxu0 %v3700
    %v3777 = vpop.f32.mrb[0].mxu0
    %v3778 = vadd.f32 %v3698, %v3777
    %v3779 = vpop.f32.mrb[0].mxu0
    %3780 = vmatprep.mubr.f32.mxu0 0.0
    %3781 = vmatmul.mubr.f32.gmra.mrb[0].mxu0 %v3703
    %v3782 = vpop.f32.mrb[0].mxu0
    %v3783 = vpop.f32.mrb[0].mxu0
    %3784 = vmatprep.mubr.f32.mxu0 0.0
    %3785 = vmatmul.mubr.f32.gmra.mrb[0].mxu0 %v3706
    %v3786 = vpop.f32.mrb[0].mxu0
    %v3787 = vadd.f32 %v3698, %v3786
    %v3788 = vpop.f32.mrb[0].mxu0
    %3789 = vmatprep.mubr.f32.mxu0 0.0
    %3790 = vmatmul.mubr.f32.gmra.mrb[0].mxu0 %v3709
    %v3791 = vpop.f32.mrb[0].mxu0
    %v3792 = vpop.f32.mrb[0].mxu0
    %3793 = vdwg.mxu0
    %v3794 = vadd.f32 %v41, %v3778
    %v3795 = vadd.f32 %v43, %v3787
    %v3796 = vld [vmem:[%s2] sm:$0xff]
    %v3797 = vld [vmem:[%s2 + $0x8] sm:$0xff]
    %v3798 = vld [vmem:[%s1] sm:$0xff]
    %v3799 = vld [vmem:[%s1 + $0x8] sm:$0xff]
    %v3800 = vld [vmem:[%s1 + $0x10] sm:$0xff]
    %v3801 = vld [vmem:[%s1 + $0x18] sm:$0xff]
    %s3802 = scalar_lea.vmem [#allocation2], 256
    %v3803 = vld [vmem:[%s3802] sm:$0xff]
    %v3804 = vld [vmem:[%s3802 + $0x8] sm:$0xff]
    %v3805 = vld [vmem:[%s3802 + $0x10] sm:$0xff]
    %v3806 = vld [vmem:[%s3802 + $0x18] sm:$0xff]
    %v3807 = vld [vmem:[%s3802 + $0x20] sm:$0xff]
    %v3808 = vld [vmem:[%s3802 + $0x28] sm:$0xff]
    %v3809 = vld [vmem:[%s3802 + $0x30] sm:$0xff]
    %v3810 = vld [vmem:[%s3802 + $0x38] sm:$0xff]
    %s3811 = scalar_lea.vmem [#allocation2], 320
    %v3812 = vld [vmem:[%s3811] sm:$0xff]
    %v3813 = vld [vmem:[%s3811 + $0x8] sm:$0xff]
    %v3814 = vld [vmem:[%s3811 + $0x10] sm:$0xff]
    %v3815 = vld [vmem:[%s3811 + $0x18] sm:$0xff]
    %v3816 = vld [vmem:[%s3811 + $0x20] sm:$0xff]
    %v3817 = vld [vmem:[%s3811 + $0x28] sm:$0xff]
    %v3818 = vld [vmem:[%s3811 + $0x30] sm:$0xff]
    %v3819 = vld [vmem:[%s3811 + $0x38] sm:$0xff]
    %s3820 = scalar_lea.vmem [#allocation2], 384
    %v3821 = vld [vmem:[%s3820] sm:$0xff]
    %v3822 = vld [vmem:[%s3820 + $0x8] sm:$0xff]
    %v3823 = vld [vmem:[%s3820 + $0x10] sm:$0xff]
    %v3824 = vld [vmem:[%s3820 + $0x18] sm:$0xff]
    %v3825 = vld [vmem:[%s3820 + $0x20] sm:$0xff]
    %v3826 = vld [vmem:[%s3820 + $0x28] sm:$0xff]
    %v3827 = vld [vmem:[%s3820 + $0x30] sm:$0xff]
    %v3828 = vld [vmem:[%s3820 + $0x38] sm:$0xff]
    %s3829 = scalar_lea.vmem [#allocation2], 448
    %v3830 = vld [vmem:[%s3829] sm:$0xff]
    %v3831 = vld [vmem:[%s3829 + $0x8] sm:$0xff]
    %v3832 = vld [vmem:[%s3829 + $0x10] sm:$0xff]
    %v3833 = vld [vmem:[%s3829 + $0x18] sm:$0xff]
    %v3834 = vld [vmem:[%s3829 + $0x20] sm:$0xff]
    %v3835 = vld [vmem:[%s3829 + $0x28] sm:$0xff]
    %v3836 = vld [vmem:[%s3829 + $0x30] sm:$0xff]
    %v3837 = vld [vmem:[%s3829 + $0x38] sm:$0xff]
    %v3838 = vld [vmem:[%s4 + $0x6] sm:$0x1]
    %v3839 = vld [vmem:[%s4 + $0x7] sm:$0x1]
    %v3840 = vld [vmem:[%s4 + $0x8] sm:$0x1]
    %v3841 = vld [vmem:[%s4 + $0x9] sm:$0x1]
    %v3842 = vld [vmem:[%s4 + $0xa] sm:$0x1]
    %v3843 = vld [vmem:[%s4 + $0xb] sm:$0x1]
    %v3844 = vadd.f32 %v3794, %v3796
    %v3845 = vadd.f32 %v3795, %v3797
    %v3846 = vlaneseq
    %v3847 = vshrl.u32 %v3846, 7
    %v3848 = vsub.s32 0, %v3847
    %v3849 = vrot.slane %v3838, %v3848
    %v3851 = vsel %vm88, %v3844, 0
    %v3854 = vsel %vm88, %v3845, 0
    %3856 = vmatprep.subr.mxu0 0.0
    %3857 = vmatpush1.msra.mxu0 %v3803
    %3858 = vmatprep.subr.mxu0 0.0
    %3859 = vmatpush1.msra.mxu0 %v3804
    %3860 = vmatprep.subr.mxu0 0.0
    %3861 = vmatpush1.msra.mxu0 %v3805
    %3862 = vmatprep.subr.mxu0 0.0
    %3863 = vmatpush1.msra.mxu0 %v3806
    %3864 = vmatprep.subr.mxu0 0.0
    %3865 = vmatpush1.msra.mxu0 %v3807
    %3866 = vmatprep.subr.mxu0 0.0
    %3867 = vmatpush1.msra.mxu0 %v3808
    %3868 = vmatprep.subr.mxu0 0.0
    %3869 = vmatpush1.msra.mxu0 %v3809
    %3870 = vmatprep.subr.mxu0 0.0
    %3871 = vmatpush1.msra.mxu0 %v3810
    %3872 = vmatprep.subr.mxu0 0.0
    %3873 = vmatpush1.msra.mxu0 0.0
    %3874 = vmatprep.subr.mxu0 0.0
    %3875 = vmatpush1.msra.mxu0 0.0
    %3876 = vmatprep.subr.mxu0 0.0
    %3877 = vmatpush1.msra.mxu0 0.0
    %3878 = vmatprep.subr.mxu0 0.0
    %3879 = vmatpush1.msra.mxu0 0.0
    %3880 = vmatprep.subr.mxu0 0.0
    %3881 = vmatpush1.msra.mxu0 0.0
    %3882 = vmatprep.subr.mxu0 0.0
    %3883 = vmatpush1.msra.mxu0 0.0
    %3884 = vmatprep.subr.mxu0 0.0
    %3885 = vmatpush1.msra.mxu0 0.0
    %3886 = vmatprep.subr.mxu0 0.0
    %3887 = vmatpush1.msra.mxu0 0.0
    %3888 = vmatprep.subr.mxu0 0.0
    %3889 = vmatpush1.msra.mxu0 0.0
    %3890 = vmatprep.subr.mxu0 0.0
    %3891 = vmatpush1.msra.mxu0 0.0
    %3892 = vmatprep.subr.mxu0 0.0
    %3893 = vmatpush1.msra.mxu0 0.0
    %3894 = vmatprep.subr.mxu0 0.0
    %3895 = vmatpush1.msra.mxu0 0.0
    %3896 = vmatprep.subr.mxu0 0.0
    %3897 = vmatpush1.msra.mxu0 0.0
    %3898 = vmatprep.subr.mxu0 0.0
    %3899 = vmatpush1.msra.mxu0 0.0
    %3900 = vmatprep.subr.mxu0 0.0
    %3901 = vmatpush1.msra.mxu0 0.0
    %3902 = vmatprep.subr.mxu0 0.0
    %3903 = vmatpush1.msra.mxu0 0.0
    %3904 = vmatprep.subr.mxu0 0.0
    %3905 = vmatpush1.msra.mxu0 0.0
    %3906 = vmatprep.subr.mxu0 0.0
    %3907 = vmatpush1.msra.mxu0 0.0
    %3908 = vmatprep.subr.mxu0 0.0
    %3909 = vmatpush1.msra.mxu0 0.0
    %3910 = vmatprep.subr.mxu0 0.0
    %3911 = vmatpush1.msra.mxu0 0.0
    %3912 = vmatprep.subr.mxu0 0.0
    %3913 = vmatpush1.msra.mxu0 0.0
    %3914 = vmatprep.subr.mxu0 0.0
    %3915 = vmatpush1.msra.mxu0 0.0
    %3916 = vmatprep.subr.mxu0 0.0
    %3917 = vmatpush1.msra.mxu0 0.0
    %3918 = vmatprep.subr.mxu0 0.0
    %3919 = vmatpush1.msra.mxu0 0.0
    %3920 = vmatprep.mubr.f32.mxu0 0.0
    %3921 = vmatmul.mubr.f32.gmra.mrb[0].mxu0 %v3851
    %v3922 = vpop.f32.mrb[0].mxu0
    %v3923 = vadd.f32 %v3849, %v3922
    %v3924 = vpop.f32.mrb[0].mxu0
    %3925 = vmatprep.mubr.f32.mxu0 0.0
    %3926 = vmatmul.mubr.f32.gmra.mrb[0].mxu0 %v3854
    %v3927 = vpop.f32.mrb[0].mxu0
    %v3928 = vadd.f32 %v3849, %v3927
    %v3929 = vpop.f32.mrb[0].mxu0
    %3930 = vdwg.mxu0
    %v3931 = vlaneseq
    %v3932 = vshrl.u32 %v3931, 7
    %v3933 = vsub.s32 0, %v3932
    %v3934 = vrot.slane %v3839, %v3933
    %v3936 = vsel %vm88, %v3798, 0
    %v3939 = vsel %vm88, %v3799, 0
    %v3942 = vsel %vm88, %v3800, 0
    %v3945 = vsel %vm88, %v3801, 0
    %3947 = vmatprep.subr.mxu0 0.0
    %3948 = vmatpush1.msra.mxu0 %v3812
    %3949 = vmatprep.subr.mxu0 0.0
    %3950 = vmatpush1.msra.mxu0 %v3813
    %3951 = vmatprep.subr.mxu0 0.0
    %3952 = vmatpush1.msra.mxu0 %v3814
    %3953 = vmatprep.subr.mxu0 0.0
    %3954 = vmatpush1.msra.mxu0 %v3815
    %3955 = vmatprep.subr.mxu0 0.0
    %3956 = vmatpush1.msra.mxu0 %v3816
    %3957 = vmatprep.subr.mxu0 0.0
    %3958 = vmatpush1.msra.mxu0 %v3817
    %3959 = vmatprep.subr.mxu0 0.0
    %3960 = vmatpush1.msra.mxu0 %v3818
    %3961 = vmatprep.subr.mxu0 0.0
    %3962 = vmatpush1.msra.mxu0 %v3819
    %3963 = vmatprep.subr.mxu0 0.0
    %3964 = vmatpush1.msra.mxu0 0.0
    %3965 = vmatprep.subr.mxu0 0.0
    %3966 = vmatpush1.msra.mxu0 0.0
    %3967 = vmatprep.subr.mxu0 0.0
    %3968 = vmatpush1.msra.mxu0 0.0
    %3969 = vmatprep.subr.mxu0 0.0
    %3970 = vmatpush1.msra.mxu0 0.0
    %3971 = vmatprep.subr.mxu0 0.0
    %3972 = vmatpush1.msra.mxu0 0.0
    %3973 = vmatprep.subr.mxu0 0.0
    %3974 = vmatpush1.msra.mxu0 0.0
    %3975 = vmatprep.subr.mxu0 0.0
    %3976 = vmatpush1.msra.mxu0 0.0
    %3977 = vmatprep.subr.mxu0 0.0
    %3978 = vmatpush1.msra.mxu0 0.0
    %3979 = vmatprep.subr.mxu0 0.0
    %3980 = vmatpush1.msra.mxu0 0.0
    %3981 = vmatprep.subr.mxu0 0.0
    %3982 = vmatpush1.msra.mxu0 0.0
    %3983 = vmatprep.subr.mxu0 0.0
    %3984 = vmatpush1.msra.mxu0 0.0
    %3985 = vmatprep.subr.mxu0 0.0
    %3986 = vmatpush1.msra.mxu0 0.0
    %3987 = vmatprep.subr.mxu0 0.0
    %3988 = vmatpush1.msra.mxu0 0.0
    %3989 = vmatprep.subr.mxu0 0.0
    %3990 = vmatpush1.msra.mxu0 0.0
    %3991 = vmatprep.subr.mxu0 0.0
    %3992 = vmatpush1.msra.mxu0 0.0
    %3993 = vmatprep.subr.mxu0 0.0
    %3994 = vmatpush1.msra.mxu0 0.0
    %3995 = vmatprep.subr.mxu0 0.0
    %3996 = vmatpush1.msra.mxu0 0.0
    %3997 = vmatprep.subr.mxu0 0.0
    %3998 = vmatpush1.msra.mxu0 0.0
    %3999 = vmatprep.subr.mxu0 0.0
    %4000 = vmatpush1.msra.mxu0 0.0
    %4001 = vmatprep.subr.mxu0 0.0
    %4002 = vmatpush1.msra.mxu0 0.0
    %4003 = vmatprep.subr.mxu0 0.0
    %4004 = vmatpush1.msra.mxu0 0.0
    %4005 = vmatprep.subr.mxu0 0.0
    %4006 = vmatpush1.msra.mxu0 0.0
    %4007 = vmatprep.subr.mxu0 0.0
    %4008 = vmatpush1.msra.mxu0 0.0
    %4009 = vmatprep.subr.mxu0 0.0
    %4010 = vmatpush1.msra.mxu0 0.0
    %4011 = vmatprep.mubr.f32.mxu0 0.0
    %4012 = vmatmul.mubr.f32.gmra.mrb[0].mxu0 %v3936
    %v4013 = vpop.f32.mrb[0].mxu0
    %v4014 = vadd.f32 %v3934, %v4013
    %v4015 = vpop.f32.mrb[0].mxu0
    %4016 = vmatprep.mubr.f32.mxu0 0.0
    %4017 = vmatmul.mubr.f32.gmra.mrb[0].mxu0 %v3939
    %v4018 = vpop.f32.mrb[0].mxu0
    %v4019 = vadd.f32 %v3934, %v4018
    %v4020 = vpop.f32.mrb[0].mxu0
    %4021 = vmatprep.mubr.f32.mxu0 0.0
    %4022 = vmatmul.mubr.f32.gmra.mrb[0].mxu0 %v3942
    %v4023 = vpop.f32.mrb[0].mxu0
    %v4024 = vadd.f32 %v3934, %v4023
    %v4025 = vpop.f32.mrb[0].mxu0
    %4026 = vmatprep.mubr.f32.mxu0 0.0
    %4027 = vmatmul.mubr.f32.gmra.mrb[0].mxu0 %v3945
    %v4028 = vpop.f32.mrb[0].mxu0
    %v4029 = vadd.f32 %v3934, %v4028
    %v4030 = vpop.f32.mrb[0].mxu0
    %4031 = vdwg.mxu0
    %v4032 = vlaneseq
    %v4033 = vshrl.u32 %v4032, 7
    %v4034 = vsub.s32 0, %v4033
    %v4035 = vrot.slane %v3840, %v4034
    %4036 = vmatprep.subr.mxu0 0.0
    %4037 = vmatpush1.msra.mxu0 %v3821
    %4038 = vmatprep.subr.mxu0 0.0
    %4039 = vmatpush1.msra.mxu0 %v3822
    %4040 = vmatprep.subr.mxu0 0.0
    %4041 = vmatpush1.msra.mxu0 %v3823
    %4042 = vmatprep.subr.mxu0 0.0
    %4043 = vmatpush1.msra.mxu0 %v3824
    %4044 = vmatprep.subr.mxu0 0.0
    %4045 = vmatpush1.msra.mxu0 %v3825
    %4046 = vmatprep.subr.mxu0 0.0
    %4047 = vmatpush1.msra.mxu0 %v3826
    %4048 = vmatprep.subr.mxu0 0.0
    %4049 = vmatpush1.msra.mxu0 %v3827
    %4050 = vmatprep.subr.mxu0 0.0
    %4051 = vmatpush1.msra.mxu0 %v3828
    %4052 = vmatprep.subr.mxu0 0.0
    %4053 = vmatpush1.msra.mxu0 0.0
    %4054 = vmatprep.subr.mxu0 0.0
    %4055 = vmatpush1.msra.mxu0 0.0
    %4056 = vmatprep.subr.mxu0 0.0
    %4057 = vmatpush1.msra.mxu0 0.0
    %4058 = vmatprep.subr.mxu0 0.0
    %4059 = vmatpush1.msra.mxu0 0.0
    %4060 = vmatprep.subr.mxu0 0.0
    %4061 = vmatpush1.msra.mxu0 0.0
    %4062 = vmatprep.subr.mxu0 0.0
    %4063 = vmatpush1.msra.mxu0 0.0
    %4064 = vmatprep.subr.mxu0 0.0
    %4065 = vmatpush1.msra.mxu0 0.0
    %4066 = vmatprep.subr.mxu0 0.0
    %4067 = vmatpush1.msra.mxu0 0.0
    %4068 = vmatprep.subr.mxu0 0.0
    %4069 = vmatpush1.msra.mxu0 0.0
    %4070 = vmatprep.subr.mxu0 0.0
    %4071 = vmatpush1.msra.mxu0 0.0
    %4072 = vmatprep.subr.mxu0 0.0
    %4073 = vmatpush1.msra.mxu0 0.0
    %4074 = vmatprep.subr.mxu0 0.0
    %4075 = vmatpush1.msra.mxu0 0.0
    %4076 = vmatprep.subr.mxu0 0.0
    %4077 = vmatpush1.msra.mxu0 0.0
    %4078 = vmatprep.subr.mxu0 0.0
    %4079 = vmatpush1.msra.mxu0 0.0
    %4080 = vmatprep.subr.mxu0 0.0
    %4081 = vmatpush1.msra.mxu0 0.0
    %4082 = vmatprep.subr.mxu0 0.0
    %4083 = vmatpush1.msra.mxu0 0.0
    %4084 = vmatprep.subr.mxu0 0.0
    %4085 = vmatpush1.msra.mxu0 0.0
    %4086 = vmatprep.subr.mxu0 0.0
    %4087 = vmatpush1.msra.mxu0 0.0
    %4088 = vmatprep.subr.mxu0 0.0
    %4089 = vmatpush1.msra.mxu0 0.0
    %4090 = vmatprep.subr.mxu0 0.0
    %4091 = vmatpush1.msra.mxu0 0.0
    %4092 = vmatprep.subr.mxu0 0.0
    %4093 = vmatpush1.msra.mxu0 0.0
    %4094 = vmatprep.subr.mxu0 0.0
    %4095 = vmatpush1.msra.mxu0 0.0
    %4096 = vmatprep.subr.mxu0 0.0
    %4097 = vmatpush1.msra.mxu0 0.0
    %4098 = vmatprep.subr.mxu0 0.0
    %4099 = vmatpush1.msra.mxu0 0.0
    %4100 = vmatprep.mubr.f32.mxu0 0.0
    %4101 = vmatmul.mubr.f32.gmra.mrb[0].mxu0 %v3936
    %v4102 = vpop.f32.mrb[0].mxu0
    %v4103 = vadd.f32 %v4035, %v4102
    %v4104 = vpop.f32.mrb[0].mxu0
    %4105 = vmatprep.mubr.f32.mxu0 0.0
    %4106 = vmatmul.mubr.f32.gmra.mrb[0].mxu0 %v3939
    %v4107 = vpop.f32.mrb[0].mxu0
    %v4108 = vadd.f32 %v4035, %v4107
    %v4109 = vpop.f32.mrb[0].mxu0
    %4110 = vmatprep.mubr.f32.mxu0 0.0
    %4111 = vmatmul.mubr.f32.gmra.mrb[0].mxu0 %v3942
    %v4112 = vpop.f32.mrb[0].mxu0
    %v4113 = vadd.f32 %v4035, %v4112
    %v4114 = vpop.f32.mrb[0].mxu0
    %4115 = vmatprep.mubr.f32.mxu0 0.0
    %4116 = vmatmul.mubr.f32.gmra.mrb[0].mxu0 %v3945
    %v4117 = vpop.f32.mrb[0].mxu0
    %v4118 = vadd.f32 %v4035, %v4117
    %v4119 = vpop.f32.mrb[0].mxu0
    %4120 = vdwg.mxu0
    %v4122 = vsel %vm364, %v3923, 0
    %v4125 = vsel %vm364, %v4014, 0
    %v4128 = vsel %vm364, %v4019, 0
    %4130 = vmatprep.subr.mxu0 0.0
    %4131 = vmatpush1.xpose.msra.mxu0 %v4125
    %4132 = vmatprep.subr.mxu0 0.0
    %4133 = vmatpush1.xpose.msra.mxu0 %v4128
    %4134 = vmatprep.subr.mxu0 0.0
    %4135 = vmatpush1.xpose.msra.mxu0 0.0
    %4136 = vmatprep.subr.mxu0 0.0
    %4137 = vmatpush1.xpose.msra.mxu0 0.0
    %4138 = vmatprep.subr.mxu0 0.0
    %4139 = vmatpush1.xpose.msra.mxu0 0.0
    %4140 = vmatprep.subr.mxu0 0.0
    %4141 = vmatpush1.xpose.msra.mxu0 0.0
    %4142 = vmatprep.subr.mxu0 0.0
    %4143 = vmatpush1.xpose.msra.mxu0 0.0
    %4144 = vmatprep.subr.mxu0 0.0
    %4145 = vmatpush1.xpose.msra.mxu0 0.0
    %4146 = vmatprep.subr.mxu0 0.0
    %4147 = vmatpush1.xpose.msra.mxu0 0.0
    %4148 = vmatprep.subr.mxu0 0.0
    %4149 = vmatpush1.xpose.msra.mxu0 0.0
    %4150 = vmatprep.subr.mxu0 0.0
    %4151 = vmatpush1.xpose.msra.mxu0 0.0
    %4152 = vmatprep.subr.mxu0 0.0
    %4153 = vmatpush1.xpose.msra.mxu0 0.0
    %4154 = vmatprep.subr.mxu0 0.0
    %4155 = vmatpush1.xpose.msra.mxu0 0.0
    %4156 = vmatprep.subr.mxu0 0.0
    %4157 = vmatpush1.xpose.msra.mxu0 0.0
    %4158 = vmatprep.subr.mxu0 0.0
    %4159 = vmatpush1.xpose.msra.mxu0 0.0
    %4160 = vmatprep.subr.mxu0 0.0
    %4161 = vmatpush1.xpose.msra.mxu0 0.0
    %4162 = vmatprep.subr.mxu0 0.0
    %4163 = vmatpush1.xpose.msra.mxu0 0.0
    %4164 = vmatprep.subr.mxu0 0.0
    %4165 = vmatpush1.xpose.msra.mxu0 0.0
    %4166 = vmatprep.subr.mxu0 0.0
    %4167 = vmatpush1.xpose.msra.mxu0 0.0
    %4168 = vmatprep.subr.mxu0 0.0
    %4169 = vmatpush1.xpose.msra.mxu0 0.0
    %4170 = vmatprep.subr.mxu0 0.0
    %4171 = vmatpush1.xpose.msra.mxu0 0.0
    %4172 = vmatprep.subr.mxu0 0.0
    %4173 = vmatpush1.xpose.msra.mxu0 0.0
    %4174 = vmatprep.subr.mxu0 0.0
    %4175 = vmatpush1.xpose.msra.mxu0 0.0
    %4176 = vmatprep.subr.mxu0 0.0
    %4177 = vmatpush1.xpose.msra.mxu0 0.0
    %4178 = vmatprep.subr.mxu0 0.0
    %4179 = vmatpush1.xpose.msra.mxu0 0.0
    %4180 = vmatprep.subr.mxu0 0.0
    %4181 = vmatpush1.xpose.msra.mxu0 0.0
    %4182 = vmatprep.subr.mxu0 0.0
    %4183 = vmatpush1.xpose.msra.mxu0 0.0
    %4184 = vmatprep.subr.mxu0 0.0
    %4185 = vmatpush1.xpose.msra.mxu0 0.0
    %4186 = vmatprep.subr.mxu0 0.0
    %4187 = vmatpush1.xpose.msra.mxu0 0.0
    %4188 = vmatprep.subr.mxu0 0.0
    %4189 = vmatpush1.xpose.msra.mxu0 0.0
    %4190 = vmatprep.subr.mxu0 0.0
    %4191 = vmatpush1.xpose.msra.mxu0 0.0
    %4192 = vmatprep.subr.mxu0 0.0
    %4193 = vmatpush1.xpose.msra.mxu0 0.0
    %4194 = vmatprep.mubr.f32.mxu0 0.0
    %4195 = vmatmul.mubr.f32.gmra.mrb[0].mxu0 %v4122
    %v4196 = vpop.f32.mrb[0].mxu0
    %v4197 = vadd.f32 0.0, %v4196
    %v4198 = vpop.f32.mrb[0].mxu0
    %4199 = vdwg.mxu0
    %v4201 = vsel %vm364, %v3928, 0
    %v4204 = vsel %vm364, %v4024, 0
    %v4207 = vsel %vm364, %v4029, 0
    %4209 = vmatprep.subr.mxu0 0.0
    %4210 = vmatpush1.xpose.msra.mxu0 %v4204
    %4211 = vmatprep.subr.mxu0 0.0
    %4212 = vmatpush1.xpose.msra.mxu0 %v4207
    %4213 = vmatprep.subr.mxu0 0.0
    %4214 = vmatpush1.xpose.msra.mxu0 0.0
    %4215 = vmatprep.subr.mxu0 0.0
    %4216 = vmatpush1.xpose.msra.mxu0 0.0
    %4217 = vmatprep.subr.mxu0 0.0
    %4218 = vmatpush1.xpose.msra.mxu0 0.0
    %4219 = vmatprep.subr.mxu0 0.0
    %4220 = vmatpush1.xpose.msra.mxu0 0.0
    %4221 = vmatprep.subr.mxu0 0.0
    %4222 = vmatpush1.xpose.msra.mxu0 0.0
    %4223 = vmatprep.subr.mxu0 0.0
    %4224 = vmatpush1.xpose.msra.mxu0 0.0
    %4225 = vmatprep.subr.mxu0 0.0
    %4226 = vmatpush1.xpose.msra.mxu0 0.0
    %4227 = vmatprep.subr.mxu0 0.0
    %4228 = vmatpush1.xpose.msra.mxu0 0.0
    %4229 = vmatprep.subr.mxu0 0.0
    %4230 = vmatpush1.xpose.msra.mxu0 0.0
    %4231 = vmatprep.subr.mxu0 0.0
    %4232 = vmatpush1.xpose.msra.mxu0 0.0
    %4233 = vmatprep.subr.mxu0 0.0
    %4234 = vmatpush1.xpose.msra.mxu0 0.0
    %4235 = vmatprep.subr.mxu0 0.0
    %4236 = vmatpush1.xpose.msra.mxu0 0.0
    %4237 = vmatprep.subr.mxu0 0.0
    %4238 = vmatpush1.xpose.msra.mxu0 0.0
    %4239 = vmatprep.subr.mxu0 0.0
    %4240 = vmatpush1.xpose.msra.mxu0 0.0
    %4241 = vmatprep.subr.mxu0 0.0
    %4242 = vmatpush1.xpose.msra.mxu0 0.0
    %4243 = vmatprep.subr.mxu0 0.0
    %4244 = vmatpush1.xpose.msra.mxu0 0.0
    %4245 = vmatprep.subr.mxu0 0.0
    %4246 = vmatpush1.xpose.msra.mxu0 0.0
    %4247 = vmatprep.subr.mxu0 0.0
    %4248 = vmatpush1.xpose.msra.mxu0 0.0
    %4249 = vmatprep.subr.mxu0 0.0
    %4250 = vmatpush1.xpose.msra.mxu0 0.0
    %4251 = vmatprep.subr.mxu0 0.0
    %4252 = vmatpush1.xpose.msra.mxu0 0.0
    %4253 = vmatprep.subr.mxu0 0.0
    %4254 = vmatpush1.xpose.msra.mxu0 0.0
    %4255 = vmatprep.subr.mxu0 0.0
    %4256 = vmatpush1.xpose.msra.mxu0 0.0
    %4257 = vmatprep.subr.mxu0 0.0
    %4258 = vmatpush1.xpose.msra.mxu0 0.0
    %4259 = vmatprep.subr.mxu0 0.0
    %4260 = vmatpush1.xpose.msra.mxu0 0.0
    %4261 = vmatprep.subr.mxu0 0.0
    %4262 = vmatpush1.xpose.msra.mxu0 0.0
    %4263 = vmatprep.subr.mxu0 0.0
    %4264 = vmatpush1.xpose.msra.mxu0 0.0
    %4265 = vmatprep.subr.mxu0 0.0
    %4266 = vmatpush1.xpose.msra.mxu0 0.0
    %4267 = vmatprep.subr.mxu0 0.0
    %4268 = vmatpush1.xpose.msra.mxu0 0.0
    %4269 = vmatprep.subr.mxu0 0.0
    %4270 = vmatpush1.xpose.msra.mxu0 0.0
    %4271 = vmatprep.subr.mxu0 0.0
    %4272 = vmatpush1.xpose.msra.mxu0 0.0
    %4273 = vmatprep.mubr.f32.mxu0 0.0
    %4274 = vmatmul.mubr.f32.gmra.mrb[0].mxu0 %v4201
    %v4275 = vpop.f32.mrb[0].mxu0
    %v4276 = vadd.f32 0.0, %v4275
    %v4277 = vpop.f32.mrb[0].mxu0
    %4278 = vdwg.mxu0
    %v4279 = vsel %vm539, %v4197, -inf
    %4280 = vmax.xlane.f32.xlu0 %v4279
    %v4281 = vpop.xlane.xlu0 %4280
    %v4282 = vsel %vm539, %v4276, -inf
    %4283 = vmax.xlane.f32.xlu0 %v4282
    %v4284 = vpop.xlane.xlu0 %4283
    %v4285 = vsub.f32 %v4197, %v4281
    %v4286 = vsub.f32 %v4276, %v4284
    %v4287 = vmul.f32 %v4285, 1.442695
    %v4288 = vpow.pop %v4287
    %v4289 = vmul.f32 %v4286, 1.442695
    %v4290 = vpow.pop %v4289
    %v4291 = vsel %vm539, %v4288, 0.0
    %4292 = vadd.xlane.f32.xlu0 %v4291
    %v4293 = vpop.xlane.xlu0 %4292
    %v4294 = vsel %vm539, %v4290, 0.0
    %4295 = vadd.xlane.f32.xlu0 %v4294
    %v4296 = vpop.xlane.xlu0 %4295
    %v4297 = vrcp.pop %v4293
    %v4298 = vrcp.pop %v4296
    %v4299 = vmul.f32 %v4288, %v4297
    %v4300 = vmul.f32 %v4290, %v4298
    %v4302 = vsel %vm539, %v4299, 0
    %4304 = vmatprep.subr.mxu0 0.0
    %4305 = vmatpush1.msra.mxu0 %v4103
    %4306 = vmatprep.subr.mxu0 0.0
    %4307 = vmatpush1.msra.mxu0 %v4108
    %4308 = vmatprep.subr.mxu0 0.0
    %4309 = vmatpush1.msra.mxu0 0.0
    %4310 = vmatprep.subr.mxu0 0.0
    %4311 = vmatpush1.msra.mxu0 0.0
    %4312 = vmatprep.subr.mxu0 0.0
    %4313 = vmatpush1.msra.mxu0 0.0
    %4314 = vmatprep.subr.mxu0 0.0
    %4315 = vmatpush1.msra.mxu0 0.0
    %4316 = vmatprep.subr.mxu0 0.0
    %4317 = vmatpush1.msra.mxu0 0.0
    %4318 = vmatprep.subr.mxu0 0.0
    %4319 = vmatpush1.msra.mxu0 0.0
    %4320 = vmatprep.subr.mxu0 0.0
    %4321 = vmatpush1.msra.mxu0 0.0
    %4322 = vmatprep.subr.mxu0 0.0
    %4323 = vmatpush1.msra.mxu0 0.0
    %4324 = vmatprep.subr.mxu0 0.0
    %4325 = vmatpush1.msra.mxu0 0.0
    %4326 = vmatprep.subr.mxu0 0.0
    %4327 = vmatpush1.msra.mxu0 0.0
    %4328 = vmatprep.subr.mxu0 0.0
    %4329 = vmatpush1.msra.mxu0 0.0
    %4330 = vmatprep.subr.mxu0 0.0
    %4331 = vmatpush1.msra.mxu0 0.0
    %4332 = vmatprep.subr.mxu0 0.0
    %4333 = vmatpush1.msra.mxu0 0.0
    %4334 = vmatprep.subr.mxu0 0.0
    %4335 = vmatpush1.msra.mxu0 0.0
    %4336 = vmatprep.subr.mxu0 0.0
    %4337 = vmatpush1.msra.mxu0 0.0
    %4338 = vmatprep.subr.mxu0 0.0
    %4339 = vmatpush1.msra.mxu0 0.0
    %4340 = vmatprep.subr.mxu0 0.0
    %4341 = vmatpush1.msra.mxu0 0.0
    %4342 = vmatprep.subr.mxu0 0.0
    %4343 = vmatpush1.msra.mxu0 0.0
    %4344 = vmatprep.subr.mxu0 0.0
    %4345 = vmatpush1.msra.mxu0 0.0
    %4346 = vmatprep.subr.mxu0 0.0
    %4347 = vmatpush1.msra.mxu0 0.0
    %4348 = vmatprep.subr.mxu0 0.0
    %4349 = vmatpush1.msra.mxu0 0.0
    %4350 = vmatprep.subr.mxu0 0.0
    %4351 = vmatpush1.msra.mxu0 0.0
    %4352 = vmatprep.subr.mxu0 0.0
    %4353 = vmatpush1.msra.mxu0 0.0
    %4354 = vmatprep.subr.mxu0 0.0
    %4355 = vmatpush1.msra.mxu0 0.0
    %4356 = vmatprep.subr.mxu0 0.0
    %4357 = vmatpush1.msra.mxu0 0.0
    %4358 = vmatprep.subr.mxu0 0.0
    %4359 = vmatpush1.msra.mxu0 0.0
    %4360 = vmatprep.subr.mxu0 0.0
    %4361 = vmatpush1.msra.mxu0 0.0
    %4362 = vmatprep.subr.mxu0 0.0
    %4363 = vmatpush1.msra.mxu0 0.0
    %4364 = vmatprep.subr.mxu0 0.0
    %4365 = vmatpush1.msra.mxu0 0.0
    %4366 = vmatprep.subr.mxu0 0.0
    %4367 = vmatpush1.msra.mxu0 0.0
    %4368 = vmatprep.mubr.f32.mxu0 0.0
    %4369 = vmatmul.mubr.f32.gmra.mrb[0].mxu0 %v4302
    %v4370 = vpop.f32.mrb[0].mxu0
    %v4371 = vadd.f32 0.0, %v4370
    %v4372 = vpop.f32.mrb[0].mxu0
    %4373 = vdwg.mxu0
    %v4375 = vsel %vm539, %v4300, 0
    %4377 = vmatprep.subr.mxu0 0.0
    %4378 = vmatpush1.msra.mxu0 %v4113
    %4379 = vmatprep.subr.mxu0 0.0
    %4380 = vmatpush1.msra.mxu0 %v4118
    %4381 = vmatprep.subr.mxu0 0.0
    %4382 = vmatpush1.msra.mxu0 0.0
    %4383 = vmatprep.subr.mxu0 0.0
    %4384 = vmatpush1.msra.mxu0 0.0
    %4385 = vmatprep.subr.mxu0 0.0
    %4386 = vmatpush1.msra.mxu0 0.0
    %4387 = vmatprep.subr.mxu0 0.0
    %4388 = vmatpush1.msra.mxu0 0.0
    %4389 = vmatprep.subr.mxu0 0.0
    %4390 = vmatpush1.msra.mxu0 0.0
    %4391 = vmatprep.subr.mxu0 0.0
    %4392 = vmatpush1.msra.mxu0 0.0
    %4393 = vmatprep.subr.mxu0 0.0
    %4394 = vmatpush1.msra.mxu0 0.0
    %4395 = vmatprep.subr.mxu0 0.0
    %4396 = vmatpush1.msra.mxu0 0.0
    %4397 = vmatprep.subr.mxu0 0.0
    %4398 = vmatpush1.msra.mxu0 0.0
    %4399 = vmatprep.subr.mxu0 0.0
    %4400 = vmatpush1.msra.mxu0 0.0
    %4401 = vmatprep.subr.mxu0 0.0
    %4402 = vmatpush1.msra.mxu0 0.0
    %4403 = vmatprep.subr.mxu0 0.0
    %4404 = vmatpush1.msra.mxu0 0.0
    %4405 = vmatprep.subr.mxu0 0.0
    %4406 = vmatpush1.msra.mxu0 0.0
    %4407 = vmatprep.subr.mxu0 0.0
    %4408 = vmatpush1.msra.mxu0 0.0
    %4409 = vmatprep.subr.mxu0 0.0
    %4410 = vmatpush1.msra.mxu0 0.0
    %4411 = vmatprep.subr.mxu0 0.0
    %4412 = vmatpush1.msra.mxu0 0.0
    %4413 = vmatprep.subr.mxu0 0.0
    %4414 = vmatpush1.msra.mxu0 0.0
    %4415 = vmatprep.subr.mxu0 0.0
    %4416 = vmatpush1.msra.mxu0 0.0
    %4417 = vmatprep.subr.mxu0 0.0
    %4418 = vmatpush1.msra.mxu0 0.0
    %4419 = vmatprep.subr.mxu0 0.0
    %4420 = vmatpush1.msra.mxu0 0.0
    %4421 = vmatprep.subr.mxu0 0.0
    %4422 = vmatpush1.msra.mxu0 0.0
    %4423 = vmatprep.subr.mxu0 0.0
    %4424 = vmatpush1.msra.mxu0 0.0
    %4425 = vmatprep.subr.mxu0 0.0
    %4426 = vmatpush1.msra.mxu0 0.0
    %4427 = vmatprep.subr.mxu0 0.0
    %4428 = vmatpush1.msra.mxu0 0.0
    %4429 = vmatprep.subr.mxu0 0.0
    %4430 = vmatpush1.msra.mxu0 0.0
    %4431 = vmatprep.subr.mxu0 0.0
    %4432 = vmatpush1.msra.mxu0 0.0
    %4433 = vmatprep.subr.mxu0 0.0
    %4434 = vmatpush1.msra.mxu0 0.0
    %4435 = vmatprep.subr.mxu0 0.0
    %4436 = vmatpush1.msra.mxu0 0.0
    %4437 = vmatprep.subr.mxu0 0.0
    %4438 = vmatpush1.msra.mxu0 0.0
    %4439 = vmatprep.subr.mxu0 0.0
    %4440 = vmatpush1.msra.mxu0 0.0
    %4441 = vmatprep.mubr.f32.mxu0 0.0
    %4442 = vmatmul.mubr.f32.gmra.mrb[0].mxu0 %v4375
    %v4443 = vpop.f32.mrb[0].mxu0
    %v4444 = vadd.f32 0.0, %v4443
    %v4445 = vpop.f32.mrb[0].mxu0
    %4446 = vdwg.mxu0
    %4447 = vrot.lane.b32.xlu0 %v3923, 120
    %v4448 = vpop.permute.xlu0 %4447
    %4449 = vrot.lane.b32.xlu0 %v4014, 120
    %v4450 = vpop.permute.xlu0 %4449
    %4451 = vrot.lane.b32.xlu0 %v4019, 120
    %v4452 = vpop.permute.xlu0 %4451
    %v4453 = vsel %vm364, %v4448, 0
    %v4455 = vsel %vm364, %v4450, 0
    %v4457 = vsel %vm364, %v4452, 0
    %4459 = vmatprep.subr.mxu0 0.0
    %4460 = vmatpush1.xpose.msra.mxu0 %v4455
    %4461 = vmatprep.subr.mxu0 0.0
    %4462 = vmatpush1.xpose.msra.mxu0 %v4457
    %4463 = vmatprep.subr.mxu0 0.0
    %4464 = vmatpush1.xpose.msra.mxu0 0.0
    %4465 = vmatprep.subr.mxu0 0.0
    %4466 = vmatpush1.xpose.msra.mxu0 0.0
    %4467 = vmatprep.subr.mxu0 0.0
    %4468 = vmatpush1.xpose.msra.mxu0 0.0
    %4469 = vmatprep.subr.mxu0 0.0
    %4470 = vmatpush1.xpose.msra.mxu0 0.0
    %4471 = vmatprep.subr.mxu0 0.0
    %4472 = vmatpush1.xpose.msra.mxu0 0.0
    %4473 = vmatprep.subr.mxu0 0.0
    %4474 = vmatpush1.xpose.msra.mxu0 0.0
    %4475 = vmatprep.subr.mxu0 0.0
    %4476 = vmatpush1.xpose.msra.mxu0 0.0
    %4477 = vmatprep.subr.mxu0 0.0
    %4478 = vmatpush1.xpose.msra.mxu0 0.0
    %4479 = vmatprep.subr.mxu0 0.0
    %4480 = vmatpush1.xpose.msra.mxu0 0.0
    %4481 = vmatprep.subr.mxu0 0.0
    %4482 = vmatpush1.xpose.msra.mxu0 0.0
    %4483 = vmatprep.subr.mxu0 0.0
    %4484 = vmatpush1.xpose.msra.mxu0 0.0
    %4485 = vmatprep.subr.mxu0 0.0
    %4486 = vmatpush1.xpose.msra.mxu0 0.0
    %4487 = vmatprep.subr.mxu0 0.0
    %4488 = vmatpush1.xpose.msra.mxu0 0.0
    %4489 = vmatprep.subr.mxu0 0.0
    %4490 = vmatpush1.xpose.msra.mxu0 0.0
    %4491 = vmatprep.subr.mxu0 0.0
    %4492 = vmatpush1.xpose.msra.mxu0 0.0
    %4493 = vmatprep.subr.mxu0 0.0
    %4494 = vmatpush1.xpose.msra.mxu0 0.0
    %4495 = vmatprep.subr.mxu0 0.0
    %4496 = vmatpush1.xpose.msra.mxu0 0.0
    %4497 = vmatprep.subr.mxu0 0.0
    %4498 = vmatpush1.xpose.msra.mxu0 0.0
    %4499 = vmatprep.subr.mxu0 0.0
    %4500 = vmatpush1.xpose.msra.mxu0 0.0
    %4501 = vmatprep.subr.mxu0 0.0
    %4502 = vmatpush1.xpose.msra.mxu0 0.0
    %4503 = vmatprep.subr.mxu0 0.0
    %4504 = vmatpush1.xpose.msra.mxu0 0.0
    %4505 = vmatprep.subr.mxu0 0.0
    %4506 = vmatpush1.xpose.msra.mxu0 0.0
    %4507 = vmatprep.subr.mxu0 0.0
    %4508 = vmatpush1.xpose.msra.mxu0 0.0
    %4509 = vmatprep.subr.mxu0 0.0
    %4510 = vmatpush1.xpose.msra.mxu0 0.0
    %4511 = vmatprep.subr.mxu0 0.0
    %4512 = vmatpush1.xpose.msra.mxu0 0.0
    %4513 = vmatprep.subr.mxu0 0.0
    %4514 = vmatpush1.xpose.msra.mxu0 0.0
    %4515 = vmatprep.subr.mxu0 0.0
    %4516 = vmatpush1.xpose.msra.mxu0 0.0
    %4517 = vmatprep.subr.mxu0 0.0
    %4518 = vmatpush1.xpose.msra.mxu0 0.0
    %4519 = vmatprep.subr.mxu0 0.0
    %4520 = vmatpush1.xpose.msra.mxu0 0.0
    %4521 = vmatprep.subr.mxu0 0.0
    %4522 = vmatpush1.xpose.msra.mxu0 0.0
    %4523 = vmatprep.mubr.f32.mxu0 0.0
    %4524 = vmatmul.mubr.f32.gmra.mrb[0].mxu0 %v4453
    %v4525 = vpop.f32.mrb[0].mxu0
    %v4526 = vadd.f32 0.0, %v4525
    %v4527 = vpop.f32.mrb[0].mxu0
    %4528 = vdwg.mxu0
    %4529 = vrot.lane.b32.xlu0 %v3928, 120
    %v4530 = vpop.permute.xlu0 %4529
    %4531 = vrot.lane.b32.xlu0 %v4024, 120
    %v4532 = vpop.permute.xlu0 %4531
    %4533 = vrot.lane.b32.xlu0 %v4029, 120
    %v4534 = vpop.permute.xlu0 %4533
    %v4535 = vsel %vm364, %v4530, 0
    %v4537 = vsel %vm364, %v4532, 0
    %v4539 = vsel %vm364, %v4534, 0
    %4541 = vmatprep.subr.mxu0 0.0
    %4542 = vmatpush1.xpose.msra.mxu0 %v4537
    %4543 = vmatprep.subr.mxu0 0.0
    %4544 = vmatpush1.xpose.msra.mxu0 %v4539
    %4545 = vmatprep.subr.mxu0 0.0
    %4546 = vmatpush1.xpose.msra.mxu0 0.0
    %4547 = vmatprep.subr.mxu0 0.0
    %4548 = vmatpush1.xpose.msra.mxu0 0.0
    %4549 = vmatprep.subr.mxu0 0.0
    %4550 = vmatpush1.xpose.msra.mxu0 0.0
    %4551 = vmatprep.subr.mxu0 0.0
    %4552 = vmatpush1.xpose.msra.mxu0 0.0
    %4553 = vmatprep.subr.mxu0 0.0
    %4554 = vmatpush1.xpose.msra.mxu0 0.0
    %4555 = vmatprep.subr.mxu0 0.0
    %4556 = vmatpush1.xpose.msra.mxu0 0.0
    %4557 = vmatprep.subr.mxu0 0.0
    %4558 = vmatpush1.xpose.msra.mxu0 0.0
    %4559 = vmatprep.subr.mxu0 0.0
    %4560 = vmatpush1.xpose.msra.mxu0 0.0
    %4561 = vmatprep.subr.mxu0 0.0
    %4562 = vmatpush1.xpose.msra.mxu0 0.0
    %4563 = vmatprep.subr.mxu0 0.0
    %4564 = vmatpush1.xpose.msra.mxu0 0.0
    %4565 = vmatprep.subr.mxu0 0.0
    %4566 = vmatpush1.xpose.msra.mxu0 0.0
    %4567 = vmatprep.subr.mxu0 0.0
    %4568 = vmatpush1.xpose.msra.mxu0 0.0
    %4569 = vmatprep.subr.mxu0 0.0
    %4570 = vmatpush1.xpose.msra.mxu0 0.0
    %4571 = vmatprep.subr.mxu0 0.0
    %4572 = vmatpush1.xpose.msra.mxu0 0.0
    %4573 = vmatprep.subr.mxu0 0.0
    %4574 = vmatpush1.xpose.msra.mxu0 0.0
    %4575 = vmatprep.subr.mxu0 0.0
    %4576 = vmatpush1.xpose.msra.mxu0 0.0
    %4577 = vmatprep.subr.mxu0 0.0
    %4578 = vmatpush1.xpose.msra.mxu0 0.0
    %4579 = vmatprep.subr.mxu0 0.0
    %4580 = vmatpush1.xpose.msra.mxu0 0.0
    %4581 = vmatprep.subr.mxu0 0.0
    %4582 = vmatpush1.xpose.msra.mxu0 0.0
    %4583 = vmatprep.subr.mxu0 0.0
    %4584 = vmatpush1.xpose.msra.mxu0 0.0
    %4585 = vmatprep.subr.mxu0 0.0
    %4586 = vmatpush1.xpose.msra.mxu0 0.0
    %4587 = vmatprep.subr.mxu0 0.0
    %4588 = vmatpush1.xpose.msra.mxu0 0.0
    %4589 = vmatprep.subr.mxu0 0.0
    %4590 = vmatpush1.xpose.msra.mxu0 0.0
    %4591 = vmatprep.subr.mxu0 0.0
    %4592 = vmatpush1.xpose.msra.mxu0 0.0
    %4593 = vmatprep.subr.mxu0 0.0
    %4594 = vmatpush1.xpose.msra.mxu0 0.0
    %4595 = vmatprep.subr.mxu0 0.0
    %4596 = vmatpush1.xpose.msra.mxu0 0.0
    %4597 = vmatprep.subr.mxu0 0.0
    %4598 = vmatpush1.xpose.msra.mxu0 0.0
    %4599 = vmatprep.subr.mxu0 0.0
    %4600 = vmatpush1.xpose.msra.mxu0 0.0
    %4601 = vmatprep.subr.mxu0 0.0
    %4602 = vmatpush1.xpose.msra.mxu0 0.0
    %4603 = vmatprep.subr.mxu0 0.0
    %4604 = vmatpush1.xpose.msra.mxu0 0.0
    %4605 = vmatprep.mubr.f32.mxu0 0.0
    %4606 = vmatmul.mubr.f32.gmra.mrb[0].mxu0 %v4535
    %v4607 = vpop.f32.mrb[0].mxu0
    %v4608 = vadd.f32 0.0, %v4607
    %v4609 = vpop.f32.mrb[0].mxu0
    %4610 = vdwg.mxu0
    %v4611 = vsel %vm539, %v4526, -inf
    %4612 = vmax.xlane.f32.xlu0 %v4611
    %v4613 = vpop.xlane.xlu0 %4612
    %v4614 = vsel %vm539, %v4608, -inf
    %4615 = vmax.xlane.f32.xlu0 %v4614
    %v4616 = vpop.xlane.xlu0 %4615
    %v4617 = vsub.f32 %v4526, %v4613
    %v4618 = vsub.f32 %v4608, %v4616
    %v4619 = vmul.f32 %v4617, 1.442695
    %v4620 = vpow.pop %v4619
    %v4621 = vmul.f32 %v4618, 1.442695
    %v4622 = vpow.pop %v4621
    %v4623 = vsel %vm539, %v4620, 0.0
    %4624 = vadd.xlane.f32.xlu0 %v4623
    %v4625 = vpop.xlane.xlu0 %4624
    %v4626 = vsel %vm539, %v4622, 0.0
    %4627 = vadd.xlane.f32.xlu0 %v4626
    %v4628 = vpop.xlane.xlu0 %4627
    %v4629 = vrcp.pop %v4625
    %v4630 = vrcp.pop %v4628
    %v4631 = vmul.f32 %v4620, %v4629
    %v4632 = vmul.f32 %v4622, %v4630
    %v4633 = vadd.f32 %v4299, %v4631
    %v4634 = vadd.f32 %v4300, %v4632
    %4637 = vrot.lane.b32.xlu0 %v4103, 120
    %v4638 = vpop.permute.xlu0 %4637
    %4639 = vrot.lane.b32.xlu0 %v4108, 120
    %v4640 = vpop.permute.xlu0 %4639
    %v4644 = vsel %vm539, %v4631, 0
    %4646 = vmatprep.subr.mxu0 0.0
    %4647 = vmatpush1.msra.mxu0 %v4638
    %4648 = vmatprep.subr.mxu0 0.0
    %4649 = vmatpush1.msra.mxu0 %v4640
    %4650 = vmatprep.subr.mxu0 0.0
    %4651 = vmatpush1.msra.mxu0 0.0
    %4652 = vmatprep.subr.mxu0 0.0
    %4653 = vmatpush1.msra.mxu0 0.0
    %4654 = vmatprep.subr.mxu0 0.0
    %4655 = vmatpush1.msra.mxu0 0.0
    %4656 = vmatprep.subr.mxu0 0.0
    %4657 = vmatpush1.msra.mxu0 0.0
    %4658 = vmatprep.subr.mxu0 0.0
    %4659 = vmatpush1.msra.mxu0 0.0
    %4660 = vmatprep.subr.mxu0 0.0
    %4661 = vmatpush1.msra.mxu0 0.0
    %4662 = vmatprep.subr.mxu0 0.0
    %4663 = vmatpush1.msra.mxu0 0.0
    %4664 = vmatprep.subr.mxu0 0.0
    %4665 = vmatpush1.msra.mxu0 0.0
    %4666 = vmatprep.subr.mxu0 0.0
    %4667 = vmatpush1.msra.mxu0 0.0
    %4668 = vmatprep.subr.mxu0 0.0
    %4669 = vmatpush1.msra.mxu0 0.0
    %4670 = vmatprep.subr.mxu0 0.0
    %4671 = vmatpush1.msra.mxu0 0.0
    %4672 = vmatprep.subr.mxu0 0.0
    %4673 = vmatpush1.msra.mxu0 0.0
    %4674 = vmatprep.subr.mxu0 0.0
    %4675 = vmatpush1.msra.mxu0 0.0
    %4676 = vmatprep.subr.mxu0 0.0
    %4677 = vmatpush1.msra.mxu0 0.0
    %4678 = vmatprep.subr.mxu0 0.0
    %4679 = vmatpush1.msra.mxu0 0.0
    %4680 = vmatprep.subr.mxu0 0.0
    %4681 = vmatpush1.msra.mxu0 0.0
    %4682 = vmatprep.subr.mxu0 0.0
    %4683 = vmatpush1.msra.mxu0 0.0
    %4684 = vmatprep.subr.mxu0 0.0
    %4685 = vmatpush1.msra.mxu0 0.0
    %4686 = vmatprep.subr.mxu0 0.0
    %4687 = vmatpush1.msra.mxu0 0.0
    %4688 = vmatprep.subr.mxu0 0.0
    %4689 = vmatpush1.msra.mxu0 0.0
    %4690 = vmatprep.subr.mxu0 0.0
    %4691 = vmatpush1.msra.mxu0 0.0
    %4692 = vmatprep.subr.mxu0 0.0
    %4693 = vmatpush1.msra.mxu0 0.0
    %4694 = vmatprep.subr.mxu0 0.0
    %4695 = vmatpush1.msra.mxu0 0.0
    %4696 = vmatprep.subr.mxu0 0.0
    %4697 = vmatpush1.msra.mxu0 0.0
    %4698 = vmatprep.subr.mxu0 0.0
    %4699 = vmatpush1.msra.mxu0 0.0
    %4700 = vmatprep.subr.mxu0 0.0
    %4701 = vmatpush1.msra.mxu0 0.0
    %4702 = vmatprep.subr.mxu0 0.0
    %4703 = vmatpush1.msra.mxu0 0.0
    %4704 = vmatprep.subr.mxu0 0.0
    %4705 = vmatpush1.msra.mxu0 0.0
    %4706 = vmatprep.subr.mxu0 0.0
    %4707 = vmatpush1.msra.mxu0 0.0
    %4708 = vmatprep.subr.mxu0 0.0
    %4709 = vmatpush1.msra.mxu0 0.0
    %4710 = vmatprep.mubr.f32.mxu0 0.0
    %4711 = vmatmul.mubr.f32.gmra.mrb[0].mxu0 %v4644
    %v4712 = vpop.f32.mrb[0].mxu0
    %v4713 = vadd.f32 0.0, %v4712
    %v4714 = vpop.f32.mrb[0].mxu0
    %4715 = vdwg.mxu0
    %4718 = vrot.lane.b32.xlu0 %v4113, 120
    %v4719 = vpop.permute.xlu0 %4718
    %4720 = vrot.lane.b32.xlu0 %v4118, 120
    %v4721 = vpop.permute.xlu0 %4720
    %v4725 = vsel %vm539, %v4632, 0
    %4727 = vmatprep.subr.mxu0 0.0
    %4728 = vmatpush1.msra.mxu0 %v4719
    %4729 = vmatprep.subr.mxu0 0.0
    %4730 = vmatpush1.msra.mxu0 %v4721
    %4731 = vmatprep.subr.mxu0 0.0
    %4732 = vmatpush1.msra.mxu0 0.0
    %4733 = vmatprep.subr.mxu0 0.0
    %4734 = vmatpush1.msra.mxu0 0.0
    %4735 = vmatprep.subr.mxu0 0.0
    %4736 = vmatpush1.msra.mxu0 0.0
    %4737 = vmatprep.subr.mxu0 0.0
    %4738 = vmatpush1.msra.mxu0 0.0
    %4739 = vmatprep.subr.mxu0 0.0
    %4740 = vmatpush1.msra.mxu0 0.0
    %4741 = vmatprep.subr.mxu0 0.0
    %4742 = vmatpush1.msra.mxu0 0.0
    %4743 = vmatprep.subr.mxu0 0.0
    %4744 = vmatpush1.msra.mxu0 0.0
    %4745 = vmatprep.subr.mxu0 0.0
    %4746 = vmatpush1.msra.mxu0 0.0
    %4747 = vmatprep.subr.mxu0 0.0
    %4748 = vmatpush1.msra.mxu0 0.0
    %4749 = vmatprep.subr.mxu0 0.0
    %4750 = vmatpush1.msra.mxu0 0.0
    %4751 = vmatprep.subr.mxu0 0.0
    %4752 = vmatpush1.msra.mxu0 0.0
    %4753 = vmatprep.subr.mxu0 0.0
    %4754 = vmatpush1.msra.mxu0 0.0
    %4755 = vmatprep.subr.mxu0 0.0
    %4756 = vmatpush1.msra.mxu0 0.0
    %4757 = vmatprep.subr.mxu0 0.0
    %4758 = vmatpush1.msra.mxu0 0.0
    %4759 = vmatprep.subr.mxu0 0.0
    %4760 = vmatpush1.msra.mxu0 0.0
    %4761 = vmatprep.subr.mxu0 0.0
    %4762 = vmatpush1.msra.mxu0 0.0
    %4763 = vmatprep.subr.mxu0 0.0
    %4764 = vmatpush1.msra.mxu0 0.0
    %4765 = vmatprep.subr.mxu0 0.0
    %4766 = vmatpush1.msra.mxu0 0.0
    %4767 = vmatprep.subr.mxu0 0.0
    %4768 = vmatpush1.msra.mxu0 0.0
    %4769 = vmatprep.subr.mxu0 0.0
    %4770 = vmatpush1.msra.mxu0 0.0
    %4771 = vmatprep.subr.mxu0 0.0
    %4772 = vmatpush1.msra.mxu0 0.0
    %4773 = vmatprep.subr.mxu0 0.0
    %4774 = vmatpush1.msra.mxu0 0.0
    %4775 = vmatprep.subr.mxu0 0.0
    %4776 = vmatpush1.msra.mxu0 0.0
    %4777 = vmatprep.subr.mxu0 0.0
    %4778 = vmatpush1.msra.mxu0 0.0
    %4779 = vmatprep.subr.mxu0 0.0
    %4780 = vmatpush1.msra.mxu0 0.0
    %4781 = vmatprep.subr.mxu0 0.0
    %4782 = vmatpush1.msra.mxu0 0.0
    %4783 = vmatprep.subr.mxu0 0.0
    %4784 = vmatpush1.msra.mxu0 0.0
    %4785 = vmatprep.subr.mxu0 0.0
    %4786 = vmatpush1.msra.mxu0 0.0
    %4787 = vmatprep.subr.mxu0 0.0
    %4788 = vmatpush1.msra.mxu0 0.0
    %4789 = vmatprep.subr.mxu0 0.0
    %4790 = vmatpush1.msra.mxu0 0.0
    %4791 = vmatprep.mubr.f32.mxu0 0.0
    %4792 = vmatmul.mubr.f32.gmra.mrb[0].mxu0 %v4725
    %v4793 = vpop.f32.mrb[0].mxu0
    %v4794 = vadd.f32 0.0, %v4793
    %v4795 = vpop.f32.mrb[0].mxu0
    %4796 = vdwg.mxu0
    %4797 = vrot.lane.b32.xlu0 %v3923, 112
    %v4798 = vpop.permute.xlu0 %4797
    %4799 = vrot.lane.b32.xlu0 %v4014, 112
    %v4800 = vpop.permute.xlu0 %4799
    %4801 = vrot.lane.b32.xlu0 %v4019, 112
    %v4802 = vpop.permute.xlu0 %4801
    %v4803 = vsel %vm364, %v4798, 0
    %v4805 = vsel %vm364, %v4800, 0
    %v4807 = vsel %vm364, %v4802, 0
    %4809 = vmatprep.subr.mxu0 0.0
    %4810 = vmatpush1.xpose.msra.mxu0 %v4805
    %4811 = vmatprep.subr.mxu0 0.0
    %4812 = vmatpush1.xpose.msra.mxu0 %v4807
    %4813 = vmatprep.subr.mxu0 0.0
    %4814 = vmatpush1.xpose.msra.mxu0 0.0
    %4815 = vmatprep.subr.mxu0 0.0
    %4816 = vmatpush1.xpose.msra.mxu0 0.0
    %4817 = vmatprep.subr.mxu0 0.0
    %4818 = vmatpush1.xpose.msra.mxu0 0.0
    %4819 = vmatprep.subr.mxu0 0.0
    %4820 = vmatpush1.xpose.msra.mxu0 0.0
    %4821 = vmatprep.subr.mxu0 0.0
    %4822 = vmatpush1.xpose.msra.mxu0 0.0
    %4823 = vmatprep.subr.mxu0 0.0
    %4824 = vmatpush1.xpose.msra.mxu0 0.0
    %4825 = vmatprep.subr.mxu0 0.0
    %4826 = vmatpush1.xpose.msra.mxu0 0.0
    %4827 = vmatprep.subr.mxu0 0.0
    %4828 = vmatpush1.xpose.msra.mxu0 0.0
    %4829 = vmatprep.subr.mxu0 0.0
    %4830 = vmatpush1.xpose.msra.mxu0 0.0
    %4831 = vmatprep.subr.mxu0 0.0
    %4832 = vmatpush1.xpose.msra.mxu0 0.0
    %4833 = vmatprep.subr.mxu0 0.0
    %4834 = vmatpush1.xpose.msra.mxu0 0.0
    %4835 = vmatprep.subr.mxu0 0.0
    %4836 = vmatpush1.xpose.msra.mxu0 0.0
    %4837 = vmatprep.subr.mxu0 0.0
    %4838 = vmatpush1.xpose.msra.mxu0 0.0
    %4839 = vmatprep.subr.mxu0 0.0
    %4840 = vmatpush1.xpose.msra.mxu0 0.0
    %4841 = vmatprep.subr.mxu0 0.0
    %4842 = vmatpush1.xpose.msra.mxu0 0.0
    %4843 = vmatprep.subr.mxu0 0.0
    %4844 = vmatpush1.xpose.msra.mxu0 0.0
    %4845 = vmatprep.subr.mxu0 0.0
    %4846 = vmatpush1.xpose.msra.mxu0 0.0
    %4847 = vmatprep.subr.mxu0 0.0
    %4848 = vmatpush1.xpose.msra.mxu0 0.0
    %4849 = vmatprep.subr.mxu0 0.0
    %4850 = vmatpush1.xpose.msra.mxu0 0.0
    %4851 = vmatprep.subr.mxu0 0.0
    %4852 = vmatpush1.xpose.msra.mxu0 0.0
    %4853 = vmatprep.subr.mxu0 0.0
    %4854 = vmatpush1.xpose.msra.mxu0 0.0
    %4855 = vmatprep.subr.mxu0 0.0
    %4856 = vmatpush1.xpose.msra.mxu0 0.0
    %4857 = vmatprep.subr.mxu0 0.0
    %4858 = vmatpush1.xpose.msra.mxu0 0.0
    %4859 = vmatprep.subr.mxu0 0.0
    %4860 = vmatpush1.xpose.msra.mxu0 0.0
    %4861 = vmatprep.subr.mxu0 0.0
    %4862 = vmatpush1.xpose.msra.mxu0 0.0
    %4863 = vmatprep.subr.mxu0 0.0
    %4864 = vmatpush1.xpose.msra.mxu0 0.0
    %4865 = vmatprep.subr.mxu0 0.0
    %4866 = vmatpush1.xpose.msra.mxu0 0.0
    %4867 = vmatprep.subr.mxu0 0.0
    %4868 = vmatpush1.xpose.msra.mxu0 0.0
    %4869 = vmatprep.subr.mxu0 0.0
    %4870 = vmatpush1.xpose.msra.mxu0 0.0
    %4871 = vmatprep.subr.mxu0 0.0
    %4872 = vmatpush1.xpose.msra.mxu0 0.0
    %4873 = vmatprep.mubr.f32.mxu0 0.0
    %4874 = vmatmul.mubr.f32.gmra.mrb[0].mxu0 %v4803
    %v4875 = vpop.f32.mrb[0].mxu0
    %v4876 = vadd.f32 0.0, %v4875
    %v4877 = vpop.f32.mrb[0].mxu0
    %4878 = vdwg.mxu0
    %4879 = vrot.lane.b32.xlu0 %v3928, 112
    %v4880 = vpop.permute.xlu0 %4879
    %4881 = vrot.lane.b32.xlu0 %v4024, 112
    %v4882 = vpop.permute.xlu0 %4881
    %4883 = vrot.lane.b32.xlu0 %v4029, 112
    %v4884 = vpop.permute.xlu0 %4883
    %v4885 = vsel %vm364, %v4880, 0
    %v4887 = vsel %vm364, %v4882, 0
    %v4889 = vsel %vm364, %v4884, 0
    %4891 = vmatprep.subr.mxu0 0.0
    %4892 = vmatpush1.xpose.msra.mxu0 %v4887
    %4893 = vmatprep.subr.mxu0 0.0
    %4894 = vmatpush1.xpose.msra.mxu0 %v4889
    %4895 = vmatprep.subr.mxu0 0.0
    %4896 = vmatpush1.xpose.msra.mxu0 0.0
    %4897 = vmatprep.subr.mxu0 0.0
    %4898 = vmatpush1.xpose.msra.mxu0 0.0
    %4899 = vmatprep.subr.mxu0 0.0
    %4900 = vmatpush1.xpose.msra.mxu0 0.0
    %4901 = vmatprep.subr.mxu0 0.0
    %4902 = vmatpush1.xpose.msra.mxu0 0.0
    %4903 = vmatprep.subr.mxu0 0.0
    %4904 = vmatpush1.xpose.msra.mxu0 0.0
    %4905 = vmatprep.subr.mxu0 0.0
    %4906 = vmatpush1.xpose.msra.mxu0 0.0
    %4907 = vmatprep.subr.mxu0 0.0
    %4908 = vmatpush1.xpose.msra.mxu0 0.0
    %4909 = vmatprep.subr.mxu0 0.0
    %4910 = vmatpush1.xpose.msra.mxu0 0.0
    %4911 = vmatprep.subr.mxu0 0.0
    %4912 = vmatpush1.xpose.msra.mxu0 0.0
    %4913 = vmatprep.subr.mxu0 0.0
    %4914 = vmatpush1.xpose.msra.mxu0 0.0
    %4915 = vmatprep.subr.mxu0 0.0
    %4916 = vmatpush1.xpose.msra.mxu0 0.0
    %4917 = vmatprep.subr.mxu0 0.0
    %4918 = vmatpush1.xpose.msra.mxu0 0.0
    %4919 = vmatprep.subr.mxu0 0.0
    %4920 = vmatpush1.xpose.msra.mxu0 0.0
    %4921 = vmatprep.subr.mxu0 0.0
    %4922 = vmatpush1.xpose.msra.mxu0 0.0
    %4923 = vmatprep.subr.mxu0 0.0
    %4924 = vmatpush1.xpose.msra.mxu0 0.0
    %4925 = vmatprep.subr.mxu0 0.0
    %4926 = vmatpush1.xpose.msra.mxu0 0.0
    %4927 = vmatprep.subr.mxu0 0.0
    %4928 = vmatpush1.xpose.msra.mxu0 0.0
    %4929 = vmatprep.subr.mxu0 0.0
    %4930 = vmatpush1.xpose.msra.mxu0 0.0
    %4931 = vmatprep.subr.mxu0 0.0
    %4932 = vmatpush1.xpose.msra.mxu0 0.0
    %4933 = vmatprep.subr.mxu0 0.0
    %4934 = vmatpush1.xpose.msra.mxu0 0.0
    %4935 = vmatprep.subr.mxu0 0.0
    %4936 = vmatpush1.xpose.msra.mxu0 0.0
    %4937 = vmatprep.subr.mxu0 0.0
    %4938 = vmatpush1.xpose.msra.mxu0 0.0
    %4939 = vmatprep.subr.mxu0 0.0
    %4940 = vmatpush1.xpose.msra.mxu0 0.0
    %4941 = vmatprep.subr.mxu0 0.0
    %4942 = vmatpush1.xpose.msra.mxu0 0.0
    %4943 = vmatprep.subr.mxu0 0.0
    %4944 = vmatpush1.xpose.msra.mxu0 0.0
    %4945 = vmatprep.subr.mxu0 0.0
    %4946 = vmatpush1.xpose.msra.mxu0 0.0
    %4947 = vmatprep.subr.mxu0 0.0
    %4948 = vmatpush1.xpose.msra.mxu0 0.0
    %4949 = vmatprep.subr.mxu0 0.0
    %4950 = vmatpush1.xpose.msra.mxu0 0.0
    %4951 = vmatprep.subr.mxu0 0.0
    %4952 = vmatpush1.xpose.msra.mxu0 0.0
    %4953 = vmatprep.subr.mxu0 0.0
    %4954 = vmatpush1.xpose.msra.mxu0 0.0
    %4955 = vmatprep.mubr.f32.mxu0 0.0
    %4956 = vmatmul.mubr.f32.gmra.mrb[0].mxu0 %v4885
    %v4957 = vpop.f32.mrb[0].mxu0
    %v4958 = vadd.f32 0.0, %v4957
    %v4959 = vpop.f32.mrb[0].mxu0
    %4960 = vdwg.mxu0
    %v4961 = vsel %vm539, %v4876, -inf
    %4962 = vmax.xlane.f32.xlu0 %v4961
    %v4963 = vpop.xlane.xlu0 %4962
    %v4964 = vsel %vm539, %v4958, -inf
    %4965 = vmax.xlane.f32.xlu0 %v4964
    %v4966 = vpop.xlane.xlu0 %4965
    %v4967 = vsub.f32 %v4876, %v4963
    %v4968 = vsub.f32 %v4958, %v4966
    %v4969 = vmul.f32 %v4967, 1.442695
    %v4970 = vpow.pop %v4969
    %v4971 = vmul.f32 %v4968, 1.442695
    %v4972 = vpow.pop %v4971
    %v4973 = vsel %vm539, %v4970, 0.0
    %4974 = vadd.xlane.f32.xlu0 %v4973
    %v4975 = vpop.xlane.xlu0 %4974
    %v4976 = vsel %vm539, %v4972, 0.0
    %4977 = vadd.xlane.f32.xlu0 %v4976
    %v4978 = vpop.xlane.xlu0 %4977
    %v4979 = vrcp.pop %v4975
    %v4980 = vrcp.pop %v4978
    %v4981 = vmul.f32 %v4970, %v4979
    %v4982 = vmul.f32 %v4972, %v4980
    %v4983 = vadd.f32 %v4633, %v4981
    %v4984 = vadd.f32 %v4634, %v4982
    %4985 = vrot.lane.b32.xlu0 %v4103, 112
    %v4986 = vpop.permute.xlu0 %4985
    %4987 = vrot.lane.b32.xlu0 %v4108, 112
    %v4988 = vpop.permute.xlu0 %4987
    %v4992 = vsel %vm539, %v4981, 0
    %4994 = vmatprep.subr.mxu0 0.0
    %4995 = vmatpush1.msra.mxu0 %v4986
    %4996 = vmatprep.subr.mxu0 0.0
    %4997 = vmatpush1.msra.mxu0 %v4988
    %4998 = vmatprep.subr.mxu0 0.0
    %4999 = vmatpush1.msra.mxu0 0.0
    %5000 = vmatprep.subr.mxu0 0.0
    %5001 = vmatpush1.msra.mxu0 0.0
    %5002 = vmatprep.subr.mxu0 0.0
    %5003 = vmatpush1.msra.mxu0 0.0
    %5004 = vmatprep.subr.mxu0 0.0
    %5005 = vmatpush1.msra.mxu0 0.0
    %5006 = vmatprep.subr.mxu0 0.0
    %5007 = vmatpush1.msra.mxu0 0.0
    %5008 = vmatprep.subr.mxu0 0.0
    %5009 = vmatpush1.msra.mxu0 0.0
    %5010 = vmatprep.subr.mxu0 0.0
    %5011 = vmatpush1.msra.mxu0 0.0
    %5012 = vmatprep.subr.mxu0 0.0
    %5013 = vmatpush1.msra.mxu0 0.0
    %5014 = vmatprep.subr.mxu0 0.0
    %5015 = vmatpush1.msra.mxu0 0.0
    %5016 = vmatprep.subr.mxu0 0.0
    %5017 = vmatpush1.msra.mxu0 0.0
    %5018 = vmatprep.subr.mxu0 0.0
    %5019 = vmatpush1.msra.mxu0 0.0
    %5020 = vmatprep.subr.mxu0 0.0
    %5021 = vmatpush1.msra.mxu0 0.0
    %5022 = vmatprep.subr.mxu0 0.0
    %5023 = vmatpush1.msra.mxu0 0.0
    %5024 = vmatprep.subr.mxu0 0.0
    %5025 = vmatpush1.msra.mxu0 0.0
    %5026 = vmatprep.subr.mxu0 0.0
    %5027 = vmatpush1.msra.mxu0 0.0
    %5028 = vmatprep.subr.mxu0 0.0
    %5029 = vmatpush1.msra.mxu0 0.0
    %5030 = vmatprep.subr.mxu0 0.0
    %5031 = vmatpush1.msra.mxu0 0.0
    %5032 = vmatprep.subr.mxu0 0.0
    %5033 = vmatpush1.msra.mxu0 0.0
    %5034 = vmatprep.subr.mxu0 0.0
    %5035 = vmatpush1.msra.mxu0 0.0
    %5036 = vmatprep.subr.mxu0 0.0
    %5037 = vmatpush1.msra.mxu0 0.0
    %5038 = vmatprep.subr.mxu0 0.0
    %5039 = vmatpush1.msra.mxu0 0.0
    %5040 = vmatprep.subr.mxu0 0.0
    %5041 = vmatpush1.msra.mxu0 0.0
    %5042 = vmatprep.subr.mxu0 0.0
    %5043 = vmatpush1.msra.mxu0 0.0
    %5044 = vmatprep.subr.mxu0 0.0
    %5045 = vmatpush1.msra.mxu0 0.0
    %5046 = vmatprep.subr.mxu0 0.0
    %5047 = vmatpush1.msra.mxu0 0.0
    %5048 = vmatprep.subr.mxu0 0.0
    %5049 = vmatpush1.msra.mxu0 0.0
    %5050 = vmatprep.subr.mxu0 0.0
    %5051 = vmatpush1.msra.mxu0 0.0
    %5052 = vmatprep.subr.mxu0 0.0
    %5053 = vmatpush1.msra.mxu0 0.0
    %5054 = vmatprep.subr.mxu0 0.0
    %5055 = vmatpush1.msra.mxu0 0.0
    %5056 = vmatprep.subr.mxu0 0.0
    %5057 = vmatpush1.msra.mxu0 0.0
    %5058 = vmatprep.mubr.f32.mxu0 0.0
    %5059 = vmatmul.mubr.f32.gmra.mrb[0].mxu0 %v4992
    %v5060 = vpop.f32.mrb[0].mxu0
    %v5061 = vadd.f32 0.0, %v5060
    %v5062 = vpop.f32.mrb[0].mxu0
    %5063 = vdwg.mxu0
    %5064 = vrot.lane.b32.xlu0 %v4113, 112
    %v5065 = vpop.permute.xlu0 %5064
    %5066 = vrot.lane.b32.xlu0 %v4118, 112
    %v5067 = vpop.permute.xlu0 %5066
    %v5071 = vsel %vm539, %v4982, 0
    %5073 = vmatprep.subr.mxu0 0.0
    %5074 = vmatpush1.msra.mxu0 %v5065
    %5075 = vmatprep.subr.mxu0 0.0
    %5076 = vmatpush1.msra.mxu0 %v5067
    %5077 = vmatprep.subr.mxu0 0.0
    %5078 = vmatpush1.msra.mxu0 0.0
    %5079 = vmatprep.subr.mxu0 0.0
    %5080 = vmatpush1.msra.mxu0 0.0
    %5081 = vmatprep.subr.mxu0 0.0
    %5082 = vmatpush1.msra.mxu0 0.0
    %5083 = vmatprep.subr.mxu0 0.0
    %5084 = vmatpush1.msra.mxu0 0.0
    %5085 = vmatprep.subr.mxu0 0.0
    %5086 = vmatpush1.msra.mxu0 0.0
    %5087 = vmatprep.subr.mxu0 0.0
    %5088 = vmatpush1.msra.mxu0 0.0
    %5089 = vmatprep.subr.mxu0 0.0
    %5090 = vmatpush1.msra.mxu0 0.0
    %5091 = vmatprep.subr.mxu0 0.0
    %5092 = vmatpush1.msra.mxu0 0.0
    %5093 = vmatprep.subr.mxu0 0.0
    %5094 = vmatpush1.msra.mxu0 0.0
    %5095 = vmatprep.subr.mxu0 0.0
    %5096 = vmatpush1.msra.mxu0 0.0
    %5097 = vmatprep.subr.mxu0 0.0
    %5098 = vmatpush1.msra.mxu0 0.0
    %5099 = vmatprep.subr.mxu0 0.0
    %5100 = vmatpush1.msra.mxu0 0.0
    %5101 = vmatprep.subr.mxu0 0.0
    %5102 = vmatpush1.msra.mxu0 0.0
    %5103 = vmatprep.subr.mxu0 0.0
    %5104 = vmatpush1.msra.mxu0 0.0
    %5105 = vmatprep.subr.mxu0 0.0
    %5106 = vmatpush1.msra.mxu0 0.0
    %5107 = vmatprep.subr.mxu0 0.0
    %5108 = vmatpush1.msra.mxu0 0.0
    %5109 = vmatprep.subr.mxu0 0.0
    %5110 = vmatpush1.msra.mxu0 0.0
    %5111 = vmatprep.subr.mxu0 0.0
    %5112 = vmatpush1.msra.mxu0 0.0
    %5113 = vmatprep.subr.mxu0 0.0
    %5114 = vmatpush1.msra.mxu0 0.0
    %5115 = vmatprep.subr.mxu0 0.0
    %5116 = vmatpush1.msra.mxu0 0.0
    %5117 = vmatprep.subr.mxu0 0.0
    %5118 = vmatpush1.msra.mxu0 0.0
    %5119 = vmatprep.subr.mxu0 0.0
    %5120 = vmatpush1.msra.mxu0 0.0
    %5121 = vmatprep.subr.mxu0 0.0
    %5122 = vmatpush1.msra.mxu0 0.0
    %5123 = vmatprep.subr.mxu0 0.0
    %5124 = vmatpush1.msra.mxu0 0.0
    %5125 = vmatprep.subr.mxu0 0.0
    %5126 = vmatpush1.msra.mxu0 0.0
    %5127 = vmatprep.subr.mxu0 0.0
    %5128 = vmatpush1.msra.mxu0 0.0
    %5129 = vmatprep.subr.mxu0 0.0
    %5130 = vmatpush1.msra.mxu0 0.0
    %5131 = vmatprep.subr.mxu0 0.0
    %5132 = vmatpush1.msra.mxu0 0.0
    %5133 = vmatprep.subr.mxu0 0.0
    %5134 = vmatpush1.msra.mxu0 0.0
    %5135 = vmatprep.subr.mxu0 0.0
    %5136 = vmatpush1.msra.mxu0 0.0
    %5137 = vmatprep.mubr.f32.mxu0 0.0
    %5138 = vmatmul.mubr.f32.gmra.mrb[0].mxu0 %v5071
    %v5139 = vpop.f32.mrb[0].mxu0
    %v5140 = vadd.f32 0.0, %v5139
    %v5141 = vpop.f32.mrb[0].mxu0
    %5142 = vdwg.mxu0
    %5143 = vrot.lane.b32.xlu0 %v3923, 104
    %v5144 = vpop.permute.xlu0 %5143
    %5145 = vrot.lane.b32.xlu0 %v4014, 104
    %v5146 = vpop.permute.xlu0 %5145
    %5147 = vrot.lane.b32.xlu0 %v4019, 104
    %v5148 = vpop.permute.xlu0 %5147
    %v5149 = vsel %vm364, %v5144, 0
    %v5151 = vsel %vm364, %v5146, 0
    %v5153 = vsel %vm364, %v5148, 0
    %5155 = vmatprep.subr.mxu0 0.0
    %5156 = vmatpush1.xpose.msra.mxu0 %v5151
    %5157 = vmatprep.subr.mxu0 0.0
    %5158 = vmatpush1.xpose.msra.mxu0 %v5153
    %5159 = vmatprep.subr.mxu0 0.0
    %5160 = vmatpush1.xpose.msra.mxu0 0.0
    %5161 = vmatprep.subr.mxu0 0.0
    %5162 = vmatpush1.xpose.msra.mxu0 0.0
    %5163 = vmatprep.subr.mxu0 0.0
    %5164 = vmatpush1.xpose.msra.mxu0 0.0
    %5165 = vmatprep.subr.mxu0 0.0
    %5166 = vmatpush1.xpose.msra.mxu0 0.0
    %5167 = vmatprep.subr.mxu0 0.0
    %5168 = vmatpush1.xpose.msra.mxu0 0.0
    %5169 = vmatprep.subr.mxu0 0.0
    %5170 = vmatpush1.xpose.msra.mxu0 0.0
    %5171 = vmatprep.subr.mxu0 0.0
    %5172 = vmatpush1.xpose.msra.mxu0 0.0
    %5173 = vmatprep.subr.mxu0 0.0
    %5174 = vmatpush1.xpose.msra.mxu0 0.0
    %5175 = vmatprep.subr.mxu0 0.0
    %5176 = vmatpush1.xpose.msra.mxu0 0.0
    %5177 = vmatprep.subr.mxu0 0.0
    %5178 = vmatpush1.xpose.msra.mxu0 0.0
    %5179 = vmatprep.subr.mxu0 0.0
    %5180 = vmatpush1.xpose.msra.mxu0 0.0
    %5181 = vmatprep.subr.mxu0 0.0
    %5182 = vmatpush1.xpose.msra.mxu0 0.0
    %5183 = vmatprep.subr.mxu0 0.0
    %5184 = vmatpush1.xpose.msra.mxu0 0.0
    %5185 = vmatprep.subr.mxu0 0.0
    %5186 = vmatpush1.xpose.msra.mxu0 0.0
    %5187 = vmatprep.subr.mxu0 0.0
    %5188 = vmatpush1.xpose.msra.mxu0 0.0
    %5189 = vmatprep.subr.mxu0 0.0
    %5190 = vmatpush1.xpose.msra.mxu0 0.0
    %5191 = vmatprep.subr.mxu0 0.0
    %5192 = vmatpush1.xpose.msra.mxu0 0.0
    %5193 = vmatprep.subr.mxu0 0.0
    %5194 = vmatpush1.xpose.msra.mxu0 0.0
    %5195 = vmatprep.subr.mxu0 0.0
    %5196 = vmatpush1.xpose.msra.mxu0 0.0
    %5197 = vmatprep.subr.mxu0 0.0
    %5198 = vmatpush1.xpose.msra.mxu0 0.0
    %5199 = vmatprep.subr.mxu0 0.0
    %5200 = vmatpush1.xpose.msra.mxu0 0.0
    %5201 = vmatprep.subr.mxu0 0.0
    %5202 = vmatpush1.xpose.msra.mxu0 0.0
    %5203 = vmatprep.subr.mxu0 0.0
    %5204 = vmatpush1.xpose.msra.mxu0 0.0
    %5205 = vmatprep.subr.mxu0 0.0
    %5206 = vmatpush1.xpose.msra.mxu0 0.0
    %5207 = vmatprep.subr.mxu0 0.0
    %5208 = vmatpush1.xpose.msra.mxu0 0.0
    %5209 = vmatprep.subr.mxu0 0.0
    %5210 = vmatpush1.xpose.msra.mxu0 0.0
    %5211 = vmatprep.subr.mxu0 0.0
    %5212 = vmatpush1.xpose.msra.mxu0 0.0
    %5213 = vmatprep.subr.mxu0 0.0
    %5214 = vmatpush1.xpose.msra.mxu0 0.0
    %5215 = vmatprep.subr.mxu0 0.0
    %5216 = vmatpush1.xpose.msra.mxu0 0.0
    %5217 = vmatprep.subr.mxu0 0.0
    %5218 = vmatpush1.xpose.msra.mxu0 0.0
    %5219 = vmatprep.mubr.f32.mxu0 0.0
    %5220 = vmatmul.mubr.f32.gmra.mrb[0].mxu0 %v5149
    %v5221 = vpop.f32.mrb[0].mxu0
    %v5222 = vadd.f32 0.0, %v5221
    %v5223 = vpop.f32.mrb[0].mxu0
    %5224 = vdwg.mxu0
    %5225 = vrot.lane.b32.xlu0 %v3928, 104
    %v5226 = vpop.permute.xlu0 %5225
    %5227 = vrot.lane.b32.xlu0 %v4024, 104
    %v5228 = vpop.permute.xlu0 %5227
    %5229 = vrot.lane.b32.xlu0 %v4029, 104
    %v5230 = vpop.permute.xlu0 %5229
    %v5231 = vsel %vm364, %v5226, 0
    %v5233 = vsel %vm364, %v5228, 0
    %v5235 = vsel %vm364, %v5230, 0
    %5237 = vmatprep.subr.mxu0 0.0
    %5238 = vmatpush1.xpose.msra.mxu0 %v5233
    %5239 = vmatprep.subr.mxu0 0.0
    %5240 = vmatpush1.xpose.msra.mxu0 %v5235
    %5241 = vmatprep.subr.mxu0 0.0
    %5242 = vmatpush1.xpose.msra.mxu0 0.0
    %5243 = vmatprep.subr.mxu0 0.0
    %5244 = vmatpush1.xpose.msra.mxu0 0.0
    %5245 = vmatprep.subr.mxu0 0.0
    %5246 = vmatpush1.xpose.msra.mxu0 0.0
    %5247 = vmatprep.subr.mxu0 0.0
    %5248 = vmatpush1.xpose.msra.mxu0 0.0
    %5249 = vmatprep.subr.mxu0 0.0
    %5250 = vmatpush1.xpose.msra.mxu0 0.0
    %5251 = vmatprep.subr.mxu0 0.0
    %5252 = vmatpush1.xpose.msra.mxu0 0.0
    %5253 = vmatprep.subr.mxu0 0.0
    %5254 = vmatpush1.xpose.msra.mxu0 0.0
    %5255 = vmatprep.subr.mxu0 0.0
    %5256 = vmatpush1.xpose.msra.mxu0 0.0
    %5257 = vmatprep.subr.mxu0 0.0
    %5258 = vmatpush1.xpose.msra.mxu0 0.0
    %5259 = vmatprep.subr.mxu0 0.0
    %5260 = vmatpush1.xpose.msra.mxu0 0.0
    %5261 = vmatprep.subr.mxu0 0.0
    %5262 = vmatpush1.xpose.msra.mxu0 0.0
    %5263 = vmatprep.subr.mxu0 0.0
    %5264 = vmatpush1.xpose.msra.mxu0 0.0
    %5265 = vmatprep.subr.mxu0 0.0
    %5266 = vmatpush1.xpose.msra.mxu0 0.0
    %5267 = vmatprep.subr.mxu0 0.0
    %5268 = vmatpush1.xpose.msra.mxu0 0.0
    %5269 = vmatprep.subr.mxu0 0.0
    %5270 = vmatpush1.xpose.msra.mxu0 0.0
    %5271 = vmatprep.subr.mxu0 0.0
    %5272 = vmatpush1.xpose.msra.mxu0 0.0
    %5273 = vmatprep.subr.mxu0 0.0
    %5274 = vmatpush1.xpose.msra.mxu0 0.0
    %5275 = vmatprep.subr.mxu0 0.0
    %5276 = vmatpush1.xpose.msra.mxu0 0.0
    %5277 = vmatprep.subr.mxu0 0.0
    %5278 = vmatpush1.xpose.msra.mxu0 0.0
    %5279 = vmatprep.subr.mxu0 0.0
    %5280 = vmatpush1.xpose.msra.mxu0 0.0
    %5281 = vmatprep.subr.mxu0 0.0
    %5282 = vmatpush1.xpose.msra.mxu0 0.0
    %5283 = vmatprep.subr.mxu0 0.0
    %5284 = vmatpush1.xpose.msra.mxu0 0.0
    %5285 = vmatprep.subr.mxu0 0.0
    %5286 = vmatpush1.xpose.msra.mxu0 0.0
    %5287 = vmatprep.subr.mxu0 0.0
    %5288 = vmatpush1.xpose.msra.mxu0 0.0
    %5289 = vmatprep.subr.mxu0 0.0
    %5290 = vmatpush1.xpose.msra.mxu0 0.0
    %5291 = vmatprep.subr.mxu0 0.0
    %5292 = vmatpush1.xpose.msra.mxu0 0.0
    %5293 = vmatprep.subr.mxu0 0.0
    %5294 = vmatpush1.xpose.msra.mxu0 0.0
    %5295 = vmatprep.subr.mxu0 0.0
    %5296 = vmatpush1.xpose.msra.mxu0 0.0
    %5297 = vmatprep.subr.mxu0 0.0
    %5298 = vmatpush1.xpose.msra.mxu0 0.0
    %5299 = vmatprep.subr.mxu0 0.0
    %5300 = vmatpush1.xpose.msra.mxu0 0.0
    %5301 = vmatprep.mubr.f32.mxu0 0.0
    %5302 = vmatmul.mubr.f32.gmra.mrb[0].mxu0 %v5231
    %v5303 = vpop.f32.mrb[0].mxu0
    %v5304 = vadd.f32 0.0, %v5303
    %v5305 = vpop.f32.mrb[0].mxu0
    %5306 = vdwg.mxu0
    %v5307 = vsel %vm539, %v5222, -inf
    %5308 = vmax.xlane.f32.xlu0 %v5307
    %v5309 = vpop.xlane.xlu0 %5308
    %v5310 = vsel %vm539, %v5304, -inf
    %5311 = vmax.xlane.f32.xlu0 %v5310
    %v5312 = vpop.xlane.xlu0 %5311
    %v5313 = vsub.f32 %v5222, %v5309
    %v5314 = vsub.f32 %v5304, %v5312
    %v5315 = vmul.f32 %v5313, 1.442695
    %v5316 = vpow.pop %v5315
    %v5317 = vmul.f32 %v5314, 1.442695
    %v5318 = vpow.pop %v5317
    %v5319 = vsel %vm539, %v5316, 0.0
    %5320 = vadd.xlane.f32.xlu0 %v5319
    %v5321 = vpop.xlane.xlu0 %5320
    %v5322 = vsel %vm539, %v5318, 0.0
    %5323 = vadd.xlane.f32.xlu0 %v5322
    %v5324 = vpop.xlane.xlu0 %5323
    %v5325 = vrcp.pop %v5321
    %v5326 = vrcp.pop %v5324
    %v5327 = vmul.f32 %v5316, %v5325
    %v5328 = vmul.f32 %v5318, %v5326
    %v5329 = vadd.f32 %v4983, %v5327
    %v5330 = vadd.f32 %v4984, %v5328
    %5331 = vrot.lane.b32.xlu0 %v4103, 104
    %v5332 = vpop.permute.xlu0 %5331
    %5333 = vrot.lane.b32.xlu0 %v4108, 104
    %v5334 = vpop.permute.xlu0 %5333
    %v5338 = vsel %vm539, %v5327, 0
    %5340 = vmatprep.subr.mxu0 0.0
    %5341 = vmatpush1.msra.mxu0 %v5332
    %5342 = vmatprep.subr.mxu0 0.0
    %5343 = vmatpush1.msra.mxu0 %v5334
    %5344 = vmatprep.subr.mxu0 0.0
    %5345 = vmatpush1.msra.mxu0 0.0
    %5346 = vmatprep.subr.mxu0 0.0
    %5347 = vmatpush1.msra.mxu0 0.0
    %5348 = vmatprep.subr.mxu0 0.0
    %5349 = vmatpush1.msra.mxu0 0.0
    %5350 = vmatprep.subr.mxu0 0.0
    %5351 = vmatpush1.msra.mxu0 0.0
    %5352 = vmatprep.subr.mxu0 0.0
    %5353 = vmatpush1.msra.mxu0 0.0
    %5354 = vmatprep.subr.mxu0 0.0
    %5355 = vmatpush1.msra.mxu0 0.0
    %5356 = vmatprep.subr.mxu0 0.0
    %5357 = vmatpush1.msra.mxu0 0.0
    %5358 = vmatprep.subr.mxu0 0.0
    %5359 = vmatpush1.msra.mxu0 0.0
    %5360 = vmatprep.subr.mxu0 0.0
    %5361 = vmatpush1.msra.mxu0 0.0
    %5362 = vmatprep.subr.mxu0 0.0
    %5363 = vmatpush1.msra.mxu0 0.0
    %5364 = vmatprep.subr.mxu0 0.0
    %5365 = vmatpush1.msra.mxu0 0.0
    %5366 = vmatprep.subr.mxu0 0.0
    %5367 = vmatpush1.msra.mxu0 0.0
    %5368 = vmatprep.subr.mxu0 0.0
    %5369 = vmatpush1.msra.mxu0 0.0
    %5370 = vmatprep.subr.mxu0 0.0
    %5371 = vmatpush1.msra.mxu0 0.0
    %5372 = vmatprep.subr.mxu0 0.0
    %5373 = vmatpush1.msra.mxu0 0.0
    %5374 = vmatprep.subr.mxu0 0.0
    %5375 = vmatpush1.msra.mxu0 0.0
    %5376 = vmatprep.subr.mxu0 0.0
    %5377 = vmatpush1.msra.mxu0 0.0
    %5378 = vmatprep.subr.mxu0 0.0
    %5379 = vmatpush1.msra.mxu0 0.0
    %5380 = vmatprep.subr.mxu0 0.0
    %5381 = vmatpush1.msra.mxu0 0.0
    %5382 = vmatprep.subr.mxu0 0.0
    %5383 = vmatpush1.msra.mxu0 0.0
    %5384 = vmatprep.subr.mxu0 0.0
    %5385 = vmatpush1.msra.mxu0 0.0
    %5386 = vmatprep.subr.mxu0 0.0
    %5387 = vmatpush1.msra.mxu0 0.0
    %5388 = vmatprep.subr.mxu0 0.0
    %5389 = vmatpush1.msra.mxu0 0.0
    %5390 = vmatprep.subr.mxu0 0.0
    %5391 = vmatpush1.msra.mxu0 0.0
    %5392 = vmatprep.subr.mxu0 0.0
    %5393 = vmatpush1.msra.mxu0 0.0
    %5394 = vmatprep.subr.mxu0 0.0
    %5395 = vmatpush1.msra.mxu0 0.0
    %5396 = vmatprep.subr.mxu0 0.0
    %5397 = vmatpush1.msra.mxu0 0.0
    %5398 = vmatprep.subr.mxu0 0.0
    %5399 = vmatpush1.msra.mxu0 0.0
    %5400 = vmatprep.subr.mxu0 0.0
    %5401 = vmatpush1.msra.mxu0 0.0
    %5402 = vmatprep.subr.mxu0 0.0
    %5403 = vmatpush1.msra.mxu0 0.0
    %5404 = vmatprep.mubr.f32.mxu0 0.0
    %5405 = vmatmul.mubr.f32.gmra.mrb[0].mxu0 %v5338
    %v5406 = vpop.f32.mrb[0].mxu0
    %v5407 = vadd.f32 0.0, %v5406
    %v5408 = vpop.f32.mrb[0].mxu0
    %5409 = vdwg.mxu0
    %5410 = vrot.lane.b32.xlu0 %v4113, 104
    %v5411 = vpop.permute.xlu0 %5410
    %5412 = vrot.lane.b32.xlu0 %v4118, 104
    %v5413 = vpop.permute.xlu0 %5412
    %v5417 = vsel %vm539, %v5328, 0
    %5419 = vmatprep.subr.mxu0 0.0
    %5420 = vmatpush1.msra.mxu0 %v5411
    %5421 = vmatprep.subr.mxu0 0.0
    %5422 = vmatpush1.msra.mxu0 %v5413
    %5423 = vmatprep.subr.mxu0 0.0
    %5424 = vmatpush1.msra.mxu0 0.0
    %5425 = vmatprep.subr.mxu0 0.0
    %5426 = vmatpush1.msra.mxu0 0.0
    %5427 = vmatprep.subr.mxu0 0.0
    %5428 = vmatpush1.msra.mxu0 0.0
    %5429 = vmatprep.subr.mxu0 0.0
    %5430 = vmatpush1.msra.mxu0 0.0
    %5431 = vmatprep.subr.mxu0 0.0
    %5432 = vmatpush1.msra.mxu0 0.0
    %5433 = vmatprep.subr.mxu0 0.0
    %5434 = vmatpush1.msra.mxu0 0.0
    %5435 = vmatprep.subr.mxu0 0.0
    %5436 = vmatpush1.msra.mxu0 0.0
    %5437 = vmatprep.subr.mxu0 0.0
    %5438 = vmatpush1.msra.mxu0 0.0
    %5439 = vmatprep.subr.mxu0 0.0
    %5440 = vmatpush1.msra.mxu0 0.0
    %5441 = vmatprep.subr.mxu0 0.0
    %5442 = vmatpush1.msra.mxu0 0.0
    %5443 = vmatprep.subr.mxu0 0.0
    %5444 = vmatpush1.msra.mxu0 0.0
    %5445 = vmatprep.subr.mxu0 0.0
    %5446 = vmatpush1.msra.mxu0 0.0
    %5447 = vmatprep.subr.mxu0 0.0
    %5448 = vmatpush1.msra.mxu0 0.0
    %5449 = vmatprep.subr.mxu0 0.0
    %5450 = vmatpush1.msra.mxu0 0.0
    %5451 = vmatprep.subr.mxu0 0.0
    %5452 = vmatpush1.msra.mxu0 0.0
    %5453 = vmatprep.subr.mxu0 0.0
    %5454 = vmatpush1.msra.mxu0 0.0
    %5455 = vmatprep.subr.mxu0 0.0
    %5456 = vmatpush1.msra.mxu0 0.0
    %5457 = vmatprep.subr.mxu0 0.0
    %5458 = vmatpush1.msra.mxu0 0.0
    %5459 = vmatprep.subr.mxu0 0.0
    %5460 = vmatpush1.msra.mxu0 0.0
    %5461 = vmatprep.subr.mxu0 0.0
    %5462 = vmatpush1.msra.mxu0 0.0
    %5463 = vmatprep.subr.mxu0 0.0
    %5464 = vmatpush1.msra.mxu0 0.0
    %5465 = vmatprep.subr.mxu0 0.0
    %5466 = vmatpush1.msra.mxu0 0.0
    %5467 = vmatprep.subr.mxu0 0.0
    %5468 = vmatpush1.msra.mxu0 0.0
    %5469 = vmatprep.subr.mxu0 0.0
    %5470 = vmatpush1.msra.mxu0 0.0
    %5471 = vmatprep.subr.mxu0 0.0
    %5472 = vmatpush1.msra.mxu0 0.0
    %5473 = vmatprep.subr.mxu0 0.0
    %5474 = vmatpush1.msra.mxu0 0.0
    %5475 = vmatprep.subr.mxu0 0.0
    %5476 = vmatpush1.msra.mxu0 0.0
    %5477 = vmatprep.subr.mxu0 0.0
    %5478 = vmatpush1.msra.mxu0 0.0
    %5479 = vmatprep.subr.mxu0 0.0
    %5480 = vmatpush1.msra.mxu0 0.0
    %5481 = vmatprep.subr.mxu0 0.0
    %5482 = vmatpush1.msra.mxu0 0.0
    %5483 = vmatprep.mubr.f32.mxu0 0.0
    %5484 = vmatmul.mubr.f32.gmra.mrb[0].mxu0 %v5417
    %v5485 = vpop.f32.mrb[0].mxu0
    %v5486 = vadd.f32 0.0, %v5485
    %v5487 = vpop.f32.mrb[0].mxu0
    %5488 = vdwg.mxu0
    %5489 = vrot.lane.b32.xlu0 %v3923, 96
    %v5490 = vpop.permute.xlu0 %5489
    %5491 = vrot.lane.b32.xlu0 %v4014, 96
    %v5492 = vpop.permute.xlu0 %5491
    %5493 = vrot.lane.b32.xlu0 %v4019, 96
    %v5494 = vpop.permute.xlu0 %5493
    %v5495 = vsel %vm364, %v5490, 0
    %v5497 = vsel %vm364, %v5492, 0
    %v5499 = vsel %vm364, %v5494, 0
    %5501 = vmatprep.subr.mxu0 0.0
    %5502 = vmatpush1.xpose.msra.mxu0 %v5497
    %5503 = vmatprep.subr.mxu0 0.0
    %5504 = vmatpush1.xpose.msra.mxu0 %v5499
    %5505 = vmatprep.subr.mxu0 0.0
    %5506 = vmatpush1.xpose.msra.mxu0 0.0
    %5507 = vmatprep.subr.mxu0 0.0
    %5508 = vmatpush1.xpose.msra.mxu0 0.0
    %5509 = vmatprep.subr.mxu0 0.0
    %5510 = vmatpush1.xpose.msra.mxu0 0.0
    %5511 = vmatprep.subr.mxu0 0.0
    %5512 = vmatpush1.xpose.msra.mxu0 0.0
    %5513 = vmatprep.subr.mxu0 0.0
    %5514 = vmatpush1.xpose.msra.mxu0 0.0
    %5515 = vmatprep.subr.mxu0 0.0
    %5516 = vmatpush1.xpose.msra.mxu0 0.0
    %5517 = vmatprep.subr.mxu0 0.0
    %5518 = vmatpush1.xpose.msra.mxu0 0.0
    %5519 = vmatprep.subr.mxu0 0.0
    %5520 = vmatpush1.xpose.msra.mxu0 0.0
    %5521 = vmatprep.subr.mxu0 0.0
    %5522 = vmatpush1.xpose.msra.mxu0 0.0
    %5523 = vmatprep.subr.mxu0 0.0
    %5524 = vmatpush1.xpose.msra.mxu0 0.0
    %5525 = vmatprep.subr.mxu0 0.0
    %5526 = vmatpush1.xpose.msra.mxu0 0.0
    %5527 = vmatprep.subr.mxu0 0.0
    %5528 = vmatpush1.xpose.msra.mxu0 0.0
    %5529 = vmatprep.subr.mxu0 0.0
    %5530 = vmatpush1.xpose.msra.mxu0 0.0
    %5531 = vmatprep.subr.mxu0 0.0
    %5532 = vmatpush1.xpose.msra.mxu0 0.0
    %5533 = vmatprep.subr.mxu0 0.0
    %5534 = vmatpush1.xpose.msra.mxu0 0.0
    %5535 = vmatprep.subr.mxu0 0.0
    %5536 = vmatpush1.xpose.msra.mxu0 0.0
    %5537 = vmatprep.subr.mxu0 0.0
    %5538 = vmatpush1.xpose.msra.mxu0 0.0
    %5539 = vmatprep.subr.mxu0 0.0
    %5540 = vmatpush1.xpose.msra.mxu0 0.0
    %5541 = vmatprep.subr.mxu0 0.0
    %5542 = vmatpush1.xpose.msra.mxu0 0.0
    %5543 = vmatprep.subr.mxu0 0.0
    %5544 = vmatpush1.xpose.msra.mxu0 0.0
    %5545 = vmatprep.subr.mxu0 0.0
    %5546 = vmatpush1.xpose.msra.mxu0 0.0
    %5547 = vmatprep.subr.mxu0 0.0
    %5548 = vmatpush1.xpose.msra.mxu0 0.0
    %5549 = vmatprep.subr.mxu0 0.0
    %5550 = vmatpush1.xpose.msra.mxu0 0.0
    %5551 = vmatprep.subr.mxu0 0.0
    %5552 = vmatpush1.xpose.msra.mxu0 0.0
    %5553 = vmatprep.subr.mxu0 0.0
    %5554 = vmatpush1.xpose.msra.mxu0 0.0
    %5555 = vmatprep.subr.mxu0 0.0
    %5556 = vmatpush1.xpose.msra.mxu0 0.0
    %5557 = vmatprep.subr.mxu0 0.0
    %5558 = vmatpush1.xpose.msra.mxu0 0.0
    %5559 = vmatprep.subr.mxu0 0.0
    %5560 = vmatpush1.xpose.msra.mxu0 0.0
    %5561 = vmatprep.subr.mxu0 0.0
    %5562 = vmatpush1.xpose.msra.mxu0 0.0
    %5563 = vmatprep.subr.mxu0 0.0
    %5564 = vmatpush1.xpose.msra.mxu0 0.0
    %5565 = vmatprep.mubr.f32.mxu0 0.0
    %5566 = vmatmul.mubr.f32.gmra.mrb[0].mxu0 %v5495
    %v5567 = vpop.f32.mrb[0].mxu0
    %v5568 = vadd.f32 0.0, %v5567
    %v5569 = vpop.f32.mrb[0].mxu0
    %5570 = vdwg.mxu0
    %5571 = vrot.lane.b32.xlu0 %v3928, 96
    %v5572 = vpop.permute.xlu0 %5571
    %5573 = vrot.lane.b32.xlu0 %v4024, 96
    %v5574 = vpop.permute.xlu0 %5573
    %5575 = vrot.lane.b32.xlu0 %v4029, 96
    %v5576 = vpop.permute.xlu0 %5575
    %v5577 = vsel %vm364, %v5572, 0
    %v5579 = vsel %vm364, %v5574, 0
    %v5581 = vsel %vm364, %v5576, 0
    %5583 = vmatprep.subr.mxu0 0.0
    %5584 = vmatpush1.xpose.msra.mxu0 %v5579
    %5585 = vmatprep.subr.mxu0 0.0
    %5586 = vmatpush1.xpose.msra.mxu0 %v5581
    %5587 = vmatprep.subr.mxu0 0.0
    %5588 = vmatpush1.xpose.msra.mxu0 0.0
    %5589 = vmatprep.subr.mxu0 0.0
    %5590 = vmatpush1.xpose.msra.mxu0 0.0
    %5591 = vmatprep.subr.mxu0 0.0
    %5592 = vmatpush1.xpose.msra.mxu0 0.0
    %5593 = vmatprep.subr.mxu0 0.0
    %5594 = vmatpush1.xpose.msra.mxu0 0.0
    %5595 = vmatprep.subr.mxu0 0.0
    %5596 = vmatpush1.xpose.msra.mxu0 0.0
    %5597 = vmatprep.subr.mxu0 0.0
    %5598 = vmatpush1.xpose.msra.mxu0 0.0
    %5599 = vmatprep.subr.mxu0 0.0
    %5600 = vmatpush1.xpose.msra.mxu0 0.0
    %5601 = vmatprep.subr.mxu0 0.0
    %5602 = vmatpush1.xpose.msra.mxu0 0.0
    %5603 = vmatprep.subr.mxu0 0.0
    %5604 = vmatpush1.xpose.msra.mxu0 0.0
    %5605 = vmatprep.subr.mxu0 0.0
    %5606 = vmatpush1.xpose.msra.mxu0 0.0
    %5607 = vmatprep.subr.mxu0 0.0
    %5608 = vmatpush1.xpose.msra.mxu0 0.0
    %5609 = vmatprep.subr.mxu0 0.0
    %5610 = vmatpush1.xpose.msra.mxu0 0.0
    %5611 = vmatprep.subr.mxu0 0.0
    %5612 = vmatpush1.xpose.msra.mxu0 0.0
    %5613 = vmatprep.subr.mxu0 0.0
    %5614 = vmatpush1.xpose.msra.mxu0 0.0
    %5615 = vmatprep.subr.mxu0 0.0
    %5616 = vmatpush1.xpose.msra.mxu0 0.0
    %5617 = vmatprep.subr.mxu0 0.0
    %5618 = vmatpush1.xpose.msra.mxu0 0.0
    %5619 = vmatprep.subr.mxu0 0.0
    %5620 = vmatpush1.xpose.msra.mxu0 0.0
    %5621 = vmatprep.subr.mxu0 0.0
    %5622 = vmatpush1.xpose.msra.mxu0 0.0
    %5623 = vmatprep.subr.mxu0 0.0
    %5624 = vmatpush1.xpose.msra.mxu0 0.0
    %5625 = vmatprep.subr.mxu0 0.0
    %5626 = vmatpush1.xpose.msra.mxu0 0.0
    %5627 = vmatprep.subr.mxu0 0.0
    %5628 = vmatpush1.xpose.msra.mxu0 0.0
    %5629 = vmatprep.subr.mxu0 0.0
    %5630 = vmatpush1.xpose.msra.mxu0 0.0
    %5631 = vmatprep.subr.mxu0 0.0
    %5632 = vmatpush1.xpose.msra.mxu0 0.0
    %5633 = vmatprep.subr.mxu0 0.0
    %5634 = vmatpush1.xpose.msra.mxu0 0.0
    %5635 = vmatprep.subr.mxu0 0.0
    %5636 = vmatpush1.xpose.msra.mxu0 0.0
    %5637 = vmatprep.subr.mxu0 0.0
    %5638 = vmatpush1.xpose.msra.mxu0 0.0
    %5639 = vmatprep.subr.mxu0 0.0
    %5640 = vmatpush1.xpose.msra.mxu0 0.0
    %5641 = vmatprep.subr.mxu0 0.0
    %5642 = vmatpush1.xpose.msra.mxu0 0.0
    %5643 = vmatprep.subr.mxu0 0.0
    %5644 = vmatpush1.xpose.msra.mxu0 0.0
    %5645 = vmatprep.subr.mxu0 0.0
    %5646 = vmatpush1.xpose.msra.mxu0 0.0
    %5647 = vmatprep.mubr.f32.mxu0 0.0
    %5648 = vmatmul.mubr.f32.gmra.mrb[0].mxu0 %v5577
    %v5649 = vpop.f32.mrb[0].mxu0
    %v5650 = vadd.f32 0.0, %v5649
    %v5651 = vpop.f32.mrb[0].mxu0
    %5652 = vdwg.mxu0
    %v5653 = vsel %vm539, %v5568, -inf
    %5654 = vmax.xlane.f32.xlu0 %v5653
    %v5655 = vpop.xlane.xlu0 %5654
    %v5656 = vsel %vm539, %v5650, -inf
    %5657 = vmax.xlane.f32.xlu0 %v5656
    %v5658 = vpop.xlane.xlu0 %5657
    %v5659 = vsub.f32 %v5568, %v5655
    %v5660 = vsub.f32 %v5650, %v5658
    %v5661 = vmul.f32 %v5659, 1.442695
    %v5662 = vpow.pop %v5661
    %v5663 = vmul.f32 %v5660, 1.442695
    %v5664 = vpow.pop %v5663
    %v5665 = vsel %vm539, %v5662, 0.0
    %5666 = vadd.xlane.f32.xlu0 %v5665
    %v5667 = vpop.xlane.xlu0 %5666
    %v5668 = vsel %vm539, %v5664, 0.0
    %5669 = vadd.xlane.f32.xlu0 %v5668
    %v5670 = vpop.xlane.xlu0 %5669
    %v5671 = vrcp.pop %v5667
    %v5672 = vrcp.pop %v5670
    %v5673 = vmul.f32 %v5662, %v5671
    %v5674 = vmul.f32 %v5664, %v5672
    %v5675 = vadd.f32 %v5329, %v5673
    %v5676 = vadd.f32 %v5330, %v5674
    %5677 = vrot.lane.b32.xlu0 %v4103, 96
    %v5678 = vpop.permute.xlu0 %5677
    %5679 = vrot.lane.b32.xlu0 %v4108, 96
    %v5680 = vpop.permute.xlu0 %5679
    %v5684 = vsel %vm539, %v5673, 0
    %5686 = vmatprep.subr.mxu0 0.0
    %5687 = vmatpush1.msra.mxu0 %v5678
    %5688 = vmatprep.subr.mxu0 0.0
    %5689 = vmatpush1.msra.mxu0 %v5680
    %5690 = vmatprep.subr.mxu0 0.0
    %5691 = vmatpush1.msra.mxu0 0.0
    %5692 = vmatprep.subr.mxu0 0.0
    %5693 = vmatpush1.msra.mxu0 0.0
    %5694 = vmatprep.subr.mxu0 0.0
    %5695 = vmatpush1.msra.mxu0 0.0
    %5696 = vmatprep.subr.mxu0 0.0
    %5697 = vmatpush1.msra.mxu0 0.0
    %5698 = vmatprep.subr.mxu0 0.0
    %5699 = vmatpush1.msra.mxu0 0.0
    %5700 = vmatprep.subr.mxu0 0.0
    %5701 = vmatpush1.msra.mxu0 0.0
    %5702 = vmatprep.subr.mxu0 0.0
    %5703 = vmatpush1.msra.mxu0 0.0
    %5704 = vmatprep.subr.mxu0 0.0
    %5705 = vmatpush1.msra.mxu0 0.0
    %5706 = vmatprep.subr.mxu0 0.0
    %5707 = vmatpush1.msra.mxu0 0.0
    %5708 = vmatprep.subr.mxu0 0.0
    %5709 = vmatpush1.msra.mxu0 0.0
    %5710 = vmatprep.subr.mxu0 0.0
    %5711 = vmatpush1.msra.mxu0 0.0
    %5712 = vmatprep.subr.mxu0 0.0
    %5713 = vmatpush1.msra.mxu0 0.0
    %5714 = vmatprep.subr.mxu0 0.0
    %5715 = vmatpush1.msra.mxu0 0.0
    %5716 = vmatprep.subr.mxu0 0.0
    %5717 = vmatpush1.msra.mxu0 0.0
    %5718 = vmatprep.subr.mxu0 0.0
    %5719 = vmatpush1.msra.mxu0 0.0
    %5720 = vmatprep.subr.mxu0 0.0
    %5721 = vmatpush1.msra.mxu0 0.0
    %5722 = vmatprep.subr.mxu0 0.0
    %5723 = vmatpush1.msra.mxu0 0.0
    %5724 = vmatprep.subr.mxu0 0.0
    %5725 = vmatpush1.msra.mxu0 0.0
    %5726 = vmatprep.subr.mxu0 0.0
    %5727 = vmatpush1.msra.mxu0 0.0
    %5728 = vmatprep.subr.mxu0 0.0
    %5729 = vmatpush1.msra.mxu0 0.0
    %5730 = vmatprep.subr.mxu0 0.0
    %5731 = vmatpush1.msra.mxu0 0.0
    %5732 = vmatprep.subr.mxu0 0.0
    %5733 = vmatpush1.msra.mxu0 0.0
    %5734 = vmatprep.subr.mxu0 0.0
    %5735 = vmatpush1.msra.mxu0 0.0
    %5736 = vmatprep.subr.mxu0 0.0
    %5737 = vmatpush1.msra.mxu0 0.0
    %5738 = vmatprep.subr.mxu0 0.0
    %5739 = vmatpush1.msra.mxu0 0.0
    %5740 = vmatprep.subr.mxu0 0.0
    %5741 = vmatpush1.msra.mxu0 0.0
    %5742 = vmatprep.subr.mxu0 0.0
    %5743 = vmatpush1.msra.mxu0 0.0
    %5744 = vmatprep.subr.mxu0 0.0
    %5745 = vmatpush1.msra.mxu0 0.0
    %5746 = vmatprep.subr.mxu0 0.0
    %5747 = vmatpush1.msra.mxu0 0.0
    %5748 = vmatprep.subr.mxu0 0.0
    %5749 = vmatpush1.msra.mxu0 0.0
    %5750 = vmatprep.mubr.f32.mxu0 0.0
    %5751 = vmatmul.mubr.f32.gmra.mrb[0].mxu0 %v5684
    %v5752 = vpop.f32.mrb[0].mxu0
    %v5753 = vadd.f32 0.0, %v5752
    %v5754 = vpop.f32.mrb[0].mxu0
    %5755 = vdwg.mxu0
    %5756 = vrot.lane.b32.xlu0 %v4113, 96
    %v5757 = vpop.permute.xlu0 %5756
    %5758 = vrot.lane.b32.xlu0 %v4118, 96
    %v5759 = vpop.permute.xlu0 %5758
    %v5763 = vsel %vm539, %v5674, 0
    %5765 = vmatprep.subr.mxu0 0.0
    %5766 = vmatpush1.msra.mxu0 %v5757
    %5767 = vmatprep.subr.mxu0 0.0
    %5768 = vmatpush1.msra.mxu0 %v5759
    %5769 = vmatprep.subr.mxu0 0.0
    %5770 = vmatpush1.msra.mxu0 0.0
    %5771 = vmatprep.subr.mxu0 0.0
    %5772 = vmatpush1.msra.mxu0 0.0
    %5773 = vmatprep.subr.mxu0 0.0
    %5774 = vmatpush1.msra.mxu0 0.0
    %5775 = vmatprep.subr.mxu0 0.0
    %5776 = vmatpush1.msra.mxu0 0.0
    %5777 = vmatprep.subr.mxu0 0.0
    %5778 = vmatpush1.msra.mxu0 0.0
    %5779 = vmatprep.subr.mxu0 0.0
    %5780 = vmatpush1.msra.mxu0 0.0
    %5781 = vmatprep.subr.mxu0 0.0
    %5782 = vmatpush1.msra.mxu0 0.0
    %5783 = vmatprep.subr.mxu0 0.0
    %5784 = vmatpush1.msra.mxu0 0.0
    %5785 = vmatprep.subr.mxu0 0.0
    %5786 = vmatpush1.msra.mxu0 0.0
    %5787 = vmatprep.subr.mxu0 0.0
    %5788 = vmatpush1.msra.mxu0 0.0
    %5789 = vmatprep.subr.mxu0 0.0
    %5790 = vmatpush1.msra.mxu0 0.0
    %5791 = vmatprep.subr.mxu0 0.0
    %5792 = vmatpush1.msra.mxu0 0.0
    %5793 = vmatprep.subr.mxu0 0.0
    %5794 = vmatpush1.msra.mxu0 0.0
    %5795 = vmatprep.subr.mxu0 0.0
    %5796 = vmatpush1.msra.mxu0 0.0
    %5797 = vmatprep.subr.mxu0 0.0
    %5798 = vmatpush1.msra.mxu0 0.0
    %5799 = vmatprep.subr.mxu0 0.0
    %5800 = vmatpush1.msra.mxu0 0.0
    %5801 = vmatprep.subr.mxu0 0.0
    %5802 = vmatpush1.msra.mxu0 0.0
    %5803 = vmatprep.subr.mxu0 0.0
    %5804 = vmatpush1.msra.mxu0 0.0
    %5805 = vmatprep.subr.mxu0 0.0
    %5806 = vmatpush1.msra.mxu0 0.0
    %5807 = vmatprep.subr.mxu0 0.0
    %5808 = vmatpush1.msra.mxu0 0.0
    %5809 = vmatprep.subr.mxu0 0.0
    %5810 = vmatpush1.msra.mxu0 0.0
    %5811 = vmatprep.subr.mxu0 0.0
    %5812 = vmatpush1.msra.mxu0 0.0
    %5813 = vmatprep.subr.mxu0 0.0
    %5814 = vmatpush1.msra.mxu0 0.0
    %5815 = vmatprep.subr.mxu0 0.0
    %5816 = vmatpush1.msra.mxu0 0.0
    %5817 = vmatprep.subr.mxu0 0.0
    %5818 = vmatpush1.msra.mxu0 0.0
    %5819 = vmatprep.subr.mxu0 0.0
    %5820 = vmatpush1.msra.mxu0 0.0
    %5821 = vmatprep.subr.mxu0 0.0
    %5822 = vmatpush1.msra.mxu0 0.0
    %5823 = vmatprep.subr.mxu0 0.0
    %5824 = vmatpush1.msra.mxu0 0.0
    %5825 = vmatprep.subr.mxu0 0.0
    %5826 = vmatpush1.msra.mxu0 0.0
    %5827 = vmatprep.subr.mxu0 0.0
    %5828 = vmatpush1.msra.mxu0 0.0
    %5829 = vmatprep.mubr.f32.mxu0 0.0
    %5830 = vmatmul.mubr.f32.gmra.mrb[0].mxu0 %v5763
    %v5831 = vpop.f32.mrb[0].mxu0
    %v5832 = vadd.f32 0.0, %v5831
    %v5833 = vpop.f32.mrb[0].mxu0
    %5834 = vdwg.mxu0
    %5835 = vrot.lane.b32.xlu0 %v3923, 88
    %v5836 = vpop.permute.xlu0 %5835
    %5837 = vrot.lane.b32.xlu0 %v4014, 88
    %v5838 = vpop.permute.xlu0 %5837
    %5839 = vrot.lane.b32.xlu0 %v4019, 88
    %v5840 = vpop.permute.xlu0 %5839
    %v5841 = vsel %vm364, %v5836, 0
    %v5843 = vsel %vm364, %v5838, 0
    %v5845 = vsel %vm364, %v5840, 0
    %5847 = vmatprep.subr.mxu0 0.0
    %5848 = vmatpush1.xpose.msra.mxu0 %v5843
    %5849 = vmatprep.subr.mxu0 0.0
    %5850 = vmatpush1.xpose.msra.mxu0 %v5845
    %5851 = vmatprep.subr.mxu0 0.0
    %5852 = vmatpush1.xpose.msra.mxu0 0.0
    %5853 = vmatprep.subr.mxu0 0.0
    %5854 = vmatpush1.xpose.msra.mxu0 0.0
    %5855 = vmatprep.subr.mxu0 0.0
    %5856 = vmatpush1.xpose.msra.mxu0 0.0
    %5857 = vmatprep.subr.mxu0 0.0
    %5858 = vmatpush1.xpose.msra.mxu0 0.0
    %5859 = vmatprep.subr.mxu0 0.0
    %5860 = vmatpush1.xpose.msra.mxu0 0.0
    %5861 = vmatprep.subr.mxu0 0.0
    %5862 = vmatpush1.xpose.msra.mxu0 0.0
    %5863 = vmatprep.subr.mxu0 0.0
    %5864 = vmatpush1.xpose.msra.mxu0 0.0
    %5865 = vmatprep.subr.mxu0 0.0
    %5866 = vmatpush1.xpose.msra.mxu0 0.0
    %5867 = vmatprep.subr.mxu0 0.0
    %5868 = vmatpush1.xpose.msra.mxu0 0.0
    %5869 = vmatprep.subr.mxu0 0.0
    %5870 = vmatpush1.xpose.msra.mxu0 0.0
    %5871 = vmatprep.subr.mxu0 0.0
    %5872 = vmatpush1.xpose.msra.mxu0 0.0
    %5873 = vmatprep.subr.mxu0 0.0
    %5874 = vmatpush1.xpose.msra.mxu0 0.0
    %5875 = vmatprep.subr.mxu0 0.0
    %5876 = vmatpush1.xpose.msra.mxu0 0.0
    %5877 = vmatprep.subr.mxu0 0.0
    %5878 = vmatpush1.xpose.msra.mxu0 0.0
    %5879 = vmatprep.subr.mxu0 0.0
    %5880 = vmatpush1.xpose.msra.mxu0 0.0
    %5881 = vmatprep.subr.mxu0 0.0
    %5882 = vmatpush1.xpose.msra.mxu0 0.0
    %5883 = vmatprep.subr.mxu0 0.0
    %5884 = vmatpush1.xpose.msra.mxu0 0.0
    %5885 = vmatprep.subr.mxu0 0.0
    %5886 = vmatpush1.xpose.msra.mxu0 0.0
    %5887 = vmatprep.subr.mxu0 0.0
    %5888 = vmatpush1.xpose.msra.mxu0 0.0
    %5889 = vmatprep.subr.mxu0 0.0
    %5890 = vmatpush1.xpose.msra.mxu0 0.0
    %5891 = vmatprep.subr.mxu0 0.0
    %5892 = vmatpush1.xpose.msra.mxu0 0.0
    %5893 = vmatprep.subr.mxu0 0.0
    %5894 = vmatpush1.xpose.msra.mxu0 0.0
    %5895 = vmatprep.subr.mxu0 0.0
    %5896 = vmatpush1.xpose.msra.mxu0 0.0
    %5897 = vmatprep.subr.mxu0 0.0
    %5898 = vmatpush1.xpose.msra.mxu0 0.0
    %5899 = vmatprep.subr.mxu0 0.0
    %5900 = vmatpush1.xpose.msra.mxu0 0.0
    %5901 = vmatprep.subr.mxu0 0.0
    %5902 = vmatpush1.xpose.msra.mxu0 0.0
    %5903 = vmatprep.subr.mxu0 0.0
    %5904 = vmatpush1.xpose.msra.mxu0 0.0
    %5905 = vmatprep.subr.mxu0 0.0
    %5906 = vmatpush1.xpose.msra.mxu0 0.0
    %5907 = vmatprep.subr.mxu0 0.0
    %5908 = vmatpush1.xpose.msra.mxu0 0.0
    %5909 = vmatprep.subr.mxu0 0.0
    %5910 = vmatpush1.xpose.msra.mxu0 0.0
    %5911 = vmatprep.mubr.f32.mxu0 0.0
    %5912 = vmatmul.mubr.f32.gmra.mrb[0].mxu0 %v5841
    %v5913 = vpop.f32.mrb[0].mxu0
    %v5914 = vadd.f32 0.0, %v5913
    %v5915 = vpop.f32.mrb[0].mxu0
    %5916 = vdwg.mxu0
    %5917 = vrot.lane.b32.xlu0 %v3928, 88
    %v5918 = vpop.permute.xlu0 %5917
    %5919 = vrot.lane.b32.xlu0 %v4024, 88
    %v5920 = vpop.permute.xlu0 %5919
    %5921 = vrot.lane.b32.xlu0 %v4029, 88
    %v5922 = vpop.permute.xlu0 %5921
    %v5923 = vsel %vm364, %v5918, 0
    %v5925 = vsel %vm364, %v5920, 0
    %v5927 = vsel %vm364, %v5922, 0
    %5929 = vmatprep.subr.mxu0 0.0
    %5930 = vmatpush1.xpose.msra.mxu0 %v5925
    %5931 = vmatprep.subr.mxu0 0.0
    %5932 = vmatpush1.xpose.msra.mxu0 %v5927
    %5933 = vmatprep.subr.mxu0 0.0
    %5934 = vmatpush1.xpose.msra.mxu0 0.0
    %5935 = vmatprep.subr.mxu0 0.0
    %5936 = vmatpush1.xpose.msra.mxu0 0.0
    %5937 = vmatprep.subr.mxu0 0.0
    %5938 = vmatpush1.xpose.msra.mxu0 0.0
    %5939 = vmatprep.subr.mxu0 0.0
    %5940 = vmatpush1.xpose.msra.mxu0 0.0
    %5941 = vmatprep.subr.mxu0 0.0
    %5942 = vmatpush1.xpose.msra.mxu0 0.0
    %5943 = vmatprep.subr.mxu0 0.0
    %5944 = vmatpush1.xpose.msra.mxu0 0.0
    %5945 = vmatprep.subr.mxu0 0.0
    %5946 = vmatpush1.xpose.msra.mxu0 0.0
    %5947 = vmatprep.subr.mxu0 0.0
    %5948 = vmatpush1.xpose.msra.mxu0 0.0
    %5949 = vmatprep.subr.mxu0 0.0
    %5950 = vmatpush1.xpose.msra.mxu0 0.0
    %5951 = vmatprep.subr.mxu0 0.0
    %5952 = vmatpush1.xpose.msra.mxu0 0.0
    %5953 = vmatprep.subr.mxu0 0.0
    %5954 = vmatpush1.xpose.msra.mxu0 0.0
    %5955 = vmatprep.subr.mxu0 0.0
    %5956 = vmatpush1.xpose.msra.mxu0 0.0
    %5957 = vmatprep.subr.mxu0 0.0
    %5958 = vmatpush1.xpose.msra.mxu0 0.0
    %5959 = vmatprep.subr.mxu0 0.0
    %5960 = vmatpush1.xpose.msra.mxu0 0.0
    %5961 = vmatprep.subr.mxu0 0.0
    %5962 = vmatpush1.xpose.msra.mxu0 0.0
    %5963 = vmatprep.subr.mxu0 0.0
    %5964 = vmatpush1.xpose.msra.mxu0 0.0
    %5965 = vmatprep.subr.mxu0 0.0
    %5966 = vmatpush1.xpose.msra.mxu0 0.0
    %5967 = vmatprep.subr.mxu0 0.0
    %5968 = vmatpush1.xpose.msra.mxu0 0.0
    %5969 = vmatprep.subr.mxu0 0.0
    %5970 = vmatpush1.xpose.msra.mxu0 0.0
    %5971 = vmatprep.subr.mxu0 0.0
    %5972 = vmatpush1.xpose.msra.mxu0 0.0
    %5973 = vmatprep.subr.mxu0 0.0
    %5974 = vmatpush1.xpose.msra.mxu0 0.0
    %5975 = vmatprep.subr.mxu0 0.0
    %5976 = vmatpush1.xpose.msra.mxu0 0.0
    %5977 = vmatprep.subr.mxu0 0.0
    %5978 = vmatpush1.xpose.msra.mxu0 0.0
    %5979 = vmatprep.subr.mxu0 0.0
    %5980 = vmatpush1.xpose.msra.mxu0 0.0
    %5981 = vmatprep.subr.mxu0 0.0
    %5982 = vmatpush1.xpose.msra.mxu0 0.0
    %5983 = vmatprep.subr.mxu0 0.0
    %5984 = vmatpush1.xpose.msra.mxu0 0.0
    %5985 = vmatprep.subr.mxu0 0.0
    %5986 = vmatpush1.xpose.msra.mxu0 0.0
    %5987 = vmatprep.subr.mxu0 0.0
    %5988 = vmatpush1.xpose.msra.mxu0 0.0
    %5989 = vmatprep.subr.mxu0 0.0
    %5990 = vmatpush1.xpose.msra.mxu0 0.0
    %5991 = vmatprep.subr.mxu0 0.0
    %5992 = vmatpush1.xpose.msra.mxu0 0.0
    %5993 = vmatprep.mubr.f32.mxu0 0.0
    %5994 = vmatmul.mubr.f32.gmra.mrb[0].mxu0 %v5923
    %v5995 = vpop.f32.mrb[0].mxu0
    %v5996 = vadd.f32 0.0, %v5995
    %v5997 = vpop.f32.mrb[0].mxu0
    %5998 = vdwg.mxu0
    %v5999 = vsel %vm539, %v5914, -inf
    %6000 = vmax.xlane.f32.xlu0 %v5999
    %v6001 = vpop.xlane.xlu0 %6000
    %v6002 = vsel %vm539, %v5996, -inf
    %6003 = vmax.xlane.f32.xlu0 %v6002
    %v6004 = vpop.xlane.xlu0 %6003
    %v6005 = vsub.f32 %v5914, %v6001
    %v6006 = vsub.f32 %v5996, %v6004
    %v6007 = vmul.f32 %v6005, 1.442695
    %v6008 = vpow.pop %v6007
    %v6009 = vmul.f32 %v6006, 1.442695
    %v6010 = vpow.pop %v6009
    %v6011 = vsel %vm539, %v6008, 0.0
    %6012 = vadd.xlane.f32.xlu0 %v6011
    %v6013 = vpop.xlane.xlu0 %6012
    %v6014 = vsel %vm539, %v6010, 0.0
    %6015 = vadd.xlane.f32.xlu0 %v6014
    %v6016 = vpop.xlane.xlu0 %6015
    %v6017 = vrcp.pop %v6013
    %v6018 = vrcp.pop %v6016
    %v6019 = vmul.f32 %v6008, %v6017
    %v6020 = vmul.f32 %v6010, %v6018
    %v6021 = vadd.f32 %v5675, %v6019
    %v6022 = vadd.f32 %v5676, %v6020
    %6023 = vrot.lane.b32.xlu0 %v4103, 88
    %v6024 = vpop.permute.xlu0 %6023
    %6025 = vrot.lane.b32.xlu0 %v4108, 88
    %v6026 = vpop.permute.xlu0 %6025
    %v6030 = vsel %vm539, %v6019, 0
    %6032 = vmatprep.subr.mxu0 0.0
    %6033 = vmatpush1.msra.mxu0 %v6024
    %6034 = vmatprep.subr.mxu0 0.0
    %6035 = vmatpush1.msra.mxu0 %v6026
    %6036 = vmatprep.subr.mxu0 0.0
    %6037 = vmatpush1.msra.mxu0 0.0
    %6038 = vmatprep.subr.mxu0 0.0
    %6039 = vmatpush1.msra.mxu0 0.0
    %6040 = vmatprep.subr.mxu0 0.0
    %6041 = vmatpush1.msra.mxu0 0.0
    %6042 = vmatprep.subr.mxu0 0.0
    %6043 = vmatpush1.msra.mxu0 0.0
    %6044 = vmatprep.subr.mxu0 0.0
    %6045 = vmatpush1.msra.mxu0 0.0
    %6046 = vmatprep.subr.mxu0 0.0
    %6047 = vmatpush1.msra.mxu0 0.0
    %6048 = vmatprep.subr.mxu0 0.0
    %6049 = vmatpush1.msra.mxu0 0.0
    %6050 = vmatprep.subr.mxu0 0.0
    %6051 = vmatpush1.msra.mxu0 0.0
    %6052 = vmatprep.subr.mxu0 0.0
    %6053 = vmatpush1.msra.mxu0 0.0
    %6054 = vmatprep.subr.mxu0 0.0
    %6055 = vmatpush1.msra.mxu0 0.0
    %6056 = vmatprep.subr.mxu0 0.0
    %6057 = vmatpush1.msra.mxu0 0.0
    %6058 = vmatprep.subr.mxu0 0.0
    %6059 = vmatpush1.msra.mxu0 0.0
    %6060 = vmatprep.subr.mxu0 0.0
    %6061 = vmatpush1.msra.mxu0 0.0
    %6062 = vmatprep.subr.mxu0 0.0
    %6063 = vmatpush1.msra.mxu0 0.0
    %6064 = vmatprep.subr.mxu0 0.0
    %6065 = vmatpush1.msra.mxu0 0.0
    %6066 = vmatprep.subr.mxu0 0.0
    %6067 = vmatpush1.msra.mxu0 0.0
    %6068 = vmatprep.subr.mxu0 0.0
    %6069 = vmatpush1.msra.mxu0 0.0
    %6070 = vmatprep.subr.mxu0 0.0
    %6071 = vmatpush1.msra.mxu0 0.0
    %6072 = vmatprep.subr.mxu0 0.0
    %6073 = vmatpush1.msra.mxu0 0.0
    %6074 = vmatprep.subr.mxu0 0.0
    %6075 = vmatpush1.msra.mxu0 0.0
    %6076 = vmatprep.subr.mxu0 0.0
    %6077 = vmatpush1.msra.mxu0 0.0
    %6078 = vmatprep.subr.mxu0 0.0
    %6079 = vmatpush1.msra.mxu0 0.0
    %6080 = vmatprep.subr.mxu0 0.0
    %6081 = vmatpush1.msra.mxu0 0.0
    %6082 = vmatprep.subr.mxu0 0.0
    %6083 = vmatpush1.msra.mxu0 0.0
    %6084 = vmatprep.subr.mxu0 0.0
    %6085 = vmatpush1.msra.mxu0 0.0
    %6086 = vmatprep.subr.mxu0 0.0
    %6087 = vmatpush1.msra.mxu0 0.0
    %6088 = vmatprep.subr.mxu0 0.0
    %6089 = vmatpush1.msra.mxu0 0.0
    %6090 = vmatprep.subr.mxu0 0.0
    %6091 = vmatpush1.msra.mxu0 0.0
    %6092 = vmatprep.subr.mxu0 0.0
    %6093 = vmatpush1.msra.mxu0 0.0
    %6094 = vmatprep.subr.mxu0 0.0
    %6095 = vmatpush1.msra.mxu0 0.0
    %6096 = vmatprep.mubr.f32.mxu0 0.0
    %6097 = vmatmul.mubr.f32.gmra.mrb[0].mxu0 %v6030
    %v6098 = vpop.f32.mrb[0].mxu0
    %v6099 = vadd.f32 0.0, %v6098
    %v6100 = vpop.f32.mrb[0].mxu0
    %6101 = vdwg.mxu0
    %6102 = vrot.lane.b32.xlu0 %v4113, 88
    %v6103 = vpop.permute.xlu0 %6102
    %6104 = vrot.lane.b32.xlu0 %v4118, 88
    %v6105 = vpop.permute.xlu0 %6104
    %v6109 = vsel %vm539, %v6020, 0
    %6111 = vmatprep.subr.mxu0 0.0
    %6112 = vmatpush1.msra.mxu0 %v6103
    %6113 = vmatprep.subr.mxu0 0.0
    %6114 = vmatpush1.msra.mxu0 %v6105
    %6115 = vmatprep.subr.mxu0 0.0
    %6116 = vmatpush1.msra.mxu0 0.0
    %6117 = vmatprep.subr.mxu0 0.0
    %6118 = vmatpush1.msra.mxu0 0.0
    %6119 = vmatprep.subr.mxu0 0.0
    %6120 = vmatpush1.msra.mxu0 0.0
    %6121 = vmatprep.subr.mxu0 0.0
    %6122 = vmatpush1.msra.mxu0 0.0
    %6123 = vmatprep.subr.mxu0 0.0
    %6124 = vmatpush1.msra.mxu0 0.0
    %6125 = vmatprep.subr.mxu0 0.0
    %6126 = vmatpush1.msra.mxu0 0.0
    %6127 = vmatprep.subr.mxu0 0.0
    %6128 = vmatpush1.msra.mxu0 0.0
    %6129 = vmatprep.subr.mxu0 0.0
    %6130 = vmatpush1.msra.mxu0 0.0
    %6131 = vmatprep.subr.mxu0 0.0
    %6132 = vmatpush1.msra.mxu0 0.0
    %6133 = vmatprep.subr.mxu0 0.0
    %6134 = vmatpush1.msra.mxu0 0.0
    %6135 = vmatprep.subr.mxu0 0.0
    %6136 = vmatpush1.msra.mxu0 0.0
    %6137 = vmatprep.subr.mxu0 0.0
    %6138 = vmatpush1.msra.mxu0 0.0
    %6139 = vmatprep.subr.mxu0 0.0
    %6140 = vmatpush1.msra.mxu0 0.0
    %6141 = vmatprep.subr.mxu0 0.0
    %6142 = vmatpush1.msra.mxu0 0.0
    %6143 = vmatprep.subr.mxu0 0.0
    %6144 = vmatpush1.msra.mxu0 0.0
    %6145 = vmatprep.subr.mxu0 0.0
    %6146 = vmatpush1.msra.mxu0 0.0
    %6147 = vmatprep.subr.mxu0 0.0
    %6148 = vmatpush1.msra.mxu0 0.0
    %6149 = vmatprep.subr.mxu0 0.0
    %6150 = vmatpush1.msra.mxu0 0.0
    %6151 = vmatprep.subr.mxu0 0.0
    %6152 = vmatpush1.msra.mxu0 0.0
    %6153 = vmatprep.subr.mxu0 0.0
    %6154 = vmatpush1.msra.mxu0 0.0
    %6155 = vmatprep.subr.mxu0 0.0
    %6156 = vmatpush1.msra.mxu0 0.0
    %6157 = vmatprep.subr.mxu0 0.0
    %6158 = vmatpush1.msra.mxu0 0.0
    %6159 = vmatprep.subr.mxu0 0.0
    %6160 = vmatpush1.msra.mxu0 0.0
    %6161 = vmatprep.subr.mxu0 0.0
    %6162 = vmatpush1.msra.mxu0 0.0
    %6163 = vmatprep.subr.mxu0 0.0
    %6164 = vmatpush1.msra.mxu0 0.0
    %6165 = vmatprep.subr.mxu0 0.0
    %6166 = vmatpush1.msra.mxu0 0.0
    %6167 = vmatprep.subr.mxu0 0.0
    %6168 = vmatpush1.msra.mxu0 0.0
    %6169 = vmatprep.subr.mxu0 0.0
    %6170 = vmatpush1.msra.mxu0 0.0
    %6171 = vmatprep.subr.mxu0 0.0
    %6172 = vmatpush1.msra.mxu0 0.0
    %6173 = vmatprep.subr.mxu0 0.0
    %6174 = vmatpush1.msra.mxu0 0.0
    %6175 = vmatprep.mubr.f32.mxu0 0.0
    %6176 = vmatmul.mubr.f32.gmra.mrb[0].mxu0 %v6109
    %v6177 = vpop.f32.mrb[0].mxu0
    %v6178 = vadd.f32 0.0, %v6177
    %v6179 = vpop.f32.mrb[0].mxu0
    %6180 = vdwg.mxu0
    %6181 = vrot.lane.b32.xlu0 %v3923, 80
    %v6182 = vpop.permute.xlu0 %6181
    %6183 = vrot.lane.b32.xlu0 %v4014, 80
    %v6184 = vpop.permute.xlu0 %6183
    %6185 = vrot.lane.b32.xlu0 %v4019, 80
    %v6186 = vpop.permute.xlu0 %6185
    %v6187 = vsel %vm364, %v6182, 0
    %v6189 = vsel %vm364, %v6184, 0
    %v6191 = vsel %vm364, %v6186, 0
    %6193 = vmatprep.subr.mxu0 0.0
    %6194 = vmatpush1.xpose.msra.mxu0 %v6189
    %6195 = vmatprep.subr.mxu0 0.0
    %6196 = vmatpush1.xpose.msra.mxu0 %v6191
    %6197 = vmatprep.subr.mxu0 0.0
    %6198 = vmatpush1.xpose.msra.mxu0 0.0
    %6199 = vmatprep.subr.mxu0 0.0
    %6200 = vmatpush1.xpose.msra.mxu0 0.0
    %6201 = vmatprep.subr.mxu0 0.0
    %6202 = vmatpush1.xpose.msra.mxu0 0.0
    %6203 = vmatprep.subr.mxu0 0.0
    %6204 = vmatpush1.xpose.msra.mxu0 0.0
    %6205 = vmatprep.subr.mxu0 0.0
    %6206 = vmatpush1.xpose.msra.mxu0 0.0
    %6207 = vmatprep.subr.mxu0 0.0
    %6208 = vmatpush1.xpose.msra.mxu0 0.0
    %6209 = vmatprep.subr.mxu0 0.0
    %6210 = vmatpush1.xpose.msra.mxu0 0.0
    %6211 = vmatprep.subr.mxu0 0.0
    %6212 = vmatpush1.xpose.msra.mxu0 0.0
    %6213 = vmatprep.subr.mxu0 0.0
    %6214 = vmatpush1.xpose.msra.mxu0 0.0
    %6215 = vmatprep.subr.mxu0 0.0
    %6216 = vmatpush1.xpose.msra.mxu0 0.0
    %6217 = vmatprep.subr.mxu0 0.0
    %6218 = vmatpush1.xpose.msra.mxu0 0.0
    %6219 = vmatprep.subr.mxu0 0.0
    %6220 = vmatpush1.xpose.msra.mxu0 0.0
    %6221 = vmatprep.subr.mxu0 0.0
    %6222 = vmatpush1.xpose.msra.mxu0 0.0
    %6223 = vmatprep.subr.mxu0 0.0
    %6224 = vmatpush1.xpose.msra.mxu0 0.0
    %6225 = vmatprep.subr.mxu0 0.0
    %6226 = vmatpush1.xpose.msra.mxu0 0.0
    %6227 = vmatprep.subr.mxu0 0.0
    %6228 = vmatpush1.xpose.msra.mxu0 0.0
    %6229 = vmatprep.subr.mxu0 0.0
    %6230 = vmatpush1.xpose.msra.mxu0 0.0
    %6231 = vmatprep.subr.mxu0 0.0
    %6232 = vmatpush1.xpose.msra.mxu0 0.0
    %6233 = vmatprep.subr.mxu0 0.0
    %6234 = vmatpush1.xpose.msra.mxu0 0.0
    %6235 = vmatprep.subr.mxu0 0.0
    %6236 = vmatpush1.xpose.msra.mxu0 0.0
    %6237 = vmatprep.subr.mxu0 0.0
    %6238 = vmatpush1.xpose.msra.mxu0 0.0
    %6239 = vmatprep.subr.mxu0 0.0
    %6240 = vmatpush1.xpose.msra.mxu0 0.0
    %6241 = vmatprep.subr.mxu0 0.0
    %6242 = vmatpush1.xpose.msra.mxu0 0.0
    %6243 = vmatprep.subr.mxu0 0.0
    %6244 = vmatpush1.xpose.msra.mxu0 0.0
    %6245 = vmatprep.subr.mxu0 0.0
    %6246 = vmatpush1.xpose.msra.mxu0 0.0
    %6247 = vmatprep.subr.mxu0 0.0
    %6248 = vmatpush1.xpose.msra.mxu0 0.0
    %6249 = vmatprep.subr.mxu0 0.0
    %6250 = vmatpush1.xpose.msra.mxu0 0.0
    %6251 = vmatprep.subr.mxu0 0.0
    %6252 = vmatpush1.xpose.msra.mxu0 0.0
    %6253 = vmatprep.subr.mxu0 0.0
    %6254 = vmatpush1.xpose.msra.mxu0 0.0
    %6255 = vmatprep.subr.mxu0 0.0
    %6256 = vmatpush1.xpose.msra.mxu0 0.0
    %6257 = vmatprep.mubr.f32.mxu0 0.0
    %6258 = vmatmul.mubr.f32.gmra.mrb[0].mxu0 %v6187
    %v6259 = vpop.f32.mrb[0].mxu0
    %v6260 = vadd.f32 0.0, %v6259
    %v6261 = vpop.f32.mrb[0].mxu0
    %6262 = vdwg.mxu0
    %6263 = vrot.lane.b32.xlu0 %v3928, 80
    %v6264 = vpop.permute.xlu0 %6263
    %6265 = vrot.lane.b32.xlu0 %v4024, 80
    %v6266 = vpop.permute.xlu0 %6265
    %6267 = vrot.lane.b32.xlu0 %v4029, 80
    %v6268 = vpop.permute.xlu0 %6267
    %v6269 = vsel %vm364, %v6264, 0
    %v6271 = vsel %vm364, %v6266, 0
    %v6273 = vsel %vm364, %v6268, 0
    %6275 = vmatprep.subr.mxu0 0.0
    %6276 = vmatpush1.xpose.msra.mxu0 %v6271
    %6277 = vmatprep.subr.mxu0 0.0
    %6278 = vmatpush1.xpose.msra.mxu0 %v6273
    %6279 = vmatprep.subr.mxu0 0.0
    %6280 = vmatpush1.xpose.msra.mxu0 0.0
    %6281 = vmatprep.subr.mxu0 0.0
    %6282 = vmatpush1.xpose.msra.mxu0 0.0
    %6283 = vmatprep.subr.mxu0 0.0
    %6284 = vmatpush1.xpose.msra.mxu0 0.0
    %6285 = vmatprep.subr.mxu0 0.0
    %6286 = vmatpush1.xpose.msra.mxu0 0.0
    %6287 = vmatprep.subr.mxu0 0.0
    %6288 = vmatpush1.xpose.msra.mxu0 0.0
    %6289 = vmatprep.subr.mxu0 0.0
    %6290 = vmatpush1.xpose.msra.mxu0 0.0
    %6291 = vmatprep.subr.mxu0 0.0
    %6292 = vmatpush1.xpose.msra.mxu0 0.0
    %6293 = vmatprep.subr.mxu0 0.0
    %6294 = vmatpush1.xpose.msra.mxu0 0.0
    %6295 = vmatprep.subr.mxu0 0.0
    %6296 = vmatpush1.xpose.msra.mxu0 0.0
    %6297 = vmatprep.subr.mxu0 0.0
    %6298 = vmatpush1.xpose.msra.mxu0 0.0
    %6299 = vmatprep.subr.mxu0 0.0
    %6300 = vmatpush1.xpose.msra.mxu0 0.0
    %6301 = vmatprep.subr.mxu0 0.0
    %6302 = vmatpush1.xpose.msra.mxu0 0.0
    %6303 = vmatprep.subr.mxu0 0.0
    %6304 = vmatpush1.xpose.msra.mxu0 0.0
    %6305 = vmatprep.subr.mxu0 0.0
    %6306 = vmatpush1.xpose.msra.mxu0 0.0
    %6307 = vmatprep.subr.mxu0 0.0
    %6308 = vmatpush1.xpose.msra.mxu0 0.0
    %6309 = vmatprep.subr.mxu0 0.0
    %6310 = vmatpush1.xpose.msra.mxu0 0.0
    %6311 = vmatprep.subr.mxu0 0.0
    %6312 = vmatpush1.xpose.msra.mxu0 0.0
    %6313 = vmatprep.subr.mxu0 0.0
    %6314 = vmatpush1.xpose.msra.mxu0 0.0
    %6315 = vmatprep.subr.mxu0 0.0
    %6316 = vmatpush1.xpose.msra.mxu0 0.0
    %6317 = vmatprep.subr.mxu0 0.0
    %6318 = vmatpush1.xpose.msra.mxu0 0.0
    %6319 = vmatprep.subr.mxu0 0.0
    %6320 = vmatpush1.xpose.msra.mxu0 0.0
    %6321 = vmatprep.subr.mxu0 0.0
    %6322 = vmatpush1.xpose.msra.mxu0 0.0
    %6323 = vmatprep.subr.mxu0 0.0
    %6324 = vmatpush1.xpose.msra.mxu0 0.0
    %6325 = vmatprep.subr.mxu0 0.0
    %6326 = vmatpush1.xpose.msra.mxu0 0.0
    %6327 = vmatprep.subr.mxu0 0.0
    %6328 = vmatpush1.xpose.msra.mxu0 0.0
    %6329 = vmatprep.subr.mxu0 0.0
    %6330 = vmatpush1.xpose.msra.mxu0 0.0
    %6331 = vmatprep.subr.mxu0 0.0
    %6332 = vmatpush1.xpose.msra.mxu0 0.0
    %6333 = vmatprep.subr.mxu0 0.0
    %6334 = vmatpush1.xpose.msra.mxu0 0.0
    %6335 = vmatprep.subr.mxu0 0.0
    %6336 = vmatpush1.xpose.msra.mxu0 0.0
    %6337 = vmatprep.subr.mxu0 0.0
    %6338 = vmatpush1.xpose.msra.mxu0 0.0
    %6339 = vmatprep.mubr.f32.mxu0 0.0
    %6340 = vmatmul.mubr.f32.gmra.mrb[0].mxu0 %v6269
    %v6341 = vpop.f32.mrb[0].mxu0
    %v6342 = vadd.f32 0.0, %v6341
    %v6343 = vpop.f32.mrb[0].mxu0
    %6344 = vdwg.mxu0
    %v6345 = vsel %vm539, %v6260, -inf
    %6346 = vmax.xlane.f32.xlu0 %v6345
    %v6347 = vpop.xlane.xlu0 %6346
    %v6348 = vsel %vm539, %v6342, -inf
    %6349 = vmax.xlane.f32.xlu0 %v6348
    %v6350 = vpop.xlane.xlu0 %6349
    %v6351 = vsub.f32 %v6260, %v6347
    %v6352 = vsub.f32 %v6342, %v6350
    %v6353 = vmul.f32 %v6351, 1.442695
    %v6354 = vpow.pop %v6353
    %v6355 = vmul.f32 %v6352, 1.442695
    %v6356 = vpow.pop %v6355
    %v6357 = vsel %vm539, %v6354, 0.0
    %6358 = vadd.xlane.f32.xlu0 %v6357
    %v6359 = vpop.xlane.xlu0 %6358
    %v6360 = vsel %vm539, %v6356, 0.0
    %6361 = vadd.xlane.f32.xlu0 %v6360
    %v6362 = vpop.xlane.xlu0 %6361
    %v6363 = vrcp.pop %v6359
    %v6364 = vrcp.pop %v6362
    %v6365 = vmul.f32 %v6354, %v6363
    %v6366 = vmul.f32 %v6356, %v6364
    %v6367 = vadd.f32 %v6021, %v6365
    %v6368 = vadd.f32 %v6022, %v6366
    %6369 = vrot.lane.b32.xlu0 %v4103, 80
    %v6370 = vpop.permute.xlu0 %6369
    %6371 = vrot.lane.b32.xlu0 %v4108, 80
    %v6372 = vpop.permute.xlu0 %6371
    %v6376 = vsel %vm539, %v6365, 0
    %6378 = vmatprep.subr.mxu0 0.0
    %6379 = vmatpush1.msra.mxu0 %v6370
    %6380 = vmatprep.subr.mxu0 0.0
    %6381 = vmatpush1.msra.mxu0 %v6372
    %6382 = vmatprep.subr.mxu0 0.0
    %6383 = vmatpush1.msra.mxu0 0.0
    %6384 = vmatprep.subr.mxu0 0.0
    %6385 = vmatpush1.msra.mxu0 0.0
    %6386 = vmatprep.subr.mxu0 0.0
    %6387 = vmatpush1.msra.mxu0 0.0
    %6388 = vmatprep.subr.mxu0 0.0
    %6389 = vmatpush1.msra.mxu0 0.0
    %6390 = vmatprep.subr.mxu0 0.0
    %6391 = vmatpush1.msra.mxu0 0.0
    %6392 = vmatprep.subr.mxu0 0.0
    %6393 = vmatpush1.msra.mxu0 0.0
    %6394 = vmatprep.subr.mxu0 0.0
    %6395 = vmatpush1.msra.mxu0 0.0
    %6396 = vmatprep.subr.mxu0 0.0
    %6397 = vmatpush1.msra.mxu0 0.0
    %6398 = vmatprep.subr.mxu0 0.0
    %6399 = vmatpush1.msra.mxu0 0.0
    %6400 = vmatprep.subr.mxu0 0.0
    %6401 = vmatpush1.msra.mxu0 0.0
    %6402 = vmatprep.subr.mxu0 0.0
    %6403 = vmatpush1.msra.mxu0 0.0
    %6404 = vmatprep.subr.mxu0 0.0
    %6405 = vmatpush1.msra.mxu0 0.0
    %6406 = vmatprep.subr.mxu0 0.0
    %6407 = vmatpush1.msra.mxu0 0.0
    %6408 = vmatprep.subr.mxu0 0.0
    %6409 = vmatpush1.msra.mxu0 0.0
    %6410 = vmatprep.subr.mxu0 0.0
    %6411 = vmatpush1.msra.mxu0 0.0
    %6412 = vmatprep.subr.mxu0 0.0
    %6413 = vmatpush1.msra.mxu0 0.0
    %6414 = vmatprep.subr.mxu0 0.0
    %6415 = vmatpush1.msra.mxu0 0.0
    %6416 = vmatprep.subr.mxu0 0.0
    %6417 = vmatpush1.msra.mxu0 0.0
    %6418 = vmatprep.subr.mxu0 0.0
    %6419 = vmatpush1.msra.mxu0 0.0
    %6420 = vmatprep.subr.mxu0 0.0
    %6421 = vmatpush1.msra.mxu0 0.0
    %6422 = vmatprep.subr.mxu0 0.0
    %6423 = vmatpush1.msra.mxu0 0.0
    %6424 = vmatprep.subr.mxu0 0.0
    %6425 = vmatpush1.msra.mxu0 0.0
    %6426 = vmatprep.subr.mxu0 0.0
    %6427 = vmatpush1.msra.mxu0 0.0
    %6428 = vmatprep.subr.mxu0 0.0
    %6429 = vmatpush1.msra.mxu0 0.0
    %6430 = vmatprep.subr.mxu0 0.0
    %6431 = vmatpush1.msra.mxu0 0.0
    %6432 = vmatprep.subr.mxu0 0.0
    %6433 = vmatpush1.msra.mxu0 0.0
    %6434 = vmatprep.subr.mxu0 0.0
    %6435 = vmatpush1.msra.mxu0 0.0
    %6436 = vmatprep.subr.mxu0 0.0
    %6437 = vmatpush1.msra.mxu0 0.0
    %6438 = vmatprep.subr.mxu0 0.0
    %6439 = vmatpush1.msra.mxu0 0.0
    %6440 = vmatprep.subr.mxu0 0.0
    %6441 = vmatpush1.msra.mxu0 0.0
    %6442 = vmatprep.mubr.f32.mxu0 0.0
    %6443 = vmatmul.mubr.f32.gmra.mrb[0].mxu0 %v6376
    %v6444 = vpop.f32.mrb[0].mxu0
    %v6445 = vadd.f32 0.0, %v6444
    %v6446 = vpop.f32.mrb[0].mxu0
    %6447 = vdwg.mxu0
    %6448 = vrot.lane.b32.xlu0 %v4113, 80
    %v6449 = vpop.permute.xlu0 %6448
    %6450 = vrot.lane.b32.xlu0 %v4118, 80
    %v6451 = vpop.permute.xlu0 %6450
    %v6455 = vsel %vm539, %v6366, 0
    %6457 = vmatprep.subr.mxu0 0.0
    %6458 = vmatpush1.msra.mxu0 %v6449
    %6459 = vmatprep.subr.mxu0 0.0
    %6460 = vmatpush1.msra.mxu0 %v6451
    %6461 = vmatprep.subr.mxu0 0.0
    %6462 = vmatpush1.msra.mxu0 0.0
    %6463 = vmatprep.subr.mxu0 0.0
    %6464 = vmatpush1.msra.mxu0 0.0
    %6465 = vmatprep.subr.mxu0 0.0
    %6466 = vmatpush1.msra.mxu0 0.0
    %6467 = vmatprep.subr.mxu0 0.0
    %6468 = vmatpush1.msra.mxu0 0.0
    %6469 = vmatprep.subr.mxu0 0.0
    %6470 = vmatpush1.msra.mxu0 0.0
    %6471 = vmatprep.subr.mxu0 0.0
    %6472 = vmatpush1.msra.mxu0 0.0
    %6473 = vmatprep.subr.mxu0 0.0
    %6474 = vmatpush1.msra.mxu0 0.0
    %6475 = vmatprep.subr.mxu0 0.0
    %6476 = vmatpush1.msra.mxu0 0.0
    %6477 = vmatprep.subr.mxu0 0.0
    %6478 = vmatpush1.msra.mxu0 0.0
    %6479 = vmatprep.subr.mxu0 0.0
    %6480 = vmatpush1.msra.mxu0 0.0
    %6481 = vmatprep.subr.mxu0 0.0
    %6482 = vmatpush1.msra.mxu0 0.0
    %6483 = vmatprep.subr.mxu0 0.0
    %6484 = vmatpush1.msra.mxu0 0.0
    %6485 = vmatprep.subr.mxu0 0.0
    %6486 = vmatpush1.msra.mxu0 0.0
    %6487 = vmatprep.subr.mxu0 0.0
    %6488 = vmatpush1.msra.mxu0 0.0
    %6489 = vmatprep.subr.mxu0 0.0
    %6490 = vmatpush1.msra.mxu0 0.0
    %6491 = vmatprep.subr.mxu0 0.0
    %6492 = vmatpush1.msra.mxu0 0.0
    %6493 = vmatprep.subr.mxu0 0.0
    %6494 = vmatpush1.msra.mxu0 0.0
    %6495 = vmatprep.subr.mxu0 0.0
    %6496 = vmatpush1.msra.mxu0 0.0
    %6497 = vmatprep.subr.mxu0 0.0
    %6498 = vmatpush1.msra.mxu0 0.0
    %6499 = vmatprep.subr.mxu0 0.0
    %6500 = vmatpush1.msra.mxu0 0.0
    %6501 = vmatprep.subr.mxu0 0.0
    %6502 = vmatpush1.msra.mxu0 0.0
    %6503 = vmatprep.subr.mxu0 0.0
    %6504 = vmatpush1.msra.mxu0 0.0
    %6505 = vmatprep.subr.mxu0 0.0
    %6506 = vmatpush1.msra.mxu0 0.0
    %6507 = vmatprep.subr.mxu0 0.0
    %6508 = vmatpush1.msra.mxu0 0.0
    %6509 = vmatprep.subr.mxu0 0.0
    %6510 = vmatpush1.msra.mxu0 0.0
    %6511 = vmatprep.subr.mxu0 0.0
    %6512 = vmatpush1.msra.mxu0 0.0
    %6513 = vmatprep.subr.mxu0 0.0
    %6514 = vmatpush1.msra.mxu0 0.0
    %6515 = vmatprep.subr.mxu0 0.0
    %6516 = vmatpush1.msra.mxu0 0.0
    %6517 = vmatprep.subr.mxu0 0.0
    %6518 = vmatpush1.msra.mxu0 0.0
    %6519 = vmatprep.subr.mxu0 0.0
    %6520 = vmatpush1.msra.mxu0 0.0
    %6521 = vmatprep.mubr.f32.mxu0 0.0
    %6522 = vmatmul.mubr.f32.gmra.mrb[0].mxu0 %v6455
    %v6523 = vpop.f32.mrb[0].mxu0
    %v6524 = vadd.f32 0.0, %v6523
    %v6525 = vpop.f32.mrb[0].mxu0
    %6526 = vdwg.mxu0
    %6527 = vrot.lane.b32.xlu0 %v3923, 72
    %v6528 = vpop.permute.xlu0 %6527
    %6529 = vrot.lane.b32.xlu0 %v4014, 72
    %v6530 = vpop.permute.xlu0 %6529
    %6531 = vrot.lane.b32.xlu0 %v4019, 72
    %v6532 = vpop.permute.xlu0 %6531
    %v6533 = vsel %vm364, %v6528, 0
    %v6535 = vsel %vm364, %v6530, 0
    %v6537 = vsel %vm364, %v6532, 0
    %6539 = vmatprep.subr.mxu0 0.0
    %6540 = vmatpush1.xpose.msra.mxu0 %v6535
    %6541 = vmatprep.subr.mxu0 0.0
    %6542 = vmatpush1.xpose.msra.mxu0 %v6537
    %6543 = vmatprep.subr.mxu0 0.0
    %6544 = vmatpush1.xpose.msra.mxu0 0.0
    %6545 = vmatprep.subr.mxu0 0.0
    %6546 = vmatpush1.xpose.msra.mxu0 0.0
    %6547 = vmatprep.subr.mxu0 0.0
    %6548 = vmatpush1.xpose.msra.mxu0 0.0
    %6549 = vmatprep.subr.mxu0 0.0
    %6550 = vmatpush1.xpose.msra.mxu0 0.0
    %6551 = vmatprep.subr.mxu0 0.0
    %6552 = vmatpush1.xpose.msra.mxu0 0.0
    %6553 = vmatprep.subr.mxu0 0.0
    %6554 = vmatpush1.xpose.msra.mxu0 0.0
    %6555 = vmatprep.subr.mxu0 0.0
    %6556 = vmatpush1.xpose.msra.mxu0 0.0
    %6557 = vmatprep.subr.mxu0 0.0
    %6558 = vmatpush1.xpose.msra.mxu0 0.0
    %6559 = vmatprep.subr.mxu0 0.0
    %6560 = vmatpush1.xpose.msra.mxu0 0.0
    %6561 = vmatprep.subr.mxu0 0.0
    %6562 = vmatpush1.xpose.msra.mxu0 0.0
    %6563 = vmatprep.subr.mxu0 0.0
    %6564 = vmatpush1.xpose.msra.mxu0 0.0
    %6565 = vmatprep.subr.mxu0 0.0
    %6566 = vmatpush1.xpose.msra.mxu0 0.0
    %6567 = vmatprep.subr.mxu0 0.0
    %6568 = vmatpush1.xpose.msra.mxu0 0.0
    %6569 = vmatprep.subr.mxu0 0.0
    %6570 = vmatpush1.xpose.msra.mxu0 0.0
    %6571 = vmatprep.subr.mxu0 0.0
    %6572 = vmatpush1.xpose.msra.mxu0 0.0
    %6573 = vmatprep.subr.mxu0 0.0
    %6574 = vmatpush1.xpose.msra.mxu0 0.0
    %6575 = vmatprep.subr.mxu0 0.0
    %6576 = vmatpush1.xpose.msra.mxu0 0.0
    %6577 = vmatprep.subr.mxu0 0.0
    %6578 = vmatpush1.xpose.msra.mxu0 0.0
    %6579 = vmatprep.subr.mxu0 0.0
    %6580 = vmatpush1.xpose.msra.mxu0 0.0
    %6581 = vmatprep.subr.mxu0 0.0
    %6582 = vmatpush1.xpose.msra.mxu0 0.0
    %6583 = vmatprep.subr.mxu0 0.0
    %6584 = vmatpush1.xpose.msra.mxu0 0.0
    %6585 = vmatprep.subr.mxu0 0.0
    %6586 = vmatpush1.xpose.msra.mxu0 0.0
    %6587 = vmatprep.subr.mxu0 0.0
    %6588 = vmatpush1.xpose.msra.mxu0 0.0
    %6589 = vmatprep.subr.mxu0 0.0
    %6590 = vmatpush1.xpose.msra.mxu0 0.0
    %6591 = vmatprep.subr.mxu0 0.0
    %6592 = vmatpush1.xpose.msra.mxu0 0.0
    %6593 = vmatprep.subr.mxu0 0.0
    %6594 = vmatpush1.xpose.msra.mxu0 0.0
    %6595 = vmatprep.subr.mxu0 0.0
    %6596 = vmatpush1.xpose.msra.mxu0 0.0
    %6597 = vmatprep.subr.mxu0 0.0
    %6598 = vmatpush1.xpose.msra.mxu0 0.0
    %6599 = vmatprep.subr.mxu0 0.0
    %6600 = vmatpush1.xpose.msra.mxu0 0.0
    %6601 = vmatprep.subr.mxu0 0.0
    %6602 = vmatpush1.xpose.msra.mxu0 0.0
    %6603 = vmatprep.mubr.f32.mxu0 0.0
    %6604 = vmatmul.mubr.f32.gmra.mrb[0].mxu0 %v6533
    %v6605 = vpop.f32.mrb[0].mxu0
    %v6606 = vadd.f32 0.0, %v6605
    %v6607 = vpop.f32.mrb[0].mxu0
    %6608 = vdwg.mxu0
    %6609 = vrot.lane.b32.xlu0 %v3928, 72
    %v6610 = vpop.permute.xlu0 %6609
    %6611 = vrot.lane.b32.xlu0 %v4024, 72
    %v6612 = vpop.permute.xlu0 %6611
    %6613 = vrot.lane.b32.xlu0 %v4029, 72
    %v6614 = vpop.permute.xlu0 %6613
    %v6615 = vsel %vm364, %v6610, 0
    %v6617 = vsel %vm364, %v6612, 0
    %v6619 = vsel %vm364, %v6614, 0
    %6621 = vmatprep.subr.mxu0 0.0
    %6622 = vmatpush1.xpose.msra.mxu0 %v6617
    %6623 = vmatprep.subr.mxu0 0.0
    %6624 = vmatpush1.xpose.msra.mxu0 %v6619
    %6625 = vmatprep.subr.mxu0 0.0
    %6626 = vmatpush1.xpose.msra.mxu0 0.0
    %6627 = vmatprep.subr.mxu0 0.0
    %6628 = vmatpush1.xpose.msra.mxu0 0.0
    %6629 = vmatprep.subr.mxu0 0.0
    %6630 = vmatpush1.xpose.msra.mxu0 0.0
    %6631 = vmatprep.subr.mxu0 0.0
    %6632 = vmatpush1.xpose.msra.mxu0 0.0
    %6633 = vmatprep.subr.mxu0 0.0
    %6634 = vmatpush1.xpose.msra.mxu0 0.0
    %6635 = vmatprep.subr.mxu0 0.0
    %6636 = vmatpush1.xpose.msra.mxu0 0.0
    %6637 = vmatprep.subr.mxu0 0.0
    %6638 = vmatpush1.xpose.msra.mxu0 0.0
    %6639 = vmatprep.subr.mxu0 0.0
    %6640 = vmatpush1.xpose.msra.mxu0 0.0
    %6641 = vmatprep.subr.mxu0 0.0
    %6642 = vmatpush1.xpose.msra.mxu0 0.0
    %6643 = vmatprep.subr.mxu0 0.0
    %6644 = vmatpush1.xpose.msra.mxu0 0.0
    %6645 = vmatprep.subr.mxu0 0.0
    %6646 = vmatpush1.xpose.msra.mxu0 0.0
    %6647 = vmatprep.subr.mxu0 0.0
    %6648 = vmatpush1.xpose.msra.mxu0 0.0
    %6649 = vmatprep.subr.mxu0 0.0
    %6650 = vmatpush1.xpose.msra.mxu0 0.0
    %6651 = vmatprep.subr.mxu0 0.0
    %6652 = vmatpush1.xpose.msra.mxu0 0.0
    %6653 = vmatprep.subr.mxu0 0.0
    %6654 = vmatpush1.xpose.msra.mxu0 0.0
    %6655 = vmatprep.subr.mxu0 0.0
    %6656 = vmatpush1.xpose.msra.mxu0 0.0
    %6657 = vmatprep.subr.mxu0 0.0
    %6658 = vmatpush1.xpose.msra.mxu0 0.0
    %6659 = vmatprep.subr.mxu0 0.0
    %6660 = vmatpush1.xpose.msra.mxu0 0.0
    %6661 = vmatprep.subr.mxu0 0.0
    %6662 = vmatpush1.xpose.msra.mxu0 0.0
    %6663 = vmatprep.subr.mxu0 0.0
    %6664 = vmatpush1.xpose.msra.mxu0 0.0
    %6665 = vmatprep.subr.mxu0 0.0
    %6666 = vmatpush1.xpose.msra.mxu0 0.0
    %6667 = vmatprep.subr.mxu0 0.0
    %6668 = vmatpush1.xpose.msra.mxu0 0.0
    %6669 = vmatprep.subr.mxu0 0.0
    %6670 = vmatpush1.xpose.msra.mxu0 0.0
    %6671 = vmatprep.subr.mxu0 0.0
    %6672 = vmatpush1.xpose.msra.mxu0 0.0
    %6673 = vmatprep.subr.mxu0 0.0
    %6674 = vmatpush1.xpose.msra.mxu0 0.0
    %6675 = vmatprep.subr.mxu0 0.0
    %6676 = vmatpush1.xpose.msra.mxu0 0.0
    %6677 = vmatprep.subr.mxu0 0.0
    %6678 = vmatpush1.xpose.msra.mxu0 0.0
    %6679 = vmatprep.subr.mxu0 0.0
    %6680 = vmatpush1.xpose.msra.mxu0 0.0
    %6681 = vmatprep.subr.mxu0 0.0
    %6682 = vmatpush1.xpose.msra.mxu0 0.0
    %6683 = vmatprep.subr.mxu0 0.0
    %6684 = vmatpush1.xpose.msra.mxu0 0.0
    %6685 = vmatprep.mubr.f32.mxu0 0.0
    %6686 = vmatmul.mubr.f32.gmra.mrb[0].mxu0 %v6615
    %v6687 = vpop.f32.mrb[0].mxu0
    %v6688 = vadd.f32 0.0, %v6687
    %v6689 = vpop.f32.mrb[0].mxu0
    %6690 = vdwg.mxu0
    %v6691 = vsel %vm539, %v6606, -inf
    %6692 = vmax.xlane.f32.xlu0 %v6691
    %v6693 = vpop.xlane.xlu0 %6692
    %v6694 = vsel %vm539, %v6688, -inf
    %6695 = vmax.xlane.f32.xlu0 %v6694
    %v6696 = vpop.xlane.xlu0 %6695
    %v6697 = vsub.f32 %v6606, %v6693
    %v6698 = vsub.f32 %v6688, %v6696
    %v6699 = vmul.f32 %v6697, 1.442695
    %v6700 = vpow.pop %v6699
    %v6701 = vmul.f32 %v6698, 1.442695
    %v6702 = vpow.pop %v6701
    %v6703 = vsel %vm539, %v6700, 0.0
    %6704 = vadd.xlane.f32.xlu0 %v6703
    %v6705 = vpop.xlane.xlu0 %6704
    %v6706 = vsel %vm539, %v6702, 0.0
    %6707 = vadd.xlane.f32.xlu0 %v6706
    %v6708 = vpop.xlane.xlu0 %6707
    %v6709 = vrcp.pop %v6705
    %v6710 = vrcp.pop %v6708
    %v6711 = vmul.f32 %v6700, %v6709
    %v6712 = vmul.f32 %v6702, %v6710
    %v6713 = vadd.f32 %v6367, %v6711
    %v6714 = vadd.f32 %v6368, %v6712
    %6715 = vrot.lane.b32.xlu0 %v4103, 72
    %v6716 = vpop.permute.xlu0 %6715
    %6717 = vrot.lane.b32.xlu0 %v4108, 72
    %v6718 = vpop.permute.xlu0 %6717
    %v6722 = vsel %vm539, %v6711, 0
    %6724 = vmatprep.subr.mxu0 0.0
    %6725 = vmatpush1.msra.mxu0 %v6716
    %6726 = vmatprep.subr.mxu0 0.0
    %6727 = vmatpush1.msra.mxu0 %v6718
    %6728 = vmatprep.subr.mxu0 0.0
    %6729 = vmatpush1.msra.mxu0 0.0
    %6730 = vmatprep.subr.mxu0 0.0
    %6731 = vmatpush1.msra.mxu0 0.0
    %6732 = vmatprep.subr.mxu0 0.0
    %6733 = vmatpush1.msra.mxu0 0.0
    %6734 = vmatprep.subr.mxu0 0.0
    %6735 = vmatpush1.msra.mxu0 0.0
    %6736 = vmatprep.subr.mxu0 0.0
    %6737 = vmatpush1.msra.mxu0 0.0
    %6738 = vmatprep.subr.mxu0 0.0
    %6739 = vmatpush1.msra.mxu0 0.0
    %6740 = vmatprep.subr.mxu0 0.0
    %6741 = vmatpush1.msra.mxu0 0.0
    %6742 = vmatprep.subr.mxu0 0.0
    %6743 = vmatpush1.msra.mxu0 0.0
    %6744 = vmatprep.subr.mxu0 0.0
    %6745 = vmatpush1.msra.mxu0 0.0
    %6746 = vmatprep.subr.mxu0 0.0
    %6747 = vmatpush1.msra.mxu0 0.0
    %6748 = vmatprep.subr.mxu0 0.0
    %6749 = vmatpush1.msra.mxu0 0.0
    %6750 = vmatprep.subr.mxu0 0.0
    %6751 = vmatpush1.msra.mxu0 0.0
    %6752 = vmatprep.subr.mxu0 0.0
    %6753 = vmatpush1.msra.mxu0 0.0
    %6754 = vmatprep.subr.mxu0 0.0
    %6755 = vmatpush1.msra.mxu0 0.0
    %6756 = vmatprep.subr.mxu0 0.0
    %6757 = vmatpush1.msra.mxu0 0.0
    %6758 = vmatprep.subr.mxu0 0.0
    %6759 = vmatpush1.msra.mxu0 0.0
    %6760 = vmatprep.subr.mxu0 0.0
    %6761 = vmatpush1.msra.mxu0 0.0
    %6762 = vmatprep.subr.mxu0 0.0
    %6763 = vmatpush1.msra.mxu0 0.0
    %6764 = vmatprep.subr.mxu0 0.0
    %6765 = vmatpush1.msra.mxu0 0.0
    %6766 = vmatprep.subr.mxu0 0.0
    %6767 = vmatpush1.msra.mxu0 0.0
    %6768 = vmatprep.subr.mxu0 0.0
    %6769 = vmatpush1.msra.mxu0 0.0
    %6770 = vmatprep.subr.mxu0 0.0
    %6771 = vmatpush1.msra.mxu0 0.0
    %6772 = vmatprep.subr.mxu0 0.0
    %6773 = vmatpush1.msra.mxu0 0.0
    %6774 = vmatprep.subr.mxu0 0.0
    %6775 = vmatpush1.msra.mxu0 0.0
    %6776 = vmatprep.subr.mxu0 0.0
    %6777 = vmatpush1.msra.mxu0 0.0
    %6778 = vmatprep.subr.mxu0 0.0
    %6779 = vmatpush1.msra.mxu0 0.0
    %6780 = vmatprep.subr.mxu0 0.0
    %6781 = vmatpush1.msra.mxu0 0.0
    %6782 = vmatprep.subr.mxu0 0.0
    %6783 = vmatpush1.msra.mxu0 0.0
    %6784 = vmatprep.subr.mxu0 0.0
    %6785 = vmatpush1.msra.mxu0 0.0
    %6786 = vmatprep.subr.mxu0 0.0
    %6787 = vmatpush1.msra.mxu0 0.0
    %6788 = vmatprep.mubr.f32.mxu0 0.0
    %6789 = vmatmul.mubr.f32.gmra.mrb[0].mxu0 %v6722
    %v6790 = vpop.f32.mrb[0].mxu0
    %v6791 = vadd.f32 0.0, %v6790
    %v6792 = vpop.f32.mrb[0].mxu0
    %6793 = vdwg.mxu0
    %6794 = vrot.lane.b32.xlu0 %v4113, 72
    %v6795 = vpop.permute.xlu0 %6794
    %6796 = vrot.lane.b32.xlu0 %v4118, 72
    %v6797 = vpop.permute.xlu0 %6796
    %v6801 = vsel %vm539, %v6712, 0
    %6803 = vmatprep.subr.mxu0 0.0
    %6804 = vmatpush1.msra.mxu0 %v6795
    %6805 = vmatprep.subr.mxu0 0.0
    %6806 = vmatpush1.msra.mxu0 %v6797
    %6807 = vmatprep.subr.mxu0 0.0
    %6808 = vmatpush1.msra.mxu0 0.0
    %6809 = vmatprep.subr.mxu0 0.0
    %6810 = vmatpush1.msra.mxu0 0.0
    %6811 = vmatprep.subr.mxu0 0.0
    %6812 = vmatpush1.msra.mxu0 0.0
    %6813 = vmatprep.subr.mxu0 0.0
    %6814 = vmatpush1.msra.mxu0 0.0
    %6815 = vmatprep.subr.mxu0 0.0
    %6816 = vmatpush1.msra.mxu0 0.0
    %6817 = vmatprep.subr.mxu0 0.0
    %6818 = vmatpush1.msra.mxu0 0.0
    %6819 = vmatprep.subr.mxu0 0.0
    %6820 = vmatpush1.msra.mxu0 0.0
    %6821 = vmatprep.subr.mxu0 0.0
    %6822 = vmatpush1.msra.mxu0 0.0
    %6823 = vmatprep.subr.mxu0 0.0
    %6824 = vmatpush1.msra.mxu0 0.0
    %6825 = vmatprep.subr.mxu0 0.0
    %6826 = vmatpush1.msra.mxu0 0.0
    %6827 = vmatprep.subr.mxu0 0.0
    %6828 = vmatpush1.msra.mxu0 0.0
    %6829 = vmatprep.subr.mxu0 0.0
    %6830 = vmatpush1.msra.mxu0 0.0
    %6831 = vmatprep.subr.mxu0 0.0
    %6832 = vmatpush1.msra.mxu0 0.0
    %6833 = vmatprep.subr.mxu0 0.0
    %6834 = vmatpush1.msra.mxu0 0.0
    %6835 = vmatprep.subr.mxu0 0.0
    %6836 = vmatpush1.msra.mxu0 0.0
    %6837 = vmatprep.subr.mxu0 0.0
    %6838 = vmatpush1.msra.mxu0 0.0
    %6839 = vmatprep.subr.mxu0 0.0
    %6840 = vmatpush1.msra.mxu0 0.0
    %6841 = vmatprep.subr.mxu0 0.0
    %6842 = vmatpush1.msra.mxu0 0.0
    %6843 = vmatprep.subr.mxu0 0.0
    %6844 = vmatpush1.msra.mxu0 0.0
    %6845 = vmatprep.subr.mxu0 0.0
    %6846 = vmatpush1.msra.mxu0 0.0
    %6847 = vmatprep.subr.mxu0 0.0
    %6848 = vmatpush1.msra.mxu0 0.0
    %6849 = vmatprep.subr.mxu0 0.0
    %6850 = vmatpush1.msra.mxu0 0.0
    %6851 = vmatprep.subr.mxu0 0.0
    %6852 = vmatpush1.msra.mxu0 0.0
    %6853 = vmatprep.subr.mxu0 0.0
    %6854 = vmatpush1.msra.mxu0 0.0
    %6855 = vmatprep.subr.mxu0 0.0
    %6856 = vmatpush1.msra.mxu0 0.0
    %6857 = vmatprep.subr.mxu0 0.0
    %6858 = vmatpush1.msra.mxu0 0.0
    %6859 = vmatprep.subr.mxu0 0.0
    %6860 = vmatpush1.msra.mxu0 0.0
    %6861 = vmatprep.subr.mxu0 0.0
    %6862 = vmatpush1.msra.mxu0 0.0
    %6863 = vmatprep.subr.mxu0 0.0
    %6864 = vmatpush1.msra.mxu0 0.0
    %6865 = vmatprep.subr.mxu0 0.0
    %6866 = vmatpush1.msra.mxu0 0.0
    %6867 = vmatprep.mubr.f32.mxu0 0.0
    %6868 = vmatmul.mubr.f32.gmra.mrb[0].mxu0 %v6801
    %v6869 = vpop.f32.mrb[0].mxu0
    %v6870 = vadd.f32 0.0, %v6869
    %v6871 = vpop.f32.mrb[0].mxu0
    %6872 = vdwg.mxu0
    %6875 = vrot.lane.b32.xlu0 %v4713, 8
    %v6876 = vpop.permute.xlu0 %6875
    %6877 = vrot.lane.b32.xlu0 %v4794, 8
    %v6878 = vpop.permute.xlu0 %6877
    %6883 = vrot.lane.b32.xlu0 %v5061, 16
    %v6884 = vpop.permute.xlu0 %6883
    %6885 = vrot.lane.b32.xlu0 %v5140, 16
    %v6886 = vpop.permute.xlu0 %6885
    %6891 = vrot.lane.b32.xlu0 %v5407, 24
    %v6892 = vpop.permute.xlu0 %6891
    %6893 = vrot.lane.b32.xlu0 %v5486, 24
    %v6894 = vpop.permute.xlu0 %6893
    %6899 = vrot.lane.b32.xlu0 %v5753, 32
    %v6900 = vpop.permute.xlu0 %6899
    %6901 = vrot.lane.b32.xlu0 %v5832, 32
    %v6902 = vpop.permute.xlu0 %6901
    %6907 = vrot.lane.b32.xlu0 %v6099, 40
    %v6908 = vpop.permute.xlu0 %6907
    %6909 = vrot.lane.b32.xlu0 %v6178, 40
    %v6910 = vpop.permute.xlu0 %6909
    %6915 = vrot.lane.b32.xlu0 %v6445, 48
    %v6916 = vpop.permute.xlu0 %6915
    %6917 = vrot.lane.b32.xlu0 %v6524, 48
    %v6918 = vpop.permute.xlu0 %6917
    %6923 = vrot.lane.b32.xlu0 %v6791, 56
    %v6924 = vpop.permute.xlu0 %6923
    %6925 = vrot.lane.b32.xlu0 %v6870, 56
    %v6926 = vpop.permute.xlu0 %6925
    %v6929 = vsel %vm364, %v4371, %v6876
    %v6930 = vsel %vm364, %v4444, %v6878
    %v6931 = vsel %vm539, %v6929, %v6884
    %v6932 = vsel %vm539, %v6930, %v6886
    %v6933 = vsel %vm3670, %v6931, %v6892
    %v6934 = vsel %vm3670, %v6932, %v6894
    %v6935 = vsel %vm3675, %v6933, %v6900
    %v6936 = vsel %vm3675, %v6934, %v6902
    %v6937 = vsel %vm3680, %v6935, %v6908
    %v6938 = vsel %vm3680, %v6936, %v6910
    %v6939 = vsel %vm3685, %v6937, %v6916
    %v6940 = vsel %vm3685, %v6938, %v6918
    %v6941 = vsel %vm3690, %v6939, %v6924
    %v6942 = vsel %vm3690, %v6940, %v6926
    %v6943 = vlaneseq
    %v6944 = vshrl.u32 %v6943, 7
    %v6945 = vsub.s32 0, %v6944
    %v6946 = vrot.slane %v3841, %v6945
    %v6948 = vsel %vm88, %v6941, 0
    %v6951 = vsel %vm88, %v6942, 0
    %6953 = vmatprep.subr.mxu0 0.0
    %6954 = vmatpush1.msra.mxu0 %v3830
    %6955 = vmatprep.subr.mxu0 0.0
    %6956 = vmatpush1.msra.mxu0 %v3831
    %6957 = vmatprep.subr.mxu0 0.0
    %6958 = vmatpush1.msra.mxu0 %v3832
    %6959 = vmatprep.subr.mxu0 0.0
    %6960 = vmatpush1.msra.mxu0 %v3833
    %6961 = vmatprep.subr.mxu0 0.0
    %6962 = vmatpush1.msra.mxu0 %v3834
    %6963 = vmatprep.subr.mxu0 0.0
    %6964 = vmatpush1.msra.mxu0 %v3835
    %6965 = vmatprep.subr.mxu0 0.0
    %6966 = vmatpush1.msra.mxu0 %v3836
    %6967 = vmatprep.subr.mxu0 0.0
    %6968 = vmatpush1.msra.mxu0 %v3837
    %6969 = vmatprep.subr.mxu0 0.0
    %6970 = vmatpush1.msra.mxu0 0.0
    %6971 = vmatprep.subr.mxu0 0.0
    %6972 = vmatpush1.msra.mxu0 0.0
    %6973 = vmatprep.subr.mxu0 0.0
    %6974 = vmatpush1.msra.mxu0 0.0
    %6975 = vmatprep.subr.mxu0 0.0
    %6976 = vmatpush1.msra.mxu0 0.0
    %6977 = vmatprep.subr.mxu0 0.0
    %6978 = vmatpush1.msra.mxu0 0.0
    %6979 = vmatprep.subr.mxu0 0.0
    %6980 = vmatpush1.msra.mxu0 0.0
    %6981 = vmatprep.subr.mxu0 0.0
    %6982 = vmatpush1.msra.mxu0 0.0
    %6983 = vmatprep.subr.mxu0 0.0
    %6984 = vmatpush1.msra.mxu0 0.0
    %6985 = vmatprep.subr.mxu0 0.0
    %6986 = vmatpush1.msra.mxu0 0.0
    %6987 = vmatprep.subr.mxu0 0.0
    %6988 = vmatpush1.msra.mxu0 0.0
    %6989 = vmatprep.subr.mxu0 0.0
    %6990 = vmatpush1.msra.mxu0 0.0
    %6991 = vmatprep.subr.mxu0 0.0
    %6992 = vmatpush1.msra.mxu0 0.0
    %6993 = vmatprep.subr.mxu0 0.0
    %6994 = vmatpush1.msra.mxu0 0.0
    %6995 = vmatprep.subr.mxu0 0.0
    %6996 = vmatpush1.msra.mxu0 0.0
    %6997 = vmatprep.subr.mxu0 0.0
    %6998 = vmatpush1.msra.mxu0 0.0
    %6999 = vmatprep.subr.mxu0 0.0
    %7000 = vmatpush1.msra.mxu0 0.0
    %7001 = vmatprep.subr.mxu0 0.0
    %7002 = vmatpush1.msra.mxu0 0.0
    %7003 = vmatprep.subr.mxu0 0.0
    %7004 = vmatpush1.msra.mxu0 0.0
    %7005 = vmatprep.subr.mxu0 0.0
    %7006 = vmatpush1.msra.mxu0 0.0
    %7007 = vmatprep.subr.mxu0 0.0
    %7008 = vmatpush1.msra.mxu0 0.0
    %7009 = vmatprep.subr.mxu0 0.0
    %7010 = vmatpush1.msra.mxu0 0.0
    %7011 = vmatprep.subr.mxu0 0.0
    %7012 = vmatpush1.msra.mxu0 0.0
    %7013 = vmatprep.subr.mxu0 0.0
    %7014 = vmatpush1.msra.mxu0 0.0
    %7015 = vmatprep.subr.mxu0 0.0
    %7016 = vmatpush1.msra.mxu0 0.0
    %7017 = vmatprep.mubr.f32.mxu0 0.0
    %7018 = vmatmul.mubr.f32.gmra.mrb[0].mxu0 %v6948
    %v7019 = vpop.f32.mrb[0].mxu0
    %v7020 = vadd.f32 %v6946, %v7019
    %v7021 = vpop.f32.mrb[0].mxu0
    %7022 = vmatprep.mubr.f32.mxu0 0.0
    %7023 = vmatmul.mubr.f32.gmra.mrb[0].mxu0 %v6951
    %v7024 = vpop.f32.mrb[0].mxu0
    %v7025 = vadd.f32 %v6946, %v7024
    %v7026 = vpop.f32.mrb[0].mxu0
    %7027 = vdwg.mxu0
    %v7028 = vadd.f32 %v3794, %v7020
    %v7029 = vadd.f32 %v3795, %v7025
    %v7030 = vsel %vm88, %v7028, 0.0
    %7031 = vadd.xlane.f32.xlu0 %v7030
    %v7032 = vpop.xlane.xlu0 %7031
    %v7033 = vsel %vm88, %v7029, 0.0
    %7034 = vadd.xlane.f32.xlu0 %v7033
    %v7035 = vpop.xlane.xlu0 %7034
    %v7036 = vrcp.pop 64.0
    %v7037 = vmul.f32 %v7032, %v7036
    %v7038 = vmul.f32 %v7035, %v7036
    %v7039 = vsub.f32 %v7028, %v7037
    %v7040 = vsub.f32 %v7029, %v7038
    %v7041 = vmul.f32 %v7039, %v7039
    %v7042 = vmul.f32 %v7040, %v7040
    %v7043 = vsel %vm88, %v7041, 0.0
    %7044 = vadd.xlane.f32.xlu0 %v7043
    %v7045 = vpop.xlane.xlu0 %7044
    %v7046 = vsel %vm88, %v7042, 0.0
    %7047 = vadd.xlane.f32.xlu0 %v7046
    %v7048 = vpop.xlane.xlu0 %7047
    %v7049 = vmul.f32 %v7045, %v7036
    %v7050 = vmul.f32 %v7048, %v7036
    %v7051 = vadd.f32 %v7049, 1e-05
    %v7052 = vadd.f32 %v7050, 1e-05
    %v7053 = vrsqrt.pop %v7051
    %v7054 = vrsqrt.pop %v7052
    %v7055 = vmul.f32 %v7039, %v7053
    %v7056 = vmul.f32 %v7040, %v7054
    %v7057 = vlaneseq
    %v7058 = vshrl.u32 %v7057, 7
    %v7059 = vsub.s32 0, %v7058
    %v7060 = vrot.slane %v3842, %v7059
    %v7061 = vmul.f32 %v7055, %v7060
    %v7062 = vmul.f32 %v7056, %v7060
    %v7063 = vlaneseq
    %v7064 = vshrl.u32 %v7063, 7
    %v7065 = vsub.s32 0, %v7064
    %v7066 = vrot.slane %v3843, %v7065
    %v7067 = vadd.f32 %v7061, %v7066
    %v7068 = vadd.f32 %v7062, %v7066
    %7069 = vst.msk [vmem:[%s5] sm:$0xff] %vm88, %v7067
    %7071 = vrot.lane.b32.xlu0 %v7068, 64
    %v7072 = vpop.permute.xlu0 %7071
    %vm7074 = vcmask 1048064
    %7075 = vst.msk [vmem:[%s5] sm:$0xff] %vm7074, %v7072
    %v7076 = vmul.f32 %v6713, 0.125
    %v7077 = vmul.f32 %v6714, 0.125
    %7078 = vst.msk [vmem:[#allocation5] sm:$0xff] %vm539, %v7076
    %7079 = vst.msk [vmem:[#allocation5 + $0x8] sm:$0xff] %vm539, %v7077
    // Predicated region
    $region26: #{_qformer_forward.1} parent=1 // pred_check
      _
    $region27: #{_qformer_forward.1} parent=1 // pred_check_branch
      %7081 = sbr.rel (0) target = $region29
    $region28: #{_qformer_forward.1} parent=1 // pred_region
      _
    $region29: #{_qformer_forward.1} parent=1 // pred_fallthru
      _
    // Predicated region
    $region30: #{_qformer_forward.1} parent=1 // pred_check
      _
    $region31: #{_qformer_forward.1} parent=1 // pred_check_branch
      %7083 = sbr.rel (0) target = $region33
    $region32: #{_qformer_forward.1} parent=1 // pred_region
      %s7085 = ssub.s32 256, 256
      %7086 = vsyncadd [#allocation4], %s7085
      %s7087 = sshll.u32 [#allocation5], 4
      %s7088 = int_to_ptr.vmem [resolvable:$true] %s7087
      %7093 = dma.vmem_to_hbm [thread:$0]  %s7088, 256, %s6, [#allocation4], 128, 128, 8
    $region33: #{_qformer_forward.1} parent=1 // pred_fallthru
      _
    // Predicated region
    $region34: #{_qformer_forward.1} parent=1 // pred_check
      _
    $region35: #{_qformer_forward.1} parent=1 // pred_check_branch
      %7095 = sbr.rel (0) target = $region37
    $region36: #{_qformer_forward.1} parent=1 // pred_region
      _
    $region37: #{_qformer_forward.1} parent=1 // pred_fallthru
      _
    // Predicated region
    $region38: #{_qformer_forward.1} parent=1 // pred_check
      _
    $region39: #{_qformer_forward.1} parent=1 // pred_check_branch
      %7097 = sbr.rel (0) target = $region41
    $region40: #{_qformer_forward.1} parent=1 // pred_region
      %7098 = dma.done [#allocation4], 256
    $region41: #{_qformer_forward.1} parent=1 // pred_fallthru
      _
    %7099 = vsyncpa [#allocation3], 1
    %7100 = vsyncpa [#allocation4], 1

</llo_original>
